<compile_context>
chip_gen: v6e
topology: v6e:2x2x1
jax: 0.10.0
libtpu: 0.0.40
codegen_flags: <defaults>
</compile_context>

<pallas_src>
import functools

import jax
import jax.numpy as jnp
from jax.experimental import pallas as pl
from jax.experimental.pallas import tpu as pltpu

VMEM_SPEC = pl.BlockSpec(memory_space=pltpu.MemorySpace.VMEM)
_PREC = jax.lax.Precision.HIGHEST        # keep f32 matmul semantics (torch parity)
_EPS = 1e-5


# ----------------------------------------------------------------------------
# In-kernel building blocks (traced values, executed inside the fused kernel)
# ----------------------------------------------------------------------------
def _conv3x3_same(act, wmat):
    """Same-padded 3x3 conv as a single im2col matmul.

    act : (H, W, B, Cin) ; wmat : (9*Cin, Cout), rows ordered (kh, kw, cin).
    Returns (H*W*B, Cout), rows ordered (h, w, b).
    """
    H, W, B, C = act.shape
    zr = jnp.zeros((1, W, B, C), jnp.float32)
    xp = jnp.concatenate([zr, act, zr], axis=0)                    # pad H
    zc = jnp.zeros((H + 2, 1, B, C), jnp.float32)
    xp = jnp.concatenate([zc, xp, zc], axis=1)                     # pad W
    taps = [xp[dy:dy + H, dx:dx + W] for dy in range(3) for dx in range(3)]
    patches = jnp.concatenate(taps, axis=-1).reshape(H * W * B, 9 * C)
    return jnp.dot(patches, wmat, preferred_element_type=jnp.float32,
                   precision=_PREC)


def _convt3x3_s2_phases(act, wmat):
    """ConvTranspose2d(3, stride=2, padding=1, output_padding=1), phase form.

    out[2m+ry, 2n+rx] = sum_{dy,dx in {0,1}} w[ry-2dy+1, rx-2dx+1] . x[m+dy, n+dx]
    One matmul yields all four output phases:
      patches (H*W*B, 4*Cin) @ wmat (4*Cin, 4*Cout) -> (H*W*B, 4*Cout),
    column blocks p = ry*2 + rx.
    """
    H, W, B, C = act.shape
    zr = jnp.zeros((1, W, B, C), jnp.float32)
    xp = jnp.concatenate([act, zr], axis=0)                        # pad bottom
    zc = jnp.zeros((H + 1, 1, B, C), jnp.float32)
    xp = jnp.concatenate([xp, zc], axis=1)                         # pad right
    shifts = [xp[dy:dy + H, dx:dx + W] for dy in range(2) for dx in range(2)]
    patches = jnp.concatenate(shifts, axis=-1).reshape(H * W * B, 4 * C)
    return jnp.dot(patches, wmat, preferred_element_type=jnp.float32,
                   precision=_PREC)


def _bn_act(y, gamma, beta, act):
    """Training-mode BatchNorm (per column == per channel) + activation.
    y: (N*H*W, C); gamma/beta: (1, C)."""
    mean = jnp.mean(y, axis=0, keepdims=True)
    var = jnp.mean((y - mean) ** 2, axis=0, keepdims=True)
    yn = (y - mean) * (gamma * jax.lax.rsqrt(var + _EPS)) + beta
    return jnp.maximum(yn, 0.0) if act == "relu" else jax.nn.sigmoid(yn)


def _bn_act_phases(y, gamma, beta, cout, act):
    """Training-mode BatchNorm + activation on a phase-packed ConvT output.

    y: (H*W*B, 4*cout); each of the 4 column blocks holds exactly 1/4 of the
    2x-upsampled output pixels, so the per-channel stats over the full map are
    the average of the per-phase column stats -- no need to materialize the
    upsampled activation first.
    """
    def phase_avg(v):                                              # (1,4c) -> (1,c)
        return (v[:, 0:cout] + v[:, cout:2 * cout]
                + v[:, 2 * cout:3 * cout] + v[:, 3 * cout:4 * cout]) * 0.25

    mean = phase_avg(jnp.mean(y, axis=0, keepdims=True))
    mean_f = jnp.concatenate([mean] * 4, axis=1)
    d = y - mean_f
    var = phase_avg(jnp.mean(d * d, axis=0, keepdims=True))
    scale = gamma * jax.lax.rsqrt(var + _EPS)
    yn = d * jnp.concatenate([scale] * 4, axis=1) + jnp.concatenate([beta] * 4, axis=1)
    return jnp.maximum(yn, 0.0) if act == "relu" else jax.nn.sigmoid(yn)


def _pixel_shuffle_x2(y, H, W, B, C):
    """(H*W*B, 4*C) phase-packed -> (2H, 2W, B, C) spatial.
    Only leading-axis concats and minor-dim-preserving reshapes."""
    y = y.reshape(H, W, B, 4 * C)
    y00, y01 = y[..., 0:C], y[..., C:2 * C]
    y10, y11 = y[..., 2 * C:3 * C], y[..., 3 * C:4 * C]
    top = jnp.concatenate([y00[:, :, None], y01[:, :, None]], axis=2).reshape(H, 2 * W, B, C)
    bot = jnp.concatenate([y10[:, :, None], y11[:, :, None]], axis=2).reshape(H, 2 * W, B, C)
    return jnp.concatenate([top[:, None], bot[:, None]], axis=1).reshape(2 * H, 2 * W, B, C)


# ----------------------------------------------------------------------------
# Fused whole-decoder kernel (architecture is static -> kernel factory)
# ----------------------------------------------------------------------------
def _make_decoder_kernel(num_kernels, out_ch, s):
    n_blocks = len(num_kernels) - 1
    c_first = num_kernels[0]

    def kernel(*refs):
        o_ref = refs[-1]
        it = iter(refs[:-1])
        x_ref, wl_ref, bl_ref = next(it), next(it), next(it)
        B = x_ref.shape[0]

        # ---- Linear + ReLU (one MXU matmul; bias kept -- no BN follows it).
        lin = jnp.dot(x_ref[...], wl_ref[...], preferred_element_type=jnp.float32,
                      precision=_PREC)
        lin = jnp.maximum(lin + bl_ref[...], 0.0)          # (B, s*s*c_first), cols (y,x,c)

        # ---- Unflatten to the (H, W, B, C) layout with lane slices + leading
        #      concats only (tiny, lowering-safe data movement).
        rows = []
        for yy in range(s):
            px = [lin[:, (yy * s + xx) * c_first:(yy * s + xx + 1) * c_first][None, None]
                  for xx in range(s)]
            rows.append(jnp.concatenate(px, axis=1))       # (1, s, B, c_first)
        act = jnp.concatenate(rows, axis=0)                # (s, s, B, c_first)

        H = W = s
        for i in range(n_blocks):
            ci, co = num_kernels[i], num_kernels[i + 1]
            w1, g1, b1 = next(it), next(it), next(it)
            w2, g2, b2 = next(it), next(it), next(it)
            wt, g3, b3 = next(it), next(it), next(it)

            y = _conv3x3_same(act, w1[...])                                # Conv+BN+ReLU
            act = _bn_act(y, g1[...], b1[...], "relu").reshape(H, W, B, ci)

            y = _conv3x3_same(act, w2[...])                                # Conv+BN+ReLU
            act = _bn_act(y, g2[...], b2[...], "relu").reshape(H, W, B, ci)

            y = _convt3x3_s2_phases(act, wt[...])                          # ConvT+BN+ReLU
            y = _bn_act_phases(y, g3[...], b3[...], co, "relu")
            act = _pixel_shuffle_x2(y, H, W, B, co)
            H, W = 2 * H, 2 * W

        # ---- Final ConvT + BN + Sigmoid, stored phase-packed & lane-dense:
        #      (4*out_ch, H*W*B) is a 128-lane-wide single store; the wrapper
        #      undoes the packing with a free XLA reshape/transpose.
        wf, gf, bf = next(it), next(it), next(it)
        y = _convt3x3_s2_phases(act, wf[...])
        y = _bn_act_phases(y, gf[...], bf[...], out_ch, "sigmoid")
        o_ref[...] = jnp.transpose(y)

    return kernel


# ----------------------------------------------------------------------------
# Wrapper-side parameter re-layout (weights only; pure plumbing, done by XLA)
# ----------------------------------------------------------------------------
def _conv_wmat(w_oihw):
    """torch Conv2d weight (Cout, Cin, 3, 3) -> im2col matrix (9*Cin, Cout)."""
    cout, cin = w_oihw.shape[0], w_oihw.shape[1]
    return jnp.transpose(w_oihw, (2, 3, 1, 0)).reshape(9 * cin, cout).astype(jnp.float32)


def _convt_wmat(w_iohw):
    """torch ConvTranspose2d weight (Cin, Cout, 3, 3) -> phase matrix (4*Cin, 4*Cout).

    Row block q = dy*2+dx (input shift), column block p = ry*2+rx (output phase);
    block (q, p) = w[ry-2dy+1, rx-2dx+1], zero when that tap falls outside the
    3x3 kernel (only 9 of 16 blocks are non-zero).
    """
    cin, cout = w_iohw.shape[0], w_iohw.shape[1]
    w = jnp.transpose(w_iohw, (2, 3, 0, 1)).astype(jnp.float32)    # (kh, kw, cin, cout)
    rows = []
    for dy in range(2):
        for dx in range(2):
            cols = []
            for ry in range(2):
                for rx in range(2):
                    ky, kx = ry - 2 * dy + 1, rx - 2 * dx + 1
                    if 0 <= ky <= 2 and 0 <= kx <= 2:
                        cols.append(w[ky, kx])
                    else:
                        cols.append(jnp.zeros((cin, cout), jnp.float32))
            rows.append(jnp.concatenate(cols, axis=1))
    return jnp.concatenate(rows, axis=0)


def decoder_cnn_forward(params, x, *, output_size, num_kernels):
    """Decoder_CNN.forward(x): returns (B, C_out, H_out, W_out) NCHW like torch."""
    x = x.astype(jnp.float32)                                      # x.float()
    B, n_in = x.shape
    out_ch = output_size[0]
    s = output_size[1] // 2 ** len(num_kernels)
    c_first = num_kernels[0]

    # Linear columns permuted from NCHW-flat (c,y,x) to NHWC-flat (y,x,c) so the
    # kernel can unflatten with contiguous lane slices.
    wl = params["lin_w"].reshape(n_in, c_first, s, s).transpose(0, 2, 3, 1).reshape(n_in, s * s * c_first)
    bl = params["lin_b"].reshape(c_first, s, s).transpose(1, 2, 0).reshape(1, s * s * c_first)

    args = [x, wl, bl]
    for blk in params["blocks"]:
        # NOTE: conv / convT biases are intentionally not passed -- a per-channel
        # constant before training-mode BatchNorm is exactly cancelled by the
        # mean subtraction, so they are dead inputs / dead VALU work.
        args += [_conv_wmat(blk["c1_w"]), blk["bn1_g"].reshape(1, -1), blk["bn1_b"].reshape(1, -1)]
        args += [_conv_wmat(blk["c2_w"]), blk["bn2_g"].reshape(1, -1), blk["bn2_b"].reshape(1, -1)]
        args += [_convt_wmat(blk["ct_w"]), blk["bn3_g"].reshape(1, -1), blk["bn3_b"].reshape(1, -1)]
    fin = params["final"]
    args += [_convt_wmat(fin["ct_w"]), fin["bn_g"].reshape(1, -1), fin["bn_b"].reshape(1, -1)]

    hf, wf = output_size[1] // 2, output_size[2] // 2      # spatial size entering final ConvT
    out = pl.pallas_call(
        _make_decoder_kernel(tuple(num_kernels), out_ch, s),
        out_shape=jax.ShapeDtypeStruct((4 * out_ch, hf * wf * B), jnp.float32),
        in_specs=[VMEM_SPEC] * len(args),
        out_specs=VMEM_SPEC,
        # grid=(): one program; at B=2 sharding over v7x's second TensorCore
        # would be pure overhead (add a parallel batch axis only if B scales).
    )(*args)

    # Undo the lane-dense phase packing: (4*out_ch, hf*wf*B) -> (B, out_ch, H, W).
    out = out.reshape(2, 2, out_ch, hf, wf, B)             # (ry, rx, c, h, w, b)
    out = jnp.transpose(out, (5, 2, 3, 0, 4, 1))           # (b, c, h, ry, w, rx)
    return out.reshape(B, out_ch, 2 * hf, 2 * wf)


# ----------------------------------------------------------------------------
# Pure-XLA reference (mirrors the torch module incl. conv biases) -- validation
# ----------------------------------------------------------------------------
def _reference_forward(params, x, *, output_size, num_kernels):
    x = x.astype(jnp.float32)
    B = x.shape[0]
    s = output_size[1] // 2 ** len(num_kernels)
    c_first = num_kernels[0]

    def bn(y, g, b):
        m = jnp.mean(y, axis=(0, 2, 3), keepdims=True)
        v = jnp.mean((y - m) ** 2, axis=(0, 2, 3), keepdims=True)
        return (y - m) * jax.lax.rsqrt(v + _EPS) * g.reshape(1, -1, 1, 1) + b.reshape(1, -1, 1, 1)

    def conv(y, w, b):
        o = jax.lax.conv_general_dilated(y, w, (1, 1), ((1, 1), (1, 1)),
                                         dimension_numbers=("NCHW", "OIHW", "NCHW"),
                                         precision=_PREC)
        return o + b.reshape(1, -1, 1, 1)

    def convt(y, w, b):
        w_flip = jnp.transpose(w, (1, 0, 2, 3))[:, :, ::-1, ::-1]
        o = jax.lax.conv_general_dilated(y, w_flip, (1, 1), ((1, 2), (1, 2)),
                                         lhs_dilation=(2, 2),
                                         dimension_numbers=("NCHW", "OIHW", "NCHW"),
                                         precision=_PREC)
        return o + b.reshape(1, -1, 1, 1)

    h = jnp.maximum(jnp.dot(x, params["lin_w"], precision=_PREC) + params["lin_b"], 0.0)
    h = h.reshape(B, c_first, s, s)
    for blk in params["blocks"]:
        h = jnp.maximum(bn(conv(h, blk["c1_w"], blk["c1_b"]), blk["bn1_g"], blk["bn1_b"]), 0.0)
        h = jnp.maximum(bn(conv(h, blk["c2_w"], blk["c2_b"]), blk["bn2_g"], blk["bn2_b"]), 0.0)
        h = jnp.maximum(bn(convt(h, blk["ct_w"], blk["ct_b"]), blk["bn3_g"], blk["bn3_b"]), 0.0)
    fin = params["final"]
    return jax.nn.sigmoid(bn(convt(h, fin["ct_w"], fin["ct_b"]), fin["bn_g"], fin["bn_b"]))


# ----------------------------------------------------------------------------
# Deterministic parameter init (synthetic; shapes follow the torch __init__)
# ----------------------------------------------------------------------------
def init_params(key, n_z, n_label, output_size, num_kernels):
    n_in = n_z + n_label
    s = output_size[1] // 2 ** len(num_kernels)
    P = num_kernels[0] * s * s
    keys = iter(jax.random.split(key, 64))

    def w(shape, scale=0.1):
        return (scale * jax.random.normal(next(keys), shape)).astype(jnp.float32)

    params = {"lin_w": w((n_in, P)), "lin_b": w((P,)), "blocks": []}
    for i in range(len(num_kernels) - 1):
        ci, co = num_kernels[i], num_kernels[i + 1]
        params["blocks"].append({
            "c1_w": w((ci, ci, 3, 3)), "c1_b": w((ci,)),
            "bn1_g": jnp.ones((ci,), jnp.float32), "bn1_b": jnp.zeros((ci,), jnp.float32),
            "c2_w": w((ci, ci, 3, 3)), "c2_b": w((ci,)),
            "bn2_g": jnp.ones((ci,), jnp.float32), "bn2_b": jnp.zeros((ci,), jnp.float32),
            "ct_w": w((ci, co, 3, 3)), "ct_b": w((co,)),
            "bn3_g": jnp.ones((co,), jnp.float32), "bn3_b": jnp.zeros((co,), jnp.float32),
        })
    c_last, c_out = num_kernels[-1], output_size[0]
    params["final"] = {
        "ct_w": w((c_last, c_out, 3, 3)), "ct_b": w((c_out,)),
        "bn_g": jnp.ones((c_out,), jnp.float32), "bn_b": jnp.zeros((c_out,), jnp.float32),
    }
    return params


if __name__ == "__main__":
    n_z, n_label = 6, 2
    output_size = (1, 16, 16)
    num_kernels = (8, 4)

    key = jax.random.PRNGKey(0)
    pkey, xkey = jax.random.split(key)
    params = init_params(pkey, n_z, n_label, output_size, num_kernels)
    x = jax.random.normal(xkey, (2, n_z + n_label), dtype=jnp.float32)

    fwd = jax.jit(functools.partial(decoder_cnn_forward,
                                    output_size=output_size, num_kernels=num_kernels))
    out = fwd(params, x)
    jax.block_until_ready(out)
    assert out.shape == (2,) + output_size, out.shape
    assert out.dtype == jnp.float32

    ref = jax.jit(functools.partial(_reference_forward,
                                    output_size=output_size, num_kernels=num_kernels))(params, x)
    max_err = float(jnp.max(jnp.abs(out - ref)))
    assert max_err < 1e-2, f"kernel vs XLA reference max abs err {max_err}"
    print("KERNEL_OK")
</pallas_src>

<mosaic_0001>
module attributes {stable_mosaic.version = 11 : i64} {
  func.func @kernel(%arg0: memref<2x8xf32, #tpu.memory_space<vmem>>, %arg1: memref<8x128xf32, #tpu.memory_space<vmem>>, %arg2: memref<1x128xf32, #tpu.memory_space<vmem>>, %arg3: memref<72x8xf32, #tpu.memory_space<vmem>>, %arg4: memref<1x8xf32, #tpu.memory_space<vmem>>, %arg5: memref<1x8xf32, #tpu.memory_space<vmem>>, %arg6: memref<72x8xf32, #tpu.memory_space<vmem>>, %arg7: memref<1x8xf32, #tpu.memory_space<vmem>>, %arg8: memref<1x8xf32, #tpu.memory_space<vmem>>, %arg9: memref<32x16xf32, #tpu.memory_space<vmem>>, %arg10: memref<1x4xf32, #tpu.memory_space<vmem>>, %arg11: memref<1x4xf32, #tpu.memory_space<vmem>>, %arg12: memref<16x4xf32, #tpu.memory_space<vmem>>, %arg13: memref<1x1xf32, #tpu.memory_space<vmem>>, %arg14: memref<1x1xf32, #tpu.memory_space<vmem>>, %arg15: memref<4x128xf32, #tpu.memory_space<vmem>>) attributes {dimension_semantics = [], scalar_prefetch = 0 : i64, scratch_operands = 0 : i64, tpu.core_type = #tpu.core_type<tc>} {
    %c0 = arith.constant 0 : index
    %c0_0 = arith.constant 0 : index
    %0 = vector.load %arg0[%c0, %c0_0] : memref<2x8xf32, #tpu.memory_space<vmem>>, vector<2x8xf32>
    %c0_1 = arith.constant 0 : index
    %c0_2 = arith.constant 0 : index
    %1 = vector.load %arg1[%c0_1, %c0_2] : memref<8x128xf32, #tpu.memory_space<vmem>>, vector<8x128xf32>
    %cst = arith.constant dense<0.000000e+00> : vector<2x128xf32>
    %2 = tpu.matmul %0, %1, %cst {dimension_numbers = #tpu.dot_dimension_numbers<[1], [0], [0], [1], [0, 0, 1, 1], [], []>, precision = #tpu.contract_precision<fp32>} : vector<2x8xf32>, vector<8x128xf32>, vector<2x128xf32> -> vector<2x128xf32>
    %c0_3 = arith.constant 0 : index
    %c0_4 = arith.constant 0 : index
    %3 = vector.load %arg2[%c0_3, %c0_4] : memref<1x128xf32, #tpu.memory_space<vmem>>, vector<1x128xf32>
    %4 = vector.broadcast %3 : vector<1x128xf32> to vector<2x128xf32>
    %5 = arith.addf %2, %4 : vector<2x128xf32>
    %cst_5 = arith.constant 0.000000e+00 : f32
    %6 = vector.broadcast %cst_5 : f32 to vector<2x128xf32>
    %7 = arith.maximumf %5, %6 : vector<2x128xf32>
    %8 = vector.extract_strided_slice %7 {offsets = [0, 0], sizes = [2, 8], strides = [1, 1]} : vector<2x128xf32> to vector<2x8xf32>
    %9 = vector.shape_cast %8 : vector<2x8xf32> to vector<1x1x2x8xf32>
    %10 = vector.extract_strided_slice %7 {offsets = [0, 8], sizes = [2, 8], strides = [1, 1]} : vector<2x128xf32> to vector<2x8xf32>
    %11 = vector.shape_cast %10 : vector<2x8xf32> to vector<1x1x2x8xf32>
    %12 = vector.extract_strided_slice %7 {offsets = [0, 16], sizes = [2, 8], strides = [1, 1]} : vector<2x128xf32> to vector<2x8xf32>
    %13 = vector.shape_cast %12 : vector<2x8xf32> to vector<1x1x2x8xf32>
    %14 = vector.extract_strided_slice %7 {offsets = [0, 24], sizes = [2, 8], strides = [1, 1]} : vector<2x128xf32> to vector<2x8xf32>
    %15 = vector.shape_cast %14 : vector<2x8xf32> to vector<1x1x2x8xf32>
    %16 = tpu.concatenate %9, %11, %13, %15 in 1 : vector<1x1x2x8xf32>, vector<1x1x2x8xf32>, vector<1x1x2x8xf32>, vector<1x1x2x8xf32> -> vector<1x4x2x8xf32>
    %17 = vector.extract_strided_slice %7 {offsets = [0, 32], sizes = [2, 8], strides = [1, 1]} : vector<2x128xf32> to vector<2x8xf32>
    %18 = vector.shape_cast %17 : vector<2x8xf32> to vector<1x1x2x8xf32>
    %19 = vector.extract_strided_slice %7 {offsets = [0, 40], sizes = [2, 8], strides = [1, 1]} : vector<2x128xf32> to vector<2x8xf32>
    %20 = vector.shape_cast %19 : vector<2x8xf32> to vector<1x1x2x8xf32>
    %21 = vector.extract_strided_slice %7 {offsets = [0, 48], sizes = [2, 8], strides = [1, 1]} : vector<2x128xf32> to vector<2x8xf32>
    %22 = vector.shape_cast %21 : vector<2x8xf32> to vector<1x1x2x8xf32>
    %23 = vector.extract_strided_slice %7 {offsets = [0, 56], sizes = [2, 8], strides = [1, 1]} : vector<2x128xf32> to vector<2x8xf32>
    %24 = vector.shape_cast %23 : vector<2x8xf32> to vector<1x1x2x8xf32>
    %25 = tpu.concatenate %18, %20, %22, %24 in 1 : vector<1x1x2x8xf32>, vector<1x1x2x8xf32>, vector<1x1x2x8xf32>, vector<1x1x2x8xf32> -> vector<1x4x2x8xf32>
    %26 = vector.extract_strided_slice %7 {offsets = [0, 64], sizes = [2, 8], strides = [1, 1]} : vector<2x128xf32> to vector<2x8xf32>
    %27 = vector.shape_cast %26 : vector<2x8xf32> to vector<1x1x2x8xf32>
    %28 = vector.extract_strided_slice %7 {offsets = [0, 72], sizes = [2, 8], strides = [1, 1]} : vector<2x128xf32> to vector<2x8xf32>
    %29 = vector.shape_cast %28 : vector<2x8xf32> to vector<1x1x2x8xf32>
    %30 = vector.extract_strided_slice %7 {offsets = [0, 80], sizes = [2, 8], strides = [1, 1]} : vector<2x128xf32> to vector<2x8xf32>
    %31 = vector.shape_cast %30 : vector<2x8xf32> to vector<1x1x2x8xf32>
    %32 = vector.extract_strided_slice %7 {offsets = [0, 88], sizes = [2, 8], strides = [1, 1]} : vector<2x128xf32> to vector<2x8xf32>
    %33 = vector.shape_cast %32 : vector<2x8xf32> to vector<1x1x2x8xf32>
    %34 = tpu.concatenate %27, %29, %31, %33 in 1 : vector<1x1x2x8xf32>, vector<1x1x2x8xf32>, vector<1x1x2x8xf32>, vector<1x1x2x8xf32> -> vector<1x4x2x8xf32>
    %35 = vector.extract_strided_slice %7 {offsets = [0, 96], sizes = [2, 8], strides = [1, 1]} : vector<2x128xf32> to vector<2x8xf32>
    %36 = vector.shape_cast %35 : vector<2x8xf32> to vector<1x1x2x8xf32>
    %37 = vector.extract_strided_slice %7 {offsets = [0, 104], sizes = [2, 8], strides = [1, 1]} : vector<2x128xf32> to vector<2x8xf32>
    %38 = vector.shape_cast %37 : vector<2x8xf32> to vector<1x1x2x8xf32>
    %39 = vector.extract_strided_slice %7 {offsets = [0, 112], sizes = [2, 8], strides = [1, 1]} : vector<2x128xf32> to vector<2x8xf32>
    %40 = vector.shape_cast %39 : vector<2x8xf32> to vector<1x1x2x8xf32>
    %41 = vector.extract_strided_slice %7 {offsets = [0, 120], sizes = [2, 8], strides = [1, 1]} : vector<2x128xf32> to vector<2x8xf32>
    %42 = vector.shape_cast %41 : vector<2x8xf32> to vector<1x1x2x8xf32>
    %43 = tpu.concatenate %36, %38, %40, %42 in 1 : vector<1x1x2x8xf32>, vector<1x1x2x8xf32>, vector<1x1x2x8xf32>, vector<1x1x2x8xf32> -> vector<1x4x2x8xf32>
    %44 = tpu.concatenate %16, %25, %34, %43 in 0 : vector<1x4x2x8xf32>, vector<1x4x2x8xf32>, vector<1x4x2x8xf32>, vector<1x4x2x8xf32> -> vector<4x4x2x8xf32>
    %c0_6 = arith.constant 0 : index
    %c0_7 = arith.constant 0 : index
    %45 = vector.load %arg3[%c0_6, %c0_7] : memref<72x8xf32, #tpu.memory_space<vmem>>, vector<72x8xf32>
    %cst_8 = arith.constant 0.000000e+00 : f32
    %46 = vector.broadcast %cst_8 : f32 to vector<1x4x2x8xf32>
    %47 = tpu.concatenate %46, %44, %46 in 0 : vector<1x4x2x8xf32>, vector<4x4x2x8xf32>, vector<1x4x2x8xf32> -> vector<6x4x2x8xf32>
    %cst_9 = arith.constant 0.000000e+00 : f32
    %48 = vector.broadcast %cst_9 : f32 to vector<6x1x2x8xf32>
    %49 = tpu.concatenate %48, %47, %48 in 1 : vector<6x1x2x8xf32>, vector<6x4x2x8xf32>, vector<6x1x2x8xf32> -> vector<6x6x2x8xf32>
    %50 = vector.extract_strided_slice %49 {offsets = [0, 0, 0, 0], sizes = [4, 4, 2, 8], strides = [1, 1, 1, 1]} : vector<6x6x2x8xf32> to vector<4x4x2x8xf32>
    %51 = vector.extract_strided_slice %49 {offsets = [0, 1, 0, 0], sizes = [4, 4, 2, 8], strides = [1, 1, 1, 1]} : vector<6x6x2x8xf32> to vector<4x4x2x8xf32>
    %52 = vector.extract_strided_slice %49 {offsets = [0, 2, 0, 0], sizes = [4, 4, 2, 8], strides = [1, 1, 1, 1]} : vector<6x6x2x8xf32> to vector<4x4x2x8xf32>
    %53 = vector.extract_strided_slice %49 {offsets = [1, 0, 0, 0], sizes = [4, 4, 2, 8], strides = [1, 1, 1, 1]} : vector<6x6x2x8xf32> to vector<4x4x2x8xf32>
    %54 = vector.extract_strided_slice %49 {offsets = [1, 1, 0, 0], sizes = [4, 4, 2, 8], strides = [1, 1, 1, 1]} : vector<6x6x2x8xf32> to vector<4x4x2x8xf32>
    %55 = vector.extract_strided_slice %49 {offsets = [1, 2, 0, 0], sizes = [4, 4, 2, 8], strides = [1, 1, 1, 1]} : vector<6x6x2x8xf32> to vector<4x4x2x8xf32>
    %56 = vector.extract_strided_slice %49 {offsets = [2, 0, 0, 0], sizes = [4, 4, 2, 8], strides = [1, 1, 1, 1]} : vector<6x6x2x8xf32> to vector<4x4x2x8xf32>
    %57 = vector.extract_strided_slice %49 {offsets = [2, 1, 0, 0], sizes = [4, 4, 2, 8], strides = [1, 1, 1, 1]} : vector<6x6x2x8xf32> to vector<4x4x2x8xf32>
    %58 = vector.extract_strided_slice %49 {offsets = [2, 2, 0, 0], sizes = [4, 4, 2, 8], strides = [1, 1, 1, 1]} : vector<6x6x2x8xf32> to vector<4x4x2x8xf32>
    %59 = tpu.concatenate %50, %51, %52, %53, %54, %55, %56, %57, %58 in 3 : vector<4x4x2x8xf32>, vector<4x4x2x8xf32>, vector<4x4x2x8xf32>, vector<4x4x2x8xf32>, vector<4x4x2x8xf32>, vector<4x4x2x8xf32>, vector<4x4x2x8xf32>, vector<4x4x2x8xf32>, vector<4x4x2x8xf32> -> vector<4x4x2x72xf32>
    %60 = vector.shape_cast %59 : vector<4x4x2x72xf32> to vector<32x72xf32>
    %cst_10 = arith.constant dense<0.000000e+00> : vector<32x8xf32>
    %61 = tpu.matmul %60, %45, %cst_10 {dimension_numbers = #tpu.dot_dimension_numbers<[1], [0], [0], [1], [0, 0, 1, 1], [], []>, precision = #tpu.contract_precision<fp32>} : vector<32x72xf32>, vector<72x8xf32>, vector<32x8xf32> -> vector<32x8xf32>
    %c0_11 = arith.constant 0 : index
    %c0_12 = arith.constant 0 : index
    %62 = vector.load %arg4[%c0_11, %c0_12] : memref<1x8xf32, #tpu.memory_space<vmem>>, vector<1x8xf32>
    %c0_13 = arith.constant 0 : index
    %c0_14 = arith.constant 0 : index
    %63 = vector.load %arg5[%c0_13, %c0_14] : memref<1x8xf32, #tpu.memory_space<vmem>>, vector<1x8xf32>
    %cst_15 = arith.constant dense<0.000000e+00> : vector<8xf32>
    %64 = vector.multi_reduction <add>, %61, %cst_15 [0] : vector<32x8xf32> to vector<8xf32>
    %65 = vector.shape_cast %64 : vector<8xf32> to vector<1x8xf32>
    %cst_16 = arith.constant 3.200000e+01 : f32
    %66 = vector.broadcast %cst_16 : f32 to vector<1x8xf32>
    %67 = arith.divf %65, %66 : vector<1x8xf32>
    %68 = vector.broadcast %67 : vector<1x8xf32> to vector<32x8xf32>
    %69 = arith.subf %61, %68 : vector<32x8xf32>
    %70 = arith.mulf %69, %69 : vector<32x8xf32>
    %cst_17 = arith.constant dense<0.000000e+00> : vector<8xf32>
    %71 = vector.multi_reduction <add>, %70, %cst_17 [0] : vector<32x8xf32> to vector<8xf32>
    %72 = vector.shape_cast %71 : vector<8xf32> to vector<1x8xf32>
    %cst_18 = arith.constant 3.200000e+01 : f32
    %73 = vector.broadcast %cst_18 : f32 to vector<1x8xf32>
    %74 = arith.divf %72, %73 : vector<1x8xf32>
    %75 = vector.broadcast %67 : vector<1x8xf32> to vector<32x8xf32>
    %76 = arith.subf %61, %75 : vector<32x8xf32>
    %cst_19 = arith.constant 9.99999974E-6 : f32
    %77 = vector.broadcast %cst_19 : f32 to vector<1x8xf32>
    %78 = arith.addf %74, %77 : vector<1x8xf32>
    %79 = math.rsqrt %78 : vector<1x8xf32>
    %80 = arith.mulf %62, %79 : vector<1x8xf32>
    %81 = vector.broadcast %80 : vector<1x8xf32> to vector<32x8xf32>
    %82 = arith.mulf %76, %81 : vector<32x8xf32>
    %83 = vector.broadcast %63 : vector<1x8xf32> to vector<32x8xf32>
    %84 = arith.addf %82, %83 : vector<32x8xf32>
    %cst_20 = arith.constant 0.000000e+00 : f32
    %85 = vector.broadcast %cst_20 : f32 to vector<32x8xf32>
    %86 = arith.maximumf %84, %85 : vector<32x8xf32>
    %87 = vector.shape_cast %86 : vector<32x8xf32> to vector<4x4x2x8xf32>
    %c0_21 = arith.constant 0 : index
    %c0_22 = arith.constant 0 : index
    %88 = vector.load %arg6[%c0_21, %c0_22] : memref<72x8xf32, #tpu.memory_space<vmem>>, vector<72x8xf32>
    %cst_23 = arith.constant 0.000000e+00 : f32
    %89 = vector.broadcast %cst_23 : f32 to vector<1x4x2x8xf32>
    %90 = tpu.concatenate %89, %87, %89 in 0 : vector<1x4x2x8xf32>, vector<4x4x2x8xf32>, vector<1x4x2x8xf32> -> vector<6x4x2x8xf32>
    %cst_24 = arith.constant 0.000000e+00 : f32
    %91 = vector.broadcast %cst_24 : f32 to vector<6x1x2x8xf32>
    %92 = tpu.concatenate %91, %90, %91 in 1 : vector<6x1x2x8xf32>, vector<6x4x2x8xf32>, vector<6x1x2x8xf32> -> vector<6x6x2x8xf32>
    %93 = vector.extract_strided_slice %92 {offsets = [0, 0, 0, 0], sizes = [4, 4, 2, 8], strides = [1, 1, 1, 1]} : vector<6x6x2x8xf32> to vector<4x4x2x8xf32>
    %94 = vector.extract_strided_slice %92 {offsets = [0, 1, 0, 0], sizes = [4, 4, 2, 8], strides = [1, 1, 1, 1]} : vector<6x6x2x8xf32> to vector<4x4x2x8xf32>
    %95 = vector.extract_strided_slice %92 {offsets = [0, 2, 0, 0], sizes = [4, 4, 2, 8], strides = [1, 1, 1, 1]} : vector<6x6x2x8xf32> to vector<4x4x2x8xf32>
    %96 = vector.extract_strided_slice %92 {offsets = [1, 0, 0, 0], sizes = [4, 4, 2, 8], strides = [1, 1, 1, 1]} : vector<6x6x2x8xf32> to vector<4x4x2x8xf32>
    %97 = vector.extract_strided_slice %92 {offsets = [1, 1, 0, 0], sizes = [4, 4, 2, 8], strides = [1, 1, 1, 1]} : vector<6x6x2x8xf32> to vector<4x4x2x8xf32>
    %98 = vector.extract_strided_slice %92 {offsets = [1, 2, 0, 0], sizes = [4, 4, 2, 8], strides = [1, 1, 1, 1]} : vector<6x6x2x8xf32> to vector<4x4x2x8xf32>
    %99 = vector.extract_strided_slice %92 {offsets = [2, 0, 0, 0], sizes = [4, 4, 2, 8], strides = [1, 1, 1, 1]} : vector<6x6x2x8xf32> to vector<4x4x2x8xf32>
    %100 = vector.extract_strided_slice %92 {offsets = [2, 1, 0, 0], sizes = [4, 4, 2, 8], strides = [1, 1, 1, 1]} : vector<6x6x2x8xf32> to vector<4x4x2x8xf32>
    %101 = vector.extract_strided_slice %92 {offsets = [2, 2, 0, 0], sizes = [4, 4, 2, 8], strides = [1, 1, 1, 1]} : vector<6x6x2x8xf32> to vector<4x4x2x8xf32>
    %102 = tpu.concatenate %93, %94, %95, %96, %97, %98, %99, %100, %101 in 3 : vector<4x4x2x8xf32>, vector<4x4x2x8xf32>, vector<4x4x2x8xf32>, vector<4x4x2x8xf32>, vector<4x4x2x8xf32>, vector<4x4x2x8xf32>, vector<4x4x2x8xf32>, vector<4x4x2x8xf32>, vector<4x4x2x8xf32> -> vector<4x4x2x72xf32>
    %103 = vector.shape_cast %102 : vector<4x4x2x72xf32> to vector<32x72xf32>
    %cst_25 = arith.constant dense<0.000000e+00> : vector<32x8xf32>
    %104 = tpu.matmul %103, %88, %cst_25 {dimension_numbers = #tpu.dot_dimension_numbers<[1], [0], [0], [1], [0, 0, 1, 1], [], []>, precision = #tpu.contract_precision<fp32>} : vector<32x72xf32>, vector<72x8xf32>, vector<32x8xf32> -> vector<32x8xf32>
    %c0_26 = arith.constant 0 : index
    %c0_27 = arith.constant 0 : index
    %105 = vector.load %arg7[%c0_26, %c0_27] : memref<1x8xf32, #tpu.memory_space<vmem>>, vector<1x8xf32>
    %c0_28 = arith.constant 0 : index
    %c0_29 = arith.constant 0 : index
    %106 = vector.load %arg8[%c0_28, %c0_29] : memref<1x8xf32, #tpu.memory_space<vmem>>, vector<1x8xf32>
    %cst_30 = arith.constant dense<0.000000e+00> : vector<8xf32>
    %107 = vector.multi_reduction <add>, %104, %cst_30 [0] : vector<32x8xf32> to vector<8xf32>
    %108 = vector.shape_cast %107 : vector<8xf32> to vector<1x8xf32>
    %cst_31 = arith.constant 3.200000e+01 : f32
    %109 = vector.broadcast %cst_31 : f32 to vector<1x8xf32>
    %110 = arith.divf %108, %109 : vector<1x8xf32>
    %111 = vector.broadcast %110 : vector<1x8xf32> to vector<32x8xf32>
    %112 = arith.subf %104, %111 : vector<32x8xf32>
    %113 = arith.mulf %112, %112 : vector<32x8xf32>
    %cst_32 = arith.constant dense<0.000000e+00> : vector<8xf32>
    %114 = vector.multi_reduction <add>, %113, %cst_32 [0] : vector<32x8xf32> to vector<8xf32>
    %115 = vector.shape_cast %114 : vector<8xf32> to vector<1x8xf32>
    %cst_33 = arith.constant 3.200000e+01 : f32
    %116 = vector.broadcast %cst_33 : f32 to vector<1x8xf32>
    %117 = arith.divf %115, %116 : vector<1x8xf32>
    %118 = vector.broadcast %110 : vector<1x8xf32> to vector<32x8xf32>
    %119 = arith.subf %104, %118 : vector<32x8xf32>
    %cst_34 = arith.constant 9.99999974E-6 : f32
    %120 = vector.broadcast %cst_34 : f32 to vector<1x8xf32>
    %121 = arith.addf %117, %120 : vector<1x8xf32>
    %122 = math.rsqrt %121 : vector<1x8xf32>
    %123 = arith.mulf %105, %122 : vector<1x8xf32>
    %124 = vector.broadcast %123 : vector<1x8xf32> to vector<32x8xf32>
    %125 = arith.mulf %119, %124 : vector<32x8xf32>
    %126 = vector.broadcast %106 : vector<1x8xf32> to vector<32x8xf32>
    %127 = arith.addf %125, %126 : vector<32x8xf32>
    %cst_35 = arith.constant 0.000000e+00 : f32
    %128 = vector.broadcast %cst_35 : f32 to vector<32x8xf32>
    %129 = arith.maximumf %127, %128 : vector<32x8xf32>
    %130 = vector.shape_cast %129 : vector<32x8xf32> to vector<4x4x2x8xf32>
    %c0_36 = arith.constant 0 : index
    %c0_37 = arith.constant 0 : index
    %131 = vector.load %arg9[%c0_36, %c0_37] : memref<32x16xf32, #tpu.memory_space<vmem>>, vector<32x16xf32>
    %cst_38 = arith.constant 0.000000e+00 : f32
    %132 = vector.broadcast %cst_38 : f32 to vector<1x4x2x8xf32>
    %133 = tpu.concatenate %130, %132 in 0 : vector<4x4x2x8xf32>, vector<1x4x2x8xf32> -> vector<5x4x2x8xf32>
    %cst_39 = arith.constant 0.000000e+00 : f32
    %134 = vector.broadcast %cst_39 : f32 to vector<5x1x2x8xf32>
    %135 = tpu.concatenate %133, %134 in 1 : vector<5x4x2x8xf32>, vector<5x1x2x8xf32> -> vector<5x5x2x8xf32>
    %136 = vector.extract_strided_slice %135 {offsets = [0, 0, 0, 0], sizes = [4, 4, 2, 8], strides = [1, 1, 1, 1]} : vector<5x5x2x8xf32> to vector<4x4x2x8xf32>
    %137 = vector.extract_strided_slice %135 {offsets = [0, 1, 0, 0], sizes = [4, 4, 2, 8], strides = [1, 1, 1, 1]} : vector<5x5x2x8xf32> to vector<4x4x2x8xf32>
    %138 = vector.extract_strided_slice %135 {offsets = [1, 0, 0, 0], sizes = [4, 4, 2, 8], strides = [1, 1, 1, 1]} : vector<5x5x2x8xf32> to vector<4x4x2x8xf32>
    %139 = vector.extract_strided_slice %135 {offsets = [1, 1, 0, 0], sizes = [4, 4, 2, 8], strides = [1, 1, 1, 1]} : vector<5x5x2x8xf32> to vector<4x4x2x8xf32>
    %140 = tpu.concatenate %136, %137, %138, %139 in 3 : vector<4x4x2x8xf32>, vector<4x4x2x8xf32>, vector<4x4x2x8xf32>, vector<4x4x2x8xf32> -> vector<4x4x2x32xf32>
    %141 = vector.shape_cast %140 : vector<4x4x2x32xf32> to vector<32x32xf32>
    %cst_40 = arith.constant dense<0.000000e+00> : vector<32x16xf32>
    %142 = tpu.matmul %141, %131, %cst_40 {dimension_numbers = #tpu.dot_dimension_numbers<[1], [0], [0], [1], [0, 0, 1, 1], [], []>, precision = #tpu.contract_precision<fp32>} : vector<32x32xf32>, vector<32x16xf32>, vector<32x16xf32> -> vector<32x16xf32>
    %c0_41 = arith.constant 0 : index
    %c0_42 = arith.constant 0 : index
    %143 = vector.load %arg10[%c0_41, %c0_42] : memref<1x4xf32, #tpu.memory_space<vmem>>, vector<1x4xf32>
    %c0_43 = arith.constant 0 : index
    %c0_44 = arith.constant 0 : index
    %144 = vector.load %arg11[%c0_43, %c0_44] : memref<1x4xf32, #tpu.memory_space<vmem>>, vector<1x4xf32>
    %cst_45 = arith.constant dense<0.000000e+00> : vector<16xf32>
    %145 = vector.multi_reduction <add>, %142, %cst_45 [0] : vector<32x16xf32> to vector<16xf32>
    %146 = vector.shape_cast %145 : vector<16xf32> to vector<1x16xf32>
    %cst_46 = arith.constant 3.200000e+01 : f32
    %147 = vector.broadcast %cst_46 : f32 to vector<1x16xf32>
    %148 = arith.divf %146, %147 : vector<1x16xf32>
    %149 = vector.extract_strided_slice %148 {offsets = [0, 0], sizes = [1, 4], strides = [1, 1]} : vector<1x16xf32> to vector<1x4xf32>
    %150 = vector.extract_strided_slice %148 {offsets = [0, 4], sizes = [1, 4], strides = [1, 1]} : vector<1x16xf32> to vector<1x4xf32>
    %151 = arith.addf %149, %150 : vector<1x4xf32>
    %152 = vector.extract_strided_slice %148 {offsets = [0, 8], sizes = [1, 4], strides = [1, 1]} : vector<1x16xf32> to vector<1x4xf32>
    %153 = arith.addf %151, %152 : vector<1x4xf32>
    %154 = vector.extract_strided_slice %148 {offsets = [0, 12], sizes = [1, 4], strides = [1, 1]} : vector<1x16xf32> to vector<1x4xf32>
    %155 = arith.addf %153, %154 : vector<1x4xf32>
    %cst_47 = arith.constant 2.500000e-01 : f32
    %156 = vector.broadcast %cst_47 : f32 to vector<1x4xf32>
    %157 = arith.mulf %155, %156 : vector<1x4xf32>
    %158 = tpu.concatenate %157, %157, %157, %157 in 1 : vector<1x4xf32>, vector<1x4xf32>, vector<1x4xf32>, vector<1x4xf32> -> vector<1x16xf32>
    %159 = vector.broadcast %158 : vector<1x16xf32> to vector<32x16xf32>
    %160 = arith.subf %142, %159 : vector<32x16xf32>
    %161 = arith.mulf %160, %160 : vector<32x16xf32>
    %cst_48 = arith.constant dense<0.000000e+00> : vector<16xf32>
    %162 = vector.multi_reduction <add>, %161, %cst_48 [0] : vector<32x16xf32> to vector<16xf32>
    %163 = vector.shape_cast %162 : vector<16xf32> to vector<1x16xf32>
    %cst_49 = arith.constant 3.200000e+01 : f32
    %164 = vector.broadcast %cst_49 : f32 to vector<1x16xf32>
    %165 = arith.divf %163, %164 : vector<1x16xf32>
    %166 = vector.extract_strided_slice %165 {offsets = [0, 0], sizes = [1, 4], strides = [1, 1]} : vector<1x16xf32> to vector<1x4xf32>
    %167 = vector.extract_strided_slice %165 {offsets = [0, 4], sizes = [1, 4], strides = [1, 1]} : vector<1x16xf32> to vector<1x4xf32>
    %168 = arith.addf %166, %167 : vector<1x4xf32>
    %169 = vector.extract_strided_slice %165 {offsets = [0, 8], sizes = [1, 4], strides = [1, 1]} : vector<1x16xf32> to vector<1x4xf32>
    %170 = arith.addf %168, %169 : vector<1x4xf32>
    %171 = vector.extract_strided_slice %165 {offsets = [0, 12], sizes = [1, 4], strides = [1, 1]} : vector<1x16xf32> to vector<1x4xf32>
    %172 = arith.addf %170, %171 : vector<1x4xf32>
    %cst_50 = arith.constant 2.500000e-01 : f32
    %173 = vector.broadcast %cst_50 : f32 to vector<1x4xf32>
    %174 = arith.mulf %172, %173 : vector<1x4xf32>
    %cst_51 = arith.constant 9.99999974E-6 : f32
    %175 = vector.broadcast %cst_51 : f32 to vector<1x4xf32>
    %176 = arith.addf %174, %175 : vector<1x4xf32>
    %177 = math.rsqrt %176 : vector<1x4xf32>
    %178 = arith.mulf %143, %177 : vector<1x4xf32>
    %179 = tpu.concatenate %178, %178, %178, %178 in 1 : vector<1x4xf32>, vector<1x4xf32>, vector<1x4xf32>, vector<1x4xf32> -> vector<1x16xf32>
    %180 = vector.broadcast %179 : vector<1x16xf32> to vector<32x16xf32>
    %181 = arith.mulf %160, %180 : vector<32x16xf32>
    %182 = tpu.concatenate %144, %144, %144, %144 in 1 : vector<1x4xf32>, vector<1x4xf32>, vector<1x4xf32>, vector<1x4xf32> -> vector<1x16xf32>
    %183 = vector.broadcast %182 : vector<1x16xf32> to vector<32x16xf32>
    %184 = arith.addf %181, %183 : vector<32x16xf32>
    %cst_52 = arith.constant 0.000000e+00 : f32
    %185 = vector.broadcast %cst_52 : f32 to vector<32x16xf32>
    %186 = arith.maximumf %184, %185 : vector<32x16xf32>
    %187 = vector.shape_cast %186 : vector<32x16xf32> to vector<4x4x2x16xf32>
    %188 = vector.extract_strided_slice %187 {offsets = [0, 0, 0, 0], sizes = [4, 4, 2, 4], strides = [1, 1, 1, 1]} : vector<4x4x2x16xf32> to vector<4x4x2x4xf32>
    %189 = vector.extract_strided_slice %187 {offsets = [0, 0, 0, 4], sizes = [4, 4, 2, 4], strides = [1, 1, 1, 1]} : vector<4x4x2x16xf32> to vector<4x4x2x4xf32>
    %190 = vector.extract_strided_slice %187 {offsets = [0, 0, 0, 8], sizes = [4, 4, 2, 4], strides = [1, 1, 1, 1]} : vector<4x4x2x16xf32> to vector<4x4x2x4xf32>
    %191 = vector.extract_strided_slice %187 {offsets = [0, 0, 0, 12], sizes = [4, 4, 2, 4], strides = [1, 1, 1, 1]} : vector<4x4x2x16xf32> to vector<4x4x2x4xf32>
    %192 = vector.shape_cast %188 : vector<4x4x2x4xf32> to vector<4x4x1x2x4xf32>
    %193 = vector.shape_cast %189 : vector<4x4x2x4xf32> to vector<4x4x1x2x4xf32>
    %194 = tpu.concatenate %192, %193 in 2 : vector<4x4x1x2x4xf32>, vector<4x4x1x2x4xf32> -> vector<4x4x2x2x4xf32>
    %195 = vector.shape_cast %194 : vector<4x4x2x2x4xf32> to vector<4x8x2x4xf32>
    %196 = vector.shape_cast %190 : vector<4x4x2x4xf32> to vector<4x4x1x2x4xf32>
    %197 = vector.shape_cast %191 : vector<4x4x2x4xf32> to vector<4x4x1x2x4xf32>
    %198 = tpu.concatenate %196, %197 in 2 : vector<4x4x1x2x4xf32>, vector<4x4x1x2x4xf32> -> vector<4x4x2x2x4xf32>
    %199 = vector.shape_cast %198 : vector<4x4x2x2x4xf32> to vector<4x8x2x4xf32>
    %200 = vector.shape_cast %195 : vector<4x8x2x4xf32> to vector<4x1x8x2x4xf32>
    %201 = vector.shape_cast %199 : vector<4x8x2x4xf32> to vector<4x1x8x2x4xf32>
    %202 = tpu.concatenate %200, %201 in 1 : vector<4x1x8x2x4xf32>, vector<4x1x8x2x4xf32> -> vector<4x2x8x2x4xf32>
    %203 = vector.shape_cast %202 : vector<4x2x8x2x4xf32> to vector<8x8x2x4xf32>
    %c0_53 = arith.constant 0 : index
    %c0_54 = arith.constant 0 : index
    %204 = vector.load %arg12[%c0_53, %c0_54] : memref<16x4xf32, #tpu.memory_space<vmem>>, vector<16x4xf32>
    %cst_55 = arith.constant 0.000000e+00 : f32
    %205 = vector.broadcast %cst_55 : f32 to vector<1x8x2x4xf32>
    %206 = tpu.concatenate %203, %205 in 0 : vector<8x8x2x4xf32>, vector<1x8x2x4xf32> -> vector<9x8x2x4xf32>
    %cst_56 = arith.constant 0.000000e+00 : f32
    %207 = vector.broadcast %cst_56 : f32 to vector<9x1x2x4xf32>
    %208 = tpu.concatenate %206, %207 in 1 : vector<9x8x2x4xf32>, vector<9x1x2x4xf32> -> vector<9x9x2x4xf32>
    %209 = vector.extract_strided_slice %208 {offsets = [0, 0, 0, 0], sizes = [8, 8, 2, 4], strides = [1, 1, 1, 1]} : vector<9x9x2x4xf32> to vector<8x8x2x4xf32>
    %210 = vector.extract_strided_slice %208 {offsets = [0, 1, 0, 0], sizes = [8, 8, 2, 4], strides = [1, 1, 1, 1]} : vector<9x9x2x4xf32> to vector<8x8x2x4xf32>
    %211 = vector.extract_strided_slice %208 {offsets = [1, 0, 0, 0], sizes = [8, 8, 2, 4], strides = [1, 1, 1, 1]} : vector<9x9x2x4xf32> to vector<8x8x2x4xf32>
    %212 = vector.extract_strided_slice %208 {offsets = [1, 1, 0, 0], sizes = [8, 8, 2, 4], strides = [1, 1, 1, 1]} : vector<9x9x2x4xf32> to vector<8x8x2x4xf32>
    %213 = tpu.concatenate %209, %210, %211, %212 in 3 : vector<8x8x2x4xf32>, vector<8x8x2x4xf32>, vector<8x8x2x4xf32>, vector<8x8x2x4xf32> -> vector<8x8x2x16xf32>
    %214 = vector.shape_cast %213 : vector<8x8x2x16xf32> to vector<128x16xf32>
    %cst_57 = arith.constant dense<0.000000e+00> : vector<128x4xf32>
    %215 = tpu.matmul %214, %204, %cst_57 {dimension_numbers = #tpu.dot_dimension_numbers<[1], [0], [0], [1], [0, 0, 1, 1], [], []>, precision = #tpu.contract_precision<fp32>} : vector<128x16xf32>, vector<16x4xf32>, vector<128x4xf32> -> vector<128x4xf32>
    %c0_58 = arith.constant 0 : index
    %c0_59 = arith.constant 0 : index
    %216 = vector.load %arg13[%c0_58, %c0_59] : memref<1x1xf32, #tpu.memory_space<vmem>>, vector<1x1xf32>
    %c0_60 = arith.constant 0 : index
    %c0_61 = arith.constant 0 : index
    %217 = vector.load %arg14[%c0_60, %c0_61] : memref<1x1xf32, #tpu.memory_space<vmem>>, vector<1x1xf32>
    %cst_62 = arith.constant dense<0.000000e+00> : vector<4xf32>
    %218 = vector.multi_reduction <add>, %215, %cst_62 [0] : vector<128x4xf32> to vector<4xf32>
    %219 = vector.shape_cast %218 : vector<4xf32> to vector<1x4xf32>
    %cst_63 = arith.constant 1.280000e+02 : f32
    %220 = vector.broadcast %cst_63 : f32 to vector<1x4xf32>
    %221 = arith.divf %219, %220 : vector<1x4xf32>
    %222 = vector.extract_strided_slice %221 {offsets = [0, 0], sizes = [1, 1], strides = [1, 1]} : vector<1x4xf32> to vector<1x1xf32>
    %223 = vector.extract_strided_slice %221 {offsets = [0, 1], sizes = [1, 1], strides = [1, 1]} : vector<1x4xf32> to vector<1x1xf32>
    %224 = arith.addf %222, %223 : vector<1x1xf32>
    %225 = vector.extract_strided_slice %221 {offsets = [0, 2], sizes = [1, 1], strides = [1, 1]} : vector<1x4xf32> to vector<1x1xf32>
    %226 = arith.addf %224, %225 : vector<1x1xf32>
    %227 = vector.extract_strided_slice %221 {offsets = [0, 3], sizes = [1, 1], strides = [1, 1]} : vector<1x4xf32> to vector<1x1xf32>
    %228 = arith.addf %226, %227 : vector<1x1xf32>
    %cst_64 = arith.constant 2.500000e-01 : f32
    %229 = vector.broadcast %cst_64 : f32 to vector<1x1xf32>
    %230 = arith.mulf %228, %229 : vector<1x1xf32>
    %231 = tpu.concatenate %230, %230, %230, %230 in 1 : vector<1x1xf32>, vector<1x1xf32>, vector<1x1xf32>, vector<1x1xf32> -> vector<1x4xf32>
    %232 = vector.broadcast %231 : vector<1x4xf32> to vector<128x4xf32>
    %233 = arith.subf %215, %232 : vector<128x4xf32>
    %234 = arith.mulf %233, %233 : vector<128x4xf32>
    %cst_65 = arith.constant dense<0.000000e+00> : vector<4xf32>
    %235 = vector.multi_reduction <add>, %234, %cst_65 [0] : vector<128x4xf32> to vector<4xf32>
    %236 = vector.shape_cast %235 : vector<4xf32> to vector<1x4xf32>
    %cst_66 = arith.constant 1.280000e+02 : f32
    %237 = vector.broadcast %cst_66 : f32 to vector<1x4xf32>
    %238 = arith.divf %236, %237 : vector<1x4xf32>
    %239 = vector.extract_strided_slice %238 {offsets = [0, 0], sizes = [1, 1], strides = [1, 1]} : vector<1x4xf32> to vector<1x1xf32>
    %240 = vector.extract_strided_slice %238 {offsets = [0, 1], sizes = [1, 1], strides = [1, 1]} : vector<1x4xf32> to vector<1x1xf32>
    %241 = arith.addf %239, %240 : vector<1x1xf32>
    %242 = vector.extract_strided_slice %238 {offsets = [0, 2], sizes = [1, 1], strides = [1, 1]} : vector<1x4xf32> to vector<1x1xf32>
    %243 = arith.addf %241, %242 : vector<1x1xf32>
    %244 = vector.extract_strided_slice %238 {offsets = [0, 3], sizes = [1, 1], strides = [1, 1]} : vector<1x4xf32> to vector<1x1xf32>
    %245 = arith.addf %243, %244 : vector<1x1xf32>
    %cst_67 = arith.constant 2.500000e-01 : f32
    %246 = vector.broadcast %cst_67 : f32 to vector<1x1xf32>
    %247 = arith.mulf %245, %246 : vector<1x1xf32>
    %cst_68 = arith.constant 9.99999974E-6 : f32
    %248 = vector.broadcast %cst_68 : f32 to vector<1x1xf32>
    %249 = arith.addf %247, %248 : vector<1x1xf32>
    %250 = math.rsqrt %249 : vector<1x1xf32>
    %251 = arith.mulf %216, %250 : vector<1x1xf32>
    %252 = tpu.concatenate %251, %251, %251, %251 in 1 : vector<1x1xf32>, vector<1x1xf32>, vector<1x1xf32>, vector<1x1xf32> -> vector<1x4xf32>
    %253 = vector.broadcast %252 : vector<1x4xf32> to vector<128x4xf32>
    %254 = arith.mulf %233, %253 : vector<128x4xf32>
    %255 = tpu.concatenate %217, %217, %217, %217 in 1 : vector<1x1xf32>, vector<1x1xf32>, vector<1x1xf32>, vector<1x1xf32> -> vector<1x4xf32>
    %256 = vector.broadcast %255 : vector<1x4xf32> to vector<128x4xf32>
    %257 = arith.addf %254, %256 : vector<128x4xf32>
    %258 = arith.negf %257 : vector<128x4xf32>
    %259 = math.exp %258 : vector<128x4xf32>
    %cst_69 = arith.constant 1.000000e+00 : f32
    %260 = vector.broadcast %cst_69 : f32 to vector<128x4xf32>
    %261 = arith.addf %260, %259 : vector<128x4xf32>
    %262 = arith.divf %260, %261 : vector<128x4xf32>
    %263 = tpu.transpose %262, [1, 0] : vector<128x4xf32> -> vector<4x128xf32>
    %c0_70 = arith.constant 0 : index
    %c0_71 = arith.constant 0 : index
    %264 = vector.load %arg15[%c0_70, %c0_71] : memref<4x128xf32, #tpu.memory_space<vmem>>, vector<4x128xf32>
    tpu.vector_store %arg15[%c0_70, %c0_71], %263 {strides = array<i32>} : memref<4x128xf32, #tpu.memory_space<vmem>>, vector<4x128xf32>,
    return
  }
}

</mosaic_0001>

<llo_original>
// kernel: decoder_cnn_forward.1
$region0: #{decoder_cnn_forward.1}
  #allocation0 [shape = 'u32[]', space=smem, size = 0x4, offset = 0x4, fixed_abs, tag = 'smem constant byte address 0x4 - core index']
  #allocation1 [shape = 'u32[144,128]{1,0:T(1,128)}', space=vmem, size = 0x12000, scoped, tag = 'internal scratch']
  #allocation2 [shape = 'f32[1,1]{1,0:T(1,128)S(1)}', space=vmem, size = 0x200, scoped, tag = 'scoped memory for decoder_cnn_forward.1']
  #allocation3 [shape = 'f32[1,1]{1,0:T(1,128)S(1)}', space=vmem, size = 0x200, scoped, tag = 'scoped memory for decoder_cnn_forward.1']
  %s0 = inlined_call_operand.vmem [shape: f32[2,8], index: 0, kind: input, shape index: {}]
  %s1 = inlined_call_operand.vmem [shape: f32[8,128], index: 1, kind: input, shape index: {}]
  %s2 = inlined_call_operand.vmem [shape: f32[1,128], index: 2, kind: input, shape index: {}]
  %s3 = inlined_call_operand.vmem [shape: f32[72,8], index: 3, kind: input, shape index: {}]
  %s4 = inlined_call_operand.vmem [shape: f32[1,8], index: 4, kind: input, shape index: {}]
  %s5 = inlined_call_operand.vmem [shape: f32[1,8], index: 5, kind: input, shape index: {}]
  %s6 = inlined_call_operand.vmem [shape: f32[72,8], index: 6, kind: input, shape index: {}]
  %s7 = inlined_call_operand.vmem [shape: f32[1,8], index: 7, kind: input, shape index: {}]
  %s8 = inlined_call_operand.vmem [shape: f32[1,8], index: 8, kind: input, shape index: {}]
  %s9 = inlined_call_operand.vmem [shape: f32[32,16], index: 9, kind: input, shape index: {}]
  %s10 = inlined_call_operand.vmem [shape: f32[1,4], index: 10, kind: input, shape index: {}]
  %s11 = inlined_call_operand.vmem [shape: f32[1,4], index: 11, kind: input, shape index: {}]
  %s12 = inlined_call_operand.vmem [shape: f32[16,4], index: 12, kind: input, shape index: {}]
  %s13 = inlined_call_operand.<no memory space> [shape: f32[1,1], index: 13, kind: input, shape index: {}]
  %s14 = inlined_call_operand.<no memory space> [shape: f32[1,1], index: 14, kind: input, shape index: {}]
  %s15 = inlined_call_operand.vmem [shape: f32[4,128], index: 15, kind: output, shape index: {}]
  %s16 = sld [smem:[#allocation0]]
  $region70: #{decoder_cnn_forward.1} parent=0
    _
  %s18 = ssub.s32 1, %s16
  %s19 = scalar_select 0, %s18, %s16
  %v20 = vstv %s13
  %21 = vst [vmem:[#allocation2] sm:$0x1] %v20
  %v22 = vstv %s14
  %23 = vst [vmem:[#allocation3] sm:$0x1] %v22
  // Predicated region
  $region2: #{decoder_cnn_forward.1} parent=0 // pred_check
    _
  $region3: #{decoder_cnn_forward.1} parent=0 // pred_check_branch
    %25 = sbr.rel (0) target = $region5
  $region4: #{decoder_cnn_forward.1} parent=0 // pred_region
    _
  $region5: #{decoder_cnn_forward.1} parent=0 // pred_fallthru
    _
  // Predicated region
  $region6: #{decoder_cnn_forward.1} parent=0 // pred_check
    _
  $region7: #{decoder_cnn_forward.1} parent=0 // pred_check_branch
    %27 = sbr.rel (0) target = $region9
  $region8: #{decoder_cnn_forward.1} parent=0 // pred_region
    _
  $region9: #{decoder_cnn_forward.1} parent=0 // pred_fallthru
    _
  // Predicated region
  $region10: #{decoder_cnn_forward.1} parent=0 // pred_check
    _
  $region11: #{decoder_cnn_forward.1} parent=0 // pred_check_branch
    %29 = sbr.rel (0) target = $region13
  $region12: #{decoder_cnn_forward.1} parent=0 // pred_region
    _
  $region13: #{decoder_cnn_forward.1} parent=0 // pred_fallthru
    _
  // Predicated region
  $region14: #{decoder_cnn_forward.1} parent=0 // pred_check
    _
  $region15: #{decoder_cnn_forward.1} parent=0 // pred_check_branch
    %31 = sbr.rel (0) target = $region17
  $region16: #{decoder_cnn_forward.1} parent=0 // pred_region
    _
  $region17: #{decoder_cnn_forward.1} parent=0 // pred_fallthru
    _
  // Predicated region
  $region18: #{decoder_cnn_forward.1} parent=0 // pred_check
    _
  $region19: #{decoder_cnn_forward.1} parent=0 // pred_check_branch
    %33 = sbr.rel (0) target = $region21
  $region20: #{decoder_cnn_forward.1} parent=0 // pred_region
    _
  $region21: #{decoder_cnn_forward.1} parent=0 // pred_fallthru
    _
  // Predicated region
  $region22: #{decoder_cnn_forward.1} parent=0 // pred_check
    _
  $region23: #{decoder_cnn_forward.1} parent=0 // pred_check_branch
    %35 = sbr.rel (0) target = $region25
  $region24: #{decoder_cnn_forward.1} parent=0 // pred_region
    _
  $region25: #{decoder_cnn_forward.1} parent=0 // pred_fallthru
    _
  // Predicated region
  $region26: #{decoder_cnn_forward.1} parent=0 // pred_check
    _
  $region27: #{decoder_cnn_forward.1} parent=0 // pred_check_branch
    %37 = sbr.rel (0) target = $region29
  $region28: #{decoder_cnn_forward.1} parent=0 // pred_region
    _
  $region29: #{decoder_cnn_forward.1} parent=0 // pred_fallthru
    _
  // Predicated region
  $region30: #{decoder_cnn_forward.1} parent=0 // pred_check
    _
  $region31: #{decoder_cnn_forward.1} parent=0 // pred_check_branch
    %39 = sbr.rel (0) target = $region33
  $region32: #{decoder_cnn_forward.1} parent=0 // pred_region
    _
  $region33: #{decoder_cnn_forward.1} parent=0 // pred_fallthru
    _
  // Predicated region
  $region34: #{decoder_cnn_forward.1} parent=0 // pred_check
    _
  $region35: #{decoder_cnn_forward.1} parent=0 // pred_check_branch
    %41 = sbr.rel (0) target = $region37
  $region36: #{decoder_cnn_forward.1} parent=0 // pred_region
    _
  $region37: #{decoder_cnn_forward.1} parent=0 // pred_fallthru
    _
  // Predicated region
  $region38: #{decoder_cnn_forward.1} parent=0 // pred_check
    _
  $region39: #{decoder_cnn_forward.1} parent=0 // pred_check_branch
    %43 = sbr.rel (0) target = $region41
  $region40: #{decoder_cnn_forward.1} parent=0 // pred_region
    _
  $region41: #{decoder_cnn_forward.1} parent=0 // pred_fallthru
    _
  // Predicated region
  $region42: #{decoder_cnn_forward.1} parent=0 // pred_check
    _
  $region43: #{decoder_cnn_forward.1} parent=0 // pred_check_branch
    %45 = sbr.rel (0) target = $region45
  $region44: #{decoder_cnn_forward.1} parent=0 // pred_region
    _
  $region45: #{decoder_cnn_forward.1} parent=0 // pred_fallthru
    _
  // Predicated region
  $region46: #{decoder_cnn_forward.1} parent=0 // pred_check
    _
  $region47: #{decoder_cnn_forward.1} parent=0 // pred_check_branch
    %47 = sbr.rel (0) target = $region49
  $region48: #{decoder_cnn_forward.1} parent=0 // pred_region
    _
  $region49: #{decoder_cnn_forward.1} parent=0 // pred_fallthru
    _
  // Predicated region
  $region50: #{decoder_cnn_forward.1} parent=0 // pred_check
    _
  $region51: #{decoder_cnn_forward.1} parent=0 // pred_check_branch
    %49 = sbr.rel (0) target = $region53
  $region52: #{decoder_cnn_forward.1} parent=0 // pred_region
    _
  $region53: #{decoder_cnn_forward.1} parent=0 // pred_fallthru
    _
  // Predicated region
  $region54: #{decoder_cnn_forward.1} parent=0 // pred_check
    _
  $region55: #{decoder_cnn_forward.1} parent=0 // pred_check_branch
    %51 = sbr.rel (0) target = $region57
  $region56: #{decoder_cnn_forward.1} parent=0 // pred_region
    _
  $region57: #{decoder_cnn_forward.1} parent=0 // pred_fallthru
    _
  // Predicated region
  $region58: #{decoder_cnn_forward.1} parent=0 // pred_check
    _
  $region59: #{decoder_cnn_forward.1} parent=0 // pred_check_branch
    %53 = sbr.rel (0) target = $region61
  $region60: #{decoder_cnn_forward.1} parent=0 // pred_region
    _
  $region61: #{decoder_cnn_forward.1} parent=0 // pred_fallthru
    _
  %v54 = vld [vmem:[%s0] sm:$0x3]
  %v55 = vld [vmem:[%s1] sm:$0xff]
  %v56 = vld [vmem:[%s2] sm:$0x1]
  %v58 = vlaneseq
  %v59 = vshrl.u32 %v58, 7
  %v60 = vsub.s32 0, %v59
  %v61 = vrot.slane %v56, %v60
  %vm63 = vcmask 64512
  %v65 = vsel %vm63, %v54, 0
  %67 = vmatprep.subr.mxu0 0.0
  %68 = vmatpush1.msra.mxu0 0.0
  %69 = vmatprep.subr.mxu0 0.0
  %70 = vmatpush1.msra.mxu0 0.0
  %71 = vmatprep.subr.mxu0 0.0
  %72 = vmatpush1.msra.mxu0 0.0
  %73 = vmatprep.subr.mxu0 0.0
  %74 = vmatpush1.msra.mxu0 0.0
  %75 = vmatprep.subr.mxu0 0.0
  %76 = vmatpush1.msra.mxu0 0.0
  %77 = vmatprep.subr.mxu0 0.0
  %78 = vmatpush1.msra.mxu0 0.0
  %79 = vmatprep.subr.mxu0 0.0
  %80 = vmatpush1.msra.mxu0 0.0
  %81 = vmatprep.subr.mxu0 0.0
  %82 = vmatpush1.msra.mxu0 0.0
  %83 = vmatprep.subr.mxu0 0.0
  %84 = vmatpush1.msra.mxu0 0.0
  %85 = vmatprep.subr.mxu0 0.0
  %86 = vmatpush1.msra.mxu0 0.0
  %87 = vmatprep.subr.mxu0 0.0
  %88 = vmatpush1.msra.mxu0 0.0
  %89 = vmatprep.subr.mxu0 0.0
  %90 = vmatpush1.msra.mxu0 0.0
  %91 = vmatprep.subr.mxu0 0.0
  %92 = vmatpush1.msra.mxu0 0.0
  %93 = vmatprep.subr.mxu0 0.0
  %94 = vmatpush1.msra.mxu0 0.0
  %95 = vmatprep.subr.mxu0 0.0
  %96 = vmatpush1.msra.mxu0 0.0
  %97 = vmatprep.subr.mxu0 0.0
  %v98 = vand.u32 %v55, 4294901760
  %99 = vmatpush1.msra.mxu0 %v98
  %100 = vmatprep.subr.mxu0 0.0
  %101 = vmatpush2.msra.mxu0 0.0
  %102 = vmatprep.subr.mxu0 0.0
  %103 = vmatpush2.msra.mxu0 0.0
  %104 = vmatprep.subr.mxu0 0.0
  %105 = vmatpush2.msra.mxu0 0.0
  %106 = vmatprep.subr.mxu0 0.0
  %107 = vmatpush2.msra.mxu0 0.0
  %108 = vmatprep.subr.mxu0 0.0
  %109 = vmatpush2.msra.mxu0 0.0
  %110 = vmatprep.subr.mxu0 0.0
  %111 = vmatpush2.msra.mxu0 0.0
  %112 = vmatprep.subr.mxu0 0.0
  %113 = vmatpush2.msra.mxu0 0.0
  %114 = vmatprep.subr.mxu0 0.0
  %115 = vmatpush2.msra.mxu0 0.0
  %116 = vmatprep.subr.mxu0 0.0
  %117 = vmatpush2.msra.mxu0 0.0
  %118 = vmatprep.subr.mxu0 0.0
  %119 = vmatpush2.msra.mxu0 0.0
  %120 = vmatprep.subr.mxu0 0.0
  %121 = vmatpush2.msra.mxu0 0.0
  %122 = vmatprep.subr.mxu0 0.0
  %123 = vmatpush2.msra.mxu0 0.0
  %124 = vmatprep.subr.mxu0 0.0
  %125 = vmatpush2.msra.mxu0 0.0
  %126 = vmatprep.subr.mxu0 0.0
  %127 = vmatpush2.msra.mxu0 0.0
  %128 = vmatprep.subr.mxu0 0.0
  %129 = vmatpush2.msra.mxu0 0.0
  %130 = vmatprep.subr.mxu0 0.0
  %131 = vmatpush2.msra.mxu0 0.0
  %132 = vmatprep.mubr.f32.mxu0 0.0
  %v133 = vand.u32 %v65, 4294901760
  %v134 = vsub.f32 %v65, %v133
  %v135 = vand.u32 %v134, 4294901760
  %v136 = vsub.f32 %v134, %v135
  %v137 = vand.u32 %v136, 4294901760
  %138 = vmatmul.mubr.f32.gmra.mxu0 %v137
  %v139 = vpop.f32.mrf.mxu0
  %v140 = vadd.f32 %v61, %v139
  %v141 = vpop.f32.mrf.mxu0
  %142 = vdwg.mxu0
  %143 = vmatprep.subr.mxu0 0.0
  %144 = vmatpush1.msra.mxu0 0.0
  %145 = vmatprep.subr.mxu0 0.0
  %146 = vmatpush1.msra.mxu0 0.0
  %147 = vmatprep.subr.mxu0 0.0
  %148 = vmatpush1.msra.mxu0 0.0
  %149 = vmatprep.subr.mxu0 0.0
  %150 = vmatpush1.msra.mxu0 0.0
  %151 = vmatprep.subr.mxu0 0.0
  %152 = vmatpush1.msra.mxu0 0.0
  %153 = vmatprep.subr.mxu0 0.0
  %154 = vmatpush1.msra.mxu0 0.0
  %155 = vmatprep.subr.mxu0 0.0
  %156 = vmatpush1.msra.mxu0 0.0
  %157 = vmatprep.subr.mxu0 0.0
  %158 = vmatpush1.msra.mxu0 0.0
  %159 = vmatprep.subr.mxu0 0.0
  %160 = vmatpush1.msra.mxu0 0.0
  %161 = vmatprep.subr.mxu0 0.0
  %162 = vmatpush1.msra.mxu0 0.0
  %163 = vmatprep.subr.mxu0 0.0
  %164 = vmatpush1.msra.mxu0 0.0
  %165 = vmatprep.subr.mxu0 0.0
  %166 = vmatpush1.msra.mxu0 0.0
  %167 = vmatprep.subr.mxu0 0.0
  %168 = vmatpush1.msra.mxu0 0.0
  %169 = vmatprep.subr.mxu0 0.0
  %170 = vmatpush1.msra.mxu0 0.0
  %171 = vmatprep.subr.mxu0 0.0
  %172 = vmatpush1.msra.mxu0 0.0
  %173 = vmatprep.subr.mxu0 0.0
  %v174 = vand.u32 %v55, 4294901760
  %v175 = vsub.f32 %v55, %v174
  %v176 = vand.u32 %v175, 4294901760
  %v177 = vsub.f32 %v175, %v176
  %v178 = vand.u32 %v177, 4294901760
  %179 = vmatpush1.msra.mxu0 %v178
  %180 = vmatprep.subr.mxu0 0.0
  %181 = vmatpush2.msra.mxu0 0.0
  %182 = vmatprep.subr.mxu0 0.0
  %183 = vmatpush2.msra.mxu0 0.0
  %184 = vmatprep.subr.mxu0 0.0
  %185 = vmatpush2.msra.mxu0 0.0
  %186 = vmatprep.subr.mxu0 0.0
  %187 = vmatpush2.msra.mxu0 0.0
  %188 = vmatprep.subr.mxu0 0.0
  %189 = vmatpush2.msra.mxu0 0.0
  %190 = vmatprep.subr.mxu0 0.0
  %191 = vmatpush2.msra.mxu0 0.0
  %192 = vmatprep.subr.mxu0 0.0
  %193 = vmatpush2.msra.mxu0 0.0
  %194 = vmatprep.subr.mxu0 0.0
  %195 = vmatpush2.msra.mxu0 0.0
  %196 = vmatprep.subr.mxu0 0.0
  %197 = vmatpush2.msra.mxu0 0.0
  %198 = vmatprep.subr.mxu0 0.0
  %199 = vmatpush2.msra.mxu0 0.0
  %200 = vmatprep.subr.mxu0 0.0
  %201 = vmatpush2.msra.mxu0 0.0
  %202 = vmatprep.subr.mxu0 0.0
  %203 = vmatpush2.msra.mxu0 0.0
  %204 = vmatprep.subr.mxu0 0.0
  %205 = vmatpush2.msra.mxu0 0.0
  %206 = vmatprep.subr.mxu0 0.0
  %207 = vmatpush2.msra.mxu0 0.0
  %208 = vmatprep.subr.mxu0 0.0
  %209 = vmatpush2.msra.mxu0 0.0
  %210 = vmatprep.subr.mxu0 0.0
  %211 = vmatpush2.msra.mxu0 0.0
  %212 = vmatprep.mubr.f32.mxu0 0.0
  %v213 = vand.u32 %v65, 4294901760
  %214 = vmatmul.mubr.f32.gmra.mxu0 %v213
  %v215 = vpop.f32.mrf.mxu0
  %v216 = vadd.f32 %v140, %v215
  %v217 = vpop.f32.mrf.mxu0
  %218 = vdwg.mxu0
  %219 = vmatprep.subr.mxu0 0.0
  %220 = vmatpush1.msra.mxu0 0.0
  %221 = vmatprep.subr.mxu0 0.0
  %222 = vmatpush1.msra.mxu0 0.0
  %223 = vmatprep.subr.mxu0 0.0
  %224 = vmatpush1.msra.mxu0 0.0
  %225 = vmatprep.subr.mxu0 0.0
  %226 = vmatpush1.msra.mxu0 0.0
  %227 = vmatprep.subr.mxu0 0.0
  %228 = vmatpush1.msra.mxu0 0.0
  %229 = vmatprep.subr.mxu0 0.0
  %230 = vmatpush1.msra.mxu0 0.0
  %231 = vmatprep.subr.mxu0 0.0
  %232 = vmatpush1.msra.mxu0 0.0
  %233 = vmatprep.subr.mxu0 0.0
  %234 = vmatpush1.msra.mxu0 0.0
  %235 = vmatprep.subr.mxu0 0.0
  %236 = vmatpush1.msra.mxu0 0.0
  %237 = vmatprep.subr.mxu0 0.0
  %238 = vmatpush1.msra.mxu0 0.0
  %239 = vmatprep.subr.mxu0 0.0
  %240 = vmatpush1.msra.mxu0 0.0
  %241 = vmatprep.subr.mxu0 0.0
  %242 = vmatpush1.msra.mxu0 0.0
  %243 = vmatprep.subr.mxu0 0.0
  %244 = vmatpush1.msra.mxu0 0.0
  %245 = vmatprep.subr.mxu0 0.0
  %246 = vmatpush1.msra.mxu0 0.0
  %247 = vmatprep.subr.mxu0 0.0
  %248 = vmatpush1.msra.mxu0 0.0
  %249 = vmatprep.subr.mxu0 0.0
  %v250 = vand.u32 %v55, 4294901760
  %v251 = vsub.f32 %v55, %v250
  %252 = vmatpush1.msra.mxu0 %v251
  %253 = vmatprep.subr.mxu0 0.0
  %254 = vmatpush2.msra.mxu0 0.0
  %255 = vmatprep.subr.mxu0 0.0
  %256 = vmatpush2.msra.mxu0 0.0
  %257 = vmatprep.subr.mxu0 0.0
  %258 = vmatpush2.msra.mxu0 0.0
  %259 = vmatprep.subr.mxu0 0.0
  %260 = vmatpush2.msra.mxu0 0.0
  %261 = vmatprep.subr.mxu0 0.0
  %262 = vmatpush2.msra.mxu0 0.0
  %263 = vmatprep.subr.mxu0 0.0
  %264 = vmatpush2.msra.mxu0 0.0
  %265 = vmatprep.subr.mxu0 0.0
  %266 = vmatpush2.msra.mxu0 0.0
  %267 = vmatprep.subr.mxu0 0.0
  %268 = vmatpush2.msra.mxu0 0.0
  %269 = vmatprep.subr.mxu0 0.0
  %270 = vmatpush2.msra.mxu0 0.0
  %271 = vmatprep.subr.mxu0 0.0
  %272 = vmatpush2.msra.mxu0 0.0
  %273 = vmatprep.subr.mxu0 0.0
  %274 = vmatpush2.msra.mxu0 0.0
  %275 = vmatprep.subr.mxu0 0.0
  %276 = vmatpush2.msra.mxu0 0.0
  %277 = vmatprep.subr.mxu0 0.0
  %278 = vmatpush2.msra.mxu0 0.0
  %279 = vmatprep.subr.mxu0 0.0
  %280 = vmatpush2.msra.mxu0 0.0
  %281 = vmatprep.subr.mxu0 0.0
  %282 = vmatpush2.msra.mxu0 0.0
  %283 = vmatprep.subr.mxu0 0.0
  %284 = vmatpush2.msra.mxu0 0.0
  %285 = vmatprep.mubr.f32.mxu0 0.0
  %v286 = vand.u32 %v65, 4294901760
  %v287 = vsub.f32 %v65, %v286
  %288 = vmatmul.mubr.f32.gmra.mxu0 %v287
  %v289 = vpop.f32.mrf.mxu0
  %v290 = vadd.f32 %v216, %v289
  %v291 = vpop.f32.mrf.mxu0
  %292 = vdwg.mxu0
  %293 = vmatprep.subr.mxu0 0.0
  %294 = vmatpush1.msra.mxu0 0.0
  %295 = vmatprep.subr.mxu0 0.0
  %296 = vmatpush1.msra.mxu0 0.0
  %297 = vmatprep.subr.mxu0 0.0
  %298 = vmatpush1.msra.mxu0 0.0
  %299 = vmatprep.subr.mxu0 0.0
  %300 = vmatpush1.msra.mxu0 0.0
  %301 = vmatprep.subr.mxu0 0.0
  %302 = vmatpush1.msra.mxu0 0.0
  %303 = vmatprep.subr.mxu0 0.0
  %304 = vmatpush1.msra.mxu0 0.0
  %305 = vmatprep.subr.mxu0 0.0
  %306 = vmatpush1.msra.mxu0 0.0
  %307 = vmatprep.subr.mxu0 0.0
  %308 = vmatpush1.msra.mxu0 0.0
  %309 = vmatprep.subr.mxu0 0.0
  %310 = vmatpush1.msra.mxu0 0.0
  %311 = vmatprep.subr.mxu0 0.0
  %312 = vmatpush1.msra.mxu0 0.0
  %313 = vmatprep.subr.mxu0 0.0
  %314 = vmatpush1.msra.mxu0 0.0
  %315 = vmatprep.subr.mxu0 0.0
  %316 = vmatpush1.msra.mxu0 0.0
  %317 = vmatprep.subr.mxu0 0.0
  %318 = vmatpush1.msra.mxu0 0.0
  %319 = vmatprep.subr.mxu0 0.0
  %320 = vmatpush1.msra.mxu0 0.0
  %321 = vmatprep.subr.mxu0 0.0
  %322 = vmatpush1.msra.mxu0 0.0
  %323 = vmatprep.subr.mxu0 0.0
  %v324 = vand.u32 %v55, 4294901760
  %325 = vmatpush1.msra.mxu0 %v324
  %326 = vmatprep.subr.mxu0 0.0
  %327 = vmatpush2.msra.mxu0 0.0
  %328 = vmatprep.subr.mxu0 0.0
  %329 = vmatpush2.msra.mxu0 0.0
  %330 = vmatprep.subr.mxu0 0.0
  %331 = vmatpush2.msra.mxu0 0.0
  %332 = vmatprep.subr.mxu0 0.0
  %333 = vmatpush2.msra.mxu0 0.0
  %334 = vmatprep.subr.mxu0 0.0
  %335 = vmatpush2.msra.mxu0 0.0
  %336 = vmatprep.subr.mxu0 0.0
  %337 = vmatpush2.msra.mxu0 0.0
  %338 = vmatprep.subr.mxu0 0.0
  %339 = vmatpush2.msra.mxu0 0.0
  %340 = vmatprep.subr.mxu0 0.0
  %341 = vmatpush2.msra.mxu0 0.0
  %342 = vmatprep.subr.mxu0 0.0
  %343 = vmatpush2.msra.mxu0 0.0
  %344 = vmatprep.subr.mxu0 0.0
  %345 = vmatpush2.msra.mxu0 0.0
  %346 = vmatprep.subr.mxu0 0.0
  %347 = vmatpush2.msra.mxu0 0.0
  %348 = vmatprep.subr.mxu0 0.0
  %349 = vmatpush2.msra.mxu0 0.0
  %350 = vmatprep.subr.mxu0 0.0
  %351 = vmatpush2.msra.mxu0 0.0
  %352 = vmatprep.subr.mxu0 0.0
  %353 = vmatpush2.msra.mxu0 0.0
  %354 = vmatprep.subr.mxu0 0.0
  %355 = vmatpush2.msra.mxu0 0.0
  %356 = vmatprep.subr.mxu0 0.0
  %357 = vmatpush2.msra.mxu0 0.0
  %358 = vmatprep.mubr.f32.mxu0 0.0
  %v359 = vand.u32 %v65, 4294901760
  %v360 = vsub.f32 %v65, %v359
  %v361 = vand.u32 %v360, 4294901760
  %362 = vmatmul.mubr.f32.gmra.mxu0 %v361
  %v363 = vpop.f32.mrf.mxu0
  %v364 = vadd.f32 %v290, %v363
  %v365 = vpop.f32.mrf.mxu0
  %366 = vdwg.mxu0
  %367 = vmatprep.subr.mxu0 0.0
  %368 = vmatpush1.msra.mxu0 0.0
  %369 = vmatprep.subr.mxu0 0.0
  %370 = vmatpush1.msra.mxu0 0.0
  %371 = vmatprep.subr.mxu0 0.0
  %372 = vmatpush1.msra.mxu0 0.0
  %373 = vmatprep.subr.mxu0 0.0
  %374 = vmatpush1.msra.mxu0 0.0
  %375 = vmatprep.subr.mxu0 0.0
  %376 = vmatpush1.msra.mxu0 0.0
  %377 = vmatprep.subr.mxu0 0.0
  %378 = vmatpush1.msra.mxu0 0.0
  %379 = vmatprep.subr.mxu0 0.0
  %380 = vmatpush1.msra.mxu0 0.0
  %381 = vmatprep.subr.mxu0 0.0
  %382 = vmatpush1.msra.mxu0 0.0
  %383 = vmatprep.subr.mxu0 0.0
  %384 = vmatpush1.msra.mxu0 0.0
  %385 = vmatprep.subr.mxu0 0.0
  %386 = vmatpush1.msra.mxu0 0.0
  %387 = vmatprep.subr.mxu0 0.0
  %388 = vmatpush1.msra.mxu0 0.0
  %389 = vmatprep.subr.mxu0 0.0
  %390 = vmatpush1.msra.mxu0 0.0
  %391 = vmatprep.subr.mxu0 0.0
  %392 = vmatpush1.msra.mxu0 0.0
  %393 = vmatprep.subr.mxu0 0.0
  %394 = vmatpush1.msra.mxu0 0.0
  %395 = vmatprep.subr.mxu0 0.0
  %396 = vmatpush1.msra.mxu0 0.0
  %397 = vmatprep.subr.mxu0 0.0
  %v398 = vand.u32 %v55, 4294901760
  %v399 = vsub.f32 %v55, %v398
  %v400 = vand.u32 %v399, 4294901760
  %401 = vmatpush1.msra.mxu0 %v400
  %402 = vmatprep.subr.mxu0 0.0
  %403 = vmatpush2.msra.mxu0 0.0
  %404 = vmatprep.subr.mxu0 0.0
  %405 = vmatpush2.msra.mxu0 0.0
  %406 = vmatprep.subr.mxu0 0.0
  %407 = vmatpush2.msra.mxu0 0.0
  %408 = vmatprep.subr.mxu0 0.0
  %409 = vmatpush2.msra.mxu0 0.0
  %410 = vmatprep.subr.mxu0 0.0
  %411 = vmatpush2.msra.mxu0 0.0
  %412 = vmatprep.subr.mxu0 0.0
  %413 = vmatpush2.msra.mxu0 0.0
  %414 = vmatprep.subr.mxu0 0.0
  %415 = vmatpush2.msra.mxu0 0.0
  %416 = vmatprep.subr.mxu0 0.0
  %417 = vmatpush2.msra.mxu0 0.0
  %418 = vmatprep.subr.mxu0 0.0
  %419 = vmatpush2.msra.mxu0 0.0
  %420 = vmatprep.subr.mxu0 0.0
  %421 = vmatpush2.msra.mxu0 0.0
  %422 = vmatprep.subr.mxu0 0.0
  %423 = vmatpush2.msra.mxu0 0.0
  %424 = vmatprep.subr.mxu0 0.0
  %425 = vmatpush2.msra.mxu0 0.0
  %426 = vmatprep.subr.mxu0 0.0
  %427 = vmatpush2.msra.mxu0 0.0
  %428 = vmatprep.subr.mxu0 0.0
  %429 = vmatpush2.msra.mxu0 0.0
  %430 = vmatprep.subr.mxu0 0.0
  %431 = vmatpush2.msra.mxu0 0.0
  %432 = vmatprep.subr.mxu0 0.0
  %433 = vmatpush2.msra.mxu0 0.0
  %434 = vmatprep.mubr.f32.mxu0 0.0
  %v435 = vand.u32 %v65, 4294901760
  %436 = vmatmul.mubr.f32.gmra.mxu0 %v435
  %v437 = vpop.f32.mrf.mxu0
  %v438 = vadd.f32 %v364, %v437
  %v439 = vpop.f32.mrf.mxu0
  %440 = vdwg.mxu0
  %441 = vmatprep.subr.mxu0 0.0
  %442 = vmatpush1.msra.mxu0 0.0
  %443 = vmatprep.subr.mxu0 0.0
  %444 = vmatpush1.msra.mxu0 0.0
  %445 = vmatprep.subr.mxu0 0.0
  %446 = vmatpush1.msra.mxu0 0.0
  %447 = vmatprep.subr.mxu0 0.0
  %448 = vmatpush1.msra.mxu0 0.0
  %449 = vmatprep.subr.mxu0 0.0
  %450 = vmatpush1.msra.mxu0 0.0
  %451 = vmatprep.subr.mxu0 0.0
  %452 = vmatpush1.msra.mxu0 0.0
  %453 = vmatprep.subr.mxu0 0.0
  %454 = vmatpush1.msra.mxu0 0.0
  %455 = vmatprep.subr.mxu0 0.0
  %456 = vmatpush1.msra.mxu0 0.0
  %457 = vmatprep.subr.mxu0 0.0
  %458 = vmatpush1.msra.mxu0 0.0
  %459 = vmatprep.subr.mxu0 0.0
  %460 = vmatpush1.msra.mxu0 0.0
  %461 = vmatprep.subr.mxu0 0.0
  %462 = vmatpush1.msra.mxu0 0.0
  %463 = vmatprep.subr.mxu0 0.0
  %464 = vmatpush1.msra.mxu0 0.0
  %465 = vmatprep.subr.mxu0 0.0
  %466 = vmatpush1.msra.mxu0 0.0
  %467 = vmatprep.subr.mxu0 0.0
  %468 = vmatpush1.msra.mxu0 0.0
  %469 = vmatprep.subr.mxu0 0.0
  %470 = vmatpush1.msra.mxu0 0.0
  %471 = vmatprep.subr.mxu0 0.0
  %v472 = vand.u32 %v55, 4294901760
  %473 = vmatpush1.msra.mxu0 %v472
  %474 = vmatprep.subr.mxu0 0.0
  %475 = vmatpush2.msra.mxu0 0.0
  %476 = vmatprep.subr.mxu0 0.0
  %477 = vmatpush2.msra.mxu0 0.0
  %478 = vmatprep.subr.mxu0 0.0
  %479 = vmatpush2.msra.mxu0 0.0
  %480 = vmatprep.subr.mxu0 0.0
  %481 = vmatpush2.msra.mxu0 0.0
  %482 = vmatprep.subr.mxu0 0.0
  %483 = vmatpush2.msra.mxu0 0.0
  %484 = vmatprep.subr.mxu0 0.0
  %485 = vmatpush2.msra.mxu0 0.0
  %486 = vmatprep.subr.mxu0 0.0
  %487 = vmatpush2.msra.mxu0 0.0
  %488 = vmatprep.subr.mxu0 0.0
  %489 = vmatpush2.msra.mxu0 0.0
  %490 = vmatprep.subr.mxu0 0.0
  %491 = vmatpush2.msra.mxu0 0.0
  %492 = vmatprep.subr.mxu0 0.0
  %493 = vmatpush2.msra.mxu0 0.0
  %494 = vmatprep.subr.mxu0 0.0
  %495 = vmatpush2.msra.mxu0 0.0
  %496 = vmatprep.subr.mxu0 0.0
  %497 = vmatpush2.msra.mxu0 0.0
  %498 = vmatprep.subr.mxu0 0.0
  %499 = vmatpush2.msra.mxu0 0.0
  %500 = vmatprep.subr.mxu0 0.0
  %501 = vmatpush2.msra.mxu0 0.0
  %502 = vmatprep.subr.mxu0 0.0
  %503 = vmatpush2.msra.mxu0 0.0
  %504 = vmatprep.subr.mxu0 0.0
  %505 = vmatpush2.msra.mxu0 0.0
  %506 = vmatprep.mubr.f32.mxu0 0.0
  %v507 = vand.u32 %v65, 4294901760
  %508 = vmatmul.mubr.f32.gmra.mxu0 %v507
  %v509 = vpop.f32.mrf.mxu0
  %v510 = vadd.f32 %v438, %v509
  %v511 = vpop.f32.mrf.mxu0
  %512 = vdwg.mxu0
  %v513 = vmax.f32 %v510, 0.0
  %515 = vrot.lane.b32.xlu0 %v513, 120
  %v516 = vpop.permute.xlu0 %515
  %518 = vrot.lane.b32.xlu0 %v513, 112
  %v519 = vpop.permute.xlu0 %518
  %521 = vrot.lane.b32.xlu0 %v513, 104
  %v522 = vpop.permute.xlu0 %521
  %523 = vrot.lane.b32.xlu0 %v513, 96
  %v524 = vpop.permute.xlu0 %523
  %525 = vrot.lane.b32.xlu0 %v516, 96
  %v526 = vpop.permute.xlu0 %525
  %527 = vrot.lane.b32.xlu0 %v519, 96
  %v528 = vpop.permute.xlu0 %527
  %529 = vrot.lane.b32.xlu0 %v522, 96
  %v530 = vpop.permute.xlu0 %529
  %534 = vrot.lane.b32.xlu0 %v513, 64
  %v535 = vpop.permute.xlu0 %534
  %536 = vrot.lane.b32.xlu0 %v516, 64
  %v537 = vpop.permute.xlu0 %536
  %538 = vrot.lane.b32.xlu0 %v519, 64
  %v539 = vpop.permute.xlu0 %538
  %540 = vrot.lane.b32.xlu0 %v522, 64
  %v541 = vpop.permute.xlu0 %540
  %545 = vrot.lane.b32.xlu0 %v513, 32
  %v546 = vpop.permute.xlu0 %545
  %547 = vrot.lane.b32.xlu0 %v516, 32
  %v548 = vpop.permute.xlu0 %547
  %549 = vrot.lane.b32.xlu0 %v519, 32
  %v550 = vpop.permute.xlu0 %549
  %551 = vrot.lane.b32.xlu0 %v522, 32
  %v552 = vpop.permute.xlu0 %551
  %v553 = vld [vmem:[%s3] sm:$0xff]
  %v554 = vld [vmem:[%s3 + $0x8] sm:$0xff]
  %v555 = vld [vmem:[%s3 + $0x10] sm:$0xff]
  %v556 = vld [vmem:[%s3 + $0x18] sm:$0xff]
  %v557 = vld [vmem:[%s3 + $0x20] sm:$0xff]
  %v558 = vld [vmem:[%s3 + $0x28] sm:$0xff]
  %v559 = vld [vmem:[%s3 + $0x30] sm:$0xff]
  %v560 = vld [vmem:[%s3 + $0x38] sm:$0xff]
  %v561 = vld [vmem:[%s3 + $0x40] sm:$0xff]
  %563 = vrot.lane.b32.xlu0 0.0, 8
  %v564 = vpop.permute.xlu0 %563
  %565 = vrot.lane.b32.xlu0 %v513, 8
  %v566 = vpop.permute.xlu0 %565
  %567 = vrot.lane.b32.xlu0 %v516, 8
  %v568 = vpop.permute.xlu0 %567
  %569 = vrot.lane.b32.xlu0 %v519, 8
  %v570 = vpop.permute.xlu0 %569
  %571 = vrot.lane.b32.xlu0 %v522, 8
  %v572 = vpop.permute.xlu0 %571
  %573 = vrot.lane.b32.xlu0 %v524, 8
  %v574 = vpop.permute.xlu0 %573
  %575 = vrot.lane.b32.xlu0 %v526, 8
  %v576 = vpop.permute.xlu0 %575
  %577 = vrot.lane.b32.xlu0 %v528, 8
  %v578 = vpop.permute.xlu0 %577
  %579 = vrot.lane.b32.xlu0 %v530, 8
  %v580 = vpop.permute.xlu0 %579
  %581 = vrot.lane.b32.xlu0 %v535, 8
  %v582 = vpop.permute.xlu0 %581
  %583 = vrot.lane.b32.xlu0 %v537, 8
  %v584 = vpop.permute.xlu0 %583
  %585 = vrot.lane.b32.xlu0 %v539, 8
  %v586 = vpop.permute.xlu0 %585
  %587 = vrot.lane.b32.xlu0 %v541, 8
  %v588 = vpop.permute.xlu0 %587
  %602 = vrot.lane.b32.xlu0 0.0, 16
  %v603 = vpop.permute.xlu0 %602
  %604 = vrot.lane.b32.xlu0 %v516, 16
  %v605 = vpop.permute.xlu0 %604
  %606 = vrot.lane.b32.xlu0 %v519, 16
  %v607 = vpop.permute.xlu0 %606
  %608 = vrot.lane.b32.xlu0 %v522, 16
  %v609 = vpop.permute.xlu0 %608
  %610 = vrot.lane.b32.xlu0 %v526, 16
  %v611 = vpop.permute.xlu0 %610
  %612 = vrot.lane.b32.xlu0 %v528, 16
  %v613 = vpop.permute.xlu0 %612
  %614 = vrot.lane.b32.xlu0 %v530, 16
  %v615 = vpop.permute.xlu0 %614
  %616 = vrot.lane.b32.xlu0 %v537, 16
  %v617 = vpop.permute.xlu0 %616
  %618 = vrot.lane.b32.xlu0 %v539, 16
  %v619 = vpop.permute.xlu0 %618
  %620 = vrot.lane.b32.xlu0 %v541, 16
  %v621 = vpop.permute.xlu0 %620
  %632 = vrot.lane.b32.xlu0 0.0, 24
  %v633 = vpop.permute.xlu0 %632
  %634 = vrot.lane.b32.xlu0 %v513, 24
  %v635 = vpop.permute.xlu0 %634
  %636 = vrot.lane.b32.xlu0 %v516, 24
  %v637 = vpop.permute.xlu0 %636
  %638 = vrot.lane.b32.xlu0 %v519, 24
  %v639 = vpop.permute.xlu0 %638
  %640 = vrot.lane.b32.xlu0 %v524, 24
  %v641 = vpop.permute.xlu0 %640
  %642 = vrot.lane.b32.xlu0 %v526, 24
  %v643 = vpop.permute.xlu0 %642
  %644 = vrot.lane.b32.xlu0 %v528, 24
  %v645 = vpop.permute.xlu0 %644
  %646 = vrot.lane.b32.xlu0 %v535, 24
  %v647 = vpop.permute.xlu0 %646
  %648 = vrot.lane.b32.xlu0 %v537, 24
  %v649 = vpop.permute.xlu0 %648
  %650 = vrot.lane.b32.xlu0 %v539, 24
  %v651 = vpop.permute.xlu0 %650
  %652 = vrot.lane.b32.xlu0 %v546, 24
  %v653 = vpop.permute.xlu0 %652
  %654 = vrot.lane.b32.xlu0 %v548, 24
  %v655 = vpop.permute.xlu0 %654
  %656 = vrot.lane.b32.xlu0 %v550, 24
  %v657 = vpop.permute.xlu0 %656
  %671 = vrot.lane.b32.xlu0 %v524, 32
  %v672 = vpop.permute.xlu0 %671
  %673 = vrot.lane.b32.xlu0 %v526, 32
  %v674 = vpop.permute.xlu0 %673
  %675 = vrot.lane.b32.xlu0 %v528, 32
  %v676 = vpop.permute.xlu0 %675
  %677 = vrot.lane.b32.xlu0 %v530, 32
  %v678 = vpop.permute.xlu0 %677
  %679 = vrot.lane.b32.xlu0 %v535, 32
  %v680 = vpop.permute.xlu0 %679
  %681 = vrot.lane.b32.xlu0 %v537, 32
  %v682 = vpop.permute.xlu0 %681
  %683 = vrot.lane.b32.xlu0 %v539, 32
  %v684 = vpop.permute.xlu0 %683
  %685 = vrot.lane.b32.xlu0 %v541, 32
  %v686 = vpop.permute.xlu0 %685
  %687 = vrot.lane.b32.xlu0 %v546, 32
  %v688 = vpop.permute.xlu0 %687
  %689 = vrot.lane.b32.xlu0 %v548, 32
  %v690 = vpop.permute.xlu0 %689
  %691 = vrot.lane.b32.xlu0 %v550, 32
  %v692 = vpop.permute.xlu0 %691
  %693 = vrot.lane.b32.xlu0 %v552, 32
  %v694 = vpop.permute.xlu0 %693
  %711 = vrot.lane.b32.xlu0 %v516, 40
  %v712 = vpop.permute.xlu0 %711
  %713 = vrot.lane.b32.xlu0 %v519, 40
  %v714 = vpop.permute.xlu0 %713
  %715 = vrot.lane.b32.xlu0 %v522, 40
  %v716 = vpop.permute.xlu0 %715
  %717 = vrot.lane.b32.xlu0 0.0, 40
  %v718 = vpop.permute.xlu0 %717
  %719 = vrot.lane.b32.xlu0 %v526, 40
  %v720 = vpop.permute.xlu0 %719
  %721 = vrot.lane.b32.xlu0 %v528, 40
  %v722 = vpop.permute.xlu0 %721
  %723 = vrot.lane.b32.xlu0 %v530, 40
  %v724 = vpop.permute.xlu0 %723
  %725 = vrot.lane.b32.xlu0 %v537, 40
  %v726 = vpop.permute.xlu0 %725
  %727 = vrot.lane.b32.xlu0 %v539, 40
  %v728 = vpop.permute.xlu0 %727
  %729 = vrot.lane.b32.xlu0 %v541, 40
  %v730 = vpop.permute.xlu0 %729
  %731 = vrot.lane.b32.xlu0 %v548, 40
  %v732 = vpop.permute.xlu0 %731
  %733 = vrot.lane.b32.xlu0 %v550, 40
  %v734 = vpop.permute.xlu0 %733
  %735 = vrot.lane.b32.xlu0 %v552, 40
  %v736 = vpop.permute.xlu0 %735
  %750 = vrot.lane.b32.xlu0 0.0, 48
  %v751 = vpop.permute.xlu0 %750
  %752 = vrot.lane.b32.xlu0 %v524, 48
  %v753 = vpop.permute.xlu0 %752
  %754 = vrot.lane.b32.xlu0 %v526, 48
  %v755 = vpop.permute.xlu0 %754
  %756 = vrot.lane.b32.xlu0 %v528, 48
  %v757 = vpop.permute.xlu0 %756
  %758 = vrot.lane.b32.xlu0 %v535, 48
  %v759 = vpop.permute.xlu0 %758
  %760 = vrot.lane.b32.xlu0 %v537, 48
  %v761 = vpop.permute.xlu0 %760
  %762 = vrot.lane.b32.xlu0 %v539, 48
  %v763 = vpop.permute.xlu0 %762
  %764 = vrot.lane.b32.xlu0 %v546, 48
  %v765 = vpop.permute.xlu0 %764
  %766 = vrot.lane.b32.xlu0 %v548, 48
  %v767 = vpop.permute.xlu0 %766
  %768 = vrot.lane.b32.xlu0 %v550, 48
  %v769 = vpop.permute.xlu0 %768
  %780 = vrot.lane.b32.xlu0 %v524, 56
  %v781 = vpop.permute.xlu0 %780
  %782 = vrot.lane.b32.xlu0 %v526, 56
  %v783 = vpop.permute.xlu0 %782
  %784 = vrot.lane.b32.xlu0 %v528, 56
  %v785 = vpop.permute.xlu0 %784
  %786 = vrot.lane.b32.xlu0 %v530, 56
  %v787 = vpop.permute.xlu0 %786
  %788 = vrot.lane.b32.xlu0 %v535, 56
  %v789 = vpop.permute.xlu0 %788
  %790 = vrot.lane.b32.xlu0 %v537, 56
  %v791 = vpop.permute.xlu0 %790
  %792 = vrot.lane.b32.xlu0 %v539, 56
  %v793 = vpop.permute.xlu0 %792
  %794 = vrot.lane.b32.xlu0 %v541, 56
  %v795 = vpop.permute.xlu0 %794
  %796 = vrot.lane.b32.xlu0 %v546, 56
  %v797 = vpop.permute.xlu0 %796
  %798 = vrot.lane.b32.xlu0 %v548, 56
  %v799 = vpop.permute.xlu0 %798
  %800 = vrot.lane.b32.xlu0 %v550, 56
  %v801 = vpop.permute.xlu0 %800
  %802 = vrot.lane.b32.xlu0 %v552, 56
  %v803 = vpop.permute.xlu0 %802
  %804 = vrot.lane.b32.xlu0 0.0, 56
  %v805 = vpop.permute.xlu0 %804
  %819 = vrot.lane.b32.xlu0 %v526, 64
  %v820 = vpop.permute.xlu0 %819
  %821 = vrot.lane.b32.xlu0 %v528, 64
  %v822 = vpop.permute.xlu0 %821
  %823 = vrot.lane.b32.xlu0 %v530, 64
  %v824 = vpop.permute.xlu0 %823
  %825 = vrot.lane.b32.xlu0 0.0, 64
  %v826 = vpop.permute.xlu0 %825
  %827 = vrot.lane.b32.xlu0 %v537, 64
  %v828 = vpop.permute.xlu0 %827
  %829 = vrot.lane.b32.xlu0 %v539, 64
  %v830 = vpop.permute.xlu0 %829
  %831 = vrot.lane.b32.xlu0 %v541, 64
  %v832 = vpop.permute.xlu0 %831
  %833 = vrot.lane.b32.xlu0 %v548, 64
  %v834 = vpop.permute.xlu0 %833
  %835 = vrot.lane.b32.xlu0 %v550, 64
  %v836 = vpop.permute.xlu0 %835
  %837 = vrot.lane.b32.xlu0 %v552, 64
  %v838 = vpop.permute.xlu0 %837
  %v849 = vsel %vm63, 0.0, %v564
  %v850 = vsel %vm63, 0.0, %v566
  %v851 = vsel %vm63, %v513, %v568
  %v852 = vsel %vm63, %v516, %v570
  %v853 = vsel %vm63, %v519, %v572
  %v854 = vsel %vm63, 0.0, %v574
  %v855 = vsel %vm63, %v524, %v576
  %v856 = vsel %vm63, %v526, %v578
  %v857 = vsel %vm63, %v528, %v580
  %v858 = vsel %vm63, 0.0, %v582
  %v859 = vsel %vm63, %v535, %v584
  %v860 = vsel %vm63, %v537, %v586
  %v861 = vsel %vm63, %v539, %v588
  %vm862 = vcmask 130048
  %v863 = vsel %vm862, %v849, %v603
  %v864 = vsel %vm862, %v850, %v605
  %v865 = vsel %vm862, %v851, %v607
  %v866 = vsel %vm862, %v852, %v609
  %v867 = vsel %vm862, %v853, %v603
  %v868 = vsel %vm862, %v854, %v611
  %v869 = vsel %vm862, %v855, %v613
  %v870 = vsel %vm862, %v856, %v615
  %v871 = vsel %vm862, %v857, %v603
  %v872 = vsel %vm862, %v858, %v617
  %v873 = vsel %vm862, %v859, %v619
  %v874 = vsel %vm862, %v860, %v621
  %v875 = vsel %vm862, %v861, %v603
  %vm876 = vcmask 195584
  %v877 = vsel %vm876, %v863, %v633
  %v878 = vsel %vm876, %v863, %v635
  %v879 = vsel %vm876, %v863, %v637
  %v880 = vsel %vm876, %v863, %v639
  %v881 = vsel %vm876, %v864, %v633
  %v882 = vsel %vm876, %v865, %v641
  %v883 = vsel %vm876, %v866, %v643
  %v884 = vsel %vm876, %v867, %v645
  %v885 = vsel %vm876, %v868, %v633
  %v886 = vsel %vm876, %v869, %v647
  %v887 = vsel %vm876, %v870, %v649
  %v888 = vsel %vm876, %v871, %v651
  %v889 = vsel %vm876, %v872, %v633
  %v890 = vsel %vm876, %v873, %v653
  %v891 = vsel %vm876, %v874, %v655
  %v892 = vsel %vm876, %v875, %v657
  %vm893 = vcmask 261120
  %v894 = vsel %vm893, %v877, %v546
  %v895 = vsel %vm893, %v878, %v548
  %v896 = vsel %vm893, %v879, %v550
  %v897 = vsel %vm893, %v880, %v552
  %v898 = vsel %vm893, %v881, %v672
  %v899 = vsel %vm893, %v882, %v674
  %v900 = vsel %vm893, %v883, %v676
  %v901 = vsel %vm893, %v884, %v678
  %v902 = vsel %vm893, %v885, %v680
  %v903 = vsel %vm893, %v886, %v682
  %v904 = vsel %vm893, %v887, %v684
  %v905 = vsel %vm893, %v888, %v686
  %v906 = vsel %vm893, %v889, %v688
  %v907 = vsel %vm893, %v890, %v690
  %v908 = vsel %vm893, %v891, %v692
  %v909 = vsel %vm893, %v892, %v694
  %vm910 = vcmask 326656
  %v911 = vsel %vm910, %v894, %v712
  %v912 = vsel %vm910, %v895, %v714
  %v913 = vsel %vm910, %v896, %v716
  %v914 = vsel %vm910, %v897, %v718
  %v915 = vsel %vm910, %v898, %v720
  %v916 = vsel %vm910, %v899, %v722
  %v917 = vsel %vm910, %v900, %v724
  %v918 = vsel %vm910, %v901, %v718
  %v919 = vsel %vm910, %v902, %v726
  %v920 = vsel %vm910, %v903, %v728
  %v921 = vsel %vm910, %v904, %v730
  %v922 = vsel %vm910, %v905, %v718
  %v923 = vsel %vm910, %v906, %v732
  %v924 = vsel %vm910, %v907, %v734
  %v925 = vsel %vm910, %v908, %v736
  %v926 = vsel %vm910, %v909, %v718
  %vm927 = vcmask 392192
  %v928 = vsel %vm927, %v911, %v751
  %v929 = vsel %vm927, %v912, %v753
  %v930 = vsel %vm927, %v913, %v755
  %v931 = vsel %vm927, %v914, %v757
  %v932 = vsel %vm927, %v915, %v751
  %v933 = vsel %vm927, %v916, %v759
  %v934 = vsel %vm927, %v917, %v761
  %v935 = vsel %vm927, %v918, %v763
  %v936 = vsel %vm927, %v919, %v751
  %v937 = vsel %vm927, %v920, %v765
  %v938 = vsel %vm927, %v921, %v767
  %v939 = vsel %vm927, %v922, %v769
  %v940 = vsel %vm927, %v923, %v751
  %v941 = vsel %vm927, %v924, %v751
  %v942 = vsel %vm927, %v925, %v751
  %v943 = vsel %vm927, %v926, %v751
  %vm944 = vcmask 457728
  %v945 = vsel %vm944, %v928, %v781
  %v946 = vsel %vm944, %v929, %v783
  %v947 = vsel %vm944, %v930, %v785
  %v948 = vsel %vm944, %v931, %v787
  %v949 = vsel %vm944, %v932, %v789
  %v950 = vsel %vm944, %v933, %v791
  %v951 = vsel %vm944, %v934, %v793
  %v952 = vsel %vm944, %v935, %v795
  %v953 = vsel %vm944, %v936, %v797
  %v954 = vsel %vm944, %v937, %v799
  %v955 = vsel %vm944, %v938, %v801
  %v956 = vsel %vm944, %v939, %v803
  %v957 = vsel %vm944, %v940, %v805
  %v958 = vsel %vm944, %v941, %v805
  %v959 = vsel %vm944, %v942, %v805
  %v960 = vsel %vm944, %v943, %v805
  %vm961 = vcmask 523264
  %v962 = vsel %vm961, %v945, %v820
  %v963 = vsel %vm961, %v946, %v822
  %v964 = vsel %vm961, %v947, %v824
  %v965 = vsel %vm961, %v948, %v826
  %v966 = vsel %vm961, %v949, %v828
  %v967 = vsel %vm961, %v950, %v830
  %v968 = vsel %vm961, %v951, %v832
  %v969 = vsel %vm961, %v952, %v826
  %v970 = vsel %vm961, %v953, %v834
  %v971 = vsel %vm961, %v954, %v836
  %v972 = vsel %vm961, %v955, %v838
  %v973 = vsel %vm961, %v956, %v826
  %v974 = vsel %vm961, %v957, %v826
  %v975 = vsel %vm961, %v958, %v826
  %v976 = vsel %vm961, %v959, %v826
  %v977 = vsel %vm961, %v960, %v826
  %v994 = vcombine.low %v962, %v963
  %v995 = vcombine.low %v964, %v965
  %v997 = vunpack.c.l.s4 1983009808
  %v998 = vunpack.c.0.s8 %v997
  %v999 = vlaneseq
  %v1000 = vshrl.u32 %v999, 7
  %v1001 = vsub.s32 %v998, %v1000
  %v1002 = vrot.slane %v994, %v1001
  %v1004 = vunpack.c.l.s4 1983009808
  %v1005 = vunpack.c.0.s8 %v1004
  %v1006 = vlaneseq
  %v1007 = vshrl.u32 %v1006, 7
  %v1008 = vsub.s32 %v1005, %v1007
  %v1009 = vrot.slane %v995, %v1008
  %v1010 = vcombine.low %v1002, %v1009
  %v1011 = vcombine.low %v966, %v967
  %v1012 = vcombine.low %v968, %v969
  %v1014 = vunpack.c.l.s4 1983009808
  %v1015 = vunpack.c.0.s8 %v1014
  %v1016 = vlaneseq
  %v1017 = vshrl.u32 %v1016, 7
  %v1018 = vsub.s32 %v1015, %v1017
  %v1019 = vrot.slane %v1011, %v1018
  %v1021 = vunpack.c.l.s4 1983009808
  %v1022 = vunpack.c.0.s8 %v1021
  %v1023 = vlaneseq
  %v1024 = vshrl.u32 %v1023, 7
  %v1025 = vsub.s32 %v1022, %v1024
  %v1026 = vrot.slane %v1012, %v1025
  %v1027 = vcombine.low %v1019, %v1026
  %v1028 = vcombine.low %v970, %v971
  %v1029 = vcombine.low %v972, %v973
  %v1031 = vunpack.c.l.s4 1983009808
  %v1032 = vunpack.c.0.s8 %v1031
  %v1033 = vlaneseq
  %v1034 = vshrl.u32 %v1033, 7
  %v1035 = vsub.s32 %v1032, %v1034
  %v1036 = vrot.slane %v1028, %v1035
  %v1038 = vunpack.c.l.s4 1983009808
  %v1039 = vunpack.c.0.s8 %v1038
  %v1040 = vlaneseq
  %v1041 = vshrl.u32 %v1040, 7
  %v1042 = vsub.s32 %v1039, %v1041
  %v1043 = vrot.slane %v1029, %v1042
  %v1044 = vcombine.low %v1036, %v1043
  %v1045 = vcombine.low %v974, %v975
  %v1046 = vcombine.low %v976, %v977
  %v1048 = vunpack.c.l.s4 1983009808
  %v1049 = vunpack.c.0.s8 %v1048
  %v1050 = vlaneseq
  %v1051 = vshrl.u32 %v1050, 7
  %v1052 = vsub.s32 %v1049, %v1051
  %v1053 = vrot.slane %v1045, %v1052
  %v1055 = vunpack.c.l.s4 1983009808
  %v1056 = vunpack.c.0.s8 %v1055
  %v1057 = vlaneseq
  %v1058 = vshrl.u32 %v1057, 7
  %v1059 = vsub.s32 %v1056, %v1058
  %v1060 = vrot.slane %v1046, %v1059
  %v1061 = vcombine.low %v1053, %v1060
  %vm1062 = vcmask 588800
  %v1063 = vsel %vm1062, %v1010, 0
  %v1065 = vsel %vm1062, %v1027, 0
  %v1067 = vsel %vm1062, %v1044, 0
  %v1069 = vsel %vm1062, %v1061, 0
  %1071 = vmatprep.subr.mxu0 0.0
  %1072 = vmatpush1.msra.mxu0 0.0
  %1073 = vmatprep.subr.mxu0 0.0
  %1074 = vmatpush1.msra.mxu0 0.0
  %1075 = vmatprep.subr.mxu0 0.0
  %1076 = vmatpush1.msra.mxu0 0.0
  %1077 = vmatprep.subr.mxu0 0.0
  %1078 = vmatpush1.msra.mxu0 0.0
  %1079 = vmatprep.subr.mxu0 0.0
  %1080 = vmatpush1.msra.mxu0 0.0
  %1081 = vmatprep.subr.mxu0 0.0
  %1082 = vmatpush1.msra.mxu0 0.0
  %1083 = vmatprep.subr.mxu0 0.0
  %1084 = vmatpush1.msra.mxu0 0.0
  %1085 = vmatprep.subr.mxu0 0.0
  %v1086 = vand.u32 %v561, 4294901760
  %1087 = vmatpush1.msra.mxu0 %v1086
  %1088 = vmatprep.subr.mxu0 0.0
  %v1089 = vand.u32 %v560, 4294901760
  %1090 = vmatpush1.msra.mxu0 %v1089
  %1091 = vmatprep.subr.mxu0 0.0
  %v1092 = vand.u32 %v559, 4294901760
  %1093 = vmatpush1.msra.mxu0 %v1092
  %1094 = vmatprep.subr.mxu0 0.0
  %v1095 = vand.u32 %v558, 4294901760
  %1096 = vmatpush1.msra.mxu0 %v1095
  %1097 = vmatprep.subr.mxu0 0.0
  %v1098 = vand.u32 %v557, 4294901760
  %1099 = vmatpush1.msra.mxu0 %v1098
  %1100 = vmatprep.subr.mxu0 0.0
  %v1101 = vand.u32 %v556, 4294901760
  %1102 = vmatpush1.msra.mxu0 %v1101
  %1103 = vmatprep.subr.mxu0 0.0
  %v1104 = vand.u32 %v555, 4294901760
  %1105 = vmatpush1.msra.mxu0 %v1104
  %1106 = vmatprep.subr.mxu0 0.0
  %v1107 = vand.u32 %v554, 4294901760
  %1108 = vmatpush1.msra.mxu0 %v1107
  %1109 = vmatprep.subr.mxu0 0.0
  %v1110 = vand.u32 %v553, 4294901760
  %1111 = vmatpush1.msra.mxu0 %v1110
  %1112 = vmatprep.subr.mxu0 0.0
  %1113 = vmatpush2.msra.mxu0 0.0
  %1114 = vmatprep.subr.mxu0 0.0
  %1115 = vmatpush2.msra.mxu0 0.0
  %1116 = vmatprep.subr.mxu0 0.0
  %1117 = vmatpush2.msra.mxu0 0.0
  %1118 = vmatprep.subr.mxu0 0.0
  %1119 = vmatpush2.msra.mxu0 0.0
  %1120 = vmatprep.subr.mxu0 0.0
  %1121 = vmatpush2.msra.mxu0 0.0
  %1122 = vmatprep.subr.mxu0 0.0
  %1123 = vmatpush2.msra.mxu0 0.0
  %1124 = vmatprep.subr.mxu0 0.0
  %1125 = vmatpush2.msra.mxu0 0.0
  %1126 = vmatprep.subr.mxu0 0.0
  %1127 = vmatpush2.msra.mxu0 0.0
  %1128 = vmatprep.subr.mxu0 0.0
  %1129 = vmatpush2.msra.mxu0 0.0
  %1130 = vmatprep.subr.mxu0 0.0
  %1131 = vmatpush2.msra.mxu0 0.0
  %1132 = vmatprep.subr.mxu0 0.0
  %1133 = vmatpush2.msra.mxu0 0.0
  %1134 = vmatprep.subr.mxu0 0.0
  %1135 = vmatpush2.msra.mxu0 0.0
  %1136 = vmatprep.subr.mxu0 0.0
  %1137 = vmatpush2.msra.mxu0 0.0
  %1138 = vmatprep.subr.mxu0 0.0
  %1139 = vmatpush2.msra.mxu0 0.0
  %1140 = vmatprep.subr.mxu0 0.0
  %1141 = vmatpush2.msra.mxu0 0.0
  %1142 = vmatprep.subr.mxu0 0.0
  %1143 = vmatpush2.msra.mxu0 0.0
  %1144 = vmatprep.mubr.f32.mxu0 0.0
  %v1145 = vand.u32 %v1063, 4294901760
  %v1146 = vsub.f32 %v1063, %v1145
  %v1147 = vand.u32 %v1146, 4294901760
  %v1148 = vsub.f32 %v1146, %v1147
  %v1149 = vand.u32 %v1148, 4294901760
  %1150 = vmatmul.mubr.f32.gmra.mxu0 %v1149
  %v1151 = vpop.f32.mrf.mxu0
  %v1152 = vadd.f32 0.0, %v1151
  %v1153 = vpop.f32.mrf.mxu0
  %1154 = vmatprep.mubr.f32.mxu0 0.0
  %v1155 = vand.u32 %v1065, 4294901760
  %v1156 = vsub.f32 %v1065, %v1155
  %v1157 = vand.u32 %v1156, 4294901760
  %v1158 = vsub.f32 %v1156, %v1157
  %v1159 = vand.u32 %v1158, 4294901760
  %1160 = vmatmul.mubr.f32.gmra.mxu0 %v1159
  %v1161 = vpop.f32.mrf.mxu0
  %v1162 = vadd.f32 0.0, %v1161
  %v1163 = vpop.f32.mrf.mxu0
  %1164 = vmatprep.mubr.f32.mxu0 0.0
  %v1165 = vand.u32 %v1067, 4294901760
  %v1166 = vsub.f32 %v1067, %v1165
  %v1167 = vand.u32 %v1166, 4294901760
  %v1168 = vsub.f32 %v1166, %v1167
  %v1169 = vand.u32 %v1168, 4294901760
  %1170 = vmatmul.mubr.f32.gmra.mxu0 %v1169
  %v1171 = vpop.f32.mrf.mxu0
  %v1172 = vadd.f32 0.0, %v1171
  %v1173 = vpop.f32.mrf.mxu0
  %1174 = vmatprep.mubr.f32.mxu0 0.0
  %v1175 = vand.u32 %v1069, 4294901760
  %v1176 = vsub.f32 %v1069, %v1175
  %v1177 = vand.u32 %v1176, 4294901760
  %v1178 = vsub.f32 %v1176, %v1177
  %v1179 = vand.u32 %v1178, 4294901760
  %1180 = vmatmul.mubr.f32.gmra.mxu0 %v1179
  %v1181 = vpop.f32.mrf.mxu0
  %v1182 = vadd.f32 0.0, %v1181
  %v1183 = vpop.f32.mrf.mxu0
  %1184 = vdwg.mxu0
  %1185 = vmatprep.subr.mxu0 0.0
  %1186 = vmatpush1.msra.mxu0 0.0
  %1187 = vmatprep.subr.mxu0 0.0
  %1188 = vmatpush1.msra.mxu0 0.0
  %1189 = vmatprep.subr.mxu0 0.0
  %1190 = vmatpush1.msra.mxu0 0.0
  %1191 = vmatprep.subr.mxu0 0.0
  %1192 = vmatpush1.msra.mxu0 0.0
  %1193 = vmatprep.subr.mxu0 0.0
  %1194 = vmatpush1.msra.mxu0 0.0
  %1195 = vmatprep.subr.mxu0 0.0
  %1196 = vmatpush1.msra.mxu0 0.0
  %1197 = vmatprep.subr.mxu0 0.0
  %1198 = vmatpush1.msra.mxu0 0.0
  %1199 = vmatprep.subr.mxu0 0.0
  %v1200 = vand.u32 %v561, 4294901760
  %v1201 = vsub.f32 %v561, %v1200
  %v1202 = vand.u32 %v1201, 4294901760
  %v1203 = vsub.f32 %v1201, %v1202
  %v1204 = vand.u32 %v1203, 4294901760
  %1205 = vmatpush1.msra.mxu0 %v1204
  %1206 = vmatprep.subr.mxu0 0.0
  %v1207 = vand.u32 %v560, 4294901760
  %v1208 = vsub.f32 %v560, %v1207
  %v1209 = vand.u32 %v1208, 4294901760
  %v1210 = vsub.f32 %v1208, %v1209
  %v1211 = vand.u32 %v1210, 4294901760
  %1212 = vmatpush1.msra.mxu0 %v1211
  %1213 = vmatprep.subr.mxu0 0.0
  %v1214 = vand.u32 %v559, 4294901760
  %v1215 = vsub.f32 %v559, %v1214
  %v1216 = vand.u32 %v1215, 4294901760
  %v1217 = vsub.f32 %v1215, %v1216
  %v1218 = vand.u32 %v1217, 4294901760
  %1219 = vmatpush1.msra.mxu0 %v1218
  %1220 = vmatprep.subr.mxu0 0.0
  %v1221 = vand.u32 %v558, 4294901760
  %v1222 = vsub.f32 %v558, %v1221
  %v1223 = vand.u32 %v1222, 4294901760
  %v1224 = vsub.f32 %v1222, %v1223
  %v1225 = vand.u32 %v1224, 4294901760
  %1226 = vmatpush1.msra.mxu0 %v1225
  %1227 = vmatprep.subr.mxu0 0.0
  %v1228 = vand.u32 %v557, 4294901760
  %v1229 = vsub.f32 %v557, %v1228
  %v1230 = vand.u32 %v1229, 4294901760
  %v1231 = vsub.f32 %v1229, %v1230
  %v1232 = vand.u32 %v1231, 4294901760
  %1233 = vmatpush1.msra.mxu0 %v1232
  %1234 = vmatprep.subr.mxu0 0.0
  %v1235 = vand.u32 %v556, 4294901760
  %v1236 = vsub.f32 %v556, %v1235
  %v1237 = vand.u32 %v1236, 4294901760
  %v1238 = vsub.f32 %v1236, %v1237
  %v1239 = vand.u32 %v1238, 4294901760
  %1240 = vmatpush1.msra.mxu0 %v1239
  %1241 = vmatprep.subr.mxu0 0.0
  %v1242 = vand.u32 %v555, 4294901760
  %v1243 = vsub.f32 %v555, %v1242
  %v1244 = vand.u32 %v1243, 4294901760
  %v1245 = vsub.f32 %v1243, %v1244
  %v1246 = vand.u32 %v1245, 4294901760
  %1247 = vmatpush1.msra.mxu0 %v1246
  %1248 = vmatprep.subr.mxu0 0.0
  %v1249 = vand.u32 %v554, 4294901760
  %v1250 = vsub.f32 %v554, %v1249
  %v1251 = vand.u32 %v1250, 4294901760
  %v1252 = vsub.f32 %v1250, %v1251
  %v1253 = vand.u32 %v1252, 4294901760
  %1254 = vmatpush1.msra.mxu0 %v1253
  %1255 = vmatprep.subr.mxu0 0.0
  %v1256 = vand.u32 %v553, 4294901760
  %v1257 = vsub.f32 %v553, %v1256
  %v1258 = vand.u32 %v1257, 4294901760
  %v1259 = vsub.f32 %v1257, %v1258
  %v1260 = vand.u32 %v1259, 4294901760
  %1261 = vmatpush1.msra.mxu0 %v1260
  %1262 = vmatprep.subr.mxu0 0.0
  %1263 = vmatpush2.msra.mxu0 0.0
  %1264 = vmatprep.subr.mxu0 0.0
  %1265 = vmatpush2.msra.mxu0 0.0
  %1266 = vmatprep.subr.mxu0 0.0
  %1267 = vmatpush2.msra.mxu0 0.0
  %1268 = vmatprep.subr.mxu0 0.0
  %1269 = vmatpush2.msra.mxu0 0.0
  %1270 = vmatprep.subr.mxu0 0.0
  %1271 = vmatpush2.msra.mxu0 0.0
  %1272 = vmatprep.subr.mxu0 0.0
  %1273 = vmatpush2.msra.mxu0 0.0
  %1274 = vmatprep.subr.mxu0 0.0
  %1275 = vmatpush2.msra.mxu0 0.0
  %1276 = vmatprep.subr.mxu0 0.0
  %1277 = vmatpush2.msra.mxu0 0.0
  %1278 = vmatprep.subr.mxu0 0.0
  %1279 = vmatpush2.msra.mxu0 0.0
  %1280 = vmatprep.subr.mxu0 0.0
  %1281 = vmatpush2.msra.mxu0 0.0
  %1282 = vmatprep.subr.mxu0 0.0
  %1283 = vmatpush2.msra.mxu0 0.0
  %1284 = vmatprep.subr.mxu0 0.0
  %1285 = vmatpush2.msra.mxu0 0.0
  %1286 = vmatprep.subr.mxu0 0.0
  %1287 = vmatpush2.msra.mxu0 0.0
  %1288 = vmatprep.subr.mxu0 0.0
  %1289 = vmatpush2.msra.mxu0 0.0
  %1290 = vmatprep.subr.mxu0 0.0
  %1291 = vmatpush2.msra.mxu0 0.0
  %1292 = vmatprep.subr.mxu0 0.0
  %1293 = vmatpush2.msra.mxu0 0.0
  %1294 = vmatprep.mubr.f32.mxu0 0.0
  %v1295 = vand.u32 %v1063, 4294901760
  %1296 = vmatmul.mubr.f32.gmra.mxu0 %v1295
  %v1297 = vpop.f32.mrf.mxu0
  %v1298 = vadd.f32 %v1152, %v1297
  %v1299 = vpop.f32.mrf.mxu0
  %1300 = vmatprep.mubr.f32.mxu0 0.0
  %v1301 = vand.u32 %v1065, 4294901760
  %1302 = vmatmul.mubr.f32.gmra.mxu0 %v1301
  %v1303 = vpop.f32.mrf.mxu0
  %v1304 = vadd.f32 %v1162, %v1303
  %v1305 = vpop.f32.mrf.mxu0
  %1306 = vmatprep.mubr.f32.mxu0 0.0
  %v1307 = vand.u32 %v1067, 4294901760
  %1308 = vmatmul.mubr.f32.gmra.mxu0 %v1307
  %v1309 = vpop.f32.mrf.mxu0
  %v1310 = vadd.f32 %v1172, %v1309
  %v1311 = vpop.f32.mrf.mxu0
  %1312 = vmatprep.mubr.f32.mxu0 0.0
  %v1313 = vand.u32 %v1069, 4294901760
  %1314 = vmatmul.mubr.f32.gmra.mxu0 %v1313
  %v1315 = vpop.f32.mrf.mxu0
  %v1316 = vadd.f32 %v1182, %v1315
  %v1317 = vpop.f32.mrf.mxu0
  %1318 = vdwg.mxu0
  %1319 = vmatprep.subr.mxu0 0.0
  %1320 = vmatpush1.msra.mxu0 0.0
  %1321 = vmatprep.subr.mxu0 0.0
  %1322 = vmatpush1.msra.mxu0 0.0
  %1323 = vmatprep.subr.mxu0 0.0
  %1324 = vmatpush1.msra.mxu0 0.0
  %1325 = vmatprep.subr.mxu0 0.0
  %1326 = vmatpush1.msra.mxu0 0.0
  %1327 = vmatprep.subr.mxu0 0.0
  %1328 = vmatpush1.msra.mxu0 0.0
  %1329 = vmatprep.subr.mxu0 0.0
  %1330 = vmatpush1.msra.mxu0 0.0
  %1331 = vmatprep.subr.mxu0 0.0
  %1332 = vmatpush1.msra.mxu0 0.0
  %1333 = vmatprep.subr.mxu0 0.0
  %v1334 = vand.u32 %v561, 4294901760
  %v1335 = vsub.f32 %v561, %v1334
  %1336 = vmatpush1.msra.mxu0 %v1335
  %1337 = vmatprep.subr.mxu0 0.0
  %v1338 = vand.u32 %v560, 4294901760
  %v1339 = vsub.f32 %v560, %v1338
  %1340 = vmatpush1.msra.mxu0 %v1339
  %1341 = vmatprep.subr.mxu0 0.0
  %v1342 = vand.u32 %v559, 4294901760
  %v1343 = vsub.f32 %v559, %v1342
  %1344 = vmatpush1.msra.mxu0 %v1343
  %1345 = vmatprep.subr.mxu0 0.0
  %v1346 = vand.u32 %v558, 4294901760
  %v1347 = vsub.f32 %v558, %v1346
  %1348 = vmatpush1.msra.mxu0 %v1347
  %1349 = vmatprep.subr.mxu0 0.0
  %v1350 = vand.u32 %v557, 4294901760
  %v1351 = vsub.f32 %v557, %v1350
  %1352 = vmatpush1.msra.mxu0 %v1351
  %1353 = vmatprep.subr.mxu0 0.0
  %v1354 = vand.u32 %v556, 4294901760
  %v1355 = vsub.f32 %v556, %v1354
  %1356 = vmatpush1.msra.mxu0 %v1355
  %1357 = vmatprep.subr.mxu0 0.0
  %v1358 = vand.u32 %v555, 4294901760
  %v1359 = vsub.f32 %v555, %v1358
  %1360 = vmatpush1.msra.mxu0 %v1359
  %1361 = vmatprep.subr.mxu0 0.0
  %v1362 = vand.u32 %v554, 4294901760
  %v1363 = vsub.f32 %v554, %v1362
  %1364 = vmatpush1.msra.mxu0 %v1363
  %1365 = vmatprep.subr.mxu0 0.0
  %v1366 = vand.u32 %v553, 4294901760
  %v1367 = vsub.f32 %v553, %v1366
  %1368 = vmatpush1.msra.mxu0 %v1367
  %1369 = vmatprep.subr.mxu0 0.0
  %1370 = vmatpush2.msra.mxu0 0.0
  %1371 = vmatprep.subr.mxu0 0.0
  %1372 = vmatpush2.msra.mxu0 0.0
  %1373 = vmatprep.subr.mxu0 0.0
  %1374 = vmatpush2.msra.mxu0 0.0
  %1375 = vmatprep.subr.mxu0 0.0
  %1376 = vmatpush2.msra.mxu0 0.0
  %1377 = vmatprep.subr.mxu0 0.0
  %1378 = vmatpush2.msra.mxu0 0.0
  %1379 = vmatprep.subr.mxu0 0.0
  %1380 = vmatpush2.msra.mxu0 0.0
  %1381 = vmatprep.subr.mxu0 0.0
  %1382 = vmatpush2.msra.mxu0 0.0
  %1383 = vmatprep.subr.mxu0 0.0
  %1384 = vmatpush2.msra.mxu0 0.0
  %1385 = vmatprep.subr.mxu0 0.0
  %1386 = vmatpush2.msra.mxu0 0.0
  %1387 = vmatprep.subr.mxu0 0.0
  %1388 = vmatpush2.msra.mxu0 0.0
  %1389 = vmatprep.subr.mxu0 0.0
  %1390 = vmatpush2.msra.mxu0 0.0
  %1391 = vmatprep.subr.mxu0 0.0
  %1392 = vmatpush2.msra.mxu0 0.0
  %1393 = vmatprep.subr.mxu0 0.0
  %1394 = vmatpush2.msra.mxu0 0.0
  %1395 = vmatprep.subr.mxu0 0.0
  %1396 = vmatpush2.msra.mxu0 0.0
  %1397 = vmatprep.subr.mxu0 0.0
  %1398 = vmatpush2.msra.mxu0 0.0
  %1399 = vmatprep.subr.mxu0 0.0
  %1400 = vmatpush2.msra.mxu0 0.0
  %1401 = vmatprep.mubr.f32.mxu0 0.0
  %v1402 = vand.u32 %v1063, 4294901760
  %v1403 = vsub.f32 %v1063, %v1402
  %1404 = vmatmul.mubr.f32.gmra.mxu0 %v1403
  %v1405 = vpop.f32.mrf.mxu0
  %v1406 = vadd.f32 %v1298, %v1405
  %v1407 = vpop.f32.mrf.mxu0
  %1408 = vmatprep.mubr.f32.mxu0 0.0
  %v1409 = vand.u32 %v1065, 4294901760
  %v1410 = vsub.f32 %v1065, %v1409
  %1411 = vmatmul.mubr.f32.gmra.mxu0 %v1410
  %v1412 = vpop.f32.mrf.mxu0
  %v1413 = vadd.f32 %v1304, %v1412
  %v1414 = vpop.f32.mrf.mxu0
  %1415 = vmatprep.mubr.f32.mxu0 0.0
  %v1416 = vand.u32 %v1067, 4294901760
  %v1417 = vsub.f32 %v1067, %v1416
  %1418 = vmatmul.mubr.f32.gmra.mxu0 %v1417
  %v1419 = vpop.f32.mrf.mxu0
  %v1420 = vadd.f32 %v1310, %v1419
  %v1421 = vpop.f32.mrf.mxu0
  %1422 = vmatprep.mubr.f32.mxu0 0.0
  %v1423 = vand.u32 %v1069, 4294901760
  %v1424 = vsub.f32 %v1069, %v1423
  %1425 = vmatmul.mubr.f32.gmra.mxu0 %v1424
  %v1426 = vpop.f32.mrf.mxu0
  %v1427 = vadd.f32 %v1316, %v1426
  %v1428 = vpop.f32.mrf.mxu0
  %1429 = vdwg.mxu0
  %1430 = vmatprep.subr.mxu0 0.0
  %1431 = vmatpush1.msra.mxu0 0.0
  %1432 = vmatprep.subr.mxu0 0.0
  %1433 = vmatpush1.msra.mxu0 0.0
  %1434 = vmatprep.subr.mxu0 0.0
  %1435 = vmatpush1.msra.mxu0 0.0
  %1436 = vmatprep.subr.mxu0 0.0
  %1437 = vmatpush1.msra.mxu0 0.0
  %1438 = vmatprep.subr.mxu0 0.0
  %1439 = vmatpush1.msra.mxu0 0.0
  %1440 = vmatprep.subr.mxu0 0.0
  %1441 = vmatpush1.msra.mxu0 0.0
  %1442 = vmatprep.subr.mxu0 0.0
  %1443 = vmatpush1.msra.mxu0 0.0
  %1444 = vmatprep.subr.mxu0 0.0
  %v1445 = vand.u32 %v561, 4294901760
  %1446 = vmatpush1.msra.mxu0 %v1445
  %1447 = vmatprep.subr.mxu0 0.0
  %v1448 = vand.u32 %v560, 4294901760
  %1449 = vmatpush1.msra.mxu0 %v1448
  %1450 = vmatprep.subr.mxu0 0.0
  %v1451 = vand.u32 %v559, 4294901760
  %1452 = vmatpush1.msra.mxu0 %v1451
  %1453 = vmatprep.subr.mxu0 0.0
  %v1454 = vand.u32 %v558, 4294901760
  %1455 = vmatpush1.msra.mxu0 %v1454
  %1456 = vmatprep.subr.mxu0 0.0
  %v1457 = vand.u32 %v557, 4294901760
  %1458 = vmatpush1.msra.mxu0 %v1457
  %1459 = vmatprep.subr.mxu0 0.0
  %v1460 = vand.u32 %v556, 4294901760
  %1461 = vmatpush1.msra.mxu0 %v1460
  %1462 = vmatprep.subr.mxu0 0.0
  %v1463 = vand.u32 %v555, 4294901760
  %1464 = vmatpush1.msra.mxu0 %v1463
  %1465 = vmatprep.subr.mxu0 0.0
  %v1466 = vand.u32 %v554, 4294901760
  %1467 = vmatpush1.msra.mxu0 %v1466
  %1468 = vmatprep.subr.mxu0 0.0
  %v1469 = vand.u32 %v553, 4294901760
  %1470 = vmatpush1.msra.mxu0 %v1469
  %1471 = vmatprep.subr.mxu0 0.0
  %1472 = vmatpush2.msra.mxu0 0.0
  %1473 = vmatprep.subr.mxu0 0.0
  %1474 = vmatpush2.msra.mxu0 0.0
  %1475 = vmatprep.subr.mxu0 0.0
  %1476 = vmatpush2.msra.mxu0 0.0
  %1477 = vmatprep.subr.mxu0 0.0
  %1478 = vmatpush2.msra.mxu0 0.0
  %1479 = vmatprep.subr.mxu0 0.0
  %1480 = vmatpush2.msra.mxu0 0.0
  %1481 = vmatprep.subr.mxu0 0.0
  %1482 = vmatpush2.msra.mxu0 0.0
  %1483 = vmatprep.subr.mxu0 0.0
  %1484 = vmatpush2.msra.mxu0 0.0
  %1485 = vmatprep.subr.mxu0 0.0
  %1486 = vmatpush2.msra.mxu0 0.0
  %1487 = vmatprep.subr.mxu0 0.0
  %1488 = vmatpush2.msra.mxu0 0.0
  %1489 = vmatprep.subr.mxu0 0.0
  %1490 = vmatpush2.msra.mxu0 0.0
  %1491 = vmatprep.subr.mxu0 0.0
  %1492 = vmatpush2.msra.mxu0 0.0
  %1493 = vmatprep.subr.mxu0 0.0
  %1494 = vmatpush2.msra.mxu0 0.0
  %1495 = vmatprep.subr.mxu0 0.0
  %1496 = vmatpush2.msra.mxu0 0.0
  %1497 = vmatprep.subr.mxu0 0.0
  %1498 = vmatpush2.msra.mxu0 0.0
  %1499 = vmatprep.subr.mxu0 0.0
  %1500 = vmatpush2.msra.mxu0 0.0
  %1501 = vmatprep.subr.mxu0 0.0
  %1502 = vmatpush2.msra.mxu0 0.0
  %1503 = vmatprep.mubr.f32.mxu0 0.0
  %v1504 = vand.u32 %v1063, 4294901760
  %v1505 = vsub.f32 %v1063, %v1504
  %v1506 = vand.u32 %v1505, 4294901760
  %1507 = vmatmul.mubr.f32.gmra.mxu0 %v1506
  %v1508 = vpop.f32.mrf.mxu0
  %v1509 = vadd.f32 %v1406, %v1508
  %v1510 = vpop.f32.mrf.mxu0
  %1511 = vmatprep.mubr.f32.mxu0 0.0
  %v1512 = vand.u32 %v1065, 4294901760
  %v1513 = vsub.f32 %v1065, %v1512
  %v1514 = vand.u32 %v1513, 4294901760
  %1515 = vmatmul.mubr.f32.gmra.mxu0 %v1514
  %v1516 = vpop.f32.mrf.mxu0
  %v1517 = vadd.f32 %v1413, %v1516
  %v1518 = vpop.f32.mrf.mxu0
  %1519 = vmatprep.mubr.f32.mxu0 0.0
  %v1520 = vand.u32 %v1067, 4294901760
  %v1521 = vsub.f32 %v1067, %v1520
  %v1522 = vand.u32 %v1521, 4294901760
  %1523 = vmatmul.mubr.f32.gmra.mxu0 %v1522
  %v1524 = vpop.f32.mrf.mxu0
  %v1525 = vadd.f32 %v1420, %v1524
  %v1526 = vpop.f32.mrf.mxu0
  %1527 = vmatprep.mubr.f32.mxu0 0.0
  %v1528 = vand.u32 %v1069, 4294901760
  %v1529 = vsub.f32 %v1069, %v1528
  %v1530 = vand.u32 %v1529, 4294901760
  %1531 = vmatmul.mubr.f32.gmra.mxu0 %v1530
  %v1532 = vpop.f32.mrf.mxu0
  %v1533 = vadd.f32 %v1427, %v1532
  %v1534 = vpop.f32.mrf.mxu0
  %1535 = vdwg.mxu0
  %1536 = vmatprep.subr.mxu0 0.0
  %1537 = vmatpush1.msra.mxu0 0.0
  %1538 = vmatprep.subr.mxu0 0.0
  %1539 = vmatpush1.msra.mxu0 0.0
  %1540 = vmatprep.subr.mxu0 0.0
  %1541 = vmatpush1.msra.mxu0 0.0
  %1542 = vmatprep.subr.mxu0 0.0
  %1543 = vmatpush1.msra.mxu0 0.0
  %1544 = vmatprep.subr.mxu0 0.0
  %1545 = vmatpush1.msra.mxu0 0.0
  %1546 = vmatprep.subr.mxu0 0.0
  %1547 = vmatpush1.msra.mxu0 0.0
  %1548 = vmatprep.subr.mxu0 0.0
  %1549 = vmatpush1.msra.mxu0 0.0
  %1550 = vmatprep.subr.mxu0 0.0
  %v1551 = vand.u32 %v561, 4294901760
  %v1552 = vsub.f32 %v561, %v1551
  %v1553 = vand.u32 %v1552, 4294901760
  %1554 = vmatpush1.msra.mxu0 %v1553
  %1555 = vmatprep.subr.mxu0 0.0
  %v1556 = vand.u32 %v560, 4294901760
  %v1557 = vsub.f32 %v560, %v1556
  %v1558 = vand.u32 %v1557, 4294901760
  %1559 = vmatpush1.msra.mxu0 %v1558
  %1560 = vmatprep.subr.mxu0 0.0
  %v1561 = vand.u32 %v559, 4294901760
  %v1562 = vsub.f32 %v559, %v1561
  %v1563 = vand.u32 %v1562, 4294901760
  %1564 = vmatpush1.msra.mxu0 %v1563
  %1565 = vmatprep.subr.mxu0 0.0
  %v1566 = vand.u32 %v558, 4294901760
  %v1567 = vsub.f32 %v558, %v1566
  %v1568 = vand.u32 %v1567, 4294901760
  %1569 = vmatpush1.msra.mxu0 %v1568
  %1570 = vmatprep.subr.mxu0 0.0
  %v1571 = vand.u32 %v557, 4294901760
  %v1572 = vsub.f32 %v557, %v1571
  %v1573 = vand.u32 %v1572, 4294901760
  %1574 = vmatpush1.msra.mxu0 %v1573
  %1575 = vmatprep.subr.mxu0 0.0
  %v1576 = vand.u32 %v556, 4294901760
  %v1577 = vsub.f32 %v556, %v1576
  %v1578 = vand.u32 %v1577, 4294901760
  %1579 = vmatpush1.msra.mxu0 %v1578
  %1580 = vmatprep.subr.mxu0 0.0
  %v1581 = vand.u32 %v555, 4294901760
  %v1582 = vsub.f32 %v555, %v1581
  %v1583 = vand.u32 %v1582, 4294901760
  %1584 = vmatpush1.msra.mxu0 %v1583
  %1585 = vmatprep.subr.mxu0 0.0
  %v1586 = vand.u32 %v554, 4294901760
  %v1587 = vsub.f32 %v554, %v1586
  %v1588 = vand.u32 %v1587, 4294901760
  %1589 = vmatpush1.msra.mxu0 %v1588
  %1590 = vmatprep.subr.mxu0 0.0
  %v1591 = vand.u32 %v553, 4294901760
  %v1592 = vsub.f32 %v553, %v1591
  %v1593 = vand.u32 %v1592, 4294901760
  %1594 = vmatpush1.msra.mxu0 %v1593
  %1595 = vmatprep.subr.mxu0 0.0
  %1596 = vmatpush2.msra.mxu0 0.0
  %1597 = vmatprep.subr.mxu0 0.0
  %1598 = vmatpush2.msra.mxu0 0.0
  %1599 = vmatprep.subr.mxu0 0.0
  %1600 = vmatpush2.msra.mxu0 0.0
  %1601 = vmatprep.subr.mxu0 0.0
  %1602 = vmatpush2.msra.mxu0 0.0
  %1603 = vmatprep.subr.mxu0 0.0
  %1604 = vmatpush2.msra.mxu0 0.0
  %1605 = vmatprep.subr.mxu0 0.0
  %1606 = vmatpush2.msra.mxu0 0.0
  %1607 = vmatprep.subr.mxu0 0.0
  %1608 = vmatpush2.msra.mxu0 0.0
  %1609 = vmatprep.subr.mxu0 0.0
  %1610 = vmatpush2.msra.mxu0 0.0
  %1611 = vmatprep.subr.mxu0 0.0
  %1612 = vmatpush2.msra.mxu0 0.0
  %1613 = vmatprep.subr.mxu0 0.0
  %1614 = vmatpush2.msra.mxu0 0.0
  %1615 = vmatprep.subr.mxu0 0.0
  %1616 = vmatpush2.msra.mxu0 0.0
  %1617 = vmatprep.subr.mxu0 0.0
  %1618 = vmatpush2.msra.mxu0 0.0
  %1619 = vmatprep.subr.mxu0 0.0
  %1620 = vmatpush2.msra.mxu0 0.0
  %1621 = vmatprep.subr.mxu0 0.0
  %1622 = vmatpush2.msra.mxu0 0.0
  %1623 = vmatprep.subr.mxu0 0.0
  %1624 = vmatpush2.msra.mxu0 0.0
  %1625 = vmatprep.subr.mxu0 0.0
  %1626 = vmatpush2.msra.mxu0 0.0
  %1627 = vmatprep.mubr.f32.mxu0 0.0
  %v1628 = vand.u32 %v1063, 4294901760
  %1629 = vmatmul.mubr.f32.gmra.mxu0 %v1628
  %v1630 = vpop.f32.mrf.mxu0
  %v1631 = vadd.f32 %v1509, %v1630
  %v1632 = vpop.f32.mrf.mxu0
  %1633 = vmatprep.mubr.f32.mxu0 0.0
  %v1634 = vand.u32 %v1065, 4294901760
  %1635 = vmatmul.mubr.f32.gmra.mxu0 %v1634
  %v1636 = vpop.f32.mrf.mxu0
  %v1637 = vadd.f32 %v1517, %v1636
  %v1638 = vpop.f32.mrf.mxu0
  %1639 = vmatprep.mubr.f32.mxu0 0.0
  %v1640 = vand.u32 %v1067, 4294901760
  %1641 = vmatmul.mubr.f32.gmra.mxu0 %v1640
  %v1642 = vpop.f32.mrf.mxu0
  %v1643 = vadd.f32 %v1525, %v1642
  %v1644 = vpop.f32.mrf.mxu0
  %1645 = vmatprep.mubr.f32.mxu0 0.0
  %v1646 = vand.u32 %v1069, 4294901760
  %1647 = vmatmul.mubr.f32.gmra.mxu0 %v1646
  %v1648 = vpop.f32.mrf.mxu0
  %v1649 = vadd.f32 %v1533, %v1648
  %v1650 = vpop.f32.mrf.mxu0
  %1651 = vdwg.mxu0
  %1652 = vmatprep.subr.mxu0 0.0
  %1653 = vmatpush1.msra.mxu0 0.0
  %1654 = vmatprep.subr.mxu0 0.0
  %1655 = vmatpush1.msra.mxu0 0.0
  %1656 = vmatprep.subr.mxu0 0.0
  %1657 = vmatpush1.msra.mxu0 0.0
  %1658 = vmatprep.subr.mxu0 0.0
  %1659 = vmatpush1.msra.mxu0 0.0
  %1660 = vmatprep.subr.mxu0 0.0
  %1661 = vmatpush1.msra.mxu0 0.0
  %1662 = vmatprep.subr.mxu0 0.0
  %1663 = vmatpush1.msra.mxu0 0.0
  %1664 = vmatprep.subr.mxu0 0.0
  %1665 = vmatpush1.msra.mxu0 0.0
  %1666 = vmatprep.subr.mxu0 0.0
  %v1667 = vand.u32 %v561, 4294901760
  %1668 = vmatpush1.msra.mxu0 %v1667
  %1669 = vmatprep.subr.mxu0 0.0
  %v1670 = vand.u32 %v560, 4294901760
  %1671 = vmatpush1.msra.mxu0 %v1670
  %1672 = vmatprep.subr.mxu0 0.0
  %v1673 = vand.u32 %v559, 4294901760
  %1674 = vmatpush1.msra.mxu0 %v1673
  %1675 = vmatprep.subr.mxu0 0.0
  %v1676 = vand.u32 %v558, 4294901760
  %1677 = vmatpush1.msra.mxu0 %v1676
  %1678 = vmatprep.subr.mxu0 0.0
  %v1679 = vand.u32 %v557, 4294901760
  %1680 = vmatpush1.msra.mxu0 %v1679
  %1681 = vmatprep.subr.mxu0 0.0
  %v1682 = vand.u32 %v556, 4294901760
  %1683 = vmatpush1.msra.mxu0 %v1682
  %1684 = vmatprep.subr.mxu0 0.0
  %v1685 = vand.u32 %v555, 4294901760
  %1686 = vmatpush1.msra.mxu0 %v1685
  %1687 = vmatprep.subr.mxu0 0.0
  %v1688 = vand.u32 %v554, 4294901760
  %1689 = vmatpush1.msra.mxu0 %v1688
  %1690 = vmatprep.subr.mxu0 0.0
  %v1691 = vand.u32 %v553, 4294901760
  %1692 = vmatpush1.msra.mxu0 %v1691
  %1693 = vmatprep.subr.mxu0 0.0
  %1694 = vmatpush2.msra.mxu0 0.0
  %1695 = vmatprep.subr.mxu0 0.0
  %1696 = vmatpush2.msra.mxu0 0.0
  %1697 = vmatprep.subr.mxu0 0.0
  %1698 = vmatpush2.msra.mxu0 0.0
  %1699 = vmatprep.subr.mxu0 0.0
  %1700 = vmatpush2.msra.mxu0 0.0
  %1701 = vmatprep.subr.mxu0 0.0
  %1702 = vmatpush2.msra.mxu0 0.0
  %1703 = vmatprep.subr.mxu0 0.0
  %1704 = vmatpush2.msra.mxu0 0.0
  %1705 = vmatprep.subr.mxu0 0.0
  %1706 = vmatpush2.msra.mxu0 0.0
  %1707 = vmatprep.subr.mxu0 0.0
  %1708 = vmatpush2.msra.mxu0 0.0
  %1709 = vmatprep.subr.mxu0 0.0
  %1710 = vmatpush2.msra.mxu0 0.0
  %1711 = vmatprep.subr.mxu0 0.0
  %1712 = vmatpush2.msra.mxu0 0.0
  %1713 = vmatprep.subr.mxu0 0.0
  %1714 = vmatpush2.msra.mxu0 0.0
  %1715 = vmatprep.subr.mxu0 0.0
  %1716 = vmatpush2.msra.mxu0 0.0
  %1717 = vmatprep.subr.mxu0 0.0
  %1718 = vmatpush2.msra.mxu0 0.0
  %1719 = vmatprep.subr.mxu0 0.0
  %1720 = vmatpush2.msra.mxu0 0.0
  %1721 = vmatprep.subr.mxu0 0.0
  %1722 = vmatpush2.msra.mxu0 0.0
  %1723 = vmatprep.subr.mxu0 0.0
  %1724 = vmatpush2.msra.mxu0 0.0
  %1725 = vmatprep.mubr.f32.mxu0 0.0
  %v1726 = vand.u32 %v1063, 4294901760
  %1727 = vmatmul.mubr.f32.gmra.mxu0 %v1726
  %v1728 = vpop.f32.mrf.mxu0
  %v1729 = vadd.f32 %v1631, %v1728
  %v1730 = vpop.f32.mrf.mxu0
  %1731 = vmatprep.mubr.f32.mxu0 0.0
  %v1732 = vand.u32 %v1065, 4294901760
  %1733 = vmatmul.mubr.f32.gmra.mxu0 %v1732
  %v1734 = vpop.f32.mrf.mxu0
  %v1735 = vadd.f32 %v1637, %v1734
  %v1736 = vpop.f32.mrf.mxu0
  %1737 = vmatprep.mubr.f32.mxu0 0.0
  %v1738 = vand.u32 %v1067, 4294901760
  %1739 = vmatmul.mubr.f32.gmra.mxu0 %v1738
  %v1740 = vpop.f32.mrf.mxu0
  %v1741 = vadd.f32 %v1643, %v1740
  %v1742 = vpop.f32.mrf.mxu0
  %1743 = vmatprep.mubr.f32.mxu0 0.0
  %v1744 = vand.u32 %v1069, 4294901760
  %1745 = vmatmul.mubr.f32.gmra.mxu0 %v1744
  %v1746 = vpop.f32.mrf.mxu0
  %v1747 = vadd.f32 %v1649, %v1746
  %v1748 = vpop.f32.mrf.mxu0
  %1749 = vdwg.mxu0
  %v1750 = vld [vmem:[%s4] sm:$0x1]
  %v1751 = vld [vmem:[%s5] sm:$0x1]
  %v1752 = vsel %vm63, %v1729, 0.0
  %v1753 = vsel %vm63, %v1735, 0.0
  %v1754 = vadd.f32 %v1752, %v1753
  %v1755 = vsel %vm63, %v1741, 0.0
  %v1756 = vadd.f32 %v1754, %v1755
  %v1757 = vsel %vm63, %v1747, 0.0
  %v1758 = vadd.f32 %v1756, %v1757
  %v1759 = vrot.slane %v1758, 4
  %v1760 = vadd.f32 %v1758, %v1759
  %v1761 = vrot.slane %v1760, 2
  %v1762 = vadd.f32 %v1760, %v1761
  %v1763 = vrot.slane %v1762, 1
  %v1764 = vadd.f32 %v1762, %v1763
  %v1765 = vrcp.pop 32.0
  %v1766 = vmul.f32 %v1764, %v1765
  %v1767 = vsub.f32 %v1729, %v1766
  %v1768 = vsub.f32 %v1735, %v1766
  %v1769 = vsub.f32 %v1741, %v1766
  %v1770 = vsub.f32 %v1747, %v1766
  %v1771 = vmul.f32 %v1767, %v1767
  %v1772 = vmul.f32 %v1768, %v1768
  %v1773 = vmul.f32 %v1769, %v1769
  %v1774 = vmul.f32 %v1770, %v1770
  %v1775 = vsel %vm63, %v1771, 0.0
  %v1776 = vsel %vm63, %v1772, 0.0
  %v1777 = vadd.f32 %v1775, %v1776
  %v1778 = vsel %vm63, %v1773, 0.0
  %v1779 = vadd.f32 %v1777, %v1778
  %v1780 = vsel %vm63, %v1774, 0.0
  %v1781 = vadd.f32 %v1779, %v1780
  %v1782 = vrot.slane %v1781, 4
  %v1783 = vadd.f32 %v1781, %v1782
  %v1784 = vrot.slane %v1783, 2
  %v1785 = vadd.f32 %v1783, %v1784
  %v1786 = vrot.slane %v1785, 1
  %v1787 = vadd.f32 %v1785, %v1786
  %v1788 = vmul.f32 %v1787, %v1765
  %v1789 = vadd.f32 %v1788, 1e-05
  %v1790 = vrsqrt.pop %v1789
  %v1791 = vmul.f32 %v1750, %v1790
  %v1793 = vlaneseq
  %v1794 = vshrl.u32 %v1793, 7
  %v1795 = vsub.s32 0, %v1794
  %v1796 = vrot.slane %v1791, %v1795
  %v1798 = vmul.f32 %v1767, %v1796
  %v1799 = vmul.f32 %v1768, %v1796
  %v1800 = vmul.f32 %v1769, %v1796
  %v1801 = vmul.f32 %v1770, %v1796
  %v1803 = vlaneseq
  %v1804 = vshrl.u32 %v1803, 7
  %v1805 = vsub.s32 0, %v1804
  %v1806 = vrot.slane %v1751, %v1805
  %v1808 = vadd.f32 %v1798, %v1806
  %v1809 = vadd.f32 %v1799, %v1806
  %v1810 = vadd.f32 %v1800, %v1806
  %v1811 = vadd.f32 %v1801, %v1806
  %v1812 = vmax.f32 %v1808, 0.0
  %v1813 = vmax.f32 %v1809, 0.0
  %v1814 = vmax.f32 %v1810, 0.0
  %v1815 = vmax.f32 %v1811, 0.0
  %v1820 = vcombine.high %v1812, %v1812
  %v1822 = vunpack.c.l.s4 1983009808
  %v1823 = vunpack.c.0.s8 %v1822
  %v1824 = vlaneseq
  %v1825 = vshrl.u32 %v1824, 7
  %v1826 = vsub.s32 %v1823, %v1825
  %v1827 = vrot.slane %v1812, %v1826
  %v1829 = vunpack.c.l.s4 1983009808
  %v1830 = vunpack.c.0.s8 %v1829
  %v1831 = vlaneseq
  %v1832 = vshrl.u32 %v1831, 7
  %v1833 = vsub.s32 %v1830, %v1832
  %v1834 = vrot.slane %v1820, %v1833
  %v1835 = vcombine.high %v1827, %v1827
  %v1836 = vcombine.high %v1834, %v1834
  %v1837 = vcombine.high %v1813, %v1813
  %v1839 = vunpack.c.l.s4 1983009808
  %v1840 = vunpack.c.0.s8 %v1839
  %v1841 = vlaneseq
  %v1842 = vshrl.u32 %v1841, 7
  %v1843 = vsub.s32 %v1840, %v1842
  %v1844 = vrot.slane %v1813, %v1843
  %v1846 = vunpack.c.l.s4 1983009808
  %v1847 = vunpack.c.0.s8 %v1846
  %v1848 = vlaneseq
  %v1849 = vshrl.u32 %v1848, 7
  %v1850 = vsub.s32 %v1847, %v1849
  %v1851 = vrot.slane %v1837, %v1850
  %v1852 = vcombine.high %v1844, %v1844
  %v1853 = vcombine.high %v1851, %v1851
  %v1854 = vcombine.high %v1814, %v1814
  %v1856 = vunpack.c.l.s4 1983009808
  %v1857 = vunpack.c.0.s8 %v1856
  %v1858 = vlaneseq
  %v1859 = vshrl.u32 %v1858, 7
  %v1860 = vsub.s32 %v1857, %v1859
  %v1861 = vrot.slane %v1814, %v1860
  %v1863 = vunpack.c.l.s4 1983009808
  %v1864 = vunpack.c.0.s8 %v1863
  %v1865 = vlaneseq
  %v1866 = vshrl.u32 %v1865, 7
  %v1867 = vsub.s32 %v1864, %v1866
  %v1868 = vrot.slane %v1854, %v1867
  %v1869 = vcombine.high %v1861, %v1861
  %v1870 = vcombine.high %v1868, %v1868
  %v1871 = vcombine.high %v1815, %v1815
  %v1873 = vunpack.c.l.s4 1983009808
  %v1874 = vunpack.c.0.s8 %v1873
  %v1875 = vlaneseq
  %v1876 = vshrl.u32 %v1875, 7
  %v1877 = vsub.s32 %v1874, %v1876
  %v1878 = vrot.slane %v1815, %v1877
  %v1880 = vunpack.c.l.s4 1983009808
  %v1881 = vunpack.c.0.s8 %v1880
  %v1882 = vlaneseq
  %v1883 = vshrl.u32 %v1882, 7
  %v1884 = vsub.s32 %v1881, %v1883
  %v1885 = vrot.slane %v1871, %v1884
  %v1886 = vcombine.high %v1878, %v1878
  %v1887 = vcombine.high %v1885, %v1885
  %v1897 = vld [vmem:[%s6] sm:$0xff]
  %v1898 = vld [vmem:[%s6 + $0x8] sm:$0xff]
  %v1899 = vld [vmem:[%s6 + $0x10] sm:$0xff]
  %v1900 = vld [vmem:[%s6 + $0x18] sm:$0xff]
  %v1901 = vld [vmem:[%s6 + $0x20] sm:$0xff]
  %v1902 = vld [vmem:[%s6 + $0x28] sm:$0xff]
  %v1903 = vld [vmem:[%s6 + $0x30] sm:$0xff]
  %v1904 = vld [vmem:[%s6 + $0x38] sm:$0xff]
  %v1905 = vld [vmem:[%s6 + $0x40] sm:$0xff]
  %1906 = vrot.lane.b32.xlu0 %v1827, 8
  %v1907 = vpop.permute.xlu0 %1906
  %1908 = vrot.lane.b32.xlu0 %v1835, 8
  %v1909 = vpop.permute.xlu0 %1908
  %1910 = vrot.lane.b32.xlu0 %v1834, 8
  %v1911 = vpop.permute.xlu0 %1910
  %1912 = vrot.lane.b32.xlu0 %v1836, 8
  %v1913 = vpop.permute.xlu0 %1912
  %1914 = vrot.lane.b32.xlu0 %v1844, 8
  %v1915 = vpop.permute.xlu0 %1914
  %1916 = vrot.lane.b32.xlu0 %v1852, 8
  %v1917 = vpop.permute.xlu0 %1916
  %1918 = vrot.lane.b32.xlu0 %v1851, 8
  %v1919 = vpop.permute.xlu0 %1918
  %1920 = vrot.lane.b32.xlu0 %v1853, 8
  %v1921 = vpop.permute.xlu0 %1920
  %1922 = vrot.lane.b32.xlu0 %v1861, 8
  %v1923 = vpop.permute.xlu0 %1922
  %1924 = vrot.lane.b32.xlu0 %v1869, 8
  %v1925 = vpop.permute.xlu0 %1924
  %1926 = vrot.lane.b32.xlu0 %v1868, 8
  %v1927 = vpop.permute.xlu0 %1926
  %1928 = vrot.lane.b32.xlu0 %v1870, 8
  %v1929 = vpop.permute.xlu0 %1928
  %1942 = vrot.lane.b32.xlu0 %v1835, 16
  %v1943 = vpop.permute.xlu0 %1942
  %1944 = vrot.lane.b32.xlu0 %v1834, 16
  %v1945 = vpop.permute.xlu0 %1944
  %1946 = vrot.lane.b32.xlu0 %v1836, 16
  %v1947 = vpop.permute.xlu0 %1946
  %1948 = vrot.lane.b32.xlu0 %v1852, 16
  %v1949 = vpop.permute.xlu0 %1948
  %1950 = vrot.lane.b32.xlu0 %v1851, 16
  %v1951 = vpop.permute.xlu0 %1950
  %1952 = vrot.lane.b32.xlu0 %v1853, 16
  %v1953 = vpop.permute.xlu0 %1952
  %1954 = vrot.lane.b32.xlu0 %v1869, 16
  %v1955 = vpop.permute.xlu0 %1954
  %1956 = vrot.lane.b32.xlu0 %v1868, 16
  %v1957 = vpop.permute.xlu0 %1956
  %1958 = vrot.lane.b32.xlu0 %v1870, 16
  %v1959 = vpop.permute.xlu0 %1958
  %1969 = vrot.lane.b32.xlu0 %v1827, 24
  %v1970 = vpop.permute.xlu0 %1969
  %1971 = vrot.lane.b32.xlu0 %v1835, 24
  %v1972 = vpop.permute.xlu0 %1971
  %1973 = vrot.lane.b32.xlu0 %v1834, 24
  %v1974 = vpop.permute.xlu0 %1973
  %1975 = vrot.lane.b32.xlu0 %v1844, 24
  %v1976 = vpop.permute.xlu0 %1975
  %1977 = vrot.lane.b32.xlu0 %v1852, 24
  %v1978 = vpop.permute.xlu0 %1977
  %1979 = vrot.lane.b32.xlu0 %v1851, 24
  %v1980 = vpop.permute.xlu0 %1979
  %1981 = vrot.lane.b32.xlu0 %v1861, 24
  %v1982 = vpop.permute.xlu0 %1981
  %1983 = vrot.lane.b32.xlu0 %v1869, 24
  %v1984 = vpop.permute.xlu0 %1983
  %1985 = vrot.lane.b32.xlu0 %v1868, 24
  %v1986 = vpop.permute.xlu0 %1985
  %1987 = vrot.lane.b32.xlu0 %v1878, 24
  %v1988 = vpop.permute.xlu0 %1987
  %1989 = vrot.lane.b32.xlu0 %v1886, 24
  %v1990 = vpop.permute.xlu0 %1989
  %1991 = vrot.lane.b32.xlu0 %v1885, 24
  %v1992 = vpop.permute.xlu0 %1991
  %2005 = vrot.lane.b32.xlu0 %v1827, 32
  %v2006 = vpop.permute.xlu0 %2005
  %2007 = vrot.lane.b32.xlu0 %v1835, 32
  %v2008 = vpop.permute.xlu0 %2007
  %2009 = vrot.lane.b32.xlu0 %v1834, 32
  %v2010 = vpop.permute.xlu0 %2009
  %2011 = vrot.lane.b32.xlu0 %v1836, 32
  %v2012 = vpop.permute.xlu0 %2011
  %2013 = vrot.lane.b32.xlu0 %v1844, 32
  %v2014 = vpop.permute.xlu0 %2013
  %2015 = vrot.lane.b32.xlu0 %v1852, 32
  %v2016 = vpop.permute.xlu0 %2015
  %2017 = vrot.lane.b32.xlu0 %v1851, 32
  %v2018 = vpop.permute.xlu0 %2017
  %2019 = vrot.lane.b32.xlu0 %v1853, 32
  %v2020 = vpop.permute.xlu0 %2019
  %2021 = vrot.lane.b32.xlu0 %v1861, 32
  %v2022 = vpop.permute.xlu0 %2021
  %2023 = vrot.lane.b32.xlu0 %v1869, 32
  %v2024 = vpop.permute.xlu0 %2023
  %2025 = vrot.lane.b32.xlu0 %v1868, 32
  %v2026 = vpop.permute.xlu0 %2025
  %2027 = vrot.lane.b32.xlu0 %v1870, 32
  %v2028 = vpop.permute.xlu0 %2027
  %2029 = vrot.lane.b32.xlu0 %v1878, 32
  %v2030 = vpop.permute.xlu0 %2029
  %2031 = vrot.lane.b32.xlu0 %v1886, 32
  %v2032 = vpop.permute.xlu0 %2031
  %2033 = vrot.lane.b32.xlu0 %v1885, 32
  %v2034 = vpop.permute.xlu0 %2033
  %2035 = vrot.lane.b32.xlu0 %v1887, 32
  %v2036 = vpop.permute.xlu0 %2035
  %2053 = vrot.lane.b32.xlu0 %v1835, 40
  %v2054 = vpop.permute.xlu0 %2053
  %2055 = vrot.lane.b32.xlu0 %v1834, 40
  %v2056 = vpop.permute.xlu0 %2055
  %2057 = vrot.lane.b32.xlu0 %v1836, 40
  %v2058 = vpop.permute.xlu0 %2057
  %2059 = vrot.lane.b32.xlu0 %v1852, 40
  %v2060 = vpop.permute.xlu0 %2059
  %2061 = vrot.lane.b32.xlu0 %v1851, 40
  %v2062 = vpop.permute.xlu0 %2061
  %2063 = vrot.lane.b32.xlu0 %v1853, 40
  %v2064 = vpop.permute.xlu0 %2063
  %2065 = vrot.lane.b32.xlu0 %v1869, 40
  %v2066 = vpop.permute.xlu0 %2065
  %2067 = vrot.lane.b32.xlu0 %v1868, 40
  %v2068 = vpop.permute.xlu0 %2067
  %2069 = vrot.lane.b32.xlu0 %v1870, 40
  %v2070 = vpop.permute.xlu0 %2069
  %2071 = vrot.lane.b32.xlu0 %v1886, 40
  %v2072 = vpop.permute.xlu0 %2071
  %2073 = vrot.lane.b32.xlu0 %v1885, 40
  %v2074 = vpop.permute.xlu0 %2073
  %2075 = vrot.lane.b32.xlu0 %v1887, 40
  %v2076 = vpop.permute.xlu0 %2075
  %2089 = vrot.lane.b32.xlu0 %v1844, 48
  %v2090 = vpop.permute.xlu0 %2089
  %2091 = vrot.lane.b32.xlu0 %v1852, 48
  %v2092 = vpop.permute.xlu0 %2091
  %2093 = vrot.lane.b32.xlu0 %v1851, 48
  %v2094 = vpop.permute.xlu0 %2093
  %2095 = vrot.lane.b32.xlu0 %v1861, 48
  %v2096 = vpop.permute.xlu0 %2095
  %2097 = vrot.lane.b32.xlu0 %v1869, 48
  %v2098 = vpop.permute.xlu0 %2097
  %2099 = vrot.lane.b32.xlu0 %v1868, 48
  %v2100 = vpop.permute.xlu0 %2099
  %2101 = vrot.lane.b32.xlu0 %v1878, 48
  %v2102 = vpop.permute.xlu0 %2101
  %2103 = vrot.lane.b32.xlu0 %v1886, 48
  %v2104 = vpop.permute.xlu0 %2103
  %2105 = vrot.lane.b32.xlu0 %v1885, 48
  %v2106 = vpop.permute.xlu0 %2105
  %2116 = vrot.lane.b32.xlu0 %v1844, 56
  %v2117 = vpop.permute.xlu0 %2116
  %2118 = vrot.lane.b32.xlu0 %v1852, 56
  %v2119 = vpop.permute.xlu0 %2118
  %2120 = vrot.lane.b32.xlu0 %v1851, 56
  %v2121 = vpop.permute.xlu0 %2120
  %2122 = vrot.lane.b32.xlu0 %v1853, 56
  %v2123 = vpop.permute.xlu0 %2122
  %2124 = vrot.lane.b32.xlu0 %v1861, 56
  %v2125 = vpop.permute.xlu0 %2124
  %2126 = vrot.lane.b32.xlu0 %v1869, 56
  %v2127 = vpop.permute.xlu0 %2126
  %2128 = vrot.lane.b32.xlu0 %v1868, 56
  %v2129 = vpop.permute.xlu0 %2128
  %2130 = vrot.lane.b32.xlu0 %v1870, 56
  %v2131 = vpop.permute.xlu0 %2130
  %2132 = vrot.lane.b32.xlu0 %v1878, 56
  %v2133 = vpop.permute.xlu0 %2132
  %2134 = vrot.lane.b32.xlu0 %v1886, 56
  %v2135 = vpop.permute.xlu0 %2134
  %2136 = vrot.lane.b32.xlu0 %v1885, 56
  %v2137 = vpop.permute.xlu0 %2136
  %2138 = vrot.lane.b32.xlu0 %v1887, 56
  %v2139 = vpop.permute.xlu0 %2138
  %2152 = vrot.lane.b32.xlu0 %v1852, 64
  %v2153 = vpop.permute.xlu0 %2152
  %2154 = vrot.lane.b32.xlu0 %v1851, 64
  %v2155 = vpop.permute.xlu0 %2154
  %2156 = vrot.lane.b32.xlu0 %v1853, 64
  %v2157 = vpop.permute.xlu0 %2156
  %2158 = vrot.lane.b32.xlu0 %v1869, 64
  %v2159 = vpop.permute.xlu0 %2158
  %2160 = vrot.lane.b32.xlu0 %v1868, 64
  %v2161 = vpop.permute.xlu0 %2160
  %2162 = vrot.lane.b32.xlu0 %v1870, 64
  %v2163 = vpop.permute.xlu0 %2162
  %2164 = vrot.lane.b32.xlu0 %v1886, 64
  %v2165 = vpop.permute.xlu0 %2164
  %2166 = vrot.lane.b32.xlu0 %v1885, 64
  %v2167 = vpop.permute.xlu0 %2166
  %2168 = vrot.lane.b32.xlu0 %v1887, 64
  %v2169 = vpop.permute.xlu0 %2168
  %v2179 = vsel %vm63, 0.0, %v1907
  %v2180 = vsel %vm63, %v1827, %v1909
  %v2181 = vsel %vm63, %v1835, %v1911
  %v2182 = vsel %vm63, %v1834, %v1913
  %v2183 = vsel %vm63, 0.0, %v1915
  %v2184 = vsel %vm63, %v1844, %v1917
  %v2185 = vsel %vm63, %v1852, %v1919
  %v2186 = vsel %vm63, %v1851, %v1921
  %v2187 = vsel %vm63, 0.0, %v1923
  %v2188 = vsel %vm63, %v1861, %v1925
  %v2189 = vsel %vm63, %v1869, %v1927
  %v2190 = vsel %vm63, %v1868, %v1929
  %v2191 = vsel %vm862, %v2179, %v1943
  %v2192 = vsel %vm862, %v2180, %v1945
  %v2193 = vsel %vm862, %v2181, %v1947
  %v2194 = vsel %vm862, %v2182, %v603
  %v2195 = vsel %vm862, %v2183, %v1949
  %v2196 = vsel %vm862, %v2184, %v1951
  %v2197 = vsel %vm862, %v2185, %v1953
  %v2198 = vsel %vm862, %v2186, %v603
  %v2199 = vsel %vm862, %v2187, %v1955
  %v2200 = vsel %vm862, %v2188, %v1957
  %v2201 = vsel %vm862, %v2189, %v1959
  %v2202 = vsel %vm862, %v2190, %v603
  %v2203 = vsel %vm876, %v863, %v1970
  %v2204 = vsel %vm876, %v863, %v1972
  %v2205 = vsel %vm876, %v863, %v1974
  %v2206 = vsel %vm876, %v2191, %v633
  %v2207 = vsel %vm876, %v2192, %v1976
  %v2208 = vsel %vm876, %v2193, %v1978
  %v2209 = vsel %vm876, %v2194, %v1980
  %v2210 = vsel %vm876, %v2195, %v633
  %v2211 = vsel %vm876, %v2196, %v1982
  %v2212 = vsel %vm876, %v2197, %v1984
  %v2213 = vsel %vm876, %v2198, %v1986
  %v2214 = vsel %vm876, %v2199, %v633
  %v2215 = vsel %vm876, %v2200, %v1988
  %v2216 = vsel %vm876, %v2201, %v1990
  %v2217 = vsel %vm876, %v2202, %v1992
  %v2218 = vsel %vm893, %v877, %v2006
  %v2219 = vsel %vm893, %v2203, %v2008
  %v2220 = vsel %vm893, %v2204, %v2010
  %v2221 = vsel %vm893, %v2205, %v2012
  %v2222 = vsel %vm893, %v2206, %v2014
  %v2223 = vsel %vm893, %v2207, %v2016
  %v2224 = vsel %vm893, %v2208, %v2018
  %v2225 = vsel %vm893, %v2209, %v2020
  %v2226 = vsel %vm893, %v2210, %v2022
  %v2227 = vsel %vm893, %v2211, %v2024
  %v2228 = vsel %vm893, %v2212, %v2026
  %v2229 = vsel %vm893, %v2213, %v2028
  %v2230 = vsel %vm893, %v2214, %v2030
  %v2231 = vsel %vm893, %v2215, %v2032
  %v2232 = vsel %vm893, %v2216, %v2034
  %v2233 = vsel %vm893, %v2217, %v2036
  %v2234 = vsel %vm910, %v2218, %v2054
  %v2235 = vsel %vm910, %v2219, %v2056
  %v2236 = vsel %vm910, %v2220, %v2058
  %v2237 = vsel %vm910, %v2221, %v718
  %v2238 = vsel %vm910, %v2222, %v2060
  %v2239 = vsel %vm910, %v2223, %v2062
  %v2240 = vsel %vm910, %v2224, %v2064
  %v2241 = vsel %vm910, %v2225, %v718
  %v2242 = vsel %vm910, %v2226, %v2066
  %v2243 = vsel %vm910, %v2227, %v2068
  %v2244 = vsel %vm910, %v2228, %v2070
  %v2245 = vsel %vm910, %v2229, %v718
  %v2246 = vsel %vm910, %v2230, %v2072
  %v2247 = vsel %vm910, %v2231, %v2074
  %v2248 = vsel %vm910, %v2232, %v2076
  %v2249 = vsel %vm910, %v2233, %v718
  %v2250 = vsel %vm927, %v2234, %v751
  %v2251 = vsel %vm927, %v2235, %v2090
  %v2252 = vsel %vm927, %v2236, %v2092
  %v2253 = vsel %vm927, %v2237, %v2094
  %v2254 = vsel %vm927, %v2238, %v751
  %v2255 = vsel %vm927, %v2239, %v2096
  %v2256 = vsel %vm927, %v2240, %v2098
  %v2257 = vsel %vm927, %v2241, %v2100
  %v2258 = vsel %vm927, %v2242, %v751
  %v2259 = vsel %vm927, %v2243, %v2102
  %v2260 = vsel %vm927, %v2244, %v2104
  %v2261 = vsel %vm927, %v2245, %v2106
  %v2262 = vsel %vm927, %v2246, %v751
  %v2263 = vsel %vm927, %v2247, %v751
  %v2264 = vsel %vm927, %v2248, %v751
  %v2265 = vsel %vm927, %v2249, %v751
  %v2266 = vsel %vm944, %v2250, %v2117
  %v2267 = vsel %vm944, %v2251, %v2119
  %v2268 = vsel %vm944, %v2252, %v2121
  %v2269 = vsel %vm944, %v2253, %v2123
  %v2270 = vsel %vm944, %v2254, %v2125
  %v2271 = vsel %vm944, %v2255, %v2127
  %v2272 = vsel %vm944, %v2256, %v2129
  %v2273 = vsel %vm944, %v2257, %v2131
  %v2274 = vsel %vm944, %v2258, %v2133
  %v2275 = vsel %vm944, %v2259, %v2135
  %v2276 = vsel %vm944, %v2260, %v2137
  %v2277 = vsel %vm944, %v2261, %v2139
  %v2278 = vsel %vm944, %v2262, %v805
  %v2279 = vsel %vm944, %v2263, %v805
  %v2280 = vsel %vm944, %v2264, %v805
  %v2281 = vsel %vm944, %v2265, %v805
  %v2282 = vsel %vm961, %v2266, %v2153
  %v2283 = vsel %vm961, %v2267, %v2155
  %v2284 = vsel %vm961, %v2268, %v2157
  %v2285 = vsel %vm961, %v2269, %v826
  %v2286 = vsel %vm961, %v2270, %v2159
  %v2287 = vsel %vm961, %v2271, %v2161
  %v2288 = vsel %vm961, %v2272, %v2163
  %v2289 = vsel %vm961, %v2273, %v826
  %v2290 = vsel %vm961, %v2274, %v2165
  %v2291 = vsel %vm961, %v2275, %v2167
  %v2292 = vsel %vm961, %v2276, %v2169
  %v2293 = vsel %vm961, %v2277, %v826
  %v2294 = vsel %vm961, %v2278, %v826
  %v2295 = vsel %vm961, %v2279, %v826
  %v2296 = vsel %vm961, %v2280, %v826
  %v2297 = vsel %vm961, %v2281, %v826
  %v2314 = vcombine.low %v2282, %v2283
  %v2315 = vcombine.low %v2284, %v2285
  %v2317 = vunpack.c.l.s4 1983009808
  %v2318 = vunpack.c.0.s8 %v2317
  %v2319 = vlaneseq
  %v2320 = vshrl.u32 %v2319, 7
  %v2321 = vsub.s32 %v2318, %v2320
  %v2322 = vrot.slane %v2314, %v2321
  %v2324 = vunpack.c.l.s4 1983009808
  %v2325 = vunpack.c.0.s8 %v2324
  %v2326 = vlaneseq
  %v2327 = vshrl.u32 %v2326, 7
  %v2328 = vsub.s32 %v2325, %v2327
  %v2329 = vrot.slane %v2315, %v2328
  %v2330 = vcombine.low %v2322, %v2329
  %v2331 = vcombine.low %v2286, %v2287
  %v2332 = vcombine.low %v2288, %v2289
  %v2334 = vunpack.c.l.s4 1983009808
  %v2335 = vunpack.c.0.s8 %v2334
  %v2336 = vlaneseq
  %v2337 = vshrl.u32 %v2336, 7
  %v2338 = vsub.s32 %v2335, %v2337
  %v2339 = vrot.slane %v2331, %v2338
  %v2341 = vunpack.c.l.s4 1983009808
  %v2342 = vunpack.c.0.s8 %v2341
  %v2343 = vlaneseq
  %v2344 = vshrl.u32 %v2343, 7
  %v2345 = vsub.s32 %v2342, %v2344
  %v2346 = vrot.slane %v2332, %v2345
  %v2347 = vcombine.low %v2339, %v2346
  %v2348 = vcombine.low %v2290, %v2291
  %v2349 = vcombine.low %v2292, %v2293
  %v2351 = vunpack.c.l.s4 1983009808
  %v2352 = vunpack.c.0.s8 %v2351
  %v2353 = vlaneseq
  %v2354 = vshrl.u32 %v2353, 7
  %v2355 = vsub.s32 %v2352, %v2354
  %v2356 = vrot.slane %v2348, %v2355
  %v2358 = vunpack.c.l.s4 1983009808
  %v2359 = vunpack.c.0.s8 %v2358
  %v2360 = vlaneseq
  %v2361 = vshrl.u32 %v2360, 7
  %v2362 = vsub.s32 %v2359, %v2361
  %v2363 = vrot.slane %v2349, %v2362
  %v2364 = vcombine.low %v2356, %v2363
  %v2365 = vcombine.low %v2294, %v2295
  %v2366 = vcombine.low %v2296, %v2297
  %v2368 = vunpack.c.l.s4 1983009808
  %v2369 = vunpack.c.0.s8 %v2368
  %v2370 = vlaneseq
  %v2371 = vshrl.u32 %v2370, 7
  %v2372 = vsub.s32 %v2369, %v2371
  %v2373 = vrot.slane %v2365, %v2372
  %v2375 = vunpack.c.l.s4 1983009808
  %v2376 = vunpack.c.0.s8 %v2375
  %v2377 = vlaneseq
  %v2378 = vshrl.u32 %v2377, 7
  %v2379 = vsub.s32 %v2376, %v2378
  %v2380 = vrot.slane %v2366, %v2379
  %v2381 = vcombine.low %v2373, %v2380
  %v2382 = vsel %vm1062, %v2330, 0
  %v2384 = vsel %vm1062, %v2347, 0
  %v2386 = vsel %vm1062, %v2364, 0
  %v2388 = vsel %vm1062, %v2381, 0
  %2390 = vmatprep.subr.mxu0 0.0
  %2391 = vmatpush1.msra.mxu0 0.0
  %2392 = vmatprep.subr.mxu0 0.0
  %2393 = vmatpush1.msra.mxu0 0.0
  %2394 = vmatprep.subr.mxu0 0.0
  %2395 = vmatpush1.msra.mxu0 0.0
  %2396 = vmatprep.subr.mxu0 0.0
  %2397 = vmatpush1.msra.mxu0 0.0
  %2398 = vmatprep.subr.mxu0 0.0
  %2399 = vmatpush1.msra.mxu0 0.0
  %2400 = vmatprep.subr.mxu0 0.0
  %2401 = vmatpush1.msra.mxu0 0.0
  %2402 = vmatprep.subr.mxu0 0.0
  %2403 = vmatpush1.msra.mxu0 0.0
  %2404 = vmatprep.subr.mxu0 0.0
  %v2405 = vand.u32 %v1905, 4294901760
  %2406 = vmatpush1.msra.mxu0 %v2405
  %2407 = vmatprep.subr.mxu0 0.0
  %v2408 = vand.u32 %v1904, 4294901760
  %2409 = vmatpush1.msra.mxu0 %v2408
  %2410 = vmatprep.subr.mxu0 0.0
  %v2411 = vand.u32 %v1903, 4294901760
  %2412 = vmatpush1.msra.mxu0 %v2411
  %2413 = vmatprep.subr.mxu0 0.0
  %v2414 = vand.u32 %v1902, 4294901760
  %2415 = vmatpush1.msra.mxu0 %v2414
  %2416 = vmatprep.subr.mxu0 0.0
  %v2417 = vand.u32 %v1901, 4294901760
  %2418 = vmatpush1.msra.mxu0 %v2417
  %2419 = vmatprep.subr.mxu0 0.0
  %v2420 = vand.u32 %v1900, 4294901760
  %2421 = vmatpush1.msra.mxu0 %v2420
  %2422 = vmatprep.subr.mxu0 0.0
  %v2423 = vand.u32 %v1899, 4294901760
  %2424 = vmatpush1.msra.mxu0 %v2423
  %2425 = vmatprep.subr.mxu0 0.0
  %v2426 = vand.u32 %v1898, 4294901760
  %2427 = vmatpush1.msra.mxu0 %v2426
  %2428 = vmatprep.subr.mxu0 0.0
  %v2429 = vand.u32 %v1897, 4294901760
  %2430 = vmatpush1.msra.mxu0 %v2429
  %2431 = vmatprep.subr.mxu0 0.0
  %2432 = vmatpush2.msra.mxu0 0.0
  %2433 = vmatprep.subr.mxu0 0.0
  %2434 = vmatpush2.msra.mxu0 0.0
  %2435 = vmatprep.subr.mxu0 0.0
  %2436 = vmatpush2.msra.mxu0 0.0
  %2437 = vmatprep.subr.mxu0 0.0
  %2438 = vmatpush2.msra.mxu0 0.0
  %2439 = vmatprep.subr.mxu0 0.0
  %2440 = vmatpush2.msra.mxu0 0.0
  %2441 = vmatprep.subr.mxu0 0.0
  %2442 = vmatpush2.msra.mxu0 0.0
  %2443 = vmatprep.subr.mxu0 0.0
  %2444 = vmatpush2.msra.mxu0 0.0
  %2445 = vmatprep.subr.mxu0 0.0
  %2446 = vmatpush2.msra.mxu0 0.0
  %2447 = vmatprep.subr.mxu0 0.0
  %2448 = vmatpush2.msra.mxu0 0.0
  %2449 = vmatprep.subr.mxu0 0.0
  %2450 = vmatpush2.msra.mxu0 0.0
  %2451 = vmatprep.subr.mxu0 0.0
  %2452 = vmatpush2.msra.mxu0 0.0
  %2453 = vmatprep.subr.mxu0 0.0
  %2454 = vmatpush2.msra.mxu0 0.0
  %2455 = vmatprep.subr.mxu0 0.0
  %2456 = vmatpush2.msra.mxu0 0.0
  %2457 = vmatprep.subr.mxu0 0.0
  %2458 = vmatpush2.msra.mxu0 0.0
  %2459 = vmatprep.subr.mxu0 0.0
  %2460 = vmatpush2.msra.mxu0 0.0
  %2461 = vmatprep.subr.mxu0 0.0
  %2462 = vmatpush2.msra.mxu0 0.0
  %2463 = vmatprep.mubr.f32.mxu0 0.0
  %v2464 = vand.u32 %v2382, 4294901760
  %v2465 = vsub.f32 %v2382, %v2464
  %v2466 = vand.u32 %v2465, 4294901760
  %v2467 = vsub.f32 %v2465, %v2466
  %v2468 = vand.u32 %v2467, 4294901760
  %2469 = vmatmul.mubr.f32.gmra.mxu0 %v2468
  %v2470 = vpop.f32.mrf.mxu0
  %v2471 = vadd.f32 0.0, %v2470
  %v2472 = vpop.f32.mrf.mxu0
  %2473 = vmatprep.mubr.f32.mxu0 0.0
  %v2474 = vand.u32 %v2384, 4294901760
  %v2475 = vsub.f32 %v2384, %v2474
  %v2476 = vand.u32 %v2475, 4294901760
  %v2477 = vsub.f32 %v2475, %v2476
  %v2478 = vand.u32 %v2477, 4294901760
  %2479 = vmatmul.mubr.f32.gmra.mxu0 %v2478
  %v2480 = vpop.f32.mrf.mxu0
  %v2481 = vadd.f32 0.0, %v2480
  %v2482 = vpop.f32.mrf.mxu0
  %2483 = vmatprep.mubr.f32.mxu0 0.0
  %v2484 = vand.u32 %v2386, 4294901760
  %v2485 = vsub.f32 %v2386, %v2484
  %v2486 = vand.u32 %v2485, 4294901760
  %v2487 = vsub.f32 %v2485, %v2486
  %v2488 = vand.u32 %v2487, 4294901760
  %2489 = vmatmul.mubr.f32.gmra.mxu0 %v2488
  %v2490 = vpop.f32.mrf.mxu0
  %v2491 = vadd.f32 0.0, %v2490
  %v2492 = vpop.f32.mrf.mxu0
  %2493 = vmatprep.mubr.f32.mxu0 0.0
  %v2494 = vand.u32 %v2388, 4294901760
  %v2495 = vsub.f32 %v2388, %v2494
  %v2496 = vand.u32 %v2495, 4294901760
  %v2497 = vsub.f32 %v2495, %v2496
  %v2498 = vand.u32 %v2497, 4294901760
  %2499 = vmatmul.mubr.f32.gmra.mxu0 %v2498
  %v2500 = vpop.f32.mrf.mxu0
  %v2501 = vadd.f32 0.0, %v2500
  %v2502 = vpop.f32.mrf.mxu0
  %2503 = vdwg.mxu0
  %2504 = vmatprep.subr.mxu0 0.0
  %2505 = vmatpush1.msra.mxu0 0.0
  %2506 = vmatprep.subr.mxu0 0.0
  %2507 = vmatpush1.msra.mxu0 0.0
  %2508 = vmatprep.subr.mxu0 0.0
  %2509 = vmatpush1.msra.mxu0 0.0
  %2510 = vmatprep.subr.mxu0 0.0
  %2511 = vmatpush1.msra.mxu0 0.0
  %2512 = vmatprep.subr.mxu0 0.0
  %2513 = vmatpush1.msra.mxu0 0.0
  %2514 = vmatprep.subr.mxu0 0.0
  %2515 = vmatpush1.msra.mxu0 0.0
  %2516 = vmatprep.subr.mxu0 0.0
  %2517 = vmatpush1.msra.mxu0 0.0
  %2518 = vmatprep.subr.mxu0 0.0
  %v2519 = vand.u32 %v1905, 4294901760
  %v2520 = vsub.f32 %v1905, %v2519
  %v2521 = vand.u32 %v2520, 4294901760
  %v2522 = vsub.f32 %v2520, %v2521
  %v2523 = vand.u32 %v2522, 4294901760
  %2524 = vmatpush1.msra.mxu0 %v2523
  %2525 = vmatprep.subr.mxu0 0.0
  %v2526 = vand.u32 %v1904, 4294901760
  %v2527 = vsub.f32 %v1904, %v2526
  %v2528 = vand.u32 %v2527, 4294901760
  %v2529 = vsub.f32 %v2527, %v2528
  %v2530 = vand.u32 %v2529, 4294901760
  %2531 = vmatpush1.msra.mxu0 %v2530
  %2532 = vmatprep.subr.mxu0 0.0
  %v2533 = vand.u32 %v1903, 4294901760
  %v2534 = vsub.f32 %v1903, %v2533
  %v2535 = vand.u32 %v2534, 4294901760
  %v2536 = vsub.f32 %v2534, %v2535
  %v2537 = vand.u32 %v2536, 4294901760
  %2538 = vmatpush1.msra.mxu0 %v2537
  %2539 = vmatprep.subr.mxu0 0.0
  %v2540 = vand.u32 %v1902, 4294901760
  %v2541 = vsub.f32 %v1902, %v2540
  %v2542 = vand.u32 %v2541, 4294901760
  %v2543 = vsub.f32 %v2541, %v2542
  %v2544 = vand.u32 %v2543, 4294901760
  %2545 = vmatpush1.msra.mxu0 %v2544
  %2546 = vmatprep.subr.mxu0 0.0
  %v2547 = vand.u32 %v1901, 4294901760
  %v2548 = vsub.f32 %v1901, %v2547
  %v2549 = vand.u32 %v2548, 4294901760
  %v2550 = vsub.f32 %v2548, %v2549
  %v2551 = vand.u32 %v2550, 4294901760
  %2552 = vmatpush1.msra.mxu0 %v2551
  %2553 = vmatprep.subr.mxu0 0.0
  %v2554 = vand.u32 %v1900, 4294901760
  %v2555 = vsub.f32 %v1900, %v2554
  %v2556 = vand.u32 %v2555, 4294901760
  %v2557 = vsub.f32 %v2555, %v2556
  %v2558 = vand.u32 %v2557, 4294901760
  %2559 = vmatpush1.msra.mxu0 %v2558
  %2560 = vmatprep.subr.mxu0 0.0
  %v2561 = vand.u32 %v1899, 4294901760
  %v2562 = vsub.f32 %v1899, %v2561
  %v2563 = vand.u32 %v2562, 4294901760
  %v2564 = vsub.f32 %v2562, %v2563
  %v2565 = vand.u32 %v2564, 4294901760
  %2566 = vmatpush1.msra.mxu0 %v2565
  %2567 = vmatprep.subr.mxu0 0.0
  %v2568 = vand.u32 %v1898, 4294901760
  %v2569 = vsub.f32 %v1898, %v2568
  %v2570 = vand.u32 %v2569, 4294901760
  %v2571 = vsub.f32 %v2569, %v2570
  %v2572 = vand.u32 %v2571, 4294901760
  %2573 = vmatpush1.msra.mxu0 %v2572
  %2574 = vmatprep.subr.mxu0 0.0
  %v2575 = vand.u32 %v1897, 4294901760
  %v2576 = vsub.f32 %v1897, %v2575
  %v2577 = vand.u32 %v2576, 4294901760
  %v2578 = vsub.f32 %v2576, %v2577
  %v2579 = vand.u32 %v2578, 4294901760
  %2580 = vmatpush1.msra.mxu0 %v2579
  %2581 = vmatprep.subr.mxu0 0.0
  %2582 = vmatpush2.msra.mxu0 0.0
  %2583 = vmatprep.subr.mxu0 0.0
  %2584 = vmatpush2.msra.mxu0 0.0
  %2585 = vmatprep.subr.mxu0 0.0
  %2586 = vmatpush2.msra.mxu0 0.0
  %2587 = vmatprep.subr.mxu0 0.0
  %2588 = vmatpush2.msra.mxu0 0.0
  %2589 = vmatprep.subr.mxu0 0.0
  %2590 = vmatpush2.msra.mxu0 0.0
  %2591 = vmatprep.subr.mxu0 0.0
  %2592 = vmatpush2.msra.mxu0 0.0
  %2593 = vmatprep.subr.mxu0 0.0
  %2594 = vmatpush2.msra.mxu0 0.0
  %2595 = vmatprep.subr.mxu0 0.0
  %2596 = vmatpush2.msra.mxu0 0.0
  %2597 = vmatprep.subr.mxu0 0.0
  %2598 = vmatpush2.msra.mxu0 0.0
  %2599 = vmatprep.subr.mxu0 0.0
  %2600 = vmatpush2.msra.mxu0 0.0
  %2601 = vmatprep.subr.mxu0 0.0
  %2602 = vmatpush2.msra.mxu0 0.0
  %2603 = vmatprep.subr.mxu0 0.0
  %2604 = vmatpush2.msra.mxu0 0.0
  %2605 = vmatprep.subr.mxu0 0.0
  %2606 = vmatpush2.msra.mxu0 0.0
  %2607 = vmatprep.subr.mxu0 0.0
  %2608 = vmatpush2.msra.mxu0 0.0
  %2609 = vmatprep.subr.mxu0 0.0
  %2610 = vmatpush2.msra.mxu0 0.0
  %2611 = vmatprep.subr.mxu0 0.0
  %2612 = vmatpush2.msra.mxu0 0.0
  %2613 = vmatprep.mubr.f32.mxu0 0.0
  %v2614 = vand.u32 %v2382, 4294901760
  %2615 = vmatmul.mubr.f32.gmra.mxu0 %v2614
  %v2616 = vpop.f32.mrf.mxu0
  %v2617 = vadd.f32 %v2471, %v2616
  %v2618 = vpop.f32.mrf.mxu0
  %2619 = vmatprep.mubr.f32.mxu0 0.0
  %v2620 = vand.u32 %v2384, 4294901760
  %2621 = vmatmul.mubr.f32.gmra.mxu0 %v2620
  %v2622 = vpop.f32.mrf.mxu0
  %v2623 = vadd.f32 %v2481, %v2622
  %v2624 = vpop.f32.mrf.mxu0
  %2625 = vmatprep.mubr.f32.mxu0 0.0
  %v2626 = vand.u32 %v2386, 4294901760
  %2627 = vmatmul.mubr.f32.gmra.mxu0 %v2626
  %v2628 = vpop.f32.mrf.mxu0
  %v2629 = vadd.f32 %v2491, %v2628
  %v2630 = vpop.f32.mrf.mxu0
  %2631 = vmatprep.mubr.f32.mxu0 0.0
  %v2632 = vand.u32 %v2388, 4294901760
  %2633 = vmatmul.mubr.f32.gmra.mxu0 %v2632
  %v2634 = vpop.f32.mrf.mxu0
  %v2635 = vadd.f32 %v2501, %v2634
  %v2636 = vpop.f32.mrf.mxu0
  %2637 = vdwg.mxu0
  %2638 = vmatprep.subr.mxu0 0.0
  %2639 = vmatpush1.msra.mxu0 0.0
  %2640 = vmatprep.subr.mxu0 0.0
  %2641 = vmatpush1.msra.mxu0 0.0
  %2642 = vmatprep.subr.mxu0 0.0
  %2643 = vmatpush1.msra.mxu0 0.0
  %2644 = vmatprep.subr.mxu0 0.0
  %2645 = vmatpush1.msra.mxu0 0.0
  %2646 = vmatprep.subr.mxu0 0.0
  %2647 = vmatpush1.msra.mxu0 0.0
  %2648 = vmatprep.subr.mxu0 0.0
  %2649 = vmatpush1.msra.mxu0 0.0
  %2650 = vmatprep.subr.mxu0 0.0
  %2651 = vmatpush1.msra.mxu0 0.0
  %2652 = vmatprep.subr.mxu0 0.0
  %v2653 = vand.u32 %v1905, 4294901760
  %v2654 = vsub.f32 %v1905, %v2653
  %2655 = vmatpush1.msra.mxu0 %v2654
  %2656 = vmatprep.subr.mxu0 0.0
  %v2657 = vand.u32 %v1904, 4294901760
  %v2658 = vsub.f32 %v1904, %v2657
  %2659 = vmatpush1.msra.mxu0 %v2658
  %2660 = vmatprep.subr.mxu0 0.0
  %v2661 = vand.u32 %v1903, 4294901760
  %v2662 = vsub.f32 %v1903, %v2661
  %2663 = vmatpush1.msra.mxu0 %v2662
  %2664 = vmatprep.subr.mxu0 0.0
  %v2665 = vand.u32 %v1902, 4294901760
  %v2666 = vsub.f32 %v1902, %v2665
  %2667 = vmatpush1.msra.mxu0 %v2666
  %2668 = vmatprep.subr.mxu0 0.0
  %v2669 = vand.u32 %v1901, 4294901760
  %v2670 = vsub.f32 %v1901, %v2669
  %2671 = vmatpush1.msra.mxu0 %v2670
  %2672 = vmatprep.subr.mxu0 0.0
  %v2673 = vand.u32 %v1900, 4294901760
  %v2674 = vsub.f32 %v1900, %v2673
  %2675 = vmatpush1.msra.mxu0 %v2674
  %2676 = vmatprep.subr.mxu0 0.0
  %v2677 = vand.u32 %v1899, 4294901760
  %v2678 = vsub.f32 %v1899, %v2677
  %2679 = vmatpush1.msra.mxu0 %v2678
  %2680 = vmatprep.subr.mxu0 0.0
  %v2681 = vand.u32 %v1898, 4294901760
  %v2682 = vsub.f32 %v1898, %v2681
  %2683 = vmatpush1.msra.mxu0 %v2682
  %2684 = vmatprep.subr.mxu0 0.0
  %v2685 = vand.u32 %v1897, 4294901760
  %v2686 = vsub.f32 %v1897, %v2685
  %2687 = vmatpush1.msra.mxu0 %v2686
  %2688 = vmatprep.subr.mxu0 0.0
  %2689 = vmatpush2.msra.mxu0 0.0
  %2690 = vmatprep.subr.mxu0 0.0
  %2691 = vmatpush2.msra.mxu0 0.0
  %2692 = vmatprep.subr.mxu0 0.0
  %2693 = vmatpush2.msra.mxu0 0.0
  %2694 = vmatprep.subr.mxu0 0.0
  %2695 = vmatpush2.msra.mxu0 0.0
  %2696 = vmatprep.subr.mxu0 0.0
  %2697 = vmatpush2.msra.mxu0 0.0
  %2698 = vmatprep.subr.mxu0 0.0
  %2699 = vmatpush2.msra.mxu0 0.0
  %2700 = vmatprep.subr.mxu0 0.0
  %2701 = vmatpush2.msra.mxu0 0.0
  %2702 = vmatprep.subr.mxu0 0.0
  %2703 = vmatpush2.msra.mxu0 0.0
  %2704 = vmatprep.subr.mxu0 0.0
  %2705 = vmatpush2.msra.mxu0 0.0
  %2706 = vmatprep.subr.mxu0 0.0
  %2707 = vmatpush2.msra.mxu0 0.0
  %2708 = vmatprep.subr.mxu0 0.0
  %2709 = vmatpush2.msra.mxu0 0.0
  %2710 = vmatprep.subr.mxu0 0.0
  %2711 = vmatpush2.msra.mxu0 0.0
  %2712 = vmatprep.subr.mxu0 0.0
  %2713 = vmatpush2.msra.mxu0 0.0
  %2714 = vmatprep.subr.mxu0 0.0
  %2715 = vmatpush2.msra.mxu0 0.0
  %2716 = vmatprep.subr.mxu0 0.0
  %2717 = vmatpush2.msra.mxu0 0.0
  %2718 = vmatprep.subr.mxu0 0.0
  %2719 = vmatpush2.msra.mxu0 0.0
  %2720 = vmatprep.mubr.f32.mxu0 0.0
  %v2721 = vand.u32 %v2382, 4294901760
  %v2722 = vsub.f32 %v2382, %v2721
  %2723 = vmatmul.mubr.f32.gmra.mxu0 %v2722
  %v2724 = vpop.f32.mrf.mxu0
  %v2725 = vadd.f32 %v2617, %v2724
  %v2726 = vpop.f32.mrf.mxu0
  %2727 = vmatprep.mubr.f32.mxu0 0.0
  %v2728 = vand.u32 %v2384, 4294901760
  %v2729 = vsub.f32 %v2384, %v2728
  %2730 = vmatmul.mubr.f32.gmra.mxu0 %v2729
  %v2731 = vpop.f32.mrf.mxu0
  %v2732 = vadd.f32 %v2623, %v2731
  %v2733 = vpop.f32.mrf.mxu0
  %2734 = vmatprep.mubr.f32.mxu0 0.0
  %v2735 = vand.u32 %v2386, 4294901760
  %v2736 = vsub.f32 %v2386, %v2735
  %2737 = vmatmul.mubr.f32.gmra.mxu0 %v2736
  %v2738 = vpop.f32.mrf.mxu0
  %v2739 = vadd.f32 %v2629, %v2738
  %v2740 = vpop.f32.mrf.mxu0
  %2741 = vmatprep.mubr.f32.mxu0 0.0
  %v2742 = vand.u32 %v2388, 4294901760
  %v2743 = vsub.f32 %v2388, %v2742
  %2744 = vmatmul.mubr.f32.gmra.mxu0 %v2743
  %v2745 = vpop.f32.mrf.mxu0
  %v2746 = vadd.f32 %v2635, %v2745
  %v2747 = vpop.f32.mrf.mxu0
  %2748 = vdwg.mxu0
  %2749 = vmatprep.subr.mxu0 0.0
  %2750 = vmatpush1.msra.mxu0 0.0
  %2751 = vmatprep.subr.mxu0 0.0
  %2752 = vmatpush1.msra.mxu0 0.0
  %2753 = vmatprep.subr.mxu0 0.0
  %2754 = vmatpush1.msra.mxu0 0.0
  %2755 = vmatprep.subr.mxu0 0.0
  %2756 = vmatpush1.msra.mxu0 0.0
  %2757 = vmatprep.subr.mxu0 0.0
  %2758 = vmatpush1.msra.mxu0 0.0
  %2759 = vmatprep.subr.mxu0 0.0
  %2760 = vmatpush1.msra.mxu0 0.0
  %2761 = vmatprep.subr.mxu0 0.0
  %2762 = vmatpush1.msra.mxu0 0.0
  %2763 = vmatprep.subr.mxu0 0.0
  %v2764 = vand.u32 %v1905, 4294901760
  %2765 = vmatpush1.msra.mxu0 %v2764
  %2766 = vmatprep.subr.mxu0 0.0
  %v2767 = vand.u32 %v1904, 4294901760
  %2768 = vmatpush1.msra.mxu0 %v2767
  %2769 = vmatprep.subr.mxu0 0.0
  %v2770 = vand.u32 %v1903, 4294901760
  %2771 = vmatpush1.msra.mxu0 %v2770
  %2772 = vmatprep.subr.mxu0 0.0
  %v2773 = vand.u32 %v1902, 4294901760
  %2774 = vmatpush1.msra.mxu0 %v2773
  %2775 = vmatprep.subr.mxu0 0.0
  %v2776 = vand.u32 %v1901, 4294901760
  %2777 = vmatpush1.msra.mxu0 %v2776
  %2778 = vmatprep.subr.mxu0 0.0
  %v2779 = vand.u32 %v1900, 4294901760
  %2780 = vmatpush1.msra.mxu0 %v2779
  %2781 = vmatprep.subr.mxu0 0.0
  %v2782 = vand.u32 %v1899, 4294901760
  %2783 = vmatpush1.msra.mxu0 %v2782
  %2784 = vmatprep.subr.mxu0 0.0
  %v2785 = vand.u32 %v1898, 4294901760
  %2786 = vmatpush1.msra.mxu0 %v2785
  %2787 = vmatprep.subr.mxu0 0.0
  %v2788 = vand.u32 %v1897, 4294901760
  %2789 = vmatpush1.msra.mxu0 %v2788
  %2790 = vmatprep.subr.mxu0 0.0
  %2791 = vmatpush2.msra.mxu0 0.0
  %2792 = vmatprep.subr.mxu0 0.0
  %2793 = vmatpush2.msra.mxu0 0.0
  %2794 = vmatprep.subr.mxu0 0.0
  %2795 = vmatpush2.msra.mxu0 0.0
  %2796 = vmatprep.subr.mxu0 0.0
  %2797 = vmatpush2.msra.mxu0 0.0
  %2798 = vmatprep.subr.mxu0 0.0
  %2799 = vmatpush2.msra.mxu0 0.0
  %2800 = vmatprep.subr.mxu0 0.0
  %2801 = vmatpush2.msra.mxu0 0.0
  %2802 = vmatprep.subr.mxu0 0.0
  %2803 = vmatpush2.msra.mxu0 0.0
  %2804 = vmatprep.subr.mxu0 0.0
  %2805 = vmatpush2.msra.mxu0 0.0
  %2806 = vmatprep.subr.mxu0 0.0
  %2807 = vmatpush2.msra.mxu0 0.0
  %2808 = vmatprep.subr.mxu0 0.0
  %2809 = vmatpush2.msra.mxu0 0.0
  %2810 = vmatprep.subr.mxu0 0.0
  %2811 = vmatpush2.msra.mxu0 0.0
  %2812 = vmatprep.subr.mxu0 0.0
  %2813 = vmatpush2.msra.mxu0 0.0
  %2814 = vmatprep.subr.mxu0 0.0
  %2815 = vmatpush2.msra.mxu0 0.0
  %2816 = vmatprep.subr.mxu0 0.0
  %2817 = vmatpush2.msra.mxu0 0.0
  %2818 = vmatprep.subr.mxu0 0.0
  %2819 = vmatpush2.msra.mxu0 0.0
  %2820 = vmatprep.subr.mxu0 0.0
  %2821 = vmatpush2.msra.mxu0 0.0
  %2822 = vmatprep.mubr.f32.mxu0 0.0
  %v2823 = vand.u32 %v2382, 4294901760
  %v2824 = vsub.f32 %v2382, %v2823
  %v2825 = vand.u32 %v2824, 4294901760
  %2826 = vmatmul.mubr.f32.gmra.mxu0 %v2825
  %v2827 = vpop.f32.mrf.mxu0
  %v2828 = vadd.f32 %v2725, %v2827
  %v2829 = vpop.f32.mrf.mxu0
  %2830 = vmatprep.mubr.f32.mxu0 0.0
  %v2831 = vand.u32 %v2384, 4294901760
  %v2832 = vsub.f32 %v2384, %v2831
  %v2833 = vand.u32 %v2832, 4294901760
  %2834 = vmatmul.mubr.f32.gmra.mxu0 %v2833
  %v2835 = vpop.f32.mrf.mxu0
  %v2836 = vadd.f32 %v2732, %v2835
  %v2837 = vpop.f32.mrf.mxu0
  %2838 = vmatprep.mubr.f32.mxu0 0.0
  %v2839 = vand.u32 %v2386, 4294901760
  %v2840 = vsub.f32 %v2386, %v2839
  %v2841 = vand.u32 %v2840, 4294901760
  %2842 = vmatmul.mubr.f32.gmra.mxu0 %v2841
  %v2843 = vpop.f32.mrf.mxu0
  %v2844 = vadd.f32 %v2739, %v2843
  %v2845 = vpop.f32.mrf.mxu0
  %2846 = vmatprep.mubr.f32.mxu0 0.0
  %v2847 = vand.u32 %v2388, 4294901760
  %v2848 = vsub.f32 %v2388, %v2847
  %v2849 = vand.u32 %v2848, 4294901760
  %2850 = vmatmul.mubr.f32.gmra.mxu0 %v2849
  %v2851 = vpop.f32.mrf.mxu0
  %v2852 = vadd.f32 %v2746, %v2851
  %v2853 = vpop.f32.mrf.mxu0
  %2854 = vdwg.mxu0
  %2855 = vmatprep.subr.mxu0 0.0
  %2856 = vmatpush1.msra.mxu0 0.0
  %2857 = vmatprep.subr.mxu0 0.0
  %2858 = vmatpush1.msra.mxu0 0.0
  %2859 = vmatprep.subr.mxu0 0.0
  %2860 = vmatpush1.msra.mxu0 0.0
  %2861 = vmatprep.subr.mxu0 0.0
  %2862 = vmatpush1.msra.mxu0 0.0
  %2863 = vmatprep.subr.mxu0 0.0
  %2864 = vmatpush1.msra.mxu0 0.0
  %2865 = vmatprep.subr.mxu0 0.0
  %2866 = vmatpush1.msra.mxu0 0.0
  %2867 = vmatprep.subr.mxu0 0.0
  %2868 = vmatpush1.msra.mxu0 0.0
  %2869 = vmatprep.subr.mxu0 0.0
  %v2870 = vand.u32 %v1905, 4294901760
  %v2871 = vsub.f32 %v1905, %v2870
  %v2872 = vand.u32 %v2871, 4294901760
  %2873 = vmatpush1.msra.mxu0 %v2872
  %2874 = vmatprep.subr.mxu0 0.0
  %v2875 = vand.u32 %v1904, 4294901760
  %v2876 = vsub.f32 %v1904, %v2875
  %v2877 = vand.u32 %v2876, 4294901760
  %2878 = vmatpush1.msra.mxu0 %v2877
  %2879 = vmatprep.subr.mxu0 0.0
  %v2880 = vand.u32 %v1903, 4294901760
  %v2881 = vsub.f32 %v1903, %v2880
  %v2882 = vand.u32 %v2881, 4294901760
  %2883 = vmatpush1.msra.mxu0 %v2882
  %2884 = vmatprep.subr.mxu0 0.0
  %v2885 = vand.u32 %v1902, 4294901760
  %v2886 = vsub.f32 %v1902, %v2885
  %v2887 = vand.u32 %v2886, 4294901760
  %2888 = vmatpush1.msra.mxu0 %v2887
  %2889 = vmatprep.subr.mxu0 0.0
  %v2890 = vand.u32 %v1901, 4294901760
  %v2891 = vsub.f32 %v1901, %v2890
  %v2892 = vand.u32 %v2891, 4294901760
  %2893 = vmatpush1.msra.mxu0 %v2892
  %2894 = vmatprep.subr.mxu0 0.0
  %v2895 = vand.u32 %v1900, 4294901760
  %v2896 = vsub.f32 %v1900, %v2895
  %v2897 = vand.u32 %v2896, 4294901760
  %2898 = vmatpush1.msra.mxu0 %v2897
  %2899 = vmatprep.subr.mxu0 0.0
  %v2900 = vand.u32 %v1899, 4294901760
  %v2901 = vsub.f32 %v1899, %v2900
  %v2902 = vand.u32 %v2901, 4294901760
  %2903 = vmatpush1.msra.mxu0 %v2902
  %2904 = vmatprep.subr.mxu0 0.0
  %v2905 = vand.u32 %v1898, 4294901760
  %v2906 = vsub.f32 %v1898, %v2905
  %v2907 = vand.u32 %v2906, 4294901760
  %2908 = vmatpush1.msra.mxu0 %v2907
  %2909 = vmatprep.subr.mxu0 0.0
  %v2910 = vand.u32 %v1897, 4294901760
  %v2911 = vsub.f32 %v1897, %v2910
  %v2912 = vand.u32 %v2911, 4294901760
  %2913 = vmatpush1.msra.mxu0 %v2912
  %2914 = vmatprep.subr.mxu0 0.0
  %2915 = vmatpush2.msra.mxu0 0.0
  %2916 = vmatprep.subr.mxu0 0.0
  %2917 = vmatpush2.msra.mxu0 0.0
  %2918 = vmatprep.subr.mxu0 0.0
  %2919 = vmatpush2.msra.mxu0 0.0
  %2920 = vmatprep.subr.mxu0 0.0
  %2921 = vmatpush2.msra.mxu0 0.0
  %2922 = vmatprep.subr.mxu0 0.0
  %2923 = vmatpush2.msra.mxu0 0.0
  %2924 = vmatprep.subr.mxu0 0.0
  %2925 = vmatpush2.msra.mxu0 0.0
  %2926 = vmatprep.subr.mxu0 0.0
  %2927 = vmatpush2.msra.mxu0 0.0
  %2928 = vmatprep.subr.mxu0 0.0
  %2929 = vmatpush2.msra.mxu0 0.0
  %2930 = vmatprep.subr.mxu0 0.0
  %2931 = vmatpush2.msra.mxu0 0.0
  %2932 = vmatprep.subr.mxu0 0.0
  %2933 = vmatpush2.msra.mxu0 0.0
  %2934 = vmatprep.subr.mxu0 0.0
  %2935 = vmatpush2.msra.mxu0 0.0
  %2936 = vmatprep.subr.mxu0 0.0
  %2937 = vmatpush2.msra.mxu0 0.0
  %2938 = vmatprep.subr.mxu0 0.0
  %2939 = vmatpush2.msra.mxu0 0.0
  %2940 = vmatprep.subr.mxu0 0.0
  %2941 = vmatpush2.msra.mxu0 0.0
  %2942 = vmatprep.subr.mxu0 0.0
  %2943 = vmatpush2.msra.mxu0 0.0
  %2944 = vmatprep.subr.mxu0 0.0
  %2945 = vmatpush2.msra.mxu0 0.0
  %2946 = vmatprep.mubr.f32.mxu0 0.0
  %v2947 = vand.u32 %v2382, 4294901760
  %2948 = vmatmul.mubr.f32.gmra.mxu0 %v2947
  %v2949 = vpop.f32.mrf.mxu0
  %v2950 = vadd.f32 %v2828, %v2949
  %v2951 = vpop.f32.mrf.mxu0
  %2952 = vmatprep.mubr.f32.mxu0 0.0
  %v2953 = vand.u32 %v2384, 4294901760
  %2954 = vmatmul.mubr.f32.gmra.mxu0 %v2953
  %v2955 = vpop.f32.mrf.mxu0
  %v2956 = vadd.f32 %v2836, %v2955
  %v2957 = vpop.f32.mrf.mxu0
  %2958 = vmatprep.mubr.f32.mxu0 0.0
  %v2959 = vand.u32 %v2386, 4294901760
  %2960 = vmatmul.mubr.f32.gmra.mxu0 %v2959
  %v2961 = vpop.f32.mrf.mxu0
  %v2962 = vadd.f32 %v2844, %v2961
  %v2963 = vpop.f32.mrf.mxu0
  %2964 = vmatprep.mubr.f32.mxu0 0.0
  %v2965 = vand.u32 %v2388, 4294901760
  %2966 = vmatmul.mubr.f32.gmra.mxu0 %v2965
  %v2967 = vpop.f32.mrf.mxu0
  %v2968 = vadd.f32 %v2852, %v2967
  %v2969 = vpop.f32.mrf.mxu0
  %2970 = vdwg.mxu0
  %2971 = vmatprep.subr.mxu0 0.0
  %2972 = vmatpush1.msra.mxu0 0.0
  %2973 = vmatprep.subr.mxu0 0.0
  %2974 = vmatpush1.msra.mxu0 0.0
  %2975 = vmatprep.subr.mxu0 0.0
  %2976 = vmatpush1.msra.mxu0 0.0
  %2977 = vmatprep.subr.mxu0 0.0
  %2978 = vmatpush1.msra.mxu0 0.0
  %2979 = vmatprep.subr.mxu0 0.0
  %2980 = vmatpush1.msra.mxu0 0.0
  %2981 = vmatprep.subr.mxu0 0.0
  %2982 = vmatpush1.msra.mxu0 0.0
  %2983 = vmatprep.subr.mxu0 0.0
  %2984 = vmatpush1.msra.mxu0 0.0
  %2985 = vmatprep.subr.mxu0 0.0
  %v2986 = vand.u32 %v1905, 4294901760
  %2987 = vmatpush1.msra.mxu0 %v2986
  %2988 = vmatprep.subr.mxu0 0.0
  %v2989 = vand.u32 %v1904, 4294901760
  %2990 = vmatpush1.msra.mxu0 %v2989
  %2991 = vmatprep.subr.mxu0 0.0
  %v2992 = vand.u32 %v1903, 4294901760
  %2993 = vmatpush1.msra.mxu0 %v2992
  %2994 = vmatprep.subr.mxu0 0.0
  %v2995 = vand.u32 %v1902, 4294901760
  %2996 = vmatpush1.msra.mxu0 %v2995
  %2997 = vmatprep.subr.mxu0 0.0
  %v2998 = vand.u32 %v1901, 4294901760
  %2999 = vmatpush1.msra.mxu0 %v2998
  %3000 = vmatprep.subr.mxu0 0.0
  %v3001 = vand.u32 %v1900, 4294901760
  %3002 = vmatpush1.msra.mxu0 %v3001
  %3003 = vmatprep.subr.mxu0 0.0
  %v3004 = vand.u32 %v1899, 4294901760
  %3005 = vmatpush1.msra.mxu0 %v3004
  %3006 = vmatprep.subr.mxu0 0.0
  %v3007 = vand.u32 %v1898, 4294901760
  %3008 = vmatpush1.msra.mxu0 %v3007
  %3009 = vmatprep.subr.mxu0 0.0
  %v3010 = vand.u32 %v1897, 4294901760
  %3011 = vmatpush1.msra.mxu0 %v3010
  %3012 = vmatprep.subr.mxu0 0.0
  %3013 = vmatpush2.msra.mxu0 0.0
  %3014 = vmatprep.subr.mxu0 0.0
  %3015 = vmatpush2.msra.mxu0 0.0
  %3016 = vmatprep.subr.mxu0 0.0
  %3017 = vmatpush2.msra.mxu0 0.0
  %3018 = vmatprep.subr.mxu0 0.0
  %3019 = vmatpush2.msra.mxu0 0.0
  %3020 = vmatprep.subr.mxu0 0.0
  %3021 = vmatpush2.msra.mxu0 0.0
  %3022 = vmatprep.subr.mxu0 0.0
  %3023 = vmatpush2.msra.mxu0 0.0
  %3024 = vmatprep.subr.mxu0 0.0
  %3025 = vmatpush2.msra.mxu0 0.0
  %3026 = vmatprep.subr.mxu0 0.0
  %3027 = vmatpush2.msra.mxu0 0.0
  %3028 = vmatprep.subr.mxu0 0.0
  %3029 = vmatpush2.msra.mxu0 0.0
  %3030 = vmatprep.subr.mxu0 0.0
  %3031 = vmatpush2.msra.mxu0 0.0
  %3032 = vmatprep.subr.mxu0 0.0
  %3033 = vmatpush2.msra.mxu0 0.0
  %3034 = vmatprep.subr.mxu0 0.0
  %3035 = vmatpush2.msra.mxu0 0.0
  %3036 = vmatprep.subr.mxu0 0.0
  %3037 = vmatpush2.msra.mxu0 0.0
  %3038 = vmatprep.subr.mxu0 0.0
  %3039 = vmatpush2.msra.mxu0 0.0
  %3040 = vmatprep.subr.mxu0 0.0
  %3041 = vmatpush2.msra.mxu0 0.0
  %3042 = vmatprep.subr.mxu0 0.0
  %3043 = vmatpush2.msra.mxu0 0.0
  %3044 = vmatprep.mubr.f32.mxu0 0.0
  %v3045 = vand.u32 %v2382, 4294901760
  %3046 = vmatmul.mubr.f32.gmra.mxu0 %v3045
  %v3047 = vpop.f32.mrf.mxu0
  %v3048 = vadd.f32 %v2950, %v3047
  %v3049 = vpop.f32.mrf.mxu0
  %3050 = vmatprep.mubr.f32.mxu0 0.0
  %v3051 = vand.u32 %v2384, 4294901760
  %3052 = vmatmul.mubr.f32.gmra.mxu0 %v3051
  %v3053 = vpop.f32.mrf.mxu0
  %v3054 = vadd.f32 %v2956, %v3053
  %v3055 = vpop.f32.mrf.mxu0
  %3056 = vmatprep.mubr.f32.mxu0 0.0
  %v3057 = vand.u32 %v2386, 4294901760
  %3058 = vmatmul.mubr.f32.gmra.mxu0 %v3057
  %v3059 = vpop.f32.mrf.mxu0
  %v3060 = vadd.f32 %v2962, %v3059
  %v3061 = vpop.f32.mrf.mxu0
  %3062 = vmatprep.mubr.f32.mxu0 0.0
  %v3063 = vand.u32 %v2388, 4294901760
  %3064 = vmatmul.mubr.f32.gmra.mxu0 %v3063
  %v3065 = vpop.f32.mrf.mxu0
  %v3066 = vadd.f32 %v2968, %v3065
  %v3067 = vpop.f32.mrf.mxu0
  %3068 = vdwg.mxu0
  %v3069 = vld [vmem:[%s7] sm:$0x1]
  %v3070 = vld [vmem:[%s8] sm:$0x1]
  %v3071 = vsel %vm63, %v3048, 0.0
  %v3072 = vsel %vm63, %v3054, 0.0
  %v3073 = vadd.f32 %v3071, %v3072
  %v3074 = vsel %vm63, %v3060, 0.0
  %v3075 = vadd.f32 %v3073, %v3074
  %v3076 = vsel %vm63, %v3066, 0.0
  %v3077 = vadd.f32 %v3075, %v3076
  %v3078 = vrot.slane %v3077, 4
  %v3079 = vadd.f32 %v3077, %v3078
  %v3080 = vrot.slane %v3079, 2
  %v3081 = vadd.f32 %v3079, %v3080
  %v3082 = vrot.slane %v3081, 1
  %v3083 = vadd.f32 %v3081, %v3082
  %v3084 = vmul.f32 %v3083, %v1765
  %v3085 = vsub.f32 %v3048, %v3084
  %v3086 = vsub.f32 %v3054, %v3084
  %v3087 = vsub.f32 %v3060, %v3084
  %v3088 = vsub.f32 %v3066, %v3084
  %v3089 = vmul.f32 %v3085, %v3085
  %v3090 = vmul.f32 %v3086, %v3086
  %v3091 = vmul.f32 %v3087, %v3087
  %v3092 = vmul.f32 %v3088, %v3088
  %v3093 = vsel %vm63, %v3089, 0.0
  %v3094 = vsel %vm63, %v3090, 0.0
  %v3095 = vadd.f32 %v3093, %v3094
  %v3096 = vsel %vm63, %v3091, 0.0
  %v3097 = vadd.f32 %v3095, %v3096
  %v3098 = vsel %vm63, %v3092, 0.0
  %v3099 = vadd.f32 %v3097, %v3098
  %v3100 = vrot.slane %v3099, 4
  %v3101 = vadd.f32 %v3099, %v3100
  %v3102 = vrot.slane %v3101, 2
  %v3103 = vadd.f32 %v3101, %v3102
  %v3104 = vrot.slane %v3103, 1
  %v3105 = vadd.f32 %v3103, %v3104
  %v3106 = vmul.f32 %v3105, %v1765
  %v3107 = vadd.f32 %v3106, 1e-05
  %v3108 = vrsqrt.pop %v3107
  %v3109 = vmul.f32 %v3069, %v3108
  %v3111 = vlaneseq
  %v3112 = vshrl.u32 %v3111, 7
  %v3113 = vsub.s32 0, %v3112
  %v3114 = vrot.slane %v3109, %v3113
  %v3116 = vmul.f32 %v3085, %v3114
  %v3117 = vmul.f32 %v3086, %v3114
  %v3118 = vmul.f32 %v3087, %v3114
  %v3119 = vmul.f32 %v3088, %v3114
  %v3121 = vlaneseq
  %v3122 = vshrl.u32 %v3121, 7
  %v3123 = vsub.s32 0, %v3122
  %v3124 = vrot.slane %v3070, %v3123
  %v3126 = vadd.f32 %v3116, %v3124
  %v3127 = vadd.f32 %v3117, %v3124
  %v3128 = vadd.f32 %v3118, %v3124
  %v3129 = vadd.f32 %v3119, %v3124
  %v3130 = vmax.f32 %v3126, 0.0
  %v3131 = vmax.f32 %v3127, 0.0
  %v3132 = vmax.f32 %v3128, 0.0
  %v3133 = vmax.f32 %v3129, 0.0
  %v3138 = vcombine.high %v3130, %v3130
  %v3140 = vunpack.c.l.s4 1983009808
  %v3141 = vunpack.c.0.s8 %v3140
  %v3142 = vlaneseq
  %v3143 = vshrl.u32 %v3142, 7
  %v3144 = vsub.s32 %v3141, %v3143
  %v3145 = vrot.slane %v3130, %v3144
  %v3147 = vunpack.c.l.s4 1983009808
  %v3148 = vunpack.c.0.s8 %v3147
  %v3149 = vlaneseq
  %v3150 = vshrl.u32 %v3149, 7
  %v3151 = vsub.s32 %v3148, %v3150
  %v3152 = vrot.slane %v3138, %v3151
  %v3153 = vcombine.high %v3145, %v3145
  %v3154 = vcombine.high %v3152, %v3152
  %v3155 = vcombine.high %v3131, %v3131
  %v3157 = vunpack.c.l.s4 1983009808
  %v3158 = vunpack.c.0.s8 %v3157
  %v3159 = vlaneseq
  %v3160 = vshrl.u32 %v3159, 7
  %v3161 = vsub.s32 %v3158, %v3160
  %v3162 = vrot.slane %v3131, %v3161
  %v3164 = vunpack.c.l.s4 1983009808
  %v3165 = vunpack.c.0.s8 %v3164
  %v3166 = vlaneseq
  %v3167 = vshrl.u32 %v3166, 7
  %v3168 = vsub.s32 %v3165, %v3167
  %v3169 = vrot.slane %v3155, %v3168
  %v3170 = vcombine.high %v3162, %v3162
  %v3171 = vcombine.high %v3169, %v3169
  %v3172 = vcombine.high %v3132, %v3132
  %v3174 = vunpack.c.l.s4 1983009808
  %v3175 = vunpack.c.0.s8 %v3174
  %v3176 = vlaneseq
  %v3177 = vshrl.u32 %v3176, 7
  %v3178 = vsub.s32 %v3175, %v3177
  %v3179 = vrot.slane %v3132, %v3178
  %v3181 = vunpack.c.l.s4 1983009808
  %v3182 = vunpack.c.0.s8 %v3181
  %v3183 = vlaneseq
  %v3184 = vshrl.u32 %v3183, 7
  %v3185 = vsub.s32 %v3182, %v3184
  %v3186 = vrot.slane %v3172, %v3185
  %v3187 = vcombine.high %v3179, %v3179
  %v3188 = vcombine.high %v3186, %v3186
  %v3189 = vcombine.high %v3133, %v3133
  %v3191 = vunpack.c.l.s4 1983009808
  %v3192 = vunpack.c.0.s8 %v3191
  %v3193 = vlaneseq
  %v3194 = vshrl.u32 %v3193, 7
  %v3195 = vsub.s32 %v3192, %v3194
  %v3196 = vrot.slane %v3133, %v3195
  %v3198 = vunpack.c.l.s4 1983009808
  %v3199 = vunpack.c.0.s8 %v3198
  %v3200 = vlaneseq
  %v3201 = vshrl.u32 %v3200, 7
  %v3202 = vsub.s32 %v3199, %v3201
  %v3203 = vrot.slane %v3189, %v3202
  %v3204 = vcombine.high %v3196, %v3196
  %v3205 = vcombine.high %v3203, %v3203
  %v3222 = vld [vmem:[%s9] sm:$0xff]
  %v3223 = vld [vmem:[%s9 + $0x8] sm:$0xff]
  %v3224 = vld [vmem:[%s9 + $0x10] sm:$0xff]
  %v3225 = vld [vmem:[%s9 + $0x18] sm:$0xff]
  %v3227 = vunpack.c.l.s4 1983009808
  %v3228 = vunpack.c.0.s8 %v3227
  %v3229 = vlaneseq
  %v3230 = vshrl.u32 %v3229, 7
  %v3231 = vsub.s32 %v3228, %v3230
  %v3232 = vrot.slane %v3153, %v3231
  %v3234 = vunpack.c.l.s4 1983009808
  %v3235 = vunpack.c.0.s8 %v3234
  %v3236 = vlaneseq
  %v3237 = vshrl.u32 %v3236, 7
  %v3238 = vsub.s32 %v3235, %v3237
  %v3239 = vrot.slane %v3152, %v3238
  %v3241 = vunpack.c.l.s4 1983009808
  %v3242 = vunpack.c.0.s8 %v3241
  %v3243 = vlaneseq
  %v3244 = vshrl.u32 %v3243, 7
  %v3245 = vsub.s32 %v3242, %v3244
  %v3246 = vrot.slane %v3154, %v3245
  %v3248 = vunpack.c.l.s4 1983009808
  %v3249 = vunpack.c.0.s8 %v3248
  %v3250 = vlaneseq
  %v3251 = vshrl.u32 %v3250, 7
  %v3252 = vsub.s32 %v3249, %v3251
  %v3253 = vrot.slane 0.0, %v3252
  %v3255 = vunpack.c.l.s4 1983009808
  %v3256 = vunpack.c.0.s8 %v3255
  %v3257 = vlaneseq
  %v3258 = vshrl.u32 %v3257, 7
  %v3259 = vsub.s32 %v3256, %v3258
  %v3260 = vrot.slane %v3170, %v3259
  %v3262 = vunpack.c.l.s4 1983009808
  %v3263 = vunpack.c.0.s8 %v3262
  %v3264 = vlaneseq
  %v3265 = vshrl.u32 %v3264, 7
  %v3266 = vsub.s32 %v3263, %v3265
  %v3267 = vrot.slane %v3169, %v3266
  %v3269 = vunpack.c.l.s4 1983009808
  %v3270 = vunpack.c.0.s8 %v3269
  %v3271 = vlaneseq
  %v3272 = vshrl.u32 %v3271, 7
  %v3273 = vsub.s32 %v3270, %v3272
  %v3274 = vrot.slane %v3171, %v3273
  %v3276 = vunpack.c.l.s4 1983009808
  %v3277 = vunpack.c.0.s8 %v3276
  %v3278 = vlaneseq
  %v3279 = vshrl.u32 %v3278, 7
  %v3280 = vsub.s32 %v3277, %v3279
  %v3281 = vrot.slane %v3187, %v3280
  %v3283 = vunpack.c.l.s4 1983009808
  %v3284 = vunpack.c.0.s8 %v3283
  %v3285 = vlaneseq
  %v3286 = vshrl.u32 %v3285, 7
  %v3287 = vsub.s32 %v3284, %v3286
  %v3288 = vrot.slane %v3186, %v3287
  %v3290 = vunpack.c.l.s4 1983009808
  %v3291 = vunpack.c.0.s8 %v3290
  %v3292 = vlaneseq
  %v3293 = vshrl.u32 %v3292, 7
  %v3294 = vsub.s32 %v3291, %v3293
  %v3295 = vrot.slane %v3188, %v3294
  %v3297 = vunpack.c.l.s4 1983009808
  %v3298 = vunpack.c.0.s8 %v3297
  %v3299 = vlaneseq
  %v3300 = vshrl.u32 %v3299, 7
  %v3301 = vsub.s32 %v3298, %v3300
  %v3302 = vrot.slane %v3204, %v3301
  %v3304 = vunpack.c.l.s4 1983009808
  %v3305 = vunpack.c.0.s8 %v3304
  %v3306 = vlaneseq
  %v3307 = vshrl.u32 %v3306, 7
  %v3308 = vsub.s32 %v3305, %v3307
  %v3309 = vrot.slane %v3203, %v3308
  %v3311 = vunpack.c.l.s4 1983009808
  %v3312 = vunpack.c.0.s8 %v3311
  %v3313 = vlaneseq
  %v3314 = vshrl.u32 %v3313, 7
  %v3315 = vsub.s32 %v3312, %v3314
  %v3316 = vrot.slane %v3205, %v3315
  %3317 = vrot.lane.b32.xlu0 %v3232, 8
  %v3318 = vpop.permute.xlu0 %3317
  %3319 = vrot.lane.b32.xlu0 %v3239, 8
  %v3320 = vpop.permute.xlu0 %3319
  %3321 = vrot.lane.b32.xlu0 %v3246, 8
  %v3322 = vpop.permute.xlu0 %3321
  %3323 = vrot.lane.b32.xlu0 %v3253, 8
  %v3324 = vpop.permute.xlu0 %3323
  %3325 = vrot.lane.b32.xlu0 %v3260, 8
  %v3326 = vpop.permute.xlu0 %3325
  %3327 = vrot.lane.b32.xlu0 %v3267, 8
  %v3328 = vpop.permute.xlu0 %3327
  %3329 = vrot.lane.b32.xlu0 %v3274, 8
  %v3330 = vpop.permute.xlu0 %3329
  %3331 = vrot.lane.b32.xlu0 %v3281, 8
  %v3332 = vpop.permute.xlu0 %3331
  %3333 = vrot.lane.b32.xlu0 %v3288, 8
  %v3334 = vpop.permute.xlu0 %3333
  %3335 = vrot.lane.b32.xlu0 %v3295, 8
  %v3336 = vpop.permute.xlu0 %3335
  %3337 = vrot.lane.b32.xlu0 %v3302, 8
  %v3338 = vpop.permute.xlu0 %3337
  %3339 = vrot.lane.b32.xlu0 %v3309, 8
  %v3340 = vpop.permute.xlu0 %3339
  %3341 = vrot.lane.b32.xlu0 %v3316, 8
  %v3342 = vpop.permute.xlu0 %3341
  %v3357 = vunpack.c.l.s4 1983009808
  %v3358 = vunpack.c.0.s8 %v3357
  %v3359 = vlaneseq
  %v3360 = vshrl.u32 %v3359, 7
  %v3361 = vsub.s32 %v3358, %v3360
  %v3362 = vrot.slane %v3162, %v3361
  %v3364 = vunpack.c.l.s4 1983009808
  %v3365 = vunpack.c.0.s8 %v3364
  %v3366 = vlaneseq
  %v3367 = vshrl.u32 %v3366, 7
  %v3368 = vsub.s32 %v3365, %v3367
  %v3369 = vrot.slane %v3179, %v3368
  %v3371 = vunpack.c.l.s4 1983009808
  %v3372 = vunpack.c.0.s8 %v3371
  %v3373 = vlaneseq
  %v3374 = vshrl.u32 %v3373, 7
  %v3375 = vsub.s32 %v3372, %v3374
  %v3376 = vrot.slane %v3196, %v3375
  %3377 = vrot.lane.b32.xlu0 %v3362, 16
  %v3378 = vpop.permute.xlu0 %3377
  %3379 = vrot.lane.b32.xlu0 %v3260, 16
  %v3380 = vpop.permute.xlu0 %3379
  %3381 = vrot.lane.b32.xlu0 %v3267, 16
  %v3382 = vpop.permute.xlu0 %3381
  %3383 = vrot.lane.b32.xlu0 %v3274, 16
  %v3384 = vpop.permute.xlu0 %3383
  %3385 = vrot.lane.b32.xlu0 %v3369, 16
  %v3386 = vpop.permute.xlu0 %3385
  %3387 = vrot.lane.b32.xlu0 %v3281, 16
  %v3388 = vpop.permute.xlu0 %3387
  %3389 = vrot.lane.b32.xlu0 %v3288, 16
  %v3390 = vpop.permute.xlu0 %3389
  %3391 = vrot.lane.b32.xlu0 %v3295, 16
  %v3392 = vpop.permute.xlu0 %3391
  %3393 = vrot.lane.b32.xlu0 %v3376, 16
  %v3394 = vpop.permute.xlu0 %3393
  %3395 = vrot.lane.b32.xlu0 %v3302, 16
  %v3396 = vpop.permute.xlu0 %3395
  %3397 = vrot.lane.b32.xlu0 %v3309, 16
  %v3398 = vpop.permute.xlu0 %3397
  %3399 = vrot.lane.b32.xlu0 %v3316, 16
  %v3400 = vpop.permute.xlu0 %3399
  %3401 = vrot.lane.b32.xlu0 %v3253, 16
  %v3402 = vpop.permute.xlu0 %3401
  %3416 = vrot.lane.b32.xlu0 %v3260, 24
  %v3417 = vpop.permute.xlu0 %3416
  %3418 = vrot.lane.b32.xlu0 %v3267, 24
  %v3419 = vpop.permute.xlu0 %3418
  %3420 = vrot.lane.b32.xlu0 %v3274, 24
  %v3421 = vpop.permute.xlu0 %3420
  %3422 = vrot.lane.b32.xlu0 %v3253, 24
  %v3423 = vpop.permute.xlu0 %3422
  %3424 = vrot.lane.b32.xlu0 %v3281, 24
  %v3425 = vpop.permute.xlu0 %3424
  %3426 = vrot.lane.b32.xlu0 %v3288, 24
  %v3427 = vpop.permute.xlu0 %3426
  %3428 = vrot.lane.b32.xlu0 %v3295, 24
  %v3429 = vpop.permute.xlu0 %3428
  %3430 = vrot.lane.b32.xlu0 %v3302, 24
  %v3431 = vpop.permute.xlu0 %3430
  %3432 = vrot.lane.b32.xlu0 %v3309, 24
  %v3433 = vpop.permute.xlu0 %3432
  %3434 = vrot.lane.b32.xlu0 %v3316, 24
  %v3435 = vpop.permute.xlu0 %3434
  %v3446 = vsel %vm63, %v3145, %v3318
  %v3447 = vsel %vm63, %v3153, %v3320
  %v3448 = vsel %vm63, %v3152, %v3322
  %v3449 = vsel %vm63, %v3154, %v3324
  %v3450 = vsel %vm63, %v3162, %v3326
  %v3451 = vsel %vm63, %v3170, %v3328
  %v3452 = vsel %vm63, %v3169, %v3330
  %v3453 = vsel %vm63, %v3171, %v3324
  %v3454 = vsel %vm63, %v3179, %v3332
  %v3455 = vsel %vm63, %v3187, %v3334
  %v3456 = vsel %vm63, %v3186, %v3336
  %v3457 = vsel %vm63, %v3188, %v3324
  %v3458 = vsel %vm63, %v3196, %v3338
  %v3459 = vsel %vm63, %v3204, %v3340
  %v3460 = vsel %vm63, %v3203, %v3342
  %v3461 = vsel %vm63, %v3205, %v3324
  %v3462 = vsel %vm862, %v3446, %v3378
  %v3463 = vsel %vm862, %v3447, %v3380
  %v3464 = vsel %vm862, %v3448, %v3382
  %v3465 = vsel %vm862, %v3449, %v3384
  %v3466 = vsel %vm862, %v3450, %v3386
  %v3467 = vsel %vm862, %v3451, %v3388
  %v3468 = vsel %vm862, %v3452, %v3390
  %v3469 = vsel %vm862, %v3453, %v3392
  %v3470 = vsel %vm862, %v3454, %v3394
  %v3471 = vsel %vm862, %v3455, %v3396
  %v3472 = vsel %vm862, %v3456, %v3398
  %v3473 = vsel %vm862, %v3457, %v3400
  %v3474 = vsel %vm862, %v3458, %v3402
  %v3475 = vsel %vm862, %v3459, %v3402
  %v3476 = vsel %vm862, %v3460, %v3402
  %v3477 = vsel %vm862, %v3461, %v3402
  %v3478 = vsel %vm876, %v3462, %v3417
  %v3479 = vsel %vm876, %v3463, %v3419
  %v3480 = vsel %vm876, %v3464, %v3421
  %v3481 = vsel %vm876, %v3465, %v3423
  %v3482 = vsel %vm876, %v3466, %v3425
  %v3483 = vsel %vm876, %v3467, %v3427
  %v3484 = vsel %vm876, %v3468, %v3429
  %v3485 = vsel %vm876, %v3469, %v3423
  %v3486 = vsel %vm876, %v3470, %v3431
  %v3487 = vsel %vm876, %v3471, %v3433
  %v3488 = vsel %vm876, %v3472, %v3435
  %v3489 = vsel %vm876, %v3473, %v3423
  %v3490 = vsel %vm876, %v3474, %v3423
  %v3491 = vsel %vm876, %v3475, %v3423
  %v3492 = vsel %vm876, %v3476, %v3423
  %v3493 = vsel %vm876, %v3477, %v3423
  %v3510 = vcombine.low %v3478, %v3479
  %v3511 = vcombine.low %v3480, %v3481
  %v3513 = vunpack.c.l.s4 1983009808
  %v3514 = vunpack.c.0.s8 %v3513
  %v3515 = vlaneseq
  %v3516 = vshrl.u32 %v3515, 7
  %v3517 = vsub.s32 %v3514, %v3516
  %v3518 = vrot.slane %v3510, %v3517
  %v3520 = vunpack.c.l.s4 1983009808
  %v3521 = vunpack.c.0.s8 %v3520
  %v3522 = vlaneseq
  %v3523 = vshrl.u32 %v3522, 7
  %v3524 = vsub.s32 %v3521, %v3523
  %v3525 = vrot.slane %v3511, %v3524
  %v3526 = vcombine.low %v3518, %v3525
  %v3527 = vcombine.low %v3482, %v3483
  %v3528 = vcombine.low %v3484, %v3485
  %v3530 = vunpack.c.l.s4 1983009808
  %v3531 = vunpack.c.0.s8 %v3530
  %v3532 = vlaneseq
  %v3533 = vshrl.u32 %v3532, 7
  %v3534 = vsub.s32 %v3531, %v3533
  %v3535 = vrot.slane %v3527, %v3534
  %v3537 = vunpack.c.l.s4 1983009808
  %v3538 = vunpack.c.0.s8 %v3537
  %v3539 = vlaneseq
  %v3540 = vshrl.u32 %v3539, 7
  %v3541 = vsub.s32 %v3538, %v3540
  %v3542 = vrot.slane %v3528, %v3541
  %v3543 = vcombine.low %v3535, %v3542
  %v3544 = vcombine.low %v3486, %v3487
  %v3545 = vcombine.low %v3488, %v3489
  %v3547 = vunpack.c.l.s4 1983009808
  %v3548 = vunpack.c.0.s8 %v3547
  %v3549 = vlaneseq
  %v3550 = vshrl.u32 %v3549, 7
  %v3551 = vsub.s32 %v3548, %v3550
  %v3552 = vrot.slane %v3544, %v3551
  %v3554 = vunpack.c.l.s4 1983009808
  %v3555 = vunpack.c.0.s8 %v3554
  %v3556 = vlaneseq
  %v3557 = vshrl.u32 %v3556, 7
  %v3558 = vsub.s32 %v3555, %v3557
  %v3559 = vrot.slane %v3545, %v3558
  %v3560 = vcombine.low %v3552, %v3559
  %v3561 = vcombine.low %v3490, %v3491
  %v3562 = vcombine.low %v3492, %v3493
  %v3564 = vunpack.c.l.s4 1983009808
  %v3565 = vunpack.c.0.s8 %v3564
  %v3566 = vlaneseq
  %v3567 = vshrl.u32 %v3566, 7
  %v3568 = vsub.s32 %v3565, %v3567
  %v3569 = vrot.slane %v3561, %v3568
  %v3571 = vunpack.c.l.s4 1983009808
  %v3572 = vunpack.c.0.s8 %v3571
  %v3573 = vlaneseq
  %v3574 = vshrl.u32 %v3573, 7
  %v3575 = vsub.s32 %v3572, %v3574
  %v3576 = vrot.slane %v3562, %v3575
  %v3577 = vcombine.low %v3569, %v3576
  %v3578 = vsel %vm893, %v3526, 0
  %v3580 = vsel %vm893, %v3543, 0
  %v3582 = vsel %vm893, %v3560, 0
  %v3584 = vsel %vm893, %v3577, 0
  %3586 = vmatprep.subr.mxu0 0.0
  %3587 = vmatpush1.msra.mxu0 0.0
  %3588 = vmatprep.subr.mxu0 0.0
  %3589 = vmatpush1.msra.mxu0 0.0
  %3590 = vmatprep.subr.mxu0 0.0
  %3591 = vmatpush1.msra.mxu0 0.0
  %3592 = vmatprep.subr.mxu0 0.0
  %3593 = vmatpush1.msra.mxu0 0.0
  %3594 = vmatprep.subr.mxu0 0.0
  %3595 = vmatpush1.msra.mxu0 0.0
  %3596 = vmatprep.subr.mxu0 0.0
  %3597 = vmatpush1.msra.mxu0 0.0
  %3598 = vmatprep.subr.mxu0 0.0
  %3599 = vmatpush1.msra.mxu0 0.0
  %3600 = vmatprep.subr.mxu0 0.0
  %3601 = vmatpush1.msra.mxu0 0.0
  %3602 = vmatprep.subr.mxu0 0.0
  %3603 = vmatpush1.msra.mxu0 0.0
  %3604 = vmatprep.subr.mxu0 0.0
  %3605 = vmatpush1.msra.mxu0 0.0
  %3606 = vmatprep.subr.mxu0 0.0
  %3607 = vmatpush1.msra.mxu0 0.0
  %3608 = vmatprep.subr.mxu0 0.0
  %3609 = vmatpush1.msra.mxu0 0.0
  %3610 = vmatprep.subr.mxu0 0.0
  %v3611 = vand.u32 %v3225, 4294901760
  %3612 = vmatpush1.msra.mxu0 %v3611
  %3613 = vmatprep.subr.mxu0 0.0
  %v3614 = vand.u32 %v3224, 4294901760
  %3615 = vmatpush1.msra.mxu0 %v3614
  %3616 = vmatprep.subr.mxu0 0.0
  %v3617 = vand.u32 %v3223, 4294901760
  %3618 = vmatpush1.msra.mxu0 %v3617
  %3619 = vmatprep.subr.mxu0 0.0
  %v3620 = vand.u32 %v3222, 4294901760
  %3621 = vmatpush1.msra.mxu0 %v3620
  %3622 = vmatprep.subr.mxu0 0.0
  %3623 = vmatpush2.msra.mxu0 0.0
  %3624 = vmatprep.subr.mxu0 0.0
  %3625 = vmatpush2.msra.mxu0 0.0
  %3626 = vmatprep.subr.mxu0 0.0
  %3627 = vmatpush2.msra.mxu0 0.0
  %3628 = vmatprep.subr.mxu0 0.0
  %3629 = vmatpush2.msra.mxu0 0.0
  %3630 = vmatprep.subr.mxu0 0.0
  %3631 = vmatpush2.msra.mxu0 0.0
  %3632 = vmatprep.subr.mxu0 0.0
  %3633 = vmatpush2.msra.mxu0 0.0
  %3634 = vmatprep.subr.mxu0 0.0
  %3635 = vmatpush2.msra.mxu0 0.0
  %3636 = vmatprep.subr.mxu0 0.0
  %3637 = vmatpush2.msra.mxu0 0.0
  %3638 = vmatprep.subr.mxu0 0.0
  %3639 = vmatpush2.msra.mxu0 0.0
  %3640 = vmatprep.subr.mxu0 0.0
  %3641 = vmatpush2.msra.mxu0 0.0
  %3642 = vmatprep.subr.mxu0 0.0
  %3643 = vmatpush2.msra.mxu0 0.0
  %3644 = vmatprep.subr.mxu0 0.0
  %3645 = vmatpush2.msra.mxu0 0.0
  %3646 = vmatprep.subr.mxu0 0.0
  %3647 = vmatpush2.msra.mxu0 0.0
  %3648 = vmatprep.subr.mxu0 0.0
  %3649 = vmatpush2.msra.mxu0 0.0
  %3650 = vmatprep.subr.mxu0 0.0
  %3651 = vmatpush2.msra.mxu0 0.0
  %3652 = vmatprep.subr.mxu0 0.0
  %3653 = vmatpush2.msra.mxu0 0.0
  %3654 = vmatprep.mubr.f32.mxu0 0.0
  %v3655 = vand.u32 %v3578, 4294901760
  %v3656 = vsub.f32 %v3578, %v3655
  %v3657 = vand.u32 %v3656, 4294901760
  %v3658 = vsub.f32 %v3656, %v3657
  %v3659 = vand.u32 %v3658, 4294901760
  %3660 = vmatmul.mubr.f32.gmra.mxu0 %v3659
  %v3661 = vpop.f32.mrf.mxu0
  %v3662 = vadd.f32 0.0, %v3661
  %v3663 = vpop.f32.mrf.mxu0
  %3664 = vmatprep.mubr.f32.mxu0 0.0
  %v3665 = vand.u32 %v3580, 4294901760
  %v3666 = vsub.f32 %v3580, %v3665
  %v3667 = vand.u32 %v3666, 4294901760
  %v3668 = vsub.f32 %v3666, %v3667
  %v3669 = vand.u32 %v3668, 4294901760
  %3670 = vmatmul.mubr.f32.gmra.mxu0 %v3669
  %v3671 = vpop.f32.mrf.mxu0
  %v3672 = vadd.f32 0.0, %v3671
  %v3673 = vpop.f32.mrf.mxu0
  %3674 = vmatprep.mubr.f32.mxu0 0.0
  %v3675 = vand.u32 %v3582, 4294901760
  %v3676 = vsub.f32 %v3582, %v3675
  %v3677 = vand.u32 %v3676, 4294901760
  %v3678 = vsub.f32 %v3676, %v3677
  %v3679 = vand.u32 %v3678, 4294901760
  %3680 = vmatmul.mubr.f32.gmra.mxu0 %v3679
  %v3681 = vpop.f32.mrf.mxu0
  %v3682 = vadd.f32 0.0, %v3681
  %v3683 = vpop.f32.mrf.mxu0
  %3684 = vmatprep.mubr.f32.mxu0 0.0
  %v3685 = vand.u32 %v3584, 4294901760
  %v3686 = vsub.f32 %v3584, %v3685
  %v3687 = vand.u32 %v3686, 4294901760
  %v3688 = vsub.f32 %v3686, %v3687
  %v3689 = vand.u32 %v3688, 4294901760
  %3690 = vmatmul.mubr.f32.gmra.mxu0 %v3689
  %v3691 = vpop.f32.mrf.mxu0
  %v3692 = vadd.f32 0.0, %v3691
  %v3693 = vpop.f32.mrf.mxu0
  %3694 = vdwg.mxu0
  %3695 = vmatprep.subr.mxu0 0.0
  %3696 = vmatpush1.msra.mxu0 0.0
  %3697 = vmatprep.subr.mxu0 0.0
  %3698 = vmatpush1.msra.mxu0 0.0
  %3699 = vmatprep.subr.mxu0 0.0
  %3700 = vmatpush1.msra.mxu0 0.0
  %3701 = vmatprep.subr.mxu0 0.0
  %3702 = vmatpush1.msra.mxu0 0.0
  %3703 = vmatprep.subr.mxu0 0.0
  %3704 = vmatpush1.msra.mxu0 0.0
  %3705 = vmatprep.subr.mxu0 0.0
  %3706 = vmatpush1.msra.mxu0 0.0
  %3707 = vmatprep.subr.mxu0 0.0
  %3708 = vmatpush1.msra.mxu0 0.0
  %3709 = vmatprep.subr.mxu0 0.0
  %3710 = vmatpush1.msra.mxu0 0.0
  %3711 = vmatprep.subr.mxu0 0.0
  %3712 = vmatpush1.msra.mxu0 0.0
  %3713 = vmatprep.subr.mxu0 0.0
  %3714 = vmatpush1.msra.mxu0 0.0
  %3715 = vmatprep.subr.mxu0 0.0
  %3716 = vmatpush1.msra.mxu0 0.0
  %3717 = vmatprep.subr.mxu0 0.0
  %3718 = vmatpush1.msra.mxu0 0.0
  %3719 = vmatprep.subr.mxu0 0.0
  %v3720 = vand.u32 %v3225, 4294901760
  %v3721 = vsub.f32 %v3225, %v3720
  %v3722 = vand.u32 %v3721, 4294901760
  %v3723 = vsub.f32 %v3721, %v3722
  %v3724 = vand.u32 %v3723, 4294901760
  %3725 = vmatpush1.msra.mxu0 %v3724
  %3726 = vmatprep.subr.mxu0 0.0
  %v3727 = vand.u32 %v3224, 4294901760
  %v3728 = vsub.f32 %v3224, %v3727
  %v3729 = vand.u32 %v3728, 4294901760
  %v3730 = vsub.f32 %v3728, %v3729
  %v3731 = vand.u32 %v3730, 4294901760
  %3732 = vmatpush1.msra.mxu0 %v3731
  %3733 = vmatprep.subr.mxu0 0.0
  %v3734 = vand.u32 %v3223, 4294901760
  %v3735 = vsub.f32 %v3223, %v3734
  %v3736 = vand.u32 %v3735, 4294901760
  %v3737 = vsub.f32 %v3735, %v3736
  %v3738 = vand.u32 %v3737, 4294901760
  %3739 = vmatpush1.msra.mxu0 %v3738
  %3740 = vmatprep.subr.mxu0 0.0
  %v3741 = vand.u32 %v3222, 4294901760
  %v3742 = vsub.f32 %v3222, %v3741
  %v3743 = vand.u32 %v3742, 4294901760
  %v3744 = vsub.f32 %v3742, %v3743
  %v3745 = vand.u32 %v3744, 4294901760
  %3746 = vmatpush1.msra.mxu0 %v3745
  %3747 = vmatprep.subr.mxu0 0.0
  %3748 = vmatpush2.msra.mxu0 0.0
  %3749 = vmatprep.subr.mxu0 0.0
  %3750 = vmatpush2.msra.mxu0 0.0
  %3751 = vmatprep.subr.mxu0 0.0
  %3752 = vmatpush2.msra.mxu0 0.0
  %3753 = vmatprep.subr.mxu0 0.0
  %3754 = vmatpush2.msra.mxu0 0.0
  %3755 = vmatprep.subr.mxu0 0.0
  %3756 = vmatpush2.msra.mxu0 0.0
  %3757 = vmatprep.subr.mxu0 0.0
  %3758 = vmatpush2.msra.mxu0 0.0
  %3759 = vmatprep.subr.mxu0 0.0
  %3760 = vmatpush2.msra.mxu0 0.0
  %3761 = vmatprep.subr.mxu0 0.0
  %3762 = vmatpush2.msra.mxu0 0.0
  %3763 = vmatprep.subr.mxu0 0.0
  %3764 = vmatpush2.msra.mxu0 0.0
  %3765 = vmatprep.subr.mxu0 0.0
  %3766 = vmatpush2.msra.mxu0 0.0
  %3767 = vmatprep.subr.mxu0 0.0
  %3768 = vmatpush2.msra.mxu0 0.0
  %3769 = vmatprep.subr.mxu0 0.0
  %3770 = vmatpush2.msra.mxu0 0.0
  %3771 = vmatprep.subr.mxu0 0.0
  %3772 = vmatpush2.msra.mxu0 0.0
  %3773 = vmatprep.subr.mxu0 0.0
  %3774 = vmatpush2.msra.mxu0 0.0
  %3775 = vmatprep.subr.mxu0 0.0
  %3776 = vmatpush2.msra.mxu0 0.0
  %3777 = vmatprep.subr.mxu0 0.0
  %3778 = vmatpush2.msra.mxu0 0.0
  %3779 = vmatprep.mubr.f32.mxu0 0.0
  %v3780 = vand.u32 %v3578, 4294901760
  %3781 = vmatmul.mubr.f32.gmra.mxu0 %v3780
  %v3782 = vpop.f32.mrf.mxu0
  %v3783 = vadd.f32 %v3662, %v3782
  %v3784 = vpop.f32.mrf.mxu0
  %3785 = vmatprep.mubr.f32.mxu0 0.0
  %v3786 = vand.u32 %v3580, 4294901760
  %3787 = vmatmul.mubr.f32.gmra.mxu0 %v3786
  %v3788 = vpop.f32.mrf.mxu0
  %v3789 = vadd.f32 %v3672, %v3788
  %v3790 = vpop.f32.mrf.mxu0
  %3791 = vmatprep.mubr.f32.mxu0 0.0
  %v3792 = vand.u32 %v3582, 4294901760
  %3793 = vmatmul.mubr.f32.gmra.mxu0 %v3792
  %v3794 = vpop.f32.mrf.mxu0
  %v3795 = vadd.f32 %v3682, %v3794
  %v3796 = vpop.f32.mrf.mxu0
  %3797 = vmatprep.mubr.f32.mxu0 0.0
  %v3798 = vand.u32 %v3584, 4294901760
  %3799 = vmatmul.mubr.f32.gmra.mxu0 %v3798
  %v3800 = vpop.f32.mrf.mxu0
  %v3801 = vadd.f32 %v3692, %v3800
  %v3802 = vpop.f32.mrf.mxu0
  %3803 = vdwg.mxu0
  %3804 = vmatprep.subr.mxu0 0.0
  %3805 = vmatpush1.msra.mxu0 0.0
  %3806 = vmatprep.subr.mxu0 0.0
  %3807 = vmatpush1.msra.mxu0 0.0
  %3808 = vmatprep.subr.mxu0 0.0
  %3809 = vmatpush1.msra.mxu0 0.0
  %3810 = vmatprep.subr.mxu0 0.0
  %3811 = vmatpush1.msra.mxu0 0.0
  %3812 = vmatprep.subr.mxu0 0.0
  %3813 = vmatpush1.msra.mxu0 0.0
  %3814 = vmatprep.subr.mxu0 0.0
  %3815 = vmatpush1.msra.mxu0 0.0
  %3816 = vmatprep.subr.mxu0 0.0
  %3817 = vmatpush1.msra.mxu0 0.0
  %3818 = vmatprep.subr.mxu0 0.0
  %3819 = vmatpush1.msra.mxu0 0.0
  %3820 = vmatprep.subr.mxu0 0.0
  %3821 = vmatpush1.msra.mxu0 0.0
  %3822 = vmatprep.subr.mxu0 0.0
  %3823 = vmatpush1.msra.mxu0 0.0
  %3824 = vmatprep.subr.mxu0 0.0
  %3825 = vmatpush1.msra.mxu0 0.0
  %3826 = vmatprep.subr.mxu0 0.0
  %3827 = vmatpush1.msra.mxu0 0.0
  %3828 = vmatprep.subr.mxu0 0.0
  %v3829 = vand.u32 %v3225, 4294901760
  %v3830 = vsub.f32 %v3225, %v3829
  %3831 = vmatpush1.msra.mxu0 %v3830
  %3832 = vmatprep.subr.mxu0 0.0
  %v3833 = vand.u32 %v3224, 4294901760
  %v3834 = vsub.f32 %v3224, %v3833
  %3835 = vmatpush1.msra.mxu0 %v3834
  %3836 = vmatprep.subr.mxu0 0.0
  %v3837 = vand.u32 %v3223, 4294901760
  %v3838 = vsub.f32 %v3223, %v3837
  %3839 = vmatpush1.msra.mxu0 %v3838
  %3840 = vmatprep.subr.mxu0 0.0
  %v3841 = vand.u32 %v3222, 4294901760
  %v3842 = vsub.f32 %v3222, %v3841
  %3843 = vmatpush1.msra.mxu0 %v3842
  %3844 = vmatprep.subr.mxu0 0.0
  %3845 = vmatpush2.msra.mxu0 0.0
  %3846 = vmatprep.subr.mxu0 0.0
  %3847 = vmatpush2.msra.mxu0 0.0
  %3848 = vmatprep.subr.mxu0 0.0
  %3849 = vmatpush2.msra.mxu0 0.0
  %3850 = vmatprep.subr.mxu0 0.0
  %3851 = vmatpush2.msra.mxu0 0.0
  %3852 = vmatprep.subr.mxu0 0.0
  %3853 = vmatpush2.msra.mxu0 0.0
  %3854 = vmatprep.subr.mxu0 0.0
  %3855 = vmatpush2.msra.mxu0 0.0
  %3856 = vmatprep.subr.mxu0 0.0
  %3857 = vmatpush2.msra.mxu0 0.0
  %3858 = vmatprep.subr.mxu0 0.0
  %3859 = vmatpush2.msra.mxu0 0.0
  %3860 = vmatprep.subr.mxu0 0.0
  %3861 = vmatpush2.msra.mxu0 0.0
  %3862 = vmatprep.subr.mxu0 0.0
  %3863 = vmatpush2.msra.mxu0 0.0
  %3864 = vmatprep.subr.mxu0 0.0
  %3865 = vmatpush2.msra.mxu0 0.0
  %3866 = vmatprep.subr.mxu0 0.0
  %3867 = vmatpush2.msra.mxu0 0.0
  %3868 = vmatprep.subr.mxu0 0.0
  %3869 = vmatpush2.msra.mxu0 0.0
  %3870 = vmatprep.subr.mxu0 0.0
  %3871 = vmatpush2.msra.mxu0 0.0
  %3872 = vmatprep.subr.mxu0 0.0
  %3873 = vmatpush2.msra.mxu0 0.0
  %3874 = vmatprep.subr.mxu0 0.0
  %3875 = vmatpush2.msra.mxu0 0.0
  %3876 = vmatprep.mubr.f32.mxu0 0.0
  %v3877 = vand.u32 %v3578, 4294901760
  %v3878 = vsub.f32 %v3578, %v3877
  %3879 = vmatmul.mubr.f32.gmra.mxu0 %v3878
  %v3880 = vpop.f32.mrf.mxu0
  %v3881 = vadd.f32 %v3783, %v3880
  %v3882 = vpop.f32.mrf.mxu0
  %3883 = vmatprep.mubr.f32.mxu0 0.0
  %v3884 = vand.u32 %v3580, 4294901760
  %v3885 = vsub.f32 %v3580, %v3884
  %3886 = vmatmul.mubr.f32.gmra.mxu0 %v3885
  %v3887 = vpop.f32.mrf.mxu0
  %v3888 = vadd.f32 %v3789, %v3887
  %v3889 = vpop.f32.mrf.mxu0
  %3890 = vmatprep.mubr.f32.mxu0 0.0
  %v3891 = vand.u32 %v3582, 4294901760
  %v3892 = vsub.f32 %v3582, %v3891
  %3893 = vmatmul.mubr.f32.gmra.mxu0 %v3892
  %v3894 = vpop.f32.mrf.mxu0
  %v3895 = vadd.f32 %v3795, %v3894
  %v3896 = vpop.f32.mrf.mxu0
  %3897 = vmatprep.mubr.f32.mxu0 0.0
  %v3898 = vand.u32 %v3584, 4294901760
  %v3899 = vsub.f32 %v3584, %v3898
  %3900 = vmatmul.mubr.f32.gmra.mxu0 %v3899
  %v3901 = vpop.f32.mrf.mxu0
  %v3902 = vadd.f32 %v3801, %v3901
  %v3903 = vpop.f32.mrf.mxu0
  %3904 = vdwg.mxu0
  %3905 = vmatprep.subr.mxu0 0.0
  %3906 = vmatpush1.msra.mxu0 0.0
  %3907 = vmatprep.subr.mxu0 0.0
  %3908 = vmatpush1.msra.mxu0 0.0
  %3909 = vmatprep.subr.mxu0 0.0
  %3910 = vmatpush1.msra.mxu0 0.0
  %3911 = vmatprep.subr.mxu0 0.0
  %3912 = vmatpush1.msra.mxu0 0.0
  %3913 = vmatprep.subr.mxu0 0.0
  %3914 = vmatpush1.msra.mxu0 0.0
  %3915 = vmatprep.subr.mxu0 0.0
  %3916 = vmatpush1.msra.mxu0 0.0
  %3917 = vmatprep.subr.mxu0 0.0
  %3918 = vmatpush1.msra.mxu0 0.0
  %3919 = vmatprep.subr.mxu0 0.0
  %3920 = vmatpush1.msra.mxu0 0.0
  %3921 = vmatprep.subr.mxu0 0.0
  %3922 = vmatpush1.msra.mxu0 0.0
  %3923 = vmatprep.subr.mxu0 0.0
  %3924 = vmatpush1.msra.mxu0 0.0
  %3925 = vmatprep.subr.mxu0 0.0
  %3926 = vmatpush1.msra.mxu0 0.0
  %3927 = vmatprep.subr.mxu0 0.0
  %3928 = vmatpush1.msra.mxu0 0.0
  %3929 = vmatprep.subr.mxu0 0.0
  %v3930 = vand.u32 %v3225, 4294901760
  %3931 = vmatpush1.msra.mxu0 %v3930
  %3932 = vmatprep.subr.mxu0 0.0
  %v3933 = vand.u32 %v3224, 4294901760
  %3934 = vmatpush1.msra.mxu0 %v3933
  %3935 = vmatprep.subr.mxu0 0.0
  %v3936 = vand.u32 %v3223, 4294901760
  %3937 = vmatpush1.msra.mxu0 %v3936
  %3938 = vmatprep.subr.mxu0 0.0
  %v3939 = vand.u32 %v3222, 4294901760
  %3940 = vmatpush1.msra.mxu0 %v3939
  %3941 = vmatprep.subr.mxu0 0.0
  %3942 = vmatpush2.msra.mxu0 0.0
  %3943 = vmatprep.subr.mxu0 0.0
  %3944 = vmatpush2.msra.mxu0 0.0
  %3945 = vmatprep.subr.mxu0 0.0
  %3946 = vmatpush2.msra.mxu0 0.0
  %3947 = vmatprep.subr.mxu0 0.0
  %3948 = vmatpush2.msra.mxu0 0.0
  %3949 = vmatprep.subr.mxu0 0.0
  %3950 = vmatpush2.msra.mxu0 0.0
  %3951 = vmatprep.subr.mxu0 0.0
  %3952 = vmatpush2.msra.mxu0 0.0
  %3953 = vmatprep.subr.mxu0 0.0
  %3954 = vmatpush2.msra.mxu0 0.0
  %3955 = vmatprep.subr.mxu0 0.0
  %3956 = vmatpush2.msra.mxu0 0.0
  %3957 = vmatprep.subr.mxu0 0.0
  %3958 = vmatpush2.msra.mxu0 0.0
  %3959 = vmatprep.subr.mxu0 0.0
  %3960 = vmatpush2.msra.mxu0 0.0
  %3961 = vmatprep.subr.mxu0 0.0
  %3962 = vmatpush2.msra.mxu0 0.0
  %3963 = vmatprep.subr.mxu0 0.0
  %3964 = vmatpush2.msra.mxu0 0.0
  %3965 = vmatprep.subr.mxu0 0.0
  %3966 = vmatpush2.msra.mxu0 0.0
  %3967 = vmatprep.subr.mxu0 0.0
  %3968 = vmatpush2.msra.mxu0 0.0
  %3969 = vmatprep.subr.mxu0 0.0
  %3970 = vmatpush2.msra.mxu0 0.0
  %3971 = vmatprep.subr.mxu0 0.0
  %3972 = vmatpush2.msra.mxu0 0.0
  %3973 = vmatprep.mubr.f32.mxu0 0.0
  %v3974 = vand.u32 %v3578, 4294901760
  %v3975 = vsub.f32 %v3578, %v3974
  %v3976 = vand.u32 %v3975, 4294901760
  %3977 = vmatmul.mubr.f32.gmra.mxu0 %v3976
  %v3978 = vpop.f32.mrf.mxu0
  %v3979 = vadd.f32 %v3881, %v3978
  %v3980 = vpop.f32.mrf.mxu0
  %3981 = vmatprep.mubr.f32.mxu0 0.0
  %v3982 = vand.u32 %v3580, 4294901760
  %v3983 = vsub.f32 %v3580, %v3982
  %v3984 = vand.u32 %v3983, 4294901760
  %3985 = vmatmul.mubr.f32.gmra.mxu0 %v3984
  %v3986 = vpop.f32.mrf.mxu0
  %v3987 = vadd.f32 %v3888, %v3986
  %v3988 = vpop.f32.mrf.mxu0
  %3989 = vmatprep.mubr.f32.mxu0 0.0
  %v3990 = vand.u32 %v3582, 4294901760
  %v3991 = vsub.f32 %v3582, %v3990
  %v3992 = vand.u32 %v3991, 4294901760
  %3993 = vmatmul.mubr.f32.gmra.mxu0 %v3992
  %v3994 = vpop.f32.mrf.mxu0
  %v3995 = vadd.f32 %v3895, %v3994
  %v3996 = vpop.f32.mrf.mxu0
  %3997 = vmatprep.mubr.f32.mxu0 0.0
  %v3998 = vand.u32 %v3584, 4294901760
  %v3999 = vsub.f32 %v3584, %v3998
  %v4000 = vand.u32 %v3999, 4294901760
  %4001 = vmatmul.mubr.f32.gmra.mxu0 %v4000
  %v4002 = vpop.f32.mrf.mxu0
  %v4003 = vadd.f32 %v3902, %v4002
  %v4004 = vpop.f32.mrf.mxu0
  %4005 = vdwg.mxu0
  %4006 = vmatprep.subr.mxu0 0.0
  %4007 = vmatpush1.msra.mxu0 0.0
  %4008 = vmatprep.subr.mxu0 0.0
  %4009 = vmatpush1.msra.mxu0 0.0
  %4010 = vmatprep.subr.mxu0 0.0
  %4011 = vmatpush1.msra.mxu0 0.0
  %4012 = vmatprep.subr.mxu0 0.0
  %4013 = vmatpush1.msra.mxu0 0.0
  %4014 = vmatprep.subr.mxu0 0.0
  %4015 = vmatpush1.msra.mxu0 0.0
  %4016 = vmatprep.subr.mxu0 0.0
  %4017 = vmatpush1.msra.mxu0 0.0
  %4018 = vmatprep.subr.mxu0 0.0
  %4019 = vmatpush1.msra.mxu0 0.0
  %4020 = vmatprep.subr.mxu0 0.0
  %4021 = vmatpush1.msra.mxu0 0.0
  %4022 = vmatprep.subr.mxu0 0.0
  %4023 = vmatpush1.msra.mxu0 0.0
  %4024 = vmatprep.subr.mxu0 0.0
  %4025 = vmatpush1.msra.mxu0 0.0
  %4026 = vmatprep.subr.mxu0 0.0
  %4027 = vmatpush1.msra.mxu0 0.0
  %4028 = vmatprep.subr.mxu0 0.0
  %4029 = vmatpush1.msra.mxu0 0.0
  %4030 = vmatprep.subr.mxu0 0.0
  %v4031 = vand.u32 %v3225, 4294901760
  %v4032 = vsub.f32 %v3225, %v4031
  %v4033 = vand.u32 %v4032, 4294901760
  %4034 = vmatpush1.msra.mxu0 %v4033
  %4035 = vmatprep.subr.mxu0 0.0
  %v4036 = vand.u32 %v3224, 4294901760
  %v4037 = vsub.f32 %v3224, %v4036
  %v4038 = vand.u32 %v4037, 4294901760
  %4039 = vmatpush1.msra.mxu0 %v4038
  %4040 = vmatprep.subr.mxu0 0.0
  %v4041 = vand.u32 %v3223, 4294901760
  %v4042 = vsub.f32 %v3223, %v4041
  %v4043 = vand.u32 %v4042, 4294901760
  %4044 = vmatpush1.msra.mxu0 %v4043
  %4045 = vmatprep.subr.mxu0 0.0
  %v4046 = vand.u32 %v3222, 4294901760
  %v4047 = vsub.f32 %v3222, %v4046
  %v4048 = vand.u32 %v4047, 4294901760
  %4049 = vmatpush1.msra.mxu0 %v4048
  %4050 = vmatprep.subr.mxu0 0.0
  %4051 = vmatpush2.msra.mxu0 0.0
  %4052 = vmatprep.subr.mxu0 0.0
  %4053 = vmatpush2.msra.mxu0 0.0
  %4054 = vmatprep.subr.mxu0 0.0
  %4055 = vmatpush2.msra.mxu0 0.0
  %4056 = vmatprep.subr.mxu0 0.0
  %4057 = vmatpush2.msra.mxu0 0.0
  %4058 = vmatprep.subr.mxu0 0.0
  %4059 = vmatpush2.msra.mxu0 0.0
  %4060 = vmatprep.subr.mxu0 0.0
  %4061 = vmatpush2.msra.mxu0 0.0
  %4062 = vmatprep.subr.mxu0 0.0
  %4063 = vmatpush2.msra.mxu0 0.0
  %4064 = vmatprep.subr.mxu0 0.0
  %4065 = vmatpush2.msra.mxu0 0.0
  %4066 = vmatprep.subr.mxu0 0.0
  %4067 = vmatpush2.msra.mxu0 0.0
  %4068 = vmatprep.subr.mxu0 0.0
  %4069 = vmatpush2.msra.mxu0 0.0
  %4070 = vmatprep.subr.mxu0 0.0
  %4071 = vmatpush2.msra.mxu0 0.0
  %4072 = vmatprep.subr.mxu0 0.0
  %4073 = vmatpush2.msra.mxu0 0.0
  %4074 = vmatprep.subr.mxu0 0.0
  %4075 = vmatpush2.msra.mxu0 0.0
  %4076 = vmatprep.subr.mxu0 0.0
  %4077 = vmatpush2.msra.mxu0 0.0
  %4078 = vmatprep.subr.mxu0 0.0
  %4079 = vmatpush2.msra.mxu0 0.0
  %4080 = vmatprep.subr.mxu0 0.0
  %4081 = vmatpush2.msra.mxu0 0.0
  %4082 = vmatprep.mubr.f32.mxu0 0.0
  %v4083 = vand.u32 %v3578, 4294901760
  %4084 = vmatmul.mubr.f32.gmra.mxu0 %v4083
  %v4085 = vpop.f32.mrf.mxu0
  %v4086 = vadd.f32 %v3979, %v4085
  %v4087 = vpop.f32.mrf.mxu0
  %4088 = vmatprep.mubr.f32.mxu0 0.0
  %v4089 = vand.u32 %v3580, 4294901760
  %4090 = vmatmul.mubr.f32.gmra.mxu0 %v4089
  %v4091 = vpop.f32.mrf.mxu0
  %v4092 = vadd.f32 %v3987, %v4091
  %v4093 = vpop.f32.mrf.mxu0
  %4094 = vmatprep.mubr.f32.mxu0 0.0
  %v4095 = vand.u32 %v3582, 4294901760
  %4096 = vmatmul.mubr.f32.gmra.mxu0 %v4095
  %v4097 = vpop.f32.mrf.mxu0
  %v4098 = vadd.f32 %v3995, %v4097
  %v4099 = vpop.f32.mrf.mxu0
  %4100 = vmatprep.mubr.f32.mxu0 0.0
  %v4101 = vand.u32 %v3584, 4294901760
  %4102 = vmatmul.mubr.f32.gmra.mxu0 %v4101
  %v4103 = vpop.f32.mrf.mxu0
  %v4104 = vadd.f32 %v4003, %v4103
  %v4105 = vpop.f32.mrf.mxu0
  %4106 = vdwg.mxu0
  %4107 = vmatprep.subr.mxu0 0.0
  %4108 = vmatpush1.msra.mxu0 0.0
  %4109 = vmatprep.subr.mxu0 0.0
  %4110 = vmatpush1.msra.mxu0 0.0
  %4111 = vmatprep.subr.mxu0 0.0
  %4112 = vmatpush1.msra.mxu0 0.0
  %4113 = vmatprep.subr.mxu0 0.0
  %4114 = vmatpush1.msra.mxu0 0.0
  %4115 = vmatprep.subr.mxu0 0.0
  %4116 = vmatpush1.msra.mxu0 0.0
  %4117 = vmatprep.subr.mxu0 0.0
  %4118 = vmatpush1.msra.mxu0 0.0
  %4119 = vmatprep.subr.mxu0 0.0
  %4120 = vmatpush1.msra.mxu0 0.0
  %4121 = vmatprep.subr.mxu0 0.0
  %4122 = vmatpush1.msra.mxu0 0.0
  %4123 = vmatprep.subr.mxu0 0.0
  %4124 = vmatpush1.msra.mxu0 0.0
  %4125 = vmatprep.subr.mxu0 0.0
  %4126 = vmatpush1.msra.mxu0 0.0
  %4127 = vmatprep.subr.mxu0 0.0
  %4128 = vmatpush1.msra.mxu0 0.0
  %4129 = vmatprep.subr.mxu0 0.0
  %4130 = vmatpush1.msra.mxu0 0.0
  %4131 = vmatprep.subr.mxu0 0.0
  %v4132 = vand.u32 %v3225, 4294901760
  %4133 = vmatpush1.msra.mxu0 %v4132
  %4134 = vmatprep.subr.mxu0 0.0
  %v4135 = vand.u32 %v3224, 4294901760
  %4136 = vmatpush1.msra.mxu0 %v4135
  %4137 = vmatprep.subr.mxu0 0.0
  %v4138 = vand.u32 %v3223, 4294901760
  %4139 = vmatpush1.msra.mxu0 %v4138
  %4140 = vmatprep.subr.mxu0 0.0
  %v4141 = vand.u32 %v3222, 4294901760
  %4142 = vmatpush1.msra.mxu0 %v4141
  %4143 = vmatprep.subr.mxu0 0.0
  %4144 = vmatpush2.msra.mxu0 0.0
  %4145 = vmatprep.subr.mxu0 0.0
  %4146 = vmatpush2.msra.mxu0 0.0
  %4147 = vmatprep.subr.mxu0 0.0
  %4148 = vmatpush2.msra.mxu0 0.0
  %4149 = vmatprep.subr.mxu0 0.0
  %4150 = vmatpush2.msra.mxu0 0.0
  %4151 = vmatprep.subr.mxu0 0.0
  %4152 = vmatpush2.msra.mxu0 0.0
  %4153 = vmatprep.subr.mxu0 0.0
  %4154 = vmatpush2.msra.mxu0 0.0
  %4155 = vmatprep.subr.mxu0 0.0
  %4156 = vmatpush2.msra.mxu0 0.0
  %4157 = vmatprep.subr.mxu0 0.0
  %4158 = vmatpush2.msra.mxu0 0.0
  %4159 = vmatprep.subr.mxu0 0.0
  %4160 = vmatpush2.msra.mxu0 0.0
  %4161 = vmatprep.subr.mxu0 0.0
  %4162 = vmatpush2.msra.mxu0 0.0
  %4163 = vmatprep.subr.mxu0 0.0
  %4164 = vmatpush2.msra.mxu0 0.0
  %4165 = vmatprep.subr.mxu0 0.0
  %4166 = vmatpush2.msra.mxu0 0.0
  %4167 = vmatprep.subr.mxu0 0.0
  %4168 = vmatpush2.msra.mxu0 0.0
  %4169 = vmatprep.subr.mxu0 0.0
  %4170 = vmatpush2.msra.mxu0 0.0
  %4171 = vmatprep.subr.mxu0 0.0
  %4172 = vmatpush2.msra.mxu0 0.0
  %4173 = vmatprep.subr.mxu0 0.0
  %4174 = vmatpush2.msra.mxu0 0.0
  %4175 = vmatprep.mubr.f32.mxu0 0.0
  %v4176 = vand.u32 %v3578, 4294901760
  %4177 = vmatmul.mubr.f32.gmra.mxu0 %v4176
  %v4178 = vpop.f32.mrf.mxu0
  %v4179 = vadd.f32 %v4086, %v4178
  %v4180 = vpop.f32.mrf.mxu0
  %4181 = vmatprep.mubr.f32.mxu0 0.0
  %v4182 = vand.u32 %v3580, 4294901760
  %4183 = vmatmul.mubr.f32.gmra.mxu0 %v4182
  %v4184 = vpop.f32.mrf.mxu0
  %v4185 = vadd.f32 %v4092, %v4184
  %v4186 = vpop.f32.mrf.mxu0
  %4187 = vmatprep.mubr.f32.mxu0 0.0
  %v4188 = vand.u32 %v3582, 4294901760
  %4189 = vmatmul.mubr.f32.gmra.mxu0 %v4188
  %v4190 = vpop.f32.mrf.mxu0
  %v4191 = vadd.f32 %v4098, %v4190
  %v4192 = vpop.f32.mrf.mxu0
  %4193 = vmatprep.mubr.f32.mxu0 0.0
  %v4194 = vand.u32 %v3584, 4294901760
  %4195 = vmatmul.mubr.f32.gmra.mxu0 %v4194
  %v4196 = vpop.f32.mrf.mxu0
  %v4197 = vadd.f32 %v4104, %v4196
  %v4198 = vpop.f32.mrf.mxu0
  %4199 = vdwg.mxu0
  %v4200 = vld [vmem:[%s10] sm:$0x1]
  %v4201 = vld [vmem:[%s11] sm:$0x1]
  %v4202 = vsel %vm862, %v4179, 0.0
  %v4203 = vsel %vm862, %v4185, 0.0
  %v4204 = vadd.f32 %v4202, %v4203
  %v4205 = vsel %vm862, %v4191, 0.0
  %v4206 = vadd.f32 %v4204, %v4205
  %v4207 = vsel %vm862, %v4197, 0.0
  %v4208 = vadd.f32 %v4206, %v4207
  %v4209 = vrot.slane %v4208, 4
  %v4210 = vadd.f32 %v4208, %v4209
  %v4211 = vrot.slane %v4210, 2
  %v4212 = vadd.f32 %v4210, %v4211
  %v4213 = vrot.slane %v4212, 1
  %v4214 = vadd.f32 %v4212, %v4213
  %v4215 = vmul.f32 %v4214, %v1765
  %4217 = vrot.lane.b32.xlu0 %v4215, 124
  %v4218 = vpop.permute.xlu0 %4217
  %v4220 = vadd.f32 %v4215, %v4218
  %4221 = vrot.lane.b32.xlu0 %v4215, 120
  %v4222 = vpop.permute.xlu0 %4221
  %v4224 = vadd.f32 %v4220, %v4222
  %4225 = vrot.lane.b32.xlu0 %v4215, 116
  %v4226 = vpop.permute.xlu0 %4225
  %v4228 = vadd.f32 %v4224, %v4226
  %v4229 = vmul.f32 %v4228, 0.25
  %4231 = vrot.lane.b32.xlu0 %v4229, 4
  %v4232 = vpop.permute.xlu0 %4231
  %4234 = vrot.lane.b32.xlu0 %v4229, 8
  %v4235 = vpop.permute.xlu0 %4234
  %4237 = vrot.lane.b32.xlu0 %v4229, 12
  %v4238 = vpop.permute.xlu0 %4237
  %vm4240 = vcmask 31744
  %v4241 = vsel %vm4240, %v4229, %v4232
  %v4242 = vsel %vm63, %v4241, %v4235
  %vm4243 = vcmask 97280
  %v4244 = vsel %vm4243, %v4242, %v4238
  %v4245 = vlaneseq
  %v4246 = vshrl.u32 %v4245, 7
  %v4247 = vsub.s32 0, %v4246
  %v4248 = vrot.slane %v4244, %v4247
  %v4249 = vsub.f32 %v4179, %v4248
  %v4250 = vsub.f32 %v4185, %v4248
  %v4251 = vsub.f32 %v4191, %v4248
  %v4252 = vsub.f32 %v4197, %v4248
  %v4253 = vmul.f32 %v4249, %v4249
  %v4254 = vmul.f32 %v4250, %v4250
  %v4255 = vmul.f32 %v4251, %v4251
  %v4256 = vmul.f32 %v4252, %v4252
  %v4257 = vsel %vm862, %v4253, 0.0
  %v4258 = vsel %vm862, %v4254, 0.0
  %v4259 = vadd.f32 %v4257, %v4258
  %v4260 = vsel %vm862, %v4255, 0.0
  %v4261 = vadd.f32 %v4259, %v4260
  %v4262 = vsel %vm862, %v4256, 0.0
  %v4263 = vadd.f32 %v4261, %v4262
  %v4264 = vrot.slane %v4263, 4
  %v4265 = vadd.f32 %v4263, %v4264
  %v4266 = vrot.slane %v4265, 2
  %v4267 = vadd.f32 %v4265, %v4266
  %v4268 = vrot.slane %v4267, 1
  %v4269 = vadd.f32 %v4267, %v4268
  %v4270 = vmul.f32 %v4269, %v1765
  %4272 = vrot.lane.b32.xlu0 %v4270, 124
  %v4273 = vpop.permute.xlu0 %4272
  %v4275 = vadd.f32 %v4270, %v4273
  %4276 = vrot.lane.b32.xlu0 %v4270, 120
  %v4277 = vpop.permute.xlu0 %4276
  %v4279 = vadd.f32 %v4275, %v4277
  %4280 = vrot.lane.b32.xlu0 %v4270, 116
  %v4281 = vpop.permute.xlu0 %4280
  %v4283 = vadd.f32 %v4279, %v4281
  %v4284 = vmul.f32 %v4283, 0.25
  %v4285 = vadd.f32 %v4284, 1e-05
  %v4286 = vrsqrt.pop %v4285
  %v4287 = vmul.f32 %v4200, %v4286
  %v4289 = vlaneseq
  %v4290 = vshrl.u32 %v4289, 7
  %v4291 = vsub.s32 0, %v4290
  %v4292 = vrot.slane %v4287, %v4291
  %4293 = vrot.lane.b32.xlu0 %v4292, 4
  %v4294 = vpop.permute.xlu0 %4293
  %4296 = vrot.lane.b32.xlu0 %v4292, 8
  %v4297 = vpop.permute.xlu0 %4296
  %4299 = vrot.lane.b32.xlu0 %v4292, 12
  %v4300 = vpop.permute.xlu0 %4299
  %v4302 = vsel %vm4240, %v4287, %v4294
  %v4303 = vsel %vm63, %v4302, %v4297
  %v4304 = vsel %vm4243, %v4303, %v4300
  %v4305 = vlaneseq
  %v4306 = vshrl.u32 %v4305, 7
  %v4307 = vsub.s32 0, %v4306
  %v4308 = vrot.slane %v4304, %v4307
  %v4309 = vmul.f32 %v4249, %v4308
  %v4310 = vmul.f32 %v4250, %v4308
  %v4311 = vmul.f32 %v4251, %v4308
  %v4312 = vmul.f32 %v4252, %v4308
  %v4314 = vlaneseq
  %v4315 = vshrl.u32 %v4314, 7
  %v4316 = vsub.s32 0, %v4315
  %v4317 = vrot.slane %v4201, %v4316
  %4318 = vrot.lane.b32.xlu0 %v4317, 4
  %v4319 = vpop.permute.xlu0 %4318
  %4321 = vrot.lane.b32.xlu0 %v4317, 8
  %v4322 = vpop.permute.xlu0 %4321
  %4324 = vrot.lane.b32.xlu0 %v4317, 12
  %v4325 = vpop.permute.xlu0 %4324
  %v4327 = vsel %vm4240, %v4201, %v4319
  %v4328 = vsel %vm63, %v4327, %v4322
  %v4329 = vsel %vm4243, %v4328, %v4325
  %v4330 = vlaneseq
  %v4331 = vshrl.u32 %v4330, 7
  %v4332 = vsub.s32 0, %v4331
  %v4333 = vrot.slane %v4329, %v4332
  %v4334 = vadd.f32 %v4309, %v4333
  %v4335 = vadd.f32 %v4310, %v4333
  %v4336 = vadd.f32 %v4311, %v4333
  %v4337 = vadd.f32 %v4312, %v4333
  %v4338 = vmax.f32 %v4334, 0.0
  %v4339 = vmax.f32 %v4335, 0.0
  %v4340 = vmax.f32 %v4336, 0.0
  %v4341 = vmax.f32 %v4337, 0.0
  %v4346 = vcombine.high %v4338, %v4338
  %v4348 = vunpack.c.l.s4 1983009808
  %v4349 = vunpack.c.0.s8 %v4348
  %v4350 = vlaneseq
  %v4351 = vshrl.u32 %v4350, 7
  %v4352 = vsub.s32 %v4349, %v4351
  %v4353 = vrot.slane %v4338, %v4352
  %v4355 = vunpack.c.l.s4 1983009808
  %v4356 = vunpack.c.0.s8 %v4355
  %v4357 = vlaneseq
  %v4358 = vshrl.u32 %v4357, 7
  %v4359 = vsub.s32 %v4356, %v4358
  %v4360 = vrot.slane %v4346, %v4359
  %v4361 = vcombine.high %v4353, %v4353
  %v4362 = vcombine.high %v4360, %v4360
  %v4363 = vcombine.high %v4339, %v4339
  %v4365 = vunpack.c.l.s4 1983009808
  %v4366 = vunpack.c.0.s8 %v4365
  %v4367 = vlaneseq
  %v4368 = vshrl.u32 %v4367, 7
  %v4369 = vsub.s32 %v4366, %v4368
  %v4370 = vrot.slane %v4339, %v4369
  %v4372 = vunpack.c.l.s4 1983009808
  %v4373 = vunpack.c.0.s8 %v4372
  %v4374 = vlaneseq
  %v4375 = vshrl.u32 %v4374, 7
  %v4376 = vsub.s32 %v4373, %v4375
  %v4377 = vrot.slane %v4363, %v4376
  %v4378 = vcombine.high %v4370, %v4370
  %v4379 = vcombine.high %v4377, %v4377
  %v4380 = vcombine.high %v4340, %v4340
  %v4382 = vunpack.c.l.s4 1983009808
  %v4383 = vunpack.c.0.s8 %v4382
  %v4384 = vlaneseq
  %v4385 = vshrl.u32 %v4384, 7
  %v4386 = vsub.s32 %v4383, %v4385
  %v4387 = vrot.slane %v4340, %v4386
  %v4389 = vunpack.c.l.s4 1983009808
  %v4390 = vunpack.c.0.s8 %v4389
  %v4391 = vlaneseq
  %v4392 = vshrl.u32 %v4391, 7
  %v4393 = vsub.s32 %v4390, %v4392
  %v4394 = vrot.slane %v4380, %v4393
  %v4395 = vcombine.high %v4387, %v4387
  %v4396 = vcombine.high %v4394, %v4394
  %v4397 = vcombine.high %v4341, %v4341
  %v4399 = vunpack.c.l.s4 1983009808
  %v4400 = vunpack.c.0.s8 %v4399
  %v4401 = vlaneseq
  %v4402 = vshrl.u32 %v4401, 7
  %v4403 = vsub.s32 %v4400, %v4402
  %v4404 = vrot.slane %v4341, %v4403
  %v4406 = vunpack.c.l.s4 1983009808
  %v4407 = vunpack.c.0.s8 %v4406
  %v4408 = vlaneseq
  %v4409 = vshrl.u32 %v4408, 7
  %v4410 = vsub.s32 %v4407, %v4409
  %v4411 = vrot.slane %v4397, %v4410
  %v4412 = vcombine.high %v4404, %v4404
  %v4413 = vcombine.high %v4411, %v4411
  %4430 = vrot.lane.b32.xlu0 %v4353, 124
  %v4431 = vpop.permute.xlu0 %4430
  %4432 = vrot.lane.b32.xlu0 %v4361, 124
  %v4433 = vpop.permute.xlu0 %4432
  %4434 = vrot.lane.b32.xlu0 %v4360, 124
  %v4435 = vpop.permute.xlu0 %4434
  %4436 = vrot.lane.b32.xlu0 %v4362, 124
  %v4437 = vpop.permute.xlu0 %4436
  %4438 = vrot.lane.b32.xlu0 %v4370, 124
  %v4439 = vpop.permute.xlu0 %4438
  %4440 = vrot.lane.b32.xlu0 %v4378, 124
  %v4441 = vpop.permute.xlu0 %4440
  %4442 = vrot.lane.b32.xlu0 %v4377, 124
  %v4443 = vpop.permute.xlu0 %4442
  %4444 = vrot.lane.b32.xlu0 %v4379, 124
  %v4445 = vpop.permute.xlu0 %4444
  %4446 = vrot.lane.b32.xlu0 %v4387, 124
  %v4447 = vpop.permute.xlu0 %4446
  %4448 = vrot.lane.b32.xlu0 %v4395, 124
  %v4449 = vpop.permute.xlu0 %4448
  %4450 = vrot.lane.b32.xlu0 %v4394, 124
  %v4451 = vpop.permute.xlu0 %4450
  %4452 = vrot.lane.b32.xlu0 %v4396, 124
  %v4453 = vpop.permute.xlu0 %4452
  %4454 = vrot.lane.b32.xlu0 %v4404, 124
  %v4455 = vpop.permute.xlu0 %4454
  %4456 = vrot.lane.b32.xlu0 %v4412, 124
  %v4457 = vpop.permute.xlu0 %4456
  %4458 = vrot.lane.b32.xlu0 %v4411, 124
  %v4459 = vpop.permute.xlu0 %4458
  %4460 = vrot.lane.b32.xlu0 %v4413, 124
  %v4461 = vpop.permute.xlu0 %4460
  %4478 = vrot.lane.b32.xlu0 %v4353, 120
  %v4479 = vpop.permute.xlu0 %4478
  %4480 = vrot.lane.b32.xlu0 %v4431, 120
  %v4481 = vpop.permute.xlu0 %4480
  %4482 = vrot.lane.b32.xlu0 %v4361, 120
  %v4483 = vpop.permute.xlu0 %4482
  %4484 = vrot.lane.b32.xlu0 %v4433, 120
  %v4485 = vpop.permute.xlu0 %4484
  %4486 = vrot.lane.b32.xlu0 %v4360, 120
  %v4487 = vpop.permute.xlu0 %4486
  %4488 = vrot.lane.b32.xlu0 %v4435, 120
  %v4489 = vpop.permute.xlu0 %4488
  %4490 = vrot.lane.b32.xlu0 %v4362, 120
  %v4491 = vpop.permute.xlu0 %4490
  %4492 = vrot.lane.b32.xlu0 %v4437, 120
  %v4493 = vpop.permute.xlu0 %4492
  %4494 = vrot.lane.b32.xlu0 %v4370, 120
  %v4495 = vpop.permute.xlu0 %4494
  %4496 = vrot.lane.b32.xlu0 %v4439, 120
  %v4497 = vpop.permute.xlu0 %4496
  %4498 = vrot.lane.b32.xlu0 %v4378, 120
  %v4499 = vpop.permute.xlu0 %4498
  %4500 = vrot.lane.b32.xlu0 %v4441, 120
  %v4501 = vpop.permute.xlu0 %4500
  %4502 = vrot.lane.b32.xlu0 %v4377, 120
  %v4503 = vpop.permute.xlu0 %4502
  %4504 = vrot.lane.b32.xlu0 %v4443, 120
  %v4505 = vpop.permute.xlu0 %4504
  %4506 = vrot.lane.b32.xlu0 %v4379, 120
  %v4507 = vpop.permute.xlu0 %4506
  %4508 = vrot.lane.b32.xlu0 %v4445, 120
  %v4509 = vpop.permute.xlu0 %4508
  %4510 = vrot.lane.b32.xlu0 %v4387, 120
  %v4511 = vpop.permute.xlu0 %4510
  %4512 = vrot.lane.b32.xlu0 %v4447, 120
  %v4513 = vpop.permute.xlu0 %4512
  %4514 = vrot.lane.b32.xlu0 %v4395, 120
  %v4515 = vpop.permute.xlu0 %4514
  %4516 = vrot.lane.b32.xlu0 %v4449, 120
  %v4517 = vpop.permute.xlu0 %4516
  %4518 = vrot.lane.b32.xlu0 %v4394, 120
  %v4519 = vpop.permute.xlu0 %4518
  %4520 = vrot.lane.b32.xlu0 %v4451, 120
  %v4521 = vpop.permute.xlu0 %4520
  %4522 = vrot.lane.b32.xlu0 %v4396, 120
  %v4523 = vpop.permute.xlu0 %4522
  %4524 = vrot.lane.b32.xlu0 %v4453, 120
  %v4525 = vpop.permute.xlu0 %4524
  %4526 = vrot.lane.b32.xlu0 %v4404, 120
  %v4527 = vpop.permute.xlu0 %4526
  %4528 = vrot.lane.b32.xlu0 %v4455, 120
  %v4529 = vpop.permute.xlu0 %4528
  %4530 = vrot.lane.b32.xlu0 %v4412, 120
  %v4531 = vpop.permute.xlu0 %4530
  %4532 = vrot.lane.b32.xlu0 %v4457, 120
  %v4533 = vpop.permute.xlu0 %4532
  %4534 = vrot.lane.b32.xlu0 %v4411, 120
  %v4535 = vpop.permute.xlu0 %4534
  %4536 = vrot.lane.b32.xlu0 %v4459, 120
  %v4537 = vpop.permute.xlu0 %4536
  %4538 = vrot.lane.b32.xlu0 %v4413, 120
  %v4539 = vpop.permute.xlu0 %4538
  %4540 = vrot.lane.b32.xlu0 %v4461, 120
  %v4541 = vpop.permute.xlu0 %4540
  %v4574 = vld [vmem:[%s12] sm:$0xff]
  %v4575 = vld [vmem:[%s12 + $0x8] sm:$0xff]
  %v4577 = vunpack.c.l.s4 1983009808
  %v4578 = vunpack.c.0.s8 %v4577
  %v4579 = vlaneseq
  %v4580 = vshrl.u32 %v4579, 7
  %v4581 = vsub.s32 %v4578, %v4580
  %v4582 = vrot.slane %v4431, %v4581
  %v4584 = vunpack.c.l.s4 1983009808
  %v4585 = vunpack.c.0.s8 %v4584
  %v4586 = vlaneseq
  %v4587 = vshrl.u32 %v4586, 7
  %v4588 = vsub.s32 %v4585, %v4587
  %v4589 = vrot.slane %v4361, %v4588
  %v4591 = vunpack.c.l.s4 1983009808
  %v4592 = vunpack.c.0.s8 %v4591
  %v4593 = vlaneseq
  %v4594 = vshrl.u32 %v4593, 7
  %v4595 = vsub.s32 %v4592, %v4594
  %v4596 = vrot.slane %v4433, %v4595
  %v4598 = vunpack.c.l.s4 1983009808
  %v4599 = vunpack.c.0.s8 %v4598
  %v4600 = vlaneseq
  %v4601 = vshrl.u32 %v4600, 7
  %v4602 = vsub.s32 %v4599, %v4601
  %v4603 = vrot.slane %v4360, %v4602
  %v4605 = vunpack.c.l.s4 1983009808
  %v4606 = vunpack.c.0.s8 %v4605
  %v4607 = vlaneseq
  %v4608 = vshrl.u32 %v4607, 7
  %v4609 = vsub.s32 %v4606, %v4608
  %v4610 = vrot.slane %v4435, %v4609
  %v4612 = vunpack.c.l.s4 1983009808
  %v4613 = vunpack.c.0.s8 %v4612
  %v4614 = vlaneseq
  %v4615 = vshrl.u32 %v4614, 7
  %v4616 = vsub.s32 %v4613, %v4615
  %v4617 = vrot.slane %v4362, %v4616
  %v4619 = vunpack.c.l.s4 1983009808
  %v4620 = vunpack.c.0.s8 %v4619
  %v4621 = vlaneseq
  %v4622 = vshrl.u32 %v4621, 7
  %v4623 = vsub.s32 %v4620, %v4622
  %v4624 = vrot.slane %v4437, %v4623
  %v4626 = vunpack.c.l.s4 1983009808
  %v4627 = vunpack.c.0.s8 %v4626
  %v4628 = vlaneseq
  %v4629 = vshrl.u32 %v4628, 7
  %v4630 = vsub.s32 %v4627, %v4629
  %v4631 = vrot.slane %v4481, %v4630
  %v4633 = vunpack.c.l.s4 1983009808
  %v4634 = vunpack.c.0.s8 %v4633
  %v4635 = vlaneseq
  %v4636 = vshrl.u32 %v4635, 7
  %v4637 = vsub.s32 %v4634, %v4636
  %v4638 = vrot.slane %v4483, %v4637
  %v4640 = vunpack.c.l.s4 1983009808
  %v4641 = vunpack.c.0.s8 %v4640
  %v4642 = vlaneseq
  %v4643 = vshrl.u32 %v4642, 7
  %v4644 = vsub.s32 %v4641, %v4643
  %v4645 = vrot.slane %v4485, %v4644
  %v4647 = vunpack.c.l.s4 1983009808
  %v4648 = vunpack.c.0.s8 %v4647
  %v4649 = vlaneseq
  %v4650 = vshrl.u32 %v4649, 7
  %v4651 = vsub.s32 %v4648, %v4650
  %v4652 = vrot.slane %v4487, %v4651
  %v4654 = vunpack.c.l.s4 1983009808
  %v4655 = vunpack.c.0.s8 %v4654
  %v4656 = vlaneseq
  %v4657 = vshrl.u32 %v4656, 7
  %v4658 = vsub.s32 %v4655, %v4657
  %v4659 = vrot.slane %v4489, %v4658
  %v4661 = vunpack.c.l.s4 1983009808
  %v4662 = vunpack.c.0.s8 %v4661
  %v4663 = vlaneseq
  %v4664 = vshrl.u32 %v4663, 7
  %v4665 = vsub.s32 %v4662, %v4664
  %v4666 = vrot.slane %v4491, %v4665
  %v4668 = vunpack.c.l.s4 1983009808
  %v4669 = vunpack.c.0.s8 %v4668
  %v4670 = vlaneseq
  %v4671 = vshrl.u32 %v4670, 7
  %v4672 = vsub.s32 %v4669, %v4671
  %v4673 = vrot.slane %v4493, %v4672
  %v4675 = vunpack.c.l.s4 1983009808
  %v4676 = vunpack.c.0.s8 %v4675
  %v4677 = vlaneseq
  %v4678 = vshrl.u32 %v4677, 7
  %v4679 = vsub.s32 %v4676, %v4678
  %v4680 = vrot.slane %v4439, %v4679
  %v4682 = vunpack.c.l.s4 1983009808
  %v4683 = vunpack.c.0.s8 %v4682
  %v4684 = vlaneseq
  %v4685 = vshrl.u32 %v4684, 7
  %v4686 = vsub.s32 %v4683, %v4685
  %v4687 = vrot.slane %v4378, %v4686
  %v4689 = vunpack.c.l.s4 1983009808
  %v4690 = vunpack.c.0.s8 %v4689
  %v4691 = vlaneseq
  %v4692 = vshrl.u32 %v4691, 7
  %v4693 = vsub.s32 %v4690, %v4692
  %v4694 = vrot.slane %v4441, %v4693
  %v4696 = vunpack.c.l.s4 1983009808
  %v4697 = vunpack.c.0.s8 %v4696
  %v4698 = vlaneseq
  %v4699 = vshrl.u32 %v4698, 7
  %v4700 = vsub.s32 %v4697, %v4699
  %v4701 = vrot.slane %v4377, %v4700
  %v4703 = vunpack.c.l.s4 1983009808
  %v4704 = vunpack.c.0.s8 %v4703
  %v4705 = vlaneseq
  %v4706 = vshrl.u32 %v4705, 7
  %v4707 = vsub.s32 %v4704, %v4706
  %v4708 = vrot.slane %v4443, %v4707
  %v4710 = vunpack.c.l.s4 1983009808
  %v4711 = vunpack.c.0.s8 %v4710
  %v4712 = vlaneseq
  %v4713 = vshrl.u32 %v4712, 7
  %v4714 = vsub.s32 %v4711, %v4713
  %v4715 = vrot.slane %v4379, %v4714
  %v4717 = vunpack.c.l.s4 1983009808
  %v4718 = vunpack.c.0.s8 %v4717
  %v4719 = vlaneseq
  %v4720 = vshrl.u32 %v4719, 7
  %v4721 = vsub.s32 %v4718, %v4720
  %v4722 = vrot.slane %v4445, %v4721
  %v4724 = vunpack.c.l.s4 1983009808
  %v4725 = vunpack.c.0.s8 %v4724
  %v4726 = vlaneseq
  %v4727 = vshrl.u32 %v4726, 7
  %v4728 = vsub.s32 %v4725, %v4727
  %v4729 = vrot.slane %v4497, %v4728
  %v4731 = vunpack.c.l.s4 1983009808
  %v4732 = vunpack.c.0.s8 %v4731
  %v4733 = vlaneseq
  %v4734 = vshrl.u32 %v4733, 7
  %v4735 = vsub.s32 %v4732, %v4734
  %v4736 = vrot.slane %v4499, %v4735
  %v4738 = vunpack.c.l.s4 1983009808
  %v4739 = vunpack.c.0.s8 %v4738
  %v4740 = vlaneseq
  %v4741 = vshrl.u32 %v4740, 7
  %v4742 = vsub.s32 %v4739, %v4741
  %v4743 = vrot.slane %v4501, %v4742
  %v4745 = vunpack.c.l.s4 1983009808
  %v4746 = vunpack.c.0.s8 %v4745
  %v4747 = vlaneseq
  %v4748 = vshrl.u32 %v4747, 7
  %v4749 = vsub.s32 %v4746, %v4748
  %v4750 = vrot.slane %v4503, %v4749
  %v4752 = vunpack.c.l.s4 1983009808
  %v4753 = vunpack.c.0.s8 %v4752
  %v4754 = vlaneseq
  %v4755 = vshrl.u32 %v4754, 7
  %v4756 = vsub.s32 %v4753, %v4755
  %v4757 = vrot.slane %v4505, %v4756
  %v4759 = vunpack.c.l.s4 1983009808
  %v4760 = vunpack.c.0.s8 %v4759
  %v4761 = vlaneseq
  %v4762 = vshrl.u32 %v4761, 7
  %v4763 = vsub.s32 %v4760, %v4762
  %v4764 = vrot.slane %v4507, %v4763
  %v4766 = vunpack.c.l.s4 1983009808
  %v4767 = vunpack.c.0.s8 %v4766
  %v4768 = vlaneseq
  %v4769 = vshrl.u32 %v4768, 7
  %v4770 = vsub.s32 %v4767, %v4769
  %v4771 = vrot.slane %v4509, %v4770
  %v4773 = vunpack.c.l.s4 1983009808
  %v4774 = vunpack.c.0.s8 %v4773
  %v4775 = vlaneseq
  %v4776 = vshrl.u32 %v4775, 7
  %v4777 = vsub.s32 %v4774, %v4776
  %v4778 = vrot.slane %v4447, %v4777
  %v4780 = vunpack.c.l.s4 1983009808
  %v4781 = vunpack.c.0.s8 %v4780
  %v4782 = vlaneseq
  %v4783 = vshrl.u32 %v4782, 7
  %v4784 = vsub.s32 %v4781, %v4783
  %v4785 = vrot.slane %v4395, %v4784
  %v4787 = vunpack.c.l.s4 1983009808
  %v4788 = vunpack.c.0.s8 %v4787
  %v4789 = vlaneseq
  %v4790 = vshrl.u32 %v4789, 7
  %v4791 = vsub.s32 %v4788, %v4790
  %v4792 = vrot.slane %v4449, %v4791
  %v4794 = vunpack.c.l.s4 1983009808
  %v4795 = vunpack.c.0.s8 %v4794
  %v4796 = vlaneseq
  %v4797 = vshrl.u32 %v4796, 7
  %v4798 = vsub.s32 %v4795, %v4797
  %v4799 = vrot.slane %v4394, %v4798
  %v4801 = vunpack.c.l.s4 1983009808
  %v4802 = vunpack.c.0.s8 %v4801
  %v4803 = vlaneseq
  %v4804 = vshrl.u32 %v4803, 7
  %v4805 = vsub.s32 %v4802, %v4804
  %v4806 = vrot.slane %v4451, %v4805
  %v4808 = vunpack.c.l.s4 1983009808
  %v4809 = vunpack.c.0.s8 %v4808
  %v4810 = vlaneseq
  %v4811 = vshrl.u32 %v4810, 7
  %v4812 = vsub.s32 %v4809, %v4811
  %v4813 = vrot.slane %v4396, %v4812
  %v4815 = vunpack.c.l.s4 1983009808
  %v4816 = vunpack.c.0.s8 %v4815
  %v4817 = vlaneseq
  %v4818 = vshrl.u32 %v4817, 7
  %v4819 = vsub.s32 %v4816, %v4818
  %v4820 = vrot.slane %v4453, %v4819
  %v4822 = vunpack.c.l.s4 1983009808
  %v4823 = vunpack.c.0.s8 %v4822
  %v4824 = vlaneseq
  %v4825 = vshrl.u32 %v4824, 7
  %v4826 = vsub.s32 %v4823, %v4825
  %v4827 = vrot.slane %v4513, %v4826
  %v4829 = vunpack.c.l.s4 1983009808
  %v4830 = vunpack.c.0.s8 %v4829
  %v4831 = vlaneseq
  %v4832 = vshrl.u32 %v4831, 7
  %v4833 = vsub.s32 %v4830, %v4832
  %v4834 = vrot.slane %v4515, %v4833
  %v4836 = vunpack.c.l.s4 1983009808
  %v4837 = vunpack.c.0.s8 %v4836
  %v4838 = vlaneseq
  %v4839 = vshrl.u32 %v4838, 7
  %v4840 = vsub.s32 %v4837, %v4839
  %v4841 = vrot.slane %v4517, %v4840
  %v4843 = vunpack.c.l.s4 1983009808
  %v4844 = vunpack.c.0.s8 %v4843
  %v4845 = vlaneseq
  %v4846 = vshrl.u32 %v4845, 7
  %v4847 = vsub.s32 %v4844, %v4846
  %v4848 = vrot.slane %v4519, %v4847
  %v4850 = vunpack.c.l.s4 1983009808
  %v4851 = vunpack.c.0.s8 %v4850
  %v4852 = vlaneseq
  %v4853 = vshrl.u32 %v4852, 7
  %v4854 = vsub.s32 %v4851, %v4853
  %v4855 = vrot.slane %v4521, %v4854
  %v4857 = vunpack.c.l.s4 1983009808
  %v4858 = vunpack.c.0.s8 %v4857
  %v4859 = vlaneseq
  %v4860 = vshrl.u32 %v4859, 7
  %v4861 = vsub.s32 %v4858, %v4860
  %v4862 = vrot.slane %v4523, %v4861
  %v4864 = vunpack.c.l.s4 1983009808
  %v4865 = vunpack.c.0.s8 %v4864
  %v4866 = vlaneseq
  %v4867 = vshrl.u32 %v4866, 7
  %v4868 = vsub.s32 %v4865, %v4867
  %v4869 = vrot.slane %v4525, %v4868
  %v4871 = vunpack.c.l.s4 1983009808
  %v4872 = vunpack.c.0.s8 %v4871
  %v4873 = vlaneseq
  %v4874 = vshrl.u32 %v4873, 7
  %v4875 = vsub.s32 %v4872, %v4874
  %v4876 = vrot.slane %v4455, %v4875
  %v4878 = vunpack.c.l.s4 1983009808
  %v4879 = vunpack.c.0.s8 %v4878
  %v4880 = vlaneseq
  %v4881 = vshrl.u32 %v4880, 7
  %v4882 = vsub.s32 %v4879, %v4881
  %v4883 = vrot.slane %v4412, %v4882
  %v4885 = vunpack.c.l.s4 1983009808
  %v4886 = vunpack.c.0.s8 %v4885
  %v4887 = vlaneseq
  %v4888 = vshrl.u32 %v4887, 7
  %v4889 = vsub.s32 %v4886, %v4888
  %v4890 = vrot.slane %v4457, %v4889
  %v4892 = vunpack.c.l.s4 1983009808
  %v4893 = vunpack.c.0.s8 %v4892
  %v4894 = vlaneseq
  %v4895 = vshrl.u32 %v4894, 7
  %v4896 = vsub.s32 %v4893, %v4895
  %v4897 = vrot.slane %v4411, %v4896
  %v4899 = vunpack.c.l.s4 1983009808
  %v4900 = vunpack.c.0.s8 %v4899
  %v4901 = vlaneseq
  %v4902 = vshrl.u32 %v4901, 7
  %v4903 = vsub.s32 %v4900, %v4902
  %v4904 = vrot.slane %v4459, %v4903
  %v4906 = vunpack.c.l.s4 1983009808
  %v4907 = vunpack.c.0.s8 %v4906
  %v4908 = vlaneseq
  %v4909 = vshrl.u32 %v4908, 7
  %v4910 = vsub.s32 %v4907, %v4909
  %v4911 = vrot.slane %v4413, %v4910
  %v4913 = vunpack.c.l.s4 1983009808
  %v4914 = vunpack.c.0.s8 %v4913
  %v4915 = vlaneseq
  %v4916 = vshrl.u32 %v4915, 7
  %v4917 = vsub.s32 %v4914, %v4916
  %v4918 = vrot.slane %v4461, %v4917
  %v4920 = vunpack.c.l.s4 1983009808
  %v4921 = vunpack.c.0.s8 %v4920
  %v4922 = vlaneseq
  %v4923 = vshrl.u32 %v4922, 7
  %v4924 = vsub.s32 %v4921, %v4923
  %v4925 = vrot.slane %v4529, %v4924
  %v4927 = vunpack.c.l.s4 1983009808
  %v4928 = vunpack.c.0.s8 %v4927
  %v4929 = vlaneseq
  %v4930 = vshrl.u32 %v4929, 7
  %v4931 = vsub.s32 %v4928, %v4930
  %v4932 = vrot.slane %v4531, %v4931
  %v4934 = vunpack.c.l.s4 1983009808
  %v4935 = vunpack.c.0.s8 %v4934
  %v4936 = vlaneseq
  %v4937 = vshrl.u32 %v4936, 7
  %v4938 = vsub.s32 %v4935, %v4937
  %v4939 = vrot.slane %v4533, %v4938
  %v4941 = vunpack.c.l.s4 1983009808
  %v4942 = vunpack.c.0.s8 %v4941
  %v4943 = vlaneseq
  %v4944 = vshrl.u32 %v4943, 7
  %v4945 = vsub.s32 %v4942, %v4944
  %v4946 = vrot.slane %v4535, %v4945
  %v4948 = vunpack.c.l.s4 1983009808
  %v4949 = vunpack.c.0.s8 %v4948
  %v4950 = vlaneseq
  %v4951 = vshrl.u32 %v4950, 7
  %v4952 = vsub.s32 %v4949, %v4951
  %v4953 = vrot.slane %v4537, %v4952
  %v4955 = vunpack.c.l.s4 1983009808
  %v4956 = vunpack.c.0.s8 %v4955
  %v4957 = vlaneseq
  %v4958 = vshrl.u32 %v4957, 7
  %v4959 = vsub.s32 %v4956, %v4958
  %v4960 = vrot.slane %v4539, %v4959
  %v4962 = vunpack.c.l.s4 1983009808
  %v4963 = vunpack.c.0.s8 %v4962
  %v4964 = vlaneseq
  %v4965 = vshrl.u32 %v4964, 7
  %v4966 = vsub.s32 %v4963, %v4965
  %v4967 = vrot.slane %v4541, %v4966
  %4968 = vrot.lane.b32.xlu0 %v4582, 4
  %v4969 = vpop.permute.xlu0 %4968
  %4970 = vrot.lane.b32.xlu0 %v4589, 4
  %v4971 = vpop.permute.xlu0 %4970
  %4972 = vrot.lane.b32.xlu0 %v4596, 4
  %v4973 = vpop.permute.xlu0 %4972
  %4974 = vrot.lane.b32.xlu0 %v4603, 4
  %v4975 = vpop.permute.xlu0 %4974
  %4976 = vrot.lane.b32.xlu0 %v4610, 4
  %v4977 = vpop.permute.xlu0 %4976
  %4978 = vrot.lane.b32.xlu0 %v4617, 4
  %v4979 = vpop.permute.xlu0 %4978
  %4980 = vrot.lane.b32.xlu0 %v4624, 4
  %v4981 = vpop.permute.xlu0 %4980
  %4982 = vrot.lane.b32.xlu0 %v3253, 4
  %v4983 = vpop.permute.xlu0 %4982
  %4984 = vrot.lane.b32.xlu0 %v4631, 4
  %v4985 = vpop.permute.xlu0 %4984
  %4986 = vrot.lane.b32.xlu0 %v4638, 4
  %v4987 = vpop.permute.xlu0 %4986
  %4988 = vrot.lane.b32.xlu0 %v4645, 4
  %v4989 = vpop.permute.xlu0 %4988
  %4990 = vrot.lane.b32.xlu0 %v4652, 4
  %v4991 = vpop.permute.xlu0 %4990
  %4992 = vrot.lane.b32.xlu0 %v4659, 4
  %v4993 = vpop.permute.xlu0 %4992
  %4994 = vrot.lane.b32.xlu0 %v4666, 4
  %v4995 = vpop.permute.xlu0 %4994
  %4996 = vrot.lane.b32.xlu0 %v4673, 4
  %v4997 = vpop.permute.xlu0 %4996
  %4998 = vrot.lane.b32.xlu0 %v4680, 4
  %v4999 = vpop.permute.xlu0 %4998
  %5000 = vrot.lane.b32.xlu0 %v4687, 4
  %v5001 = vpop.permute.xlu0 %5000
  %5002 = vrot.lane.b32.xlu0 %v4694, 4
  %v5003 = vpop.permute.xlu0 %5002
  %5004 = vrot.lane.b32.xlu0 %v4701, 4
  %v5005 = vpop.permute.xlu0 %5004
  %5006 = vrot.lane.b32.xlu0 %v4708, 4
  %v5007 = vpop.permute.xlu0 %5006
  %5008 = vrot.lane.b32.xlu0 %v4715, 4
  %v5009 = vpop.permute.xlu0 %5008
  %5010 = vrot.lane.b32.xlu0 %v4722, 4
  %v5011 = vpop.permute.xlu0 %5010
  %5012 = vrot.lane.b32.xlu0 %v4729, 4
  %v5013 = vpop.permute.xlu0 %5012
  %5014 = vrot.lane.b32.xlu0 %v4736, 4
  %v5015 = vpop.permute.xlu0 %5014
  %5016 = vrot.lane.b32.xlu0 %v4743, 4
  %v5017 = vpop.permute.xlu0 %5016
  %5018 = vrot.lane.b32.xlu0 %v4750, 4
  %v5019 = vpop.permute.xlu0 %5018
  %5020 = vrot.lane.b32.xlu0 %v4757, 4
  %v5021 = vpop.permute.xlu0 %5020
  %5022 = vrot.lane.b32.xlu0 %v4764, 4
  %v5023 = vpop.permute.xlu0 %5022
  %5024 = vrot.lane.b32.xlu0 %v4771, 4
  %v5025 = vpop.permute.xlu0 %5024
  %5026 = vrot.lane.b32.xlu0 %v4778, 4
  %v5027 = vpop.permute.xlu0 %5026
  %5028 = vrot.lane.b32.xlu0 %v4785, 4
  %v5029 = vpop.permute.xlu0 %5028
  %5030 = vrot.lane.b32.xlu0 %v4792, 4
  %v5031 = vpop.permute.xlu0 %5030
  %5032 = vrot.lane.b32.xlu0 %v4799, 4
  %v5033 = vpop.permute.xlu0 %5032
  %5034 = vrot.lane.b32.xlu0 %v4806, 4
  %v5035 = vpop.permute.xlu0 %5034
  %5036 = vrot.lane.b32.xlu0 %v4813, 4
  %v5037 = vpop.permute.xlu0 %5036
  %5038 = vrot.lane.b32.xlu0 %v4820, 4
  %v5039 = vpop.permute.xlu0 %5038
  %5040 = vrot.lane.b32.xlu0 %v4827, 4
  %v5041 = vpop.permute.xlu0 %5040
  %5042 = vrot.lane.b32.xlu0 %v4834, 4
  %v5043 = vpop.permute.xlu0 %5042
  %5044 = vrot.lane.b32.xlu0 %v4841, 4
  %v5045 = vpop.permute.xlu0 %5044
  %5046 = vrot.lane.b32.xlu0 %v4848, 4
  %v5047 = vpop.permute.xlu0 %5046
  %5048 = vrot.lane.b32.xlu0 %v4855, 4
  %v5049 = vpop.permute.xlu0 %5048
  %5050 = vrot.lane.b32.xlu0 %v4862, 4
  %v5051 = vpop.permute.xlu0 %5050
  %5052 = vrot.lane.b32.xlu0 %v4869, 4
  %v5053 = vpop.permute.xlu0 %5052
  %5054 = vrot.lane.b32.xlu0 %v4876, 4
  %v5055 = vpop.permute.xlu0 %5054
  %5056 = vrot.lane.b32.xlu0 %v4883, 4
  %v5057 = vpop.permute.xlu0 %5056
  %5058 = vrot.lane.b32.xlu0 %v4890, 4
  %v5059 = vpop.permute.xlu0 %5058
  %5060 = vrot.lane.b32.xlu0 %v4897, 4
  %v5061 = vpop.permute.xlu0 %5060
  %5062 = vrot.lane.b32.xlu0 %v4904, 4
  %v5063 = vpop.permute.xlu0 %5062
  %5064 = vrot.lane.b32.xlu0 %v4911, 4
  %v5065 = vpop.permute.xlu0 %5064
  %5066 = vrot.lane.b32.xlu0 %v4918, 4
  %v5067 = vpop.permute.xlu0 %5066
  %5068 = vrot.lane.b32.xlu0 %v4925, 4
  %v5069 = vpop.permute.xlu0 %5068
  %5070 = vrot.lane.b32.xlu0 %v4932, 4
  %v5071 = vpop.permute.xlu0 %5070
  %5072 = vrot.lane.b32.xlu0 %v4939, 4
  %v5073 = vpop.permute.xlu0 %5072
  %5074 = vrot.lane.b32.xlu0 %v4946, 4
  %v5075 = vpop.permute.xlu0 %5074
  %5076 = vrot.lane.b32.xlu0 %v4953, 4
  %v5077 = vpop.permute.xlu0 %5076
  %5078 = vrot.lane.b32.xlu0 %v4960, 4
  %v5079 = vpop.permute.xlu0 %5078
  %5080 = vrot.lane.b32.xlu0 %v4967, 4
  %v5081 = vpop.permute.xlu0 %5080
  %v5140 = vunpack.c.l.s4 1983009808
  %v5141 = vunpack.c.0.s8 %v5140
  %v5142 = vlaneseq
  %v5143 = vshrl.u32 %v5142, 7
  %v5144 = vsub.s32 %v5141, %v5143
  %v5145 = vrot.slane %v4479, %v5144
  %v5147 = vunpack.c.l.s4 1983009808
  %v5148 = vunpack.c.0.s8 %v5147
  %v5149 = vlaneseq
  %v5150 = vshrl.u32 %v5149, 7
  %v5151 = vsub.s32 %v5148, %v5150
  %v5152 = vrot.slane %v4370, %v5151
  %v5154 = vunpack.c.l.s4 1983009808
  %v5155 = vunpack.c.0.s8 %v5154
  %v5156 = vlaneseq
  %v5157 = vshrl.u32 %v5156, 7
  %v5158 = vsub.s32 %v5155, %v5157
  %v5159 = vrot.slane %v4495, %v5158
  %v5161 = vunpack.c.l.s4 1983009808
  %v5162 = vunpack.c.0.s8 %v5161
  %v5163 = vlaneseq
  %v5164 = vshrl.u32 %v5163, 7
  %v5165 = vsub.s32 %v5162, %v5164
  %v5166 = vrot.slane %v4387, %v5165
  %v5168 = vunpack.c.l.s4 1983009808
  %v5169 = vunpack.c.0.s8 %v5168
  %v5170 = vlaneseq
  %v5171 = vshrl.u32 %v5170, 7
  %v5172 = vsub.s32 %v5169, %v5171
  %v5173 = vrot.slane %v4511, %v5172
  %v5175 = vunpack.c.l.s4 1983009808
  %v5176 = vunpack.c.0.s8 %v5175
  %v5177 = vlaneseq
  %v5178 = vshrl.u32 %v5177, 7
  %v5179 = vsub.s32 %v5176, %v5178
  %v5180 = vrot.slane %v4404, %v5179
  %v5182 = vunpack.c.l.s4 1983009808
  %v5183 = vunpack.c.0.s8 %v5182
  %v5184 = vlaneseq
  %v5185 = vshrl.u32 %v5184, 7
  %v5186 = vsub.s32 %v5183, %v5185
  %v5187 = vrot.slane %v4527, %v5186
  %5188 = vrot.lane.b32.xlu0 %v5145, 8
  %v5189 = vpop.permute.xlu0 %5188
  %5190 = vrot.lane.b32.xlu0 %v4631, 8
  %v5191 = vpop.permute.xlu0 %5190
  %5192 = vrot.lane.b32.xlu0 %v4638, 8
  %v5193 = vpop.permute.xlu0 %5192
  %5194 = vrot.lane.b32.xlu0 %v4645, 8
  %v5195 = vpop.permute.xlu0 %5194
  %5196 = vrot.lane.b32.xlu0 %v4652, 8
  %v5197 = vpop.permute.xlu0 %5196
  %5198 = vrot.lane.b32.xlu0 %v4659, 8
  %v5199 = vpop.permute.xlu0 %5198
  %5200 = vrot.lane.b32.xlu0 %v4666, 8
  %v5201 = vpop.permute.xlu0 %5200
  %5202 = vrot.lane.b32.xlu0 %v4673, 8
  %v5203 = vpop.permute.xlu0 %5202
  %5204 = vrot.lane.b32.xlu0 %v5152, 8
  %v5205 = vpop.permute.xlu0 %5204
  %5206 = vrot.lane.b32.xlu0 %v4680, 8
  %v5207 = vpop.permute.xlu0 %5206
  %5208 = vrot.lane.b32.xlu0 %v4687, 8
  %v5209 = vpop.permute.xlu0 %5208
  %5210 = vrot.lane.b32.xlu0 %v4694, 8
  %v5211 = vpop.permute.xlu0 %5210
  %5212 = vrot.lane.b32.xlu0 %v4701, 8
  %v5213 = vpop.permute.xlu0 %5212
  %5214 = vrot.lane.b32.xlu0 %v4708, 8
  %v5215 = vpop.permute.xlu0 %5214
  %5216 = vrot.lane.b32.xlu0 %v4715, 8
  %v5217 = vpop.permute.xlu0 %5216
  %5218 = vrot.lane.b32.xlu0 %v4722, 8
  %v5219 = vpop.permute.xlu0 %5218
  %5220 = vrot.lane.b32.xlu0 %v5159, 8
  %v5221 = vpop.permute.xlu0 %5220
  %5222 = vrot.lane.b32.xlu0 %v4729, 8
  %v5223 = vpop.permute.xlu0 %5222
  %5224 = vrot.lane.b32.xlu0 %v4736, 8
  %v5225 = vpop.permute.xlu0 %5224
  %5226 = vrot.lane.b32.xlu0 %v4743, 8
  %v5227 = vpop.permute.xlu0 %5226
  %5228 = vrot.lane.b32.xlu0 %v4750, 8
  %v5229 = vpop.permute.xlu0 %5228
  %5230 = vrot.lane.b32.xlu0 %v4757, 8
  %v5231 = vpop.permute.xlu0 %5230
  %5232 = vrot.lane.b32.xlu0 %v4764, 8
  %v5233 = vpop.permute.xlu0 %5232
  %5234 = vrot.lane.b32.xlu0 %v4771, 8
  %v5235 = vpop.permute.xlu0 %5234
  %5236 = vrot.lane.b32.xlu0 %v5166, 8
  %v5237 = vpop.permute.xlu0 %5236
  %5238 = vrot.lane.b32.xlu0 %v4778, 8
  %v5239 = vpop.permute.xlu0 %5238
  %5240 = vrot.lane.b32.xlu0 %v4785, 8
  %v5241 = vpop.permute.xlu0 %5240
  %5242 = vrot.lane.b32.xlu0 %v4792, 8
  %v5243 = vpop.permute.xlu0 %5242
  %5244 = vrot.lane.b32.xlu0 %v4799, 8
  %v5245 = vpop.permute.xlu0 %5244
  %5246 = vrot.lane.b32.xlu0 %v4806, 8
  %v5247 = vpop.permute.xlu0 %5246
  %5248 = vrot.lane.b32.xlu0 %v4813, 8
  %v5249 = vpop.permute.xlu0 %5248
  %5250 = vrot.lane.b32.xlu0 %v4820, 8
  %v5251 = vpop.permute.xlu0 %5250
  %5252 = vrot.lane.b32.xlu0 %v5173, 8
  %v5253 = vpop.permute.xlu0 %5252
  %5254 = vrot.lane.b32.xlu0 %v4827, 8
  %v5255 = vpop.permute.xlu0 %5254
  %5256 = vrot.lane.b32.xlu0 %v4834, 8
  %v5257 = vpop.permute.xlu0 %5256
  %5258 = vrot.lane.b32.xlu0 %v4841, 8
  %v5259 = vpop.permute.xlu0 %5258
  %5260 = vrot.lane.b32.xlu0 %v4848, 8
  %v5261 = vpop.permute.xlu0 %5260
  %5262 = vrot.lane.b32.xlu0 %v4855, 8
  %v5263 = vpop.permute.xlu0 %5262
  %5264 = vrot.lane.b32.xlu0 %v4862, 8
  %v5265 = vpop.permute.xlu0 %5264
  %5266 = vrot.lane.b32.xlu0 %v4869, 8
  %v5267 = vpop.permute.xlu0 %5266
  %5268 = vrot.lane.b32.xlu0 %v5180, 8
  %v5269 = vpop.permute.xlu0 %5268
  %5270 = vrot.lane.b32.xlu0 %v4876, 8
  %v5271 = vpop.permute.xlu0 %5270
  %5272 = vrot.lane.b32.xlu0 %v4883, 8
  %v5273 = vpop.permute.xlu0 %5272
  %5274 = vrot.lane.b32.xlu0 %v4890, 8
  %v5275 = vpop.permute.xlu0 %5274
  %5276 = vrot.lane.b32.xlu0 %v4897, 8
  %v5277 = vpop.permute.xlu0 %5276
  %5278 = vrot.lane.b32.xlu0 %v4904, 8
  %v5279 = vpop.permute.xlu0 %5278
  %5280 = vrot.lane.b32.xlu0 %v4911, 8
  %v5281 = vpop.permute.xlu0 %5280
  %5282 = vrot.lane.b32.xlu0 %v4918, 8
  %v5283 = vpop.permute.xlu0 %5282
  %5284 = vrot.lane.b32.xlu0 %v5187, 8
  %v5285 = vpop.permute.xlu0 %5284
  %5286 = vrot.lane.b32.xlu0 %v4925, 8
  %v5287 = vpop.permute.xlu0 %5286
  %5288 = vrot.lane.b32.xlu0 %v4932, 8
  %v5289 = vpop.permute.xlu0 %5288
  %5290 = vrot.lane.b32.xlu0 %v4939, 8
  %v5291 = vpop.permute.xlu0 %5290
  %5292 = vrot.lane.b32.xlu0 %v4946, 8
  %v5293 = vpop.permute.xlu0 %5292
  %5294 = vrot.lane.b32.xlu0 %v4953, 8
  %v5295 = vpop.permute.xlu0 %5294
  %5296 = vrot.lane.b32.xlu0 %v4960, 8
  %v5297 = vpop.permute.xlu0 %5296
  %5298 = vrot.lane.b32.xlu0 %v4967, 8
  %v5299 = vpop.permute.xlu0 %5298
  %5356 = vrot.lane.b32.xlu0 %v4631, 12
  %v5357 = vpop.permute.xlu0 %5356
  %5358 = vrot.lane.b32.xlu0 %v4638, 12
  %v5359 = vpop.permute.xlu0 %5358
  %5360 = vrot.lane.b32.xlu0 %v4645, 12
  %v5361 = vpop.permute.xlu0 %5360
  %5362 = vrot.lane.b32.xlu0 %v4652, 12
  %v5363 = vpop.permute.xlu0 %5362
  %5364 = vrot.lane.b32.xlu0 %v4659, 12
  %v5365 = vpop.permute.xlu0 %5364
  %5366 = vrot.lane.b32.xlu0 %v4666, 12
  %v5367 = vpop.permute.xlu0 %5366
  %5368 = vrot.lane.b32.xlu0 %v4673, 12
  %v5369 = vpop.permute.xlu0 %5368
  %5370 = vrot.lane.b32.xlu0 %v3253, 12
  %v5371 = vpop.permute.xlu0 %5370
  %5372 = vrot.lane.b32.xlu0 %v4680, 12
  %v5373 = vpop.permute.xlu0 %5372
  %5374 = vrot.lane.b32.xlu0 %v4687, 12
  %v5375 = vpop.permute.xlu0 %5374
  %5376 = vrot.lane.b32.xlu0 %v4694, 12
  %v5377 = vpop.permute.xlu0 %5376
  %5378 = vrot.lane.b32.xlu0 %v4701, 12
  %v5379 = vpop.permute.xlu0 %5378
  %5380 = vrot.lane.b32.xlu0 %v4708, 12
  %v5381 = vpop.permute.xlu0 %5380
  %5382 = vrot.lane.b32.xlu0 %v4715, 12
  %v5383 = vpop.permute.xlu0 %5382
  %5384 = vrot.lane.b32.xlu0 %v4722, 12
  %v5385 = vpop.permute.xlu0 %5384
  %5386 = vrot.lane.b32.xlu0 %v4729, 12
  %v5387 = vpop.permute.xlu0 %5386
  %5388 = vrot.lane.b32.xlu0 %v4736, 12
  %v5389 = vpop.permute.xlu0 %5388
  %5390 = vrot.lane.b32.xlu0 %v4743, 12
  %v5391 = vpop.permute.xlu0 %5390
  %5392 = vrot.lane.b32.xlu0 %v4750, 12
  %v5393 = vpop.permute.xlu0 %5392
  %5394 = vrot.lane.b32.xlu0 %v4757, 12
  %v5395 = vpop.permute.xlu0 %5394
  %5396 = vrot.lane.b32.xlu0 %v4764, 12
  %v5397 = vpop.permute.xlu0 %5396
  %5398 = vrot.lane.b32.xlu0 %v4771, 12
  %v5399 = vpop.permute.xlu0 %5398
  %5400 = vrot.lane.b32.xlu0 %v4778, 12
  %v5401 = vpop.permute.xlu0 %5400
  %5402 = vrot.lane.b32.xlu0 %v4785, 12
  %v5403 = vpop.permute.xlu0 %5402
  %5404 = vrot.lane.b32.xlu0 %v4792, 12
  %v5405 = vpop.permute.xlu0 %5404
  %5406 = vrot.lane.b32.xlu0 %v4799, 12
  %v5407 = vpop.permute.xlu0 %5406
  %5408 = vrot.lane.b32.xlu0 %v4806, 12
  %v5409 = vpop.permute.xlu0 %5408
  %5410 = vrot.lane.b32.xlu0 %v4813, 12
  %v5411 = vpop.permute.xlu0 %5410
  %5412 = vrot.lane.b32.xlu0 %v4820, 12
  %v5413 = vpop.permute.xlu0 %5412
  %5414 = vrot.lane.b32.xlu0 %v4827, 12
  %v5415 = vpop.permute.xlu0 %5414
  %5416 = vrot.lane.b32.xlu0 %v4834, 12
  %v5417 = vpop.permute.xlu0 %5416
  %5418 = vrot.lane.b32.xlu0 %v4841, 12
  %v5419 = vpop.permute.xlu0 %5418
  %5420 = vrot.lane.b32.xlu0 %v4848, 12
  %v5421 = vpop.permute.xlu0 %5420
  %5422 = vrot.lane.b32.xlu0 %v4855, 12
  %v5423 = vpop.permute.xlu0 %5422
  %5424 = vrot.lane.b32.xlu0 %v4862, 12
  %v5425 = vpop.permute.xlu0 %5424
  %5426 = vrot.lane.b32.xlu0 %v4869, 12
  %v5427 = vpop.permute.xlu0 %5426
  %5428 = vrot.lane.b32.xlu0 %v4876, 12
  %v5429 = vpop.permute.xlu0 %5428
  %5430 = vrot.lane.b32.xlu0 %v4883, 12
  %v5431 = vpop.permute.xlu0 %5430
  %5432 = vrot.lane.b32.xlu0 %v4890, 12
  %v5433 = vpop.permute.xlu0 %5432
  %5434 = vrot.lane.b32.xlu0 %v4897, 12
  %v5435 = vpop.permute.xlu0 %5434
  %5436 = vrot.lane.b32.xlu0 %v4904, 12
  %v5437 = vpop.permute.xlu0 %5436
  %5438 = vrot.lane.b32.xlu0 %v4911, 12
  %v5439 = vpop.permute.xlu0 %5438
  %5440 = vrot.lane.b32.xlu0 %v4918, 12
  %v5441 = vpop.permute.xlu0 %5440
  %5442 = vrot.lane.b32.xlu0 %v4925, 12
  %v5443 = vpop.permute.xlu0 %5442
  %5444 = vrot.lane.b32.xlu0 %v4932, 12
  %v5445 = vpop.permute.xlu0 %5444
  %5446 = vrot.lane.b32.xlu0 %v4939, 12
  %v5447 = vpop.permute.xlu0 %5446
  %5448 = vrot.lane.b32.xlu0 %v4946, 12
  %v5449 = vpop.permute.xlu0 %5448
  %5450 = vrot.lane.b32.xlu0 %v4953, 12
  %v5451 = vpop.permute.xlu0 %5450
  %5452 = vrot.lane.b32.xlu0 %v4960, 12
  %v5453 = vpop.permute.xlu0 %5452
  %5454 = vrot.lane.b32.xlu0 %v4967, 12
  %v5455 = vpop.permute.xlu0 %5454
  %v5506 = vsel %vm4240, %v4353, %v4969
  %v5507 = vsel %vm4240, %v4431, %v4971
  %v5508 = vsel %vm4240, %v4361, %v4973
  %v5509 = vsel %vm4240, %v4433, %v4975
  %v5510 = vsel %vm4240, %v4360, %v4977
  %v5511 = vsel %vm4240, %v4435, %v4979
  %v5512 = vsel %vm4240, %v4362, %v4981
  %v5513 = vsel %vm4240, %v4437, %v4983
  %v5514 = vsel %vm4240, %v4479, %v4985
  %v5515 = vsel %vm4240, %v4481, %v4987
  %v5516 = vsel %vm4240, %v4483, %v4989
  %v5517 = vsel %vm4240, %v4485, %v4991
  %v5518 = vsel %vm4240, %v4487, %v4993
  %v5519 = vsel %vm4240, %v4489, %v4995
  %v5520 = vsel %vm4240, %v4491, %v4997
  %v5521 = vsel %vm4240, %v4493, %v4983
  %v5522 = vsel %vm4240, %v4370, %v4999
  %v5523 = vsel %vm4240, %v4439, %v5001
  %v5524 = vsel %vm4240, %v4378, %v5003
  %v5525 = vsel %vm4240, %v4441, %v5005
  %v5526 = vsel %vm4240, %v4377, %v5007
  %v5527 = vsel %vm4240, %v4443, %v5009
  %v5528 = vsel %vm4240, %v4379, %v5011
  %v5529 = vsel %vm4240, %v4445, %v4983
  %v5530 = vsel %vm4240, %v4495, %v5013
  %v5531 = vsel %vm4240, %v4497, %v5015
  %v5532 = vsel %vm4240, %v4499, %v5017
  %v5533 = vsel %vm4240, %v4501, %v5019
  %v5534 = vsel %vm4240, %v4503, %v5021
  %v5535 = vsel %vm4240, %v4505, %v5023
  %v5536 = vsel %vm4240, %v4507, %v5025
  %v5537 = vsel %vm4240, %v4509, %v4983
  %v5538 = vsel %vm4240, %v4387, %v5027
  %v5539 = vsel %vm4240, %v4447, %v5029
  %v5540 = vsel %vm4240, %v4395, %v5031
  %v5541 = vsel %vm4240, %v4449, %v5033
  %v5542 = vsel %vm4240, %v4394, %v5035
  %v5543 = vsel %vm4240, %v4451, %v5037
  %v5544 = vsel %vm4240, %v4396, %v5039
  %v5545 = vsel %vm4240, %v4453, %v4983
  %v5546 = vsel %vm4240, %v4511, %v5041
  %v5547 = vsel %vm4240, %v4513, %v5043
  %v5548 = vsel %vm4240, %v4515, %v5045
  %v5549 = vsel %vm4240, %v4517, %v5047
  %v5550 = vsel %vm4240, %v4519, %v5049
  %v5551 = vsel %vm4240, %v4521, %v5051
  %v5552 = vsel %vm4240, %v4523, %v5053
  %v5553 = vsel %vm4240, %v4525, %v4983
  %v5554 = vsel %vm4240, %v4404, %v5055
  %v5555 = vsel %vm4240, %v4455, %v5057
  %v5556 = vsel %vm4240, %v4412, %v5059
  %v5557 = vsel %vm4240, %v4457, %v5061
  %v5558 = vsel %vm4240, %v4411, %v5063
  %v5559 = vsel %vm4240, %v4459, %v5065
  %v5560 = vsel %vm4240, %v4413, %v5067
  %v5561 = vsel %vm4240, %v4461, %v4983
  %v5562 = vsel %vm4240, %v4527, %v5069
  %v5563 = vsel %vm4240, %v4529, %v5071
  %v5564 = vsel %vm4240, %v4531, %v5073
  %v5565 = vsel %vm4240, %v4533, %v5075
  %v5566 = vsel %vm4240, %v4535, %v5077
  %v5567 = vsel %vm4240, %v4537, %v5079
  %v5568 = vsel %vm4240, %v4539, %v5081
  %v5569 = vsel %vm4240, %v4541, %v4983
  %v5570 = vsel %vm63, %v5506, %v5189
  %v5571 = vsel %vm63, %v5507, %v5191
  %v5572 = vsel %vm63, %v5508, %v5193
  %v5573 = vsel %vm63, %v5509, %v5195
  %v5574 = vsel %vm63, %v5510, %v5197
  %v5575 = vsel %vm63, %v5511, %v5199
  %v5576 = vsel %vm63, %v5512, %v5201
  %v5577 = vsel %vm63, %v5513, %v5203
  %v5578 = vsel %vm63, %v5514, %v5205
  %v5579 = vsel %vm63, %v5515, %v5207
  %v5580 = vsel %vm63, %v5516, %v5209
  %v5581 = vsel %vm63, %v5517, %v5211
  %v5582 = vsel %vm63, %v5518, %v5213
  %v5583 = vsel %vm63, %v5519, %v5215
  %v5584 = vsel %vm63, %v5520, %v5217
  %v5585 = vsel %vm63, %v5521, %v5219
  %v5586 = vsel %vm63, %v5522, %v5221
  %v5587 = vsel %vm63, %v5523, %v5223
  %v5588 = vsel %vm63, %v5524, %v5225
  %v5589 = vsel %vm63, %v5525, %v5227
  %v5590 = vsel %vm63, %v5526, %v5229
  %v5591 = vsel %vm63, %v5527, %v5231
  %v5592 = vsel %vm63, %v5528, %v5233
  %v5593 = vsel %vm63, %v5529, %v5235
  %v5594 = vsel %vm63, %v5530, %v5237
  %v5595 = vsel %vm63, %v5531, %v5239
  %v5596 = vsel %vm63, %v5532, %v5241
  %v5597 = vsel %vm63, %v5533, %v5243
  %v5598 = vsel %vm63, %v5534, %v5245
  %v5599 = vsel %vm63, %v5535, %v5247
  %v5600 = vsel %vm63, %v5536, %v5249
  %v5601 = vsel %vm63, %v5537, %v5251
  %v5602 = vsel %vm63, %v5538, %v5253
  %v5603 = vsel %vm63, %v5539, %v5255
  %v5604 = vsel %vm63, %v5540, %v5257
  %v5605 = vsel %vm63, %v5541, %v5259
  %v5606 = vsel %vm63, %v5542, %v5261
  %v5607 = vsel %vm63, %v5543, %v5263
  %v5608 = vsel %vm63, %v5544, %v5265
  %v5609 = vsel %vm63, %v5545, %v5267
  %v5610 = vsel %vm63, %v5546, %v5269
  %v5611 = vsel %vm63, %v5547, %v5271
  %v5612 = vsel %vm63, %v5548, %v5273
  %v5613 = vsel %vm63, %v5549, %v5275
  %v5614 = vsel %vm63, %v5550, %v5277
  %v5615 = vsel %vm63, %v5551, %v5279
  %v5616 = vsel %vm63, %v5552, %v5281
  %v5617 = vsel %vm63, %v5553, %v5283
  %v5618 = vsel %vm63, %v5554, %v5285
  %v5619 = vsel %vm63, %v5555, %v5287
  %v5620 = vsel %vm63, %v5556, %v5289
  %v5621 = vsel %vm63, %v5557, %v5291
  %v5622 = vsel %vm63, %v5558, %v5293
  %v5623 = vsel %vm63, %v5559, %v5295
  %v5624 = vsel %vm63, %v5560, %v5297
  %v5625 = vsel %vm63, %v5561, %v5299
  %v5626 = vsel %vm63, %v5562, %v3324
  %v5627 = vsel %vm63, %v5563, %v3324
  %v5628 = vsel %vm63, %v5564, %v3324
  %v5629 = vsel %vm63, %v5565, %v3324
  %v5630 = vsel %vm63, %v5566, %v3324
  %v5631 = vsel %vm63, %v5567, %v3324
  %v5632 = vsel %vm63, %v5568, %v3324
  %v5633 = vsel %vm63, %v5569, %v3324
  %v5634 = vsel %vm4243, %v5570, %v5357
  %v5635 = vsel %vm4243, %v5571, %v5359
  %v5636 = vsel %vm4243, %v5572, %v5361
  %v5637 = vsel %vm4243, %v5573, %v5363
  %v5638 = vsel %vm4243, %v5574, %v5365
  %v5639 = vsel %vm4243, %v5575, %v5367
  %v5640 = vsel %vm4243, %v5576, %v5369
  %v5641 = vsel %vm4243, %v5577, %v5371
  %v5642 = vsel %vm4243, %v5578, %v5373
  %v5643 = vsel %vm4243, %v5579, %v5375
  %v5644 = vsel %vm4243, %v5580, %v5377
  %v5645 = vsel %vm4243, %v5581, %v5379
  %v5646 = vsel %vm4243, %v5582, %v5381
  %v5647 = vsel %vm4243, %v5583, %v5383
  %v5648 = vsel %vm4243, %v5584, %v5385
  %v5649 = vsel %vm4243, %v5585, %v5371
  %v5650 = vsel %vm4243, %v5586, %v5387
  %v5651 = vsel %vm4243, %v5587, %v5389
  %v5652 = vsel %vm4243, %v5588, %v5391
  %v5653 = vsel %vm4243, %v5589, %v5393
  %v5654 = vsel %vm4243, %v5590, %v5395
  %v5655 = vsel %vm4243, %v5591, %v5397
  %v5656 = vsel %vm4243, %v5592, %v5399
  %v5657 = vsel %vm4243, %v5593, %v5371
  %v5658 = vsel %vm4243, %v5594, %v5401
  %v5659 = vsel %vm4243, %v5595, %v5403
  %v5660 = vsel %vm4243, %v5596, %v5405
  %v5661 = vsel %vm4243, %v5597, %v5407
  %v5662 = vsel %vm4243, %v5598, %v5409
  %v5663 = vsel %vm4243, %v5599, %v5411
  %v5664 = vsel %vm4243, %v5600, %v5413
  %v5665 = vsel %vm4243, %v5601, %v5371
  %v5666 = vsel %vm4243, %v5602, %v5415
  %v5667 = vsel %vm4243, %v5603, %v5417
  %v5668 = vsel %vm4243, %v5604, %v5419
  %v5669 = vsel %vm4243, %v5605, %v5421
  %v5670 = vsel %vm4243, %v5606, %v5423
  %v5671 = vsel %vm4243, %v5607, %v5425
  %v5672 = vsel %vm4243, %v5608, %v5427
  %v5673 = vsel %vm4243, %v5609, %v5371
  %v5674 = vsel %vm4243, %v5610, %v5429
  %v5675 = vsel %vm4243, %v5611, %v5431
  %v5676 = vsel %vm4243, %v5612, %v5433
  %v5677 = vsel %vm4243, %v5613, %v5435
  %v5678 = vsel %vm4243, %v5614, %v5437
  %v5679 = vsel %vm4243, %v5615, %v5439
  %v5680 = vsel %vm4243, %v5616, %v5441
  %v5681 = vsel %vm4243, %v5617, %v5371
  %v5682 = vsel %vm4243, %v5618, %v5443
  %v5683 = vsel %vm4243, %v5619, %v5445
  %v5684 = vsel %vm4243, %v5620, %v5447
  %v5685 = vsel %vm4243, %v5621, %v5449
  %v5686 = vsel %vm4243, %v5622, %v5451
  %v5687 = vsel %vm4243, %v5623, %v5453
  %v5688 = vsel %vm4243, %v5624, %v5455
  %v5689 = vsel %vm4243, %v5625, %v5371
  %v5690 = vsel %vm4243, %v5626, %v5371
  %v5691 = vsel %vm4243, %v5627, %v5371
  %v5692 = vsel %vm4243, %v5628, %v5371
  %v5693 = vsel %vm4243, %v5629, %v5371
  %v5694 = vsel %vm4243, %v5630, %v5371
  %v5695 = vsel %vm4243, %v5631, %v5371
  %v5696 = vsel %vm4243, %v5632, %v5371
  %v5697 = vsel %vm4243, %v5633, %v5371
  %v5762 = vcombine.low %v5634, %v5635
  %v5763 = vcombine.low %v5636, %v5637
  %v5765 = vunpack.c.l.s4 1983009808
  %v5766 = vunpack.c.0.s8 %v5765
  %v5767 = vlaneseq
  %v5768 = vshrl.u32 %v5767, 7
  %v5769 = vsub.s32 %v5766, %v5768
  %v5770 = vrot.slane %v5762, %v5769
  %v5772 = vunpack.c.l.s4 1983009808
  %v5773 = vunpack.c.0.s8 %v5772
  %v5774 = vlaneseq
  %v5775 = vshrl.u32 %v5774, 7
  %v5776 = vsub.s32 %v5773, %v5775
  %v5777 = vrot.slane %v5763, %v5776
  %v5778 = vcombine.low %v5770, %v5777
  %v5779 = vcombine.low %v5638, %v5639
  %v5780 = vcombine.low %v5640, %v5641
  %v5782 = vunpack.c.l.s4 1983009808
  %v5783 = vunpack.c.0.s8 %v5782
  %v5784 = vlaneseq
  %v5785 = vshrl.u32 %v5784, 7
  %v5786 = vsub.s32 %v5783, %v5785
  %v5787 = vrot.slane %v5779, %v5786
  %v5789 = vunpack.c.l.s4 1983009808
  %v5790 = vunpack.c.0.s8 %v5789
  %v5791 = vlaneseq
  %v5792 = vshrl.u32 %v5791, 7
  %v5793 = vsub.s32 %v5790, %v5792
  %v5794 = vrot.slane %v5780, %v5793
  %v5795 = vcombine.low %v5787, %v5794
  %v5796 = vcombine.low %v5642, %v5643
  %v5797 = vcombine.low %v5644, %v5645
  %v5799 = vunpack.c.l.s4 1983009808
  %v5800 = vunpack.c.0.s8 %v5799
  %v5801 = vlaneseq
  %v5802 = vshrl.u32 %v5801, 7
  %v5803 = vsub.s32 %v5800, %v5802
  %v5804 = vrot.slane %v5796, %v5803
  %v5806 = vunpack.c.l.s4 1983009808
  %v5807 = vunpack.c.0.s8 %v5806
  %v5808 = vlaneseq
  %v5809 = vshrl.u32 %v5808, 7
  %v5810 = vsub.s32 %v5807, %v5809
  %v5811 = vrot.slane %v5797, %v5810
  %v5812 = vcombine.low %v5804, %v5811
  %v5813 = vcombine.low %v5646, %v5647
  %v5814 = vcombine.low %v5648, %v5649
  %v5816 = vunpack.c.l.s4 1983009808
  %v5817 = vunpack.c.0.s8 %v5816
  %v5818 = vlaneseq
  %v5819 = vshrl.u32 %v5818, 7
  %v5820 = vsub.s32 %v5817, %v5819
  %v5821 = vrot.slane %v5813, %v5820
  %v5823 = vunpack.c.l.s4 1983009808
  %v5824 = vunpack.c.0.s8 %v5823
  %v5825 = vlaneseq
  %v5826 = vshrl.u32 %v5825, 7
  %v5827 = vsub.s32 %v5824, %v5826
  %v5828 = vrot.slane %v5814, %v5827
  %v5829 = vcombine.low %v5821, %v5828
  %v5830 = vcombine.low %v5650, %v5651
  %v5831 = vcombine.low %v5652, %v5653
  %v5833 = vunpack.c.l.s4 1983009808
  %v5834 = vunpack.c.0.s8 %v5833
  %v5835 = vlaneseq
  %v5836 = vshrl.u32 %v5835, 7
  %v5837 = vsub.s32 %v5834, %v5836
  %v5838 = vrot.slane %v5830, %v5837
  %v5840 = vunpack.c.l.s4 1983009808
  %v5841 = vunpack.c.0.s8 %v5840
  %v5842 = vlaneseq
  %v5843 = vshrl.u32 %v5842, 7
  %v5844 = vsub.s32 %v5841, %v5843
  %v5845 = vrot.slane %v5831, %v5844
  %v5846 = vcombine.low %v5838, %v5845
  %v5847 = vcombine.low %v5654, %v5655
  %v5848 = vcombine.low %v5656, %v5657
  %v5850 = vunpack.c.l.s4 1983009808
  %v5851 = vunpack.c.0.s8 %v5850
  %v5852 = vlaneseq
  %v5853 = vshrl.u32 %v5852, 7
  %v5854 = vsub.s32 %v5851, %v5853
  %v5855 = vrot.slane %v5847, %v5854
  %v5857 = vunpack.c.l.s4 1983009808
  %v5858 = vunpack.c.0.s8 %v5857
  %v5859 = vlaneseq
  %v5860 = vshrl.u32 %v5859, 7
  %v5861 = vsub.s32 %v5858, %v5860
  %v5862 = vrot.slane %v5848, %v5861
  %v5863 = vcombine.low %v5855, %v5862
  %v5864 = vcombine.low %v5658, %v5659
  %v5865 = vcombine.low %v5660, %v5661
  %v5867 = vunpack.c.l.s4 1983009808
  %v5868 = vunpack.c.0.s8 %v5867
  %v5869 = vlaneseq
  %v5870 = vshrl.u32 %v5869, 7
  %v5871 = vsub.s32 %v5868, %v5870
  %v5872 = vrot.slane %v5864, %v5871
  %v5874 = vunpack.c.l.s4 1983009808
  %v5875 = vunpack.c.0.s8 %v5874
  %v5876 = vlaneseq
  %v5877 = vshrl.u32 %v5876, 7
  %v5878 = vsub.s32 %v5875, %v5877
  %v5879 = vrot.slane %v5865, %v5878
  %v5880 = vcombine.low %v5872, %v5879
  %v5881 = vcombine.low %v5662, %v5663
  %v5882 = vcombine.low %v5664, %v5665
  %v5884 = vunpack.c.l.s4 1983009808
  %v5885 = vunpack.c.0.s8 %v5884
  %v5886 = vlaneseq
  %v5887 = vshrl.u32 %v5886, 7
  %v5888 = vsub.s32 %v5885, %v5887
  %v5889 = vrot.slane %v5881, %v5888
  %v5891 = vunpack.c.l.s4 1983009808
  %v5892 = vunpack.c.0.s8 %v5891
  %v5893 = vlaneseq
  %v5894 = vshrl.u32 %v5893, 7
  %v5895 = vsub.s32 %v5892, %v5894
  %v5896 = vrot.slane %v5882, %v5895
  %v5897 = vcombine.low %v5889, %v5896
  %v5898 = vcombine.low %v5666, %v5667
  %v5899 = vcombine.low %v5668, %v5669
  %v5901 = vunpack.c.l.s4 1983009808
  %v5902 = vunpack.c.0.s8 %v5901
  %v5903 = vlaneseq
  %v5904 = vshrl.u32 %v5903, 7
  %v5905 = vsub.s32 %v5902, %v5904
  %v5906 = vrot.slane %v5898, %v5905
  %v5908 = vunpack.c.l.s4 1983009808
  %v5909 = vunpack.c.0.s8 %v5908
  %v5910 = vlaneseq
  %v5911 = vshrl.u32 %v5910, 7
  %v5912 = vsub.s32 %v5909, %v5911
  %v5913 = vrot.slane %v5899, %v5912
  %v5914 = vcombine.low %v5906, %v5913
  %v5915 = vcombine.low %v5670, %v5671
  %v5916 = vcombine.low %v5672, %v5673
  %v5918 = vunpack.c.l.s4 1983009808
  %v5919 = vunpack.c.0.s8 %v5918
  %v5920 = vlaneseq
  %v5921 = vshrl.u32 %v5920, 7
  %v5922 = vsub.s32 %v5919, %v5921
  %v5923 = vrot.slane %v5915, %v5922
  %v5925 = vunpack.c.l.s4 1983009808
  %v5926 = vunpack.c.0.s8 %v5925
  %v5927 = vlaneseq
  %v5928 = vshrl.u32 %v5927, 7
  %v5929 = vsub.s32 %v5926, %v5928
  %v5930 = vrot.slane %v5916, %v5929
  %v5931 = vcombine.low %v5923, %v5930
  %v5932 = vcombine.low %v5674, %v5675
  %v5933 = vcombine.low %v5676, %v5677
  %v5935 = vunpack.c.l.s4 1983009808
  %v5936 = vunpack.c.0.s8 %v5935
  %v5937 = vlaneseq
  %v5938 = vshrl.u32 %v5937, 7
  %v5939 = vsub.s32 %v5936, %v5938
  %v5940 = vrot.slane %v5932, %v5939
  %v5942 = vunpack.c.l.s4 1983009808
  %v5943 = vunpack.c.0.s8 %v5942
  %v5944 = vlaneseq
  %v5945 = vshrl.u32 %v5944, 7
  %v5946 = vsub.s32 %v5943, %v5945
  %v5947 = vrot.slane %v5933, %v5946
  %v5948 = vcombine.low %v5940, %v5947
  %v5949 = vcombine.low %v5678, %v5679
  %v5950 = vcombine.low %v5680, %v5681
  %v5952 = vunpack.c.l.s4 1983009808
  %v5953 = vunpack.c.0.s8 %v5952
  %v5954 = vlaneseq
  %v5955 = vshrl.u32 %v5954, 7
  %v5956 = vsub.s32 %v5953, %v5955
  %v5957 = vrot.slane %v5949, %v5956
  %v5959 = vunpack.c.l.s4 1983009808
  %v5960 = vunpack.c.0.s8 %v5959
  %v5961 = vlaneseq
  %v5962 = vshrl.u32 %v5961, 7
  %v5963 = vsub.s32 %v5960, %v5962
  %v5964 = vrot.slane %v5950, %v5963
  %v5965 = vcombine.low %v5957, %v5964
  %v5966 = vcombine.low %v5682, %v5683
  %v5967 = vcombine.low %v5684, %v5685
  %v5969 = vunpack.c.l.s4 1983009808
  %v5970 = vunpack.c.0.s8 %v5969
  %v5971 = vlaneseq
  %v5972 = vshrl.u32 %v5971, 7
  %v5973 = vsub.s32 %v5970, %v5972
  %v5974 = vrot.slane %v5966, %v5973
  %v5976 = vunpack.c.l.s4 1983009808
  %v5977 = vunpack.c.0.s8 %v5976
  %v5978 = vlaneseq
  %v5979 = vshrl.u32 %v5978, 7
  %v5980 = vsub.s32 %v5977, %v5979
  %v5981 = vrot.slane %v5967, %v5980
  %v5982 = vcombine.low %v5974, %v5981
  %v5983 = vcombine.low %v5686, %v5687
  %v5984 = vcombine.low %v5688, %v5689
  %v5986 = vunpack.c.l.s4 1983009808
  %v5987 = vunpack.c.0.s8 %v5986
  %v5988 = vlaneseq
  %v5989 = vshrl.u32 %v5988, 7
  %v5990 = vsub.s32 %v5987, %v5989
  %v5991 = vrot.slane %v5983, %v5990
  %v5993 = vunpack.c.l.s4 1983009808
  %v5994 = vunpack.c.0.s8 %v5993
  %v5995 = vlaneseq
  %v5996 = vshrl.u32 %v5995, 7
  %v5997 = vsub.s32 %v5994, %v5996
  %v5998 = vrot.slane %v5984, %v5997
  %v5999 = vcombine.low %v5991, %v5998
  %v6000 = vcombine.low %v5690, %v5691
  %v6001 = vcombine.low %v5692, %v5693
  %v6003 = vunpack.c.l.s4 1983009808
  %v6004 = vunpack.c.0.s8 %v6003
  %v6005 = vlaneseq
  %v6006 = vshrl.u32 %v6005, 7
  %v6007 = vsub.s32 %v6004, %v6006
  %v6008 = vrot.slane %v6000, %v6007
  %v6010 = vunpack.c.l.s4 1983009808
  %v6011 = vunpack.c.0.s8 %v6010
  %v6012 = vlaneseq
  %v6013 = vshrl.u32 %v6012, 7
  %v6014 = vsub.s32 %v6011, %v6013
  %v6015 = vrot.slane %v6001, %v6014
  %v6016 = vcombine.low %v6008, %v6015
  %v6017 = vcombine.low %v5694, %v5695
  %v6018 = vcombine.low %v5696, %v5697
  %v6020 = vunpack.c.l.s4 1983009808
  %v6021 = vunpack.c.0.s8 %v6020
  %v6022 = vlaneseq
  %v6023 = vshrl.u32 %v6022, 7
  %v6024 = vsub.s32 %v6021, %v6023
  %v6025 = vrot.slane %v6017, %v6024
  %v6027 = vunpack.c.l.s4 1983009808
  %v6028 = vunpack.c.0.s8 %v6027
  %v6029 = vlaneseq
  %v6030 = vshrl.u32 %v6029, 7
  %v6031 = vsub.s32 %v6028, %v6030
  %v6032 = vrot.slane %v6018, %v6031
  %v6033 = vcombine.low %v6025, %v6032
  %v6034 = vsel %vm862, %v5778, 0
  %v6036 = vsel %vm862, %v5795, 0
  %v6038 = vsel %vm862, %v5812, 0
  %v6040 = vsel %vm862, %v5829, 0
  %v6042 = vsel %vm862, %v5846, 0
  %v6044 = vsel %vm862, %v5863, 0
  %v6046 = vsel %vm862, %v5880, 0
  %v6048 = vsel %vm862, %v5897, 0
  %v6050 = vsel %vm862, %v5914, 0
  %v6052 = vsel %vm862, %v5931, 0
  %v6054 = vsel %vm862, %v5948, 0
  %v6056 = vsel %vm862, %v5965, 0
  %v6058 = vsel %vm862, %v5982, 0
  %v6060 = vsel %vm862, %v5999, 0
  %v6062 = vsel %vm862, %v6016, 0
  %v6064 = vsel %vm862, %v6033, 0
  %6066 = vmatprep.subr.mxu0 0.0
  %6067 = vmatpush1.msra.mxu0 0.0
  %6068 = vmatprep.subr.mxu0 0.0
  %6069 = vmatpush1.msra.mxu0 0.0
  %6070 = vmatprep.subr.mxu0 0.0
  %6071 = vmatpush1.msra.mxu0 0.0
  %6072 = vmatprep.subr.mxu0 0.0
  %6073 = vmatpush1.msra.mxu0 0.0
  %6074 = vmatprep.subr.mxu0 0.0
  %6075 = vmatpush1.msra.mxu0 0.0
  %6076 = vmatprep.subr.mxu0 0.0
  %6077 = vmatpush1.msra.mxu0 0.0
  %6078 = vmatprep.subr.mxu0 0.0
  %6079 = vmatpush1.msra.mxu0 0.0
  %6080 = vmatprep.subr.mxu0 0.0
  %6081 = vmatpush1.msra.mxu0 0.0
  %6082 = vmatprep.subr.mxu0 0.0
  %6083 = vmatpush1.msra.mxu0 0.0
  %6084 = vmatprep.subr.mxu0 0.0
  %6085 = vmatpush1.msra.mxu0 0.0
  %6086 = vmatprep.subr.mxu0 0.0
  %6087 = vmatpush1.msra.mxu0 0.0
  %6088 = vmatprep.subr.mxu0 0.0
  %6089 = vmatpush1.msra.mxu0 0.0
  %6090 = vmatprep.subr.mxu0 0.0
  %6091 = vmatpush1.msra.mxu0 0.0
  %6092 = vmatprep.subr.mxu0 0.0
  %6093 = vmatpush1.msra.mxu0 0.0
  %6094 = vmatprep.subr.mxu0 0.0
  %v6095 = vand.u32 %v4575, 4294901760
  %6096 = vmatpush1.msra.mxu0 %v6095
  %6097 = vmatprep.subr.mxu0 0.0
  %v6098 = vand.u32 %v4574, 4294901760
  %6099 = vmatpush1.msra.mxu0 %v6098
  %6100 = vmatprep.subr.mxu0 0.0
  %6101 = vmatpush2.msra.mxu0 0.0
  %6102 = vmatprep.subr.mxu0 0.0
  %6103 = vmatpush2.msra.mxu0 0.0
  %6104 = vmatprep.subr.mxu0 0.0
  %6105 = vmatpush2.msra.mxu0 0.0
  %6106 = vmatprep.subr.mxu0 0.0
  %6107 = vmatpush2.msra.mxu0 0.0
  %6108 = vmatprep.subr.mxu0 0.0
  %6109 = vmatpush2.msra.mxu0 0.0
  %6110 = vmatprep.subr.mxu0 0.0
  %6111 = vmatpush2.msra.mxu0 0.0
  %6112 = vmatprep.subr.mxu0 0.0
  %6113 = vmatpush2.msra.mxu0 0.0
  %6114 = vmatprep.subr.mxu0 0.0
  %6115 = vmatpush2.msra.mxu0 0.0
  %6116 = vmatprep.subr.mxu0 0.0
  %6117 = vmatpush2.msra.mxu0 0.0
  %6118 = vmatprep.subr.mxu0 0.0
  %6119 = vmatpush2.msra.mxu0 0.0
  %6120 = vmatprep.subr.mxu0 0.0
  %6121 = vmatpush2.msra.mxu0 0.0
  %6122 = vmatprep.subr.mxu0 0.0
  %6123 = vmatpush2.msra.mxu0 0.0
  %6124 = vmatprep.subr.mxu0 0.0
  %6125 = vmatpush2.msra.mxu0 0.0
  %6126 = vmatprep.subr.mxu0 0.0
  %6127 = vmatpush2.msra.mxu0 0.0
  %6128 = vmatprep.subr.mxu0 0.0
  %6129 = vmatpush2.msra.mxu0 0.0
  %6130 = vmatprep.subr.mxu0 0.0
  %6131 = vmatpush2.msra.mxu0 0.0
  %6132 = vmatprep.mubr.f32.mxu0 0.0
  %v6133 = vand.u32 %v6034, 4294901760
  %v6134 = vsub.f32 %v6034, %v6133
  %v6135 = vand.u32 %v6134, 4294901760
  %v6136 = vsub.f32 %v6134, %v6135
  %v6137 = vand.u32 %v6136, 4294901760
  %6138 = vmatmul.mubr.f32.gmra.mxu0 %v6137
  %v6139 = vpop.f32.mrf.mxu0
  %v6140 = vadd.f32 0.0, %v6139
  %v6141 = vpop.f32.mrf.mxu0
  %6142 = vmatprep.mubr.f32.mxu0 0.0
  %v6143 = vand.u32 %v6036, 4294901760
  %v6144 = vsub.f32 %v6036, %v6143
  %v6145 = vand.u32 %v6144, 4294901760
  %v6146 = vsub.f32 %v6144, %v6145
  %v6147 = vand.u32 %v6146, 4294901760
  %6148 = vmatmul.mubr.f32.gmra.mxu0 %v6147
  %v6149 = vpop.f32.mrf.mxu0
  %v6150 = vadd.f32 0.0, %v6149
  %v6151 = vpop.f32.mrf.mxu0
  %6152 = vmatprep.mubr.f32.mxu0 0.0
  %v6153 = vand.u32 %v6038, 4294901760
  %v6154 = vsub.f32 %v6038, %v6153
  %v6155 = vand.u32 %v6154, 4294901760
  %v6156 = vsub.f32 %v6154, %v6155
  %v6157 = vand.u32 %v6156, 4294901760
  %6158 = vmatmul.mubr.f32.gmra.mxu0 %v6157
  %v6159 = vpop.f32.mrf.mxu0
  %v6160 = vadd.f32 0.0, %v6159
  %v6161 = vpop.f32.mrf.mxu0
  %6162 = vmatprep.mubr.f32.mxu0 0.0
  %v6163 = vand.u32 %v6040, 4294901760
  %v6164 = vsub.f32 %v6040, %v6163
  %v6165 = vand.u32 %v6164, 4294901760
  %v6166 = vsub.f32 %v6164, %v6165
  %v6167 = vand.u32 %v6166, 4294901760
  %6168 = vmatmul.mubr.f32.gmra.mxu0 %v6167
  %v6169 = vpop.f32.mrf.mxu0
  %v6170 = vadd.f32 0.0, %v6169
  %v6171 = vpop.f32.mrf.mxu0
  %6172 = vmatprep.mubr.f32.mxu0 0.0
  %v6173 = vand.u32 %v6042, 4294901760
  %v6174 = vsub.f32 %v6042, %v6173
  %v6175 = vand.u32 %v6174, 4294901760
  %v6176 = vsub.f32 %v6174, %v6175
  %v6177 = vand.u32 %v6176, 4294901760
  %6178 = vmatmul.mubr.f32.gmra.mxu0 %v6177
  %v6179 = vpop.f32.mrf.mxu0
  %v6180 = vadd.f32 0.0, %v6179
  %v6181 = vpop.f32.mrf.mxu0
  %6182 = vmatprep.mubr.f32.mxu0 0.0
  %v6183 = vand.u32 %v6044, 4294901760
  %v6184 = vsub.f32 %v6044, %v6183
  %v6185 = vand.u32 %v6184, 4294901760
  %v6186 = vsub.f32 %v6184, %v6185
  %v6187 = vand.u32 %v6186, 4294901760
  %6188 = vmatmul.mubr.f32.gmra.mxu0 %v6187
  %v6189 = vpop.f32.mrf.mxu0
  %v6190 = vadd.f32 0.0, %v6189
  %v6191 = vpop.f32.mrf.mxu0
  %6192 = vmatprep.mubr.f32.mxu0 0.0
  %v6193 = vand.u32 %v6046, 4294901760
  %v6194 = vsub.f32 %v6046, %v6193
  %v6195 = vand.u32 %v6194, 4294901760
  %v6196 = vsub.f32 %v6194, %v6195
  %v6197 = vand.u32 %v6196, 4294901760
  %6198 = vmatmul.mubr.f32.gmra.mxu0 %v6197
  %v6199 = vpop.f32.mrf.mxu0
  %v6200 = vadd.f32 0.0, %v6199
  %v6201 = vpop.f32.mrf.mxu0
  %6202 = vmatprep.mubr.f32.mxu0 0.0
  %v6203 = vand.u32 %v6048, 4294901760
  %v6204 = vsub.f32 %v6048, %v6203
  %v6205 = vand.u32 %v6204, 4294901760
  %v6206 = vsub.f32 %v6204, %v6205
  %v6207 = vand.u32 %v6206, 4294901760
  %6208 = vmatmul.mubr.f32.gmra.mxu0 %v6207
  %v6209 = vpop.f32.mrf.mxu0
  %v6210 = vadd.f32 0.0, %v6209
  %v6211 = vpop.f32.mrf.mxu0
  %6212 = vmatprep.mubr.f32.mxu0 0.0
  %v6213 = vand.u32 %v6050, 4294901760
  %v6214 = vsub.f32 %v6050, %v6213
  %v6215 = vand.u32 %v6214, 4294901760
  %v6216 = vsub.f32 %v6214, %v6215
  %v6217 = vand.u32 %v6216, 4294901760
  %6218 = vmatmul.mubr.f32.gmra.mxu0 %v6217
  %v6219 = vpop.f32.mrf.mxu0
  %v6220 = vadd.f32 0.0, %v6219
  %v6221 = vpop.f32.mrf.mxu0
  %6222 = vmatprep.mubr.f32.mxu0 0.0
  %v6223 = vand.u32 %v6052, 4294901760
  %v6224 = vsub.f32 %v6052, %v6223
  %v6225 = vand.u32 %v6224, 4294901760
  %v6226 = vsub.f32 %v6224, %v6225
  %v6227 = vand.u32 %v6226, 4294901760
  %6228 = vmatmul.mubr.f32.gmra.mxu0 %v6227
  %v6229 = vpop.f32.mrf.mxu0
  %v6230 = vadd.f32 0.0, %v6229
  %v6231 = vpop.f32.mrf.mxu0
  %6232 = vmatprep.mubr.f32.mxu0 0.0
  %v6233 = vand.u32 %v6054, 4294901760
  %v6234 = vsub.f32 %v6054, %v6233
  %v6235 = vand.u32 %v6234, 4294901760
  %v6236 = vsub.f32 %v6234, %v6235
  %v6237 = vand.u32 %v6236, 4294901760
  %6238 = vmatmul.mubr.f32.gmra.mxu0 %v6237
  %v6239 = vpop.f32.mrf.mxu0
  %v6240 = vadd.f32 0.0, %v6239
  %v6241 = vpop.f32.mrf.mxu0
  %6242 = vmatprep.mubr.f32.mxu0 0.0
  %v6243 = vand.u32 %v6056, 4294901760
  %v6244 = vsub.f32 %v6056, %v6243
  %v6245 = vand.u32 %v6244, 4294901760
  %v6246 = vsub.f32 %v6244, %v6245
  %v6247 = vand.u32 %v6246, 4294901760
  %6248 = vmatmul.mubr.f32.gmra.mxu0 %v6247
  %v6249 = vpop.f32.mrf.mxu0
  %v6250 = vadd.f32 0.0, %v6249
  %v6251 = vpop.f32.mrf.mxu0
  %6252 = vmatprep.mubr.f32.mxu0 0.0
  %v6253 = vand.u32 %v6058, 4294901760
  %v6254 = vsub.f32 %v6058, %v6253
  %v6255 = vand.u32 %v6254, 4294901760
  %v6256 = vsub.f32 %v6254, %v6255
  %v6257 = vand.u32 %v6256, 4294901760
  %6258 = vmatmul.mubr.f32.gmra.mxu0 %v6257
  %v6259 = vpop.f32.mrf.mxu0
  %v6260 = vadd.f32 0.0, %v6259
  %v6261 = vpop.f32.mrf.mxu0
  %6262 = vmatprep.mubr.f32.mxu0 0.0
  %v6263 = vand.u32 %v6060, 4294901760
  %v6264 = vsub.f32 %v6060, %v6263
  %v6265 = vand.u32 %v6264, 4294901760
  %v6266 = vsub.f32 %v6264, %v6265
  %v6267 = vand.u32 %v6266, 4294901760
  %6268 = vmatmul.mubr.f32.gmra.mxu0 %v6267
  %v6269 = vpop.f32.mrf.mxu0
  %v6270 = vadd.f32 0.0, %v6269
  %v6271 = vpop.f32.mrf.mxu0
  %6272 = vmatprep.mubr.f32.mxu0 0.0
  %v6273 = vand.u32 %v6062, 4294901760
  %v6274 = vsub.f32 %v6062, %v6273
  %v6275 = vand.u32 %v6274, 4294901760
  %v6276 = vsub.f32 %v6274, %v6275
  %v6277 = vand.u32 %v6276, 4294901760
  %6278 = vmatmul.mubr.f32.gmra.mxu0 %v6277
  %v6279 = vpop.f32.mrf.mxu0
  %v6280 = vadd.f32 0.0, %v6279
  %v6281 = vpop.f32.mrf.mxu0
  %6282 = vmatprep.mubr.f32.mxu0 0.0
  %v6283 = vand.u32 %v6064, 4294901760
  %v6284 = vsub.f32 %v6064, %v6283
  %v6285 = vand.u32 %v6284, 4294901760
  %v6286 = vsub.f32 %v6284, %v6285
  %v6287 = vand.u32 %v6286, 4294901760
  %6288 = vmatmul.mubr.f32.gmra.mxu0 %v6287
  %v6289 = vpop.f32.mrf.mxu0
  %v6290 = vadd.f32 0.0, %v6289
  %v6291 = vpop.f32.mrf.mxu0
  %6292 = vdwg.mxu0
  %6293 = vmatprep.subr.mxu0 0.0
  %6294 = vmatpush1.msra.mxu0 0.0
  %6295 = vmatprep.subr.mxu0 0.0
  %6296 = vmatpush1.msra.mxu0 0.0
  %6297 = vmatprep.subr.mxu0 0.0
  %6298 = vmatpush1.msra.mxu0 0.0
  %6299 = vmatprep.subr.mxu0 0.0
  %6300 = vmatpush1.msra.mxu0 0.0
  %6301 = vmatprep.subr.mxu0 0.0
  %6302 = vmatpush1.msra.mxu0 0.0
  %6303 = vmatprep.subr.mxu0 0.0
  %6304 = vmatpush1.msra.mxu0 0.0
  %6305 = vmatprep.subr.mxu0 0.0
  %6306 = vmatpush1.msra.mxu0 0.0
  %6307 = vmatprep.subr.mxu0 0.0
  %6308 = vmatpush1.msra.mxu0 0.0
  %6309 = vmatprep.subr.mxu0 0.0
  %6310 = vmatpush1.msra.mxu0 0.0
  %6311 = vmatprep.subr.mxu0 0.0
  %6312 = vmatpush1.msra.mxu0 0.0
  %6313 = vmatprep.subr.mxu0 0.0
  %6314 = vmatpush1.msra.mxu0 0.0
  %6315 = vmatprep.subr.mxu0 0.0
  %6316 = vmatpush1.msra.mxu0 0.0
  %6317 = vmatprep.subr.mxu0 0.0
  %6318 = vmatpush1.msra.mxu0 0.0
  %6319 = vmatprep.subr.mxu0 0.0
  %6320 = vmatpush1.msra.mxu0 0.0
  %6321 = vmatprep.subr.mxu0 0.0
  %v6322 = vand.u32 %v4575, 4294901760
  %v6323 = vsub.f32 %v4575, %v6322
  %v6324 = vand.u32 %v6323, 4294901760
  %v6325 = vsub.f32 %v6323, %v6324
  %v6326 = vand.u32 %v6325, 4294901760
  %6327 = vmatpush1.msra.mxu0 %v6326
  %6328 = vmatprep.subr.mxu0 0.0
  %v6329 = vand.u32 %v4574, 4294901760
  %v6330 = vsub.f32 %v4574, %v6329
  %v6331 = vand.u32 %v6330, 4294901760
  %v6332 = vsub.f32 %v6330, %v6331
  %v6333 = vand.u32 %v6332, 4294901760
  %6334 = vmatpush1.msra.mxu0 %v6333
  %6335 = vmatprep.subr.mxu0 0.0
  %6336 = vmatpush2.msra.mxu0 0.0
  %6337 = vmatprep.subr.mxu0 0.0
  %6338 = vmatpush2.msra.mxu0 0.0
  %6339 = vmatprep.subr.mxu0 0.0
  %6340 = vmatpush2.msra.mxu0 0.0
  %6341 = vmatprep.subr.mxu0 0.0
  %6342 = vmatpush2.msra.mxu0 0.0
  %6343 = vmatprep.subr.mxu0 0.0
  %6344 = vmatpush2.msra.mxu0 0.0
  %6345 = vmatprep.subr.mxu0 0.0
  %6346 = vmatpush2.msra.mxu0 0.0
  %6347 = vmatprep.subr.mxu0 0.0
  %6348 = vmatpush2.msra.mxu0 0.0
  %6349 = vmatprep.subr.mxu0 0.0
  %6350 = vmatpush2.msra.mxu0 0.0
  %6351 = vmatprep.subr.mxu0 0.0
  %6352 = vmatpush2.msra.mxu0 0.0
  %6353 = vmatprep.subr.mxu0 0.0
  %6354 = vmatpush2.msra.mxu0 0.0
  %6355 = vmatprep.subr.mxu0 0.0
  %6356 = vmatpush2.msra.mxu0 0.0
  %6357 = vmatprep.subr.mxu0 0.0
  %6358 = vmatpush2.msra.mxu0 0.0
  %6359 = vmatprep.subr.mxu0 0.0
  %6360 = vmatpush2.msra.mxu0 0.0
  %6361 = vmatprep.subr.mxu0 0.0
  %6362 = vmatpush2.msra.mxu0 0.0
  %6363 = vmatprep.subr.mxu0 0.0
  %6364 = vmatpush2.msra.mxu0 0.0
  %6365 = vmatprep.subr.mxu0 0.0
  %6366 = vmatpush2.msra.mxu0 0.0
  %6367 = vmatprep.mubr.f32.mxu0 0.0
  %v6368 = vand.u32 %v6034, 4294901760
  %6369 = vmatmul.mubr.f32.gmra.mxu0 %v6368
  %v6370 = vpop.f32.mrf.mxu0
  %v6371 = vadd.f32 %v6140, %v6370
  %v6372 = vpop.f32.mrf.mxu0
  %6373 = vmatprep.mubr.f32.mxu0 0.0
  %v6374 = vand.u32 %v6036, 4294901760
  %6375 = vmatmul.mubr.f32.gmra.mxu0 %v6374
  %v6376 = vpop.f32.mrf.mxu0
  %v6377 = vadd.f32 %v6150, %v6376
  %v6378 = vpop.f32.mrf.mxu0
  %6379 = vmatprep.mubr.f32.mxu0 0.0
  %v6380 = vand.u32 %v6038, 4294901760
  %6381 = vmatmul.mubr.f32.gmra.mxu0 %v6380
  %v6382 = vpop.f32.mrf.mxu0
  %v6383 = vadd.f32 %v6160, %v6382
  %v6384 = vpop.f32.mrf.mxu0
  %6385 = vmatprep.mubr.f32.mxu0 0.0
  %v6386 = vand.u32 %v6040, 4294901760
  %6387 = vmatmul.mubr.f32.gmra.mxu0 %v6386
  %v6388 = vpop.f32.mrf.mxu0
  %v6389 = vadd.f32 %v6170, %v6388
  %v6390 = vpop.f32.mrf.mxu0
  %6391 = vmatprep.mubr.f32.mxu0 0.0
  %v6392 = vand.u32 %v6042, 4294901760
  %6393 = vmatmul.mubr.f32.gmra.mxu0 %v6392
  %v6394 = vpop.f32.mrf.mxu0
  %v6395 = vadd.f32 %v6180, %v6394
  %v6396 = vpop.f32.mrf.mxu0
  %6397 = vmatprep.mubr.f32.mxu0 0.0
  %v6398 = vand.u32 %v6044, 4294901760
  %6399 = vmatmul.mubr.f32.gmra.mxu0 %v6398
  %v6400 = vpop.f32.mrf.mxu0
  %v6401 = vadd.f32 %v6190, %v6400
  %v6402 = vpop.f32.mrf.mxu0
  %6403 = vmatprep.mubr.f32.mxu0 0.0
  %v6404 = vand.u32 %v6046, 4294901760
  %6405 = vmatmul.mubr.f32.gmra.mxu0 %v6404
  %v6406 = vpop.f32.mrf.mxu0
  %v6407 = vadd.f32 %v6200, %v6406
  %v6408 = vpop.f32.mrf.mxu0
  %6409 = vmatprep.mubr.f32.mxu0 0.0
  %v6410 = vand.u32 %v6048, 4294901760
  %6411 = vmatmul.mubr.f32.gmra.mxu0 %v6410
  %v6412 = vpop.f32.mrf.mxu0
  %v6413 = vadd.f32 %v6210, %v6412
  %v6414 = vpop.f32.mrf.mxu0
  %6415 = vmatprep.mubr.f32.mxu0 0.0
  %v6416 = vand.u32 %v6050, 4294901760
  %6417 = vmatmul.mubr.f32.gmra.mxu0 %v6416
  %v6418 = vpop.f32.mrf.mxu0
  %v6419 = vadd.f32 %v6220, %v6418
  %v6420 = vpop.f32.mrf.mxu0
  %6421 = vmatprep.mubr.f32.mxu0 0.0
  %v6422 = vand.u32 %v6052, 4294901760
  %6423 = vmatmul.mubr.f32.gmra.mxu0 %v6422
  %v6424 = vpop.f32.mrf.mxu0
  %v6425 = vadd.f32 %v6230, %v6424
  %v6426 = vpop.f32.mrf.mxu0
  %6427 = vmatprep.mubr.f32.mxu0 0.0
  %v6428 = vand.u32 %v6054, 4294901760
  %6429 = vmatmul.mubr.f32.gmra.mxu0 %v6428
  %v6430 = vpop.f32.mrf.mxu0
  %v6431 = vadd.f32 %v6240, %v6430
  %v6432 = vpop.f32.mrf.mxu0
  %6433 = vmatprep.mubr.f32.mxu0 0.0
  %v6434 = vand.u32 %v6056, 4294901760
  %6435 = vmatmul.mubr.f32.gmra.mxu0 %v6434
  %v6436 = vpop.f32.mrf.mxu0
  %v6437 = vadd.f32 %v6250, %v6436
  %v6438 = vpop.f32.mrf.mxu0
  %6439 = vmatprep.mubr.f32.mxu0 0.0
  %v6440 = vand.u32 %v6058, 4294901760
  %6441 = vmatmul.mubr.f32.gmra.mxu0 %v6440
  %v6442 = vpop.f32.mrf.mxu0
  %v6443 = vadd.f32 %v6260, %v6442
  %v6444 = vpop.f32.mrf.mxu0
  %6445 = vmatprep.mubr.f32.mxu0 0.0
  %v6446 = vand.u32 %v6060, 4294901760
  %6447 = vmatmul.mubr.f32.gmra.mxu0 %v6446
  %v6448 = vpop.f32.mrf.mxu0
  %v6449 = vadd.f32 %v6270, %v6448
  %v6450 = vpop.f32.mrf.mxu0
  %6451 = vmatprep.mubr.f32.mxu0 0.0
  %v6452 = vand.u32 %v6062, 4294901760
  %6453 = vmatmul.mubr.f32.gmra.mxu0 %v6452
  %v6454 = vpop.f32.mrf.mxu0
  %v6455 = vadd.f32 %v6280, %v6454
  %v6456 = vpop.f32.mrf.mxu0
  %6457 = vmatprep.mubr.f32.mxu0 0.0
  %v6458 = vand.u32 %v6064, 4294901760
  %6459 = vmatmul.mubr.f32.gmra.mxu0 %v6458
  %v6460 = vpop.f32.mrf.mxu0
  %v6461 = vadd.f32 %v6290, %v6460
  %v6462 = vpop.f32.mrf.mxu0
  %6463 = vdwg.mxu0
  %6464 = vmatprep.subr.mxu0 0.0
  %6465 = vmatpush1.msra.mxu0 0.0
  %6466 = vmatprep.subr.mxu0 0.0
  %6467 = vmatpush1.msra.mxu0 0.0
  %6468 = vmatprep.subr.mxu0 0.0
  %6469 = vmatpush1.msra.mxu0 0.0
  %6470 = vmatprep.subr.mxu0 0.0
  %6471 = vmatpush1.msra.mxu0 0.0
  %6472 = vmatprep.subr.mxu0 0.0
  %6473 = vmatpush1.msra.mxu0 0.0
  %6474 = vmatprep.subr.mxu0 0.0
  %6475 = vmatpush1.msra.mxu0 0.0
  %6476 = vmatprep.subr.mxu0 0.0
  %6477 = vmatpush1.msra.mxu0 0.0
  %6478 = vmatprep.subr.mxu0 0.0
  %6479 = vmatpush1.msra.mxu0 0.0
  %6480 = vmatprep.subr.mxu0 0.0
  %6481 = vmatpush1.msra.mxu0 0.0
  %6482 = vmatprep.subr.mxu0 0.0
  %6483 = vmatpush1.msra.mxu0 0.0
  %6484 = vmatprep.subr.mxu0 0.0
  %6485 = vmatpush1.msra.mxu0 0.0
  %6486 = vmatprep.subr.mxu0 0.0
  %6487 = vmatpush1.msra.mxu0 0.0
  %6488 = vmatprep.subr.mxu0 0.0
  %6489 = vmatpush1.msra.mxu0 0.0
  %6490 = vmatprep.subr.mxu0 0.0
  %6491 = vmatpush1.msra.mxu0 0.0
  %6492 = vmatprep.subr.mxu0 0.0
  %v6493 = vand.u32 %v4575, 4294901760
  %v6494 = vsub.f32 %v4575, %v6493
  %6495 = vmatpush1.msra.mxu0 %v6494
  %6496 = vmatprep.subr.mxu0 0.0
  %v6497 = vand.u32 %v4574, 4294901760
  %v6498 = vsub.f32 %v4574, %v6497
  %6499 = vmatpush1.msra.mxu0 %v6498
  %6500 = vmatprep.subr.mxu0 0.0
  %6501 = vmatpush2.msra.mxu0 0.0
  %6502 = vmatprep.subr.mxu0 0.0
  %6503 = vmatpush2.msra.mxu0 0.0
  %6504 = vmatprep.subr.mxu0 0.0
  %6505 = vmatpush2.msra.mxu0 0.0
  %6506 = vmatprep.subr.mxu0 0.0
  %6507 = vmatpush2.msra.mxu0 0.0
  %6508 = vmatprep.subr.mxu0 0.0
  %6509 = vmatpush2.msra.mxu0 0.0
  %6510 = vmatprep.subr.mxu0 0.0
  %6511 = vmatpush2.msra.mxu0 0.0
  %6512 = vmatprep.subr.mxu0 0.0
  %6513 = vmatpush2.msra.mxu0 0.0
  %6514 = vmatprep.subr.mxu0 0.0
  %6515 = vmatpush2.msra.mxu0 0.0
  %6516 = vmatprep.subr.mxu0 0.0
  %6517 = vmatpush2.msra.mxu0 0.0
  %6518 = vmatprep.subr.mxu0 0.0
  %6519 = vmatpush2.msra.mxu0 0.0
  %6520 = vmatprep.subr.mxu0 0.0
  %6521 = vmatpush2.msra.mxu0 0.0
  %6522 = vmatprep.subr.mxu0 0.0
  %6523 = vmatpush2.msra.mxu0 0.0
  %6524 = vmatprep.subr.mxu0 0.0
  %6525 = vmatpush2.msra.mxu0 0.0
  %6526 = vmatprep.subr.mxu0 0.0
  %6527 = vmatpush2.msra.mxu0 0.0
  %6528 = vmatprep.subr.mxu0 0.0
  %6529 = vmatpush2.msra.mxu0 0.0
  %6530 = vmatprep.subr.mxu0 0.0
  %6531 = vmatpush2.msra.mxu0 0.0
  %6532 = vmatprep.mubr.f32.mxu0 0.0
  %v6533 = vand.u32 %v6034, 4294901760
  %v6534 = vsub.f32 %v6034, %v6533
  %6535 = vmatmul.mubr.f32.gmra.mxu0 %v6534
  %v6536 = vpop.f32.mrf.mxu0
  %v6537 = vadd.f32 %v6371, %v6536
  %v6538 = vpop.f32.mrf.mxu0
  %6539 = vmatprep.mubr.f32.mxu0 0.0
  %v6540 = vand.u32 %v6036, 4294901760
  %v6541 = vsub.f32 %v6036, %v6540
  %6542 = vmatmul.mubr.f32.gmra.mxu0 %v6541
  %v6543 = vpop.f32.mrf.mxu0
  %v6544 = vadd.f32 %v6377, %v6543
  %v6545 = vpop.f32.mrf.mxu0
  %6546 = vmatprep.mubr.f32.mxu0 0.0
  %v6547 = vand.u32 %v6038, 4294901760
  %v6548 = vsub.f32 %v6038, %v6547
  %6549 = vmatmul.mubr.f32.gmra.mxu0 %v6548
  %v6550 = vpop.f32.mrf.mxu0
  %v6551 = vadd.f32 %v6383, %v6550
  %v6552 = vpop.f32.mrf.mxu0
  %6553 = vmatprep.mubr.f32.mxu0 0.0
  %v6554 = vand.u32 %v6040, 4294901760
  %v6555 = vsub.f32 %v6040, %v6554
  %6556 = vmatmul.mubr.f32.gmra.mxu0 %v6555
  %v6557 = vpop.f32.mrf.mxu0
  %v6558 = vadd.f32 %v6389, %v6557
  %v6559 = vpop.f32.mrf.mxu0
  %6560 = vmatprep.mubr.f32.mxu0 0.0
  %v6561 = vand.u32 %v6042, 4294901760
  %v6562 = vsub.f32 %v6042, %v6561
  %6563 = vmatmul.mubr.f32.gmra.mxu0 %v6562
  %v6564 = vpop.f32.mrf.mxu0
  %v6565 = vadd.f32 %v6395, %v6564
  %v6566 = vpop.f32.mrf.mxu0
  %6567 = vmatprep.mubr.f32.mxu0 0.0
  %v6568 = vand.u32 %v6044, 4294901760
  %v6569 = vsub.f32 %v6044, %v6568
  %6570 = vmatmul.mubr.f32.gmra.mxu0 %v6569
  %v6571 = vpop.f32.mrf.mxu0
  %v6572 = vadd.f32 %v6401, %v6571
  %v6573 = vpop.f32.mrf.mxu0
  %6574 = vmatprep.mubr.f32.mxu0 0.0
  %v6575 = vand.u32 %v6046, 4294901760
  %v6576 = vsub.f32 %v6046, %v6575
  %6577 = vmatmul.mubr.f32.gmra.mxu0 %v6576
  %v6578 = vpop.f32.mrf.mxu0
  %v6579 = vadd.f32 %v6407, %v6578
  %v6580 = vpop.f32.mrf.mxu0
  %6581 = vmatprep.mubr.f32.mxu0 0.0
  %v6582 = vand.u32 %v6048, 4294901760
  %v6583 = vsub.f32 %v6048, %v6582
  %6584 = vmatmul.mubr.f32.gmra.mxu0 %v6583
  %v6585 = vpop.f32.mrf.mxu0
  %v6586 = vadd.f32 %v6413, %v6585
  %v6587 = vpop.f32.mrf.mxu0
  %6588 = vmatprep.mubr.f32.mxu0 0.0
  %v6589 = vand.u32 %v6050, 4294901760
  %v6590 = vsub.f32 %v6050, %v6589
  %6591 = vmatmul.mubr.f32.gmra.mxu0 %v6590
  %v6592 = vpop.f32.mrf.mxu0
  %v6593 = vadd.f32 %v6419, %v6592
  %v6594 = vpop.f32.mrf.mxu0
  %6595 = vmatprep.mubr.f32.mxu0 0.0
  %v6596 = vand.u32 %v6052, 4294901760
  %v6597 = vsub.f32 %v6052, %v6596
  %6598 = vmatmul.mubr.f32.gmra.mxu0 %v6597
  %v6599 = vpop.f32.mrf.mxu0
  %v6600 = vadd.f32 %v6425, %v6599
  %v6601 = vpop.f32.mrf.mxu0
  %6602 = vmatprep.mubr.f32.mxu0 0.0
  %v6603 = vand.u32 %v6054, 4294901760
  %v6604 = vsub.f32 %v6054, %v6603
  %6605 = vmatmul.mubr.f32.gmra.mxu0 %v6604
  %v6606 = vpop.f32.mrf.mxu0
  %v6607 = vadd.f32 %v6431, %v6606
  %v6608 = vpop.f32.mrf.mxu0
  %6609 = vmatprep.mubr.f32.mxu0 0.0
  %v6610 = vand.u32 %v6056, 4294901760
  %v6611 = vsub.f32 %v6056, %v6610
  %6612 = vmatmul.mubr.f32.gmra.mxu0 %v6611
  %v6613 = vpop.f32.mrf.mxu0
  %v6614 = vadd.f32 %v6437, %v6613
  %v6615 = vpop.f32.mrf.mxu0
  %6616 = vmatprep.mubr.f32.mxu0 0.0
  %v6617 = vand.u32 %v6058, 4294901760
  %v6618 = vsub.f32 %v6058, %v6617
  %6619 = vmatmul.mubr.f32.gmra.mxu0 %v6618
  %v6620 = vpop.f32.mrf.mxu0
  %v6621 = vadd.f32 %v6443, %v6620
  %v6622 = vpop.f32.mrf.mxu0
  %6623 = vmatprep.mubr.f32.mxu0 0.0
  %v6624 = vand.u32 %v6060, 4294901760
  %v6625 = vsub.f32 %v6060, %v6624
  %6626 = vmatmul.mubr.f32.gmra.mxu0 %v6625
  %v6627 = vpop.f32.mrf.mxu0
  %v6628 = vadd.f32 %v6449, %v6627
  %v6629 = vpop.f32.mrf.mxu0
  %6630 = vmatprep.mubr.f32.mxu0 0.0
  %v6631 = vand.u32 %v6062, 4294901760
  %v6632 = vsub.f32 %v6062, %v6631
  %6633 = vmatmul.mubr.f32.gmra.mxu0 %v6632
  %v6634 = vpop.f32.mrf.mxu0
  %v6635 = vadd.f32 %v6455, %v6634
  %v6636 = vpop.f32.mrf.mxu0
  %6637 = vmatprep.mubr.f32.mxu0 0.0
  %v6638 = vand.u32 %v6064, 4294901760
  %v6639 = vsub.f32 %v6064, %v6638
  %6640 = vmatmul.mubr.f32.gmra.mxu0 %v6639
  %v6641 = vpop.f32.mrf.mxu0
  %v6642 = vadd.f32 %v6461, %v6641
  %v6643 = vpop.f32.mrf.mxu0
  %6644 = vdwg.mxu0
  %6645 = vmatprep.subr.mxu0 0.0
  %6646 = vmatpush1.msra.mxu0 0.0
  %6647 = vmatprep.subr.mxu0 0.0
  %6648 = vmatpush1.msra.mxu0 0.0
  %6649 = vmatprep.subr.mxu0 0.0
  %6650 = vmatpush1.msra.mxu0 0.0
  %6651 = vmatprep.subr.mxu0 0.0
  %6652 = vmatpush1.msra.mxu0 0.0
  %6653 = vmatprep.subr.mxu0 0.0
  %6654 = vmatpush1.msra.mxu0 0.0
  %6655 = vmatprep.subr.mxu0 0.0
  %6656 = vmatpush1.msra.mxu0 0.0
  %6657 = vmatprep.subr.mxu0 0.0
  %6658 = vmatpush1.msra.mxu0 0.0
  %6659 = vmatprep.subr.mxu0 0.0
  %6660 = vmatpush1.msra.mxu0 0.0
  %6661 = vmatprep.subr.mxu0 0.0
  %6662 = vmatpush1.msra.mxu0 0.0
  %6663 = vmatprep.subr.mxu0 0.0
  %6664 = vmatpush1.msra.mxu0 0.0
  %6665 = vmatprep.subr.mxu0 0.0
  %6666 = vmatpush1.msra.mxu0 0.0
  %6667 = vmatprep.subr.mxu0 0.0
  %6668 = vmatpush1.msra.mxu0 0.0
  %6669 = vmatprep.subr.mxu0 0.0
  %6670 = vmatpush1.msra.mxu0 0.0
  %6671 = vmatprep.subr.mxu0 0.0
  %6672 = vmatpush1.msra.mxu0 0.0
  %6673 = vmatprep.subr.mxu0 0.0
  %v6674 = vand.u32 %v4575, 4294901760
  %6675 = vmatpush1.msra.mxu0 %v6674
  %6676 = vmatprep.subr.mxu0 0.0
  %v6677 = vand.u32 %v4574, 4294901760
  %6678 = vmatpush1.msra.mxu0 %v6677
  %6679 = vmatprep.subr.mxu0 0.0
  %6680 = vmatpush2.msra.mxu0 0.0
  %6681 = vmatprep.subr.mxu0 0.0
  %6682 = vmatpush2.msra.mxu0 0.0
  %6683 = vmatprep.subr.mxu0 0.0
  %6684 = vmatpush2.msra.mxu0 0.0
  %6685 = vmatprep.subr.mxu0 0.0
  %6686 = vmatpush2.msra.mxu0 0.0
  %6687 = vmatprep.subr.mxu0 0.0
  %6688 = vmatpush2.msra.mxu0 0.0
  %6689 = vmatprep.subr.mxu0 0.0
  %6690 = vmatpush2.msra.mxu0 0.0
  %6691 = vmatprep.subr.mxu0 0.0
  %6692 = vmatpush2.msra.mxu0 0.0
  %6693 = vmatprep.subr.mxu0 0.0
  %6694 = vmatpush2.msra.mxu0 0.0
  %6695 = vmatprep.subr.mxu0 0.0
  %6696 = vmatpush2.msra.mxu0 0.0
  %6697 = vmatprep.subr.mxu0 0.0
  %6698 = vmatpush2.msra.mxu0 0.0
  %6699 = vmatprep.subr.mxu0 0.0
  %6700 = vmatpush2.msra.mxu0 0.0
  %6701 = vmatprep.subr.mxu0 0.0
  %6702 = vmatpush2.msra.mxu0 0.0
  %6703 = vmatprep.subr.mxu0 0.0
  %6704 = vmatpush2.msra.mxu0 0.0
  %6705 = vmatprep.subr.mxu0 0.0
  %6706 = vmatpush2.msra.mxu0 0.0
  %6707 = vmatprep.subr.mxu0 0.0
  %6708 = vmatpush2.msra.mxu0 0.0
  %6709 = vmatprep.subr.mxu0 0.0
  %6710 = vmatpush2.msra.mxu0 0.0
  %6711 = vmatprep.mubr.f32.mxu0 0.0
  %v6712 = vand.u32 %v6034, 4294901760
  %v6713 = vsub.f32 %v6034, %v6712
  %v6714 = vand.u32 %v6713, 4294901760
  %6715 = vmatmul.mubr.f32.gmra.mxu0 %v6714
  %v6716 = vpop.f32.mrf.mxu0
  %v6717 = vadd.f32 %v6537, %v6716
  %v6718 = vpop.f32.mrf.mxu0
  %6719 = vmatprep.mubr.f32.mxu0 0.0
  %v6720 = vand.u32 %v6036, 4294901760
  %v6721 = vsub.f32 %v6036, %v6720
  %v6722 = vand.u32 %v6721, 4294901760
  %6723 = vmatmul.mubr.f32.gmra.mxu0 %v6722
  %v6724 = vpop.f32.mrf.mxu0
  %v6725 = vadd.f32 %v6544, %v6724
  %v6726 = vpop.f32.mrf.mxu0
  %6727 = vmatprep.mubr.f32.mxu0 0.0
  %v6728 = vand.u32 %v6038, 4294901760
  %v6729 = vsub.f32 %v6038, %v6728
  %v6730 = vand.u32 %v6729, 4294901760
  %6731 = vmatmul.mubr.f32.gmra.mxu0 %v6730
  %v6732 = vpop.f32.mrf.mxu0
  %v6733 = vadd.f32 %v6551, %v6732
  %v6734 = vpop.f32.mrf.mxu0
  %6735 = vmatprep.mubr.f32.mxu0 0.0
  %v6736 = vand.u32 %v6040, 4294901760
  %v6737 = vsub.f32 %v6040, %v6736
  %v6738 = vand.u32 %v6737, 4294901760
  %6739 = vmatmul.mubr.f32.gmra.mxu0 %v6738
  %v6740 = vpop.f32.mrf.mxu0
  %v6741 = vadd.f32 %v6558, %v6740
  %v6742 = vpop.f32.mrf.mxu0
  %6743 = vmatprep.mubr.f32.mxu0 0.0
  %v6744 = vand.u32 %v6042, 4294901760
  %v6745 = vsub.f32 %v6042, %v6744
  %v6746 = vand.u32 %v6745, 4294901760
  %6747 = vmatmul.mubr.f32.gmra.mxu0 %v6746
  %v6748 = vpop.f32.mrf.mxu0
  %v6749 = vadd.f32 %v6565, %v6748
  %v6750 = vpop.f32.mrf.mxu0
  %6751 = vmatprep.mubr.f32.mxu0 0.0
  %v6752 = vand.u32 %v6044, 4294901760
  %v6753 = vsub.f32 %v6044, %v6752
  %v6754 = vand.u32 %v6753, 4294901760
  %6755 = vmatmul.mubr.f32.gmra.mxu0 %v6754
  %v6756 = vpop.f32.mrf.mxu0
  %v6757 = vadd.f32 %v6572, %v6756
  %v6758 = vpop.f32.mrf.mxu0
  %6759 = vmatprep.mubr.f32.mxu0 0.0
  %v6760 = vand.u32 %v6046, 4294901760
  %v6761 = vsub.f32 %v6046, %v6760
  %v6762 = vand.u32 %v6761, 4294901760
  %6763 = vmatmul.mubr.f32.gmra.mxu0 %v6762
  %v6764 = vpop.f32.mrf.mxu0
  %v6765 = vadd.f32 %v6579, %v6764
  %v6766 = vpop.f32.mrf.mxu0
  %6767 = vmatprep.mubr.f32.mxu0 0.0
  %v6768 = vand.u32 %v6048, 4294901760
  %v6769 = vsub.f32 %v6048, %v6768
  %v6770 = vand.u32 %v6769, 4294901760
  %6771 = vmatmul.mubr.f32.gmra.mxu0 %v6770
  %v6772 = vpop.f32.mrf.mxu0
  %v6773 = vadd.f32 %v6586, %v6772
  %v6774 = vpop.f32.mrf.mxu0
  %6775 = vmatprep.mubr.f32.mxu0 0.0
  %v6776 = vand.u32 %v6050, 4294901760
  %v6777 = vsub.f32 %v6050, %v6776
  %v6778 = vand.u32 %v6777, 4294901760
  %6779 = vmatmul.mubr.f32.gmra.mxu0 %v6778
  %v6780 = vpop.f32.mrf.mxu0
  %v6781 = vadd.f32 %v6593, %v6780
  %v6782 = vpop.f32.mrf.mxu0
  %6783 = vmatprep.mubr.f32.mxu0 0.0
  %v6784 = vand.u32 %v6052, 4294901760
  %v6785 = vsub.f32 %v6052, %v6784
  %v6786 = vand.u32 %v6785, 4294901760
  %6787 = vmatmul.mubr.f32.gmra.mxu0 %v6786
  %v6788 = vpop.f32.mrf.mxu0
  %v6789 = vadd.f32 %v6600, %v6788
  %v6790 = vpop.f32.mrf.mxu0
  %6791 = vmatprep.mubr.f32.mxu0 0.0
  %v6792 = vand.u32 %v6054, 4294901760
  %v6793 = vsub.f32 %v6054, %v6792
  %v6794 = vand.u32 %v6793, 4294901760
  %6795 = vmatmul.mubr.f32.gmra.mxu0 %v6794
  %v6796 = vpop.f32.mrf.mxu0
  %v6797 = vadd.f32 %v6607, %v6796
  %v6798 = vpop.f32.mrf.mxu0
  %6799 = vmatprep.mubr.f32.mxu0 0.0
  %v6800 = vand.u32 %v6056, 4294901760
  %v6801 = vsub.f32 %v6056, %v6800
  %v6802 = vand.u32 %v6801, 4294901760
  %6803 = vmatmul.mubr.f32.gmra.mxu0 %v6802
  %v6804 = vpop.f32.mrf.mxu0
  %v6805 = vadd.f32 %v6614, %v6804
  %v6806 = vpop.f32.mrf.mxu0
  %6807 = vmatprep.mubr.f32.mxu0 0.0
  %v6808 = vand.u32 %v6058, 4294901760
  %v6809 = vsub.f32 %v6058, %v6808
  %v6810 = vand.u32 %v6809, 4294901760
  %6811 = vmatmul.mubr.f32.gmra.mxu0 %v6810
  %v6812 = vpop.f32.mrf.mxu0
  %v6813 = vadd.f32 %v6621, %v6812
  %v6814 = vpop.f32.mrf.mxu0
  %6815 = vmatprep.mubr.f32.mxu0 0.0
  %v6816 = vand.u32 %v6060, 4294901760
  %v6817 = vsub.f32 %v6060, %v6816
  %v6818 = vand.u32 %v6817, 4294901760
  %6819 = vmatmul.mubr.f32.gmra.mxu0 %v6818
  %v6820 = vpop.f32.mrf.mxu0
  %v6821 = vadd.f32 %v6628, %v6820
  %v6822 = vpop.f32.mrf.mxu0
  %6823 = vmatprep.mubr.f32.mxu0 0.0
  %v6824 = vand.u32 %v6062, 4294901760
  %v6825 = vsub.f32 %v6062, %v6824
  %v6826 = vand.u32 %v6825, 4294901760
  %6827 = vmatmul.mubr.f32.gmra.mxu0 %v6826
  %v6828 = vpop.f32.mrf.mxu0
  %v6829 = vadd.f32 %v6635, %v6828
  %v6830 = vpop.f32.mrf.mxu0
  %6831 = vmatprep.mubr.f32.mxu0 0.0
  %v6832 = vand.u32 %v6064, 4294901760
  %v6833 = vsub.f32 %v6064, %v6832
  %v6834 = vand.u32 %v6833, 4294901760
  %6835 = vmatmul.mubr.f32.gmra.mxu0 %v6834
  %v6836 = vpop.f32.mrf.mxu0
  %v6837 = vadd.f32 %v6642, %v6836
  %v6838 = vpop.f32.mrf.mxu0
  %6839 = vdwg.mxu0
  %6840 = vmatprep.subr.mxu0 0.0
  %6841 = vmatpush1.msra.mxu0 0.0
  %6842 = vmatprep.subr.mxu0 0.0
  %6843 = vmatpush1.msra.mxu0 0.0
  %6844 = vmatprep.subr.mxu0 0.0
  %6845 = vmatpush1.msra.mxu0 0.0
  %6846 = vmatprep.subr.mxu0 0.0
  %6847 = vmatpush1.msra.mxu0 0.0
  %6848 = vmatprep.subr.mxu0 0.0
  %6849 = vmatpush1.msra.mxu0 0.0
  %6850 = vmatprep.subr.mxu0 0.0
  %6851 = vmatpush1.msra.mxu0 0.0
  %6852 = vmatprep.subr.mxu0 0.0
  %6853 = vmatpush1.msra.mxu0 0.0
  %6854 = vmatprep.subr.mxu0 0.0
  %6855 = vmatpush1.msra.mxu0 0.0
  %6856 = vmatprep.subr.mxu0 0.0
  %6857 = vmatpush1.msra.mxu0 0.0
  %6858 = vmatprep.subr.mxu0 0.0
  %6859 = vmatpush1.msra.mxu0 0.0
  %6860 = vmatprep.subr.mxu0 0.0
  %6861 = vmatpush1.msra.mxu0 0.0
  %6862 = vmatprep.subr.mxu0 0.0
  %6863 = vmatpush1.msra.mxu0 0.0
  %6864 = vmatprep.subr.mxu0 0.0
  %6865 = vmatpush1.msra.mxu0 0.0
  %6866 = vmatprep.subr.mxu0 0.0
  %6867 = vmatpush1.msra.mxu0 0.0
  %6868 = vmatprep.subr.mxu0 0.0
  %v6869 = vand.u32 %v4575, 4294901760
  %v6870 = vsub.f32 %v4575, %v6869
  %v6871 = vand.u32 %v6870, 4294901760
  %6872 = vmatpush1.msra.mxu0 %v6871
  %6873 = vmatprep.subr.mxu0 0.0
  %v6874 = vand.u32 %v4574, 4294901760
  %v6875 = vsub.f32 %v4574, %v6874
  %v6876 = vand.u32 %v6875, 4294901760
  %6877 = vmatpush1.msra.mxu0 %v6876
  %6878 = vmatprep.subr.mxu0 0.0
  %6879 = vmatpush2.msra.mxu0 0.0
  %6880 = vmatprep.subr.mxu0 0.0
  %6881 = vmatpush2.msra.mxu0 0.0
  %6882 = vmatprep.subr.mxu0 0.0
  %6883 = vmatpush2.msra.mxu0 0.0
  %6884 = vmatprep.subr.mxu0 0.0
  %6885 = vmatpush2.msra.mxu0 0.0
  %6886 = vmatprep.subr.mxu0 0.0
  %6887 = vmatpush2.msra.mxu0 0.0
  %6888 = vmatprep.subr.mxu0 0.0
  %6889 = vmatpush2.msra.mxu0 0.0
  %6890 = vmatprep.subr.mxu0 0.0
  %6891 = vmatpush2.msra.mxu0 0.0
  %6892 = vmatprep.subr.mxu0 0.0
  %6893 = vmatpush2.msra.mxu0 0.0
  %6894 = vmatprep.subr.mxu0 0.0
  %6895 = vmatpush2.msra.mxu0 0.0
  %6896 = vmatprep.subr.mxu0 0.0
  %6897 = vmatpush2.msra.mxu0 0.0
  %6898 = vmatprep.subr.mxu0 0.0
  %6899 = vmatpush2.msra.mxu0 0.0
  %6900 = vmatprep.subr.mxu0 0.0
  %6901 = vmatpush2.msra.mxu0 0.0
  %6902 = vmatprep.subr.mxu0 0.0
  %6903 = vmatpush2.msra.mxu0 0.0
  %6904 = vmatprep.subr.mxu0 0.0
  %6905 = vmatpush2.msra.mxu0 0.0
  %6906 = vmatprep.subr.mxu0 0.0
  %6907 = vmatpush2.msra.mxu0 0.0
  %6908 = vmatprep.subr.mxu0 0.0
  %6909 = vmatpush2.msra.mxu0 0.0
  %6910 = vmatprep.mubr.f32.mxu0 0.0
  %v6911 = vand.u32 %v6034, 4294901760
  %6912 = vmatmul.mubr.f32.gmra.mxu0 %v6911
  %v6913 = vpop.f32.mrf.mxu0
  %v6914 = vadd.f32 %v6717, %v6913
  %v6915 = vpop.f32.mrf.mxu0
  %6916 = vmatprep.mubr.f32.mxu0 0.0
  %v6917 = vand.u32 %v6036, 4294901760
  %6918 = vmatmul.mubr.f32.gmra.mxu0 %v6917
  %v6919 = vpop.f32.mrf.mxu0
  %v6920 = vadd.f32 %v6725, %v6919
  %v6921 = vpop.f32.mrf.mxu0
  %6922 = vmatprep.mubr.f32.mxu0 0.0
  %v6923 = vand.u32 %v6038, 4294901760
  %6924 = vmatmul.mubr.f32.gmra.mxu0 %v6923
  %v6925 = vpop.f32.mrf.mxu0
  %v6926 = vadd.f32 %v6733, %v6925
  %v6927 = vpop.f32.mrf.mxu0
  %6928 = vmatprep.mubr.f32.mxu0 0.0
  %v6929 = vand.u32 %v6040, 4294901760
  %6930 = vmatmul.mubr.f32.gmra.mxu0 %v6929
  %v6931 = vpop.f32.mrf.mxu0
  %v6932 = vadd.f32 %v6741, %v6931
  %v6933 = vpop.f32.mrf.mxu0
  %6934 = vmatprep.mubr.f32.mxu0 0.0
  %v6935 = vand.u32 %v6042, 4294901760
  %6936 = vmatmul.mubr.f32.gmra.mxu0 %v6935
  %v6937 = vpop.f32.mrf.mxu0
  %v6938 = vadd.f32 %v6749, %v6937
  %v6939 = vpop.f32.mrf.mxu0
  %6940 = vmatprep.mubr.f32.mxu0 0.0
  %v6941 = vand.u32 %v6044, 4294901760
  %6942 = vmatmul.mubr.f32.gmra.mxu0 %v6941
  %v6943 = vpop.f32.mrf.mxu0
  %v6944 = vadd.f32 %v6757, %v6943
  %v6945 = vpop.f32.mrf.mxu0
  %6946 = vmatprep.mubr.f32.mxu0 0.0
  %v6947 = vand.u32 %v6046, 4294901760
  %6948 = vmatmul.mubr.f32.gmra.mxu0 %v6947
  %v6949 = vpop.f32.mrf.mxu0
  %v6950 = vadd.f32 %v6765, %v6949
  %v6951 = vpop.f32.mrf.mxu0
  %6952 = vmatprep.mubr.f32.mxu0 0.0
  %v6953 = vand.u32 %v6048, 4294901760
  %6954 = vmatmul.mubr.f32.gmra.mxu0 %v6953
  %v6955 = vpop.f32.mrf.mxu0
  %v6956 = vadd.f32 %v6773, %v6955
  %v6957 = vpop.f32.mrf.mxu0
  %6958 = vmatprep.mubr.f32.mxu0 0.0
  %v6959 = vand.u32 %v6050, 4294901760
  %6960 = vmatmul.mubr.f32.gmra.mxu0 %v6959
  %v6961 = vpop.f32.mrf.mxu0
  %v6962 = vadd.f32 %v6781, %v6961
  %v6963 = vpop.f32.mrf.mxu0
  %6964 = vmatprep.mubr.f32.mxu0 0.0
  %v6965 = vand.u32 %v6052, 4294901760
  %6966 = vmatmul.mubr.f32.gmra.mxu0 %v6965
  %v6967 = vpop.f32.mrf.mxu0
  %v6968 = vadd.f32 %v6789, %v6967
  %v6969 = vpop.f32.mrf.mxu0
  %6970 = vmatprep.mubr.f32.mxu0 0.0
  %v6971 = vand.u32 %v6054, 4294901760
  %6972 = vmatmul.mubr.f32.gmra.mxu0 %v6971
  %v6973 = vpop.f32.mrf.mxu0
  %v6974 = vadd.f32 %v6797, %v6973
  %v6975 = vpop.f32.mrf.mxu0
  %6976 = vmatprep.mubr.f32.mxu0 0.0
  %v6977 = vand.u32 %v6056, 4294901760
  %6978 = vmatmul.mubr.f32.gmra.mxu0 %v6977
  %v6979 = vpop.f32.mrf.mxu0
  %v6980 = vadd.f32 %v6805, %v6979
  %v6981 = vpop.f32.mrf.mxu0
  %6982 = vmatprep.mubr.f32.mxu0 0.0
  %v6983 = vand.u32 %v6058, 4294901760
  %6984 = vmatmul.mubr.f32.gmra.mxu0 %v6983
  %v6985 = vpop.f32.mrf.mxu0
  %v6986 = vadd.f32 %v6813, %v6985
  %v6987 = vpop.f32.mrf.mxu0
  %6988 = vmatprep.mubr.f32.mxu0 0.0
  %v6989 = vand.u32 %v6060, 4294901760
  %6990 = vmatmul.mubr.f32.gmra.mxu0 %v6989
  %v6991 = vpop.f32.mrf.mxu0
  %v6992 = vadd.f32 %v6821, %v6991
  %v6993 = vpop.f32.mrf.mxu0
  %6994 = vmatprep.mubr.f32.mxu0 0.0
  %v6995 = vand.u32 %v6062, 4294901760
  %6996 = vmatmul.mubr.f32.gmra.mxu0 %v6995
  %v6997 = vpop.f32.mrf.mxu0
  %v6998 = vadd.f32 %v6829, %v6997
  %v6999 = vpop.f32.mrf.mxu0
  %7000 = vmatprep.mubr.f32.mxu0 0.0
  %v7001 = vand.u32 %v6064, 4294901760
  %7002 = vmatmul.mubr.f32.gmra.mxu0 %v7001
  %v7003 = vpop.f32.mrf.mxu0
  %v7004 = vadd.f32 %v6837, %v7003
  %v7005 = vpop.f32.mrf.mxu0
  %7006 = vdwg.mxu0
  %7007 = vmatprep.subr.mxu0 0.0
  %7008 = vmatpush1.msra.mxu0 0.0
  %7009 = vmatprep.subr.mxu0 0.0
  %7010 = vmatpush1.msra.mxu0 0.0
  %7011 = vmatprep.subr.mxu0 0.0
  %7012 = vmatpush1.msra.mxu0 0.0
  %7013 = vmatprep.subr.mxu0 0.0
  %7014 = vmatpush1.msra.mxu0 0.0
  %7015 = vmatprep.subr.mxu0 0.0
  %7016 = vmatpush1.msra.mxu0 0.0
  %7017 = vmatprep.subr.mxu0 0.0
  %7018 = vmatpush1.msra.mxu0 0.0
  %7019 = vmatprep.subr.mxu0 0.0
  %7020 = vmatpush1.msra.mxu0 0.0
  %7021 = vmatprep.subr.mxu0 0.0
  %7022 = vmatpush1.msra.mxu0 0.0
  %7023 = vmatprep.subr.mxu0 0.0
  %7024 = vmatpush1.msra.mxu0 0.0
  %7025 = vmatprep.subr.mxu0 0.0
  %7026 = vmatpush1.msra.mxu0 0.0
  %7027 = vmatprep.subr.mxu0 0.0
  %7028 = vmatpush1.msra.mxu0 0.0
  %7029 = vmatprep.subr.mxu0 0.0
  %7030 = vmatpush1.msra.mxu0 0.0
  %7031 = vmatprep.subr.mxu0 0.0
  %7032 = vmatpush1.msra.mxu0 0.0
  %7033 = vmatprep.subr.mxu0 0.0
  %7034 = vmatpush1.msra.mxu0 0.0
  %7035 = vmatprep.subr.mxu0 0.0
  %v7036 = vand.u32 %v4575, 4294901760
  %7037 = vmatpush1.msra.mxu0 %v7036
  %7038 = vmatprep.subr.mxu0 0.0
  %v7039 = vand.u32 %v4574, 4294901760
  %7040 = vmatpush1.msra.mxu0 %v7039
  %7041 = vmatprep.subr.mxu0 0.0
  %7042 = vmatpush2.msra.mxu0 0.0
  %7043 = vmatprep.subr.mxu0 0.0
  %7044 = vmatpush2.msra.mxu0 0.0
  %7045 = vmatprep.subr.mxu0 0.0
  %7046 = vmatpush2.msra.mxu0 0.0
  %7047 = vmatprep.subr.mxu0 0.0
  %7048 = vmatpush2.msra.mxu0 0.0
  %7049 = vmatprep.subr.mxu0 0.0
  %7050 = vmatpush2.msra.mxu0 0.0
  %7051 = vmatprep.subr.mxu0 0.0
  %7052 = vmatpush2.msra.mxu0 0.0
  %7053 = vmatprep.subr.mxu0 0.0
  %7054 = vmatpush2.msra.mxu0 0.0
  %7055 = vmatprep.subr.mxu0 0.0
  %7056 = vmatpush2.msra.mxu0 0.0
  %7057 = vmatprep.subr.mxu0 0.0
  %7058 = vmatpush2.msra.mxu0 0.0
  %7059 = vmatprep.subr.mxu0 0.0
  %7060 = vmatpush2.msra.mxu0 0.0
  %7061 = vmatprep.subr.mxu0 0.0
  %7062 = vmatpush2.msra.mxu0 0.0
  %7063 = vmatprep.subr.mxu0 0.0
  %7064 = vmatpush2.msra.mxu0 0.0
  %7065 = vmatprep.subr.mxu0 0.0
  %7066 = vmatpush2.msra.mxu0 0.0
  %7067 = vmatprep.subr.mxu0 0.0
  %7068 = vmatpush2.msra.mxu0 0.0
  %7069 = vmatprep.subr.mxu0 0.0
  %7070 = vmatpush2.msra.mxu0 0.0
  %7071 = vmatprep.subr.mxu0 0.0
  %7072 = vmatpush2.msra.mxu0 0.0
  %7073 = vmatprep.mubr.f32.mxu0 0.0
  %v7074 = vand.u32 %v6034, 4294901760
  %7075 = vmatmul.mubr.f32.gmra.mxu0 %v7074
  %v7076 = vpop.f32.mrf.mxu0
  %v7077 = vadd.f32 %v6914, %v7076
  %v7078 = vpop.f32.mrf.mxu0
  %7079 = vmatprep.mubr.f32.mxu0 0.0
  %v7080 = vand.u32 %v6036, 4294901760
  %7081 = vmatmul.mubr.f32.gmra.mxu0 %v7080
  %v7082 = vpop.f32.mrf.mxu0
  %v7083 = vadd.f32 %v6920, %v7082
  %v7084 = vpop.f32.mrf.mxu0
  %7085 = vmatprep.mubr.f32.mxu0 0.0
  %v7086 = vand.u32 %v6038, 4294901760
  %7087 = vmatmul.mubr.f32.gmra.mxu0 %v7086
  %v7088 = vpop.f32.mrf.mxu0
  %v7089 = vadd.f32 %v6926, %v7088
  %v7090 = vpop.f32.mrf.mxu0
  %7091 = vmatprep.mubr.f32.mxu0 0.0
  %v7092 = vand.u32 %v6040, 4294901760
  %7093 = vmatmul.mubr.f32.gmra.mxu0 %v7092
  %v7094 = vpop.f32.mrf.mxu0
  %v7095 = vadd.f32 %v6932, %v7094
  %v7096 = vpop.f32.mrf.mxu0
  %7097 = vmatprep.mubr.f32.mxu0 0.0
  %v7098 = vand.u32 %v6042, 4294901760
  %7099 = vmatmul.mubr.f32.gmra.mxu0 %v7098
  %v7100 = vpop.f32.mrf.mxu0
  %v7101 = vadd.f32 %v6938, %v7100
  %v7102 = vpop.f32.mrf.mxu0
  %7103 = vmatprep.mubr.f32.mxu0 0.0
  %v7104 = vand.u32 %v6044, 4294901760
  %7105 = vmatmul.mubr.f32.gmra.mxu0 %v7104
  %v7106 = vpop.f32.mrf.mxu0
  %v7107 = vadd.f32 %v6944, %v7106
  %v7108 = vpop.f32.mrf.mxu0
  %7109 = vmatprep.mubr.f32.mxu0 0.0
  %v7110 = vand.u32 %v6046, 4294901760
  %7111 = vmatmul.mubr.f32.gmra.mxu0 %v7110
  %v7112 = vpop.f32.mrf.mxu0
  %v7113 = vadd.f32 %v6950, %v7112
  %v7114 = vpop.f32.mrf.mxu0
  %7115 = vmatprep.mubr.f32.mxu0 0.0
  %v7116 = vand.u32 %v6048, 4294901760
  %7117 = vmatmul.mubr.f32.gmra.mxu0 %v7116
  %v7118 = vpop.f32.mrf.mxu0
  %v7119 = vadd.f32 %v6956, %v7118
  %v7120 = vpop.f32.mrf.mxu0
  %7121 = vmatprep.mubr.f32.mxu0 0.0
  %v7122 = vand.u32 %v6050, 4294901760
  %7123 = vmatmul.mubr.f32.gmra.mxu0 %v7122
  %v7124 = vpop.f32.mrf.mxu0
  %v7125 = vadd.f32 %v6962, %v7124
  %v7126 = vpop.f32.mrf.mxu0
  %7127 = vmatprep.mubr.f32.mxu0 0.0
  %v7128 = vand.u32 %v6052, 4294901760
  %7129 = vmatmul.mubr.f32.gmra.mxu0 %v7128
  %v7130 = vpop.f32.mrf.mxu0
  %v7131 = vadd.f32 %v6968, %v7130
  %v7132 = vpop.f32.mrf.mxu0
  %7133 = vmatprep.mubr.f32.mxu0 0.0
  %v7134 = vand.u32 %v6054, 4294901760
  %7135 = vmatmul.mubr.f32.gmra.mxu0 %v7134
  %v7136 = vpop.f32.mrf.mxu0
  %v7137 = vadd.f32 %v6974, %v7136
  %v7138 = vpop.f32.mrf.mxu0
  %7139 = vmatprep.mubr.f32.mxu0 0.0
  %v7140 = vand.u32 %v6056, 4294901760
  %7141 = vmatmul.mubr.f32.gmra.mxu0 %v7140
  %v7142 = vpop.f32.mrf.mxu0
  %v7143 = vadd.f32 %v6980, %v7142
  %v7144 = vpop.f32.mrf.mxu0
  %7145 = vmatprep.mubr.f32.mxu0 0.0
  %v7146 = vand.u32 %v6058, 4294901760
  %7147 = vmatmul.mubr.f32.gmra.mxu0 %v7146
  %v7148 = vpop.f32.mrf.mxu0
  %v7149 = vadd.f32 %v6986, %v7148
  %v7150 = vpop.f32.mrf.mxu0
  %7151 = vmatprep.mubr.f32.mxu0 0.0
  %v7152 = vand.u32 %v6060, 4294901760
  %7153 = vmatmul.mubr.f32.gmra.mxu0 %v7152
  %v7154 = vpop.f32.mrf.mxu0
  %v7155 = vadd.f32 %v6992, %v7154
  %v7156 = vpop.f32.mrf.mxu0
  %7157 = vmatprep.mubr.f32.mxu0 0.0
  %v7158 = vand.u32 %v6062, 4294901760
  %7159 = vmatmul.mubr.f32.gmra.mxu0 %v7158
  %v7160 = vpop.f32.mrf.mxu0
  %v7161 = vadd.f32 %v6998, %v7160
  %v7162 = vpop.f32.mrf.mxu0
  %7163 = vmatprep.mubr.f32.mxu0 0.0
  %v7164 = vand.u32 %v6064, 4294901760
  %7165 = vmatmul.mubr.f32.gmra.mxu0 %v7164
  %v7166 = vpop.f32.mrf.mxu0
  %v7167 = vadd.f32 %v7004, %v7166
  %v7168 = vpop.f32.mrf.mxu0
  %7169 = vdwg.mxu0
  %v7170 = vld [vmem:[#allocation2] sm:$0x1]
  %v7171 = vld [vmem:[#allocation3] sm:$0x1]
  %v7172 = vsel %vm4240, %v7077, 0.0
  %v7173 = vsel %vm4240, %v7083, 0.0
  %v7174 = vadd.f32 %v7172, %v7173
  %v7175 = vsel %vm4240, %v7089, 0.0
  %v7176 = vadd.f32 %v7174, %v7175
  %v7177 = vsel %vm4240, %v7095, 0.0
  %v7178 = vadd.f32 %v7176, %v7177
  %v7179 = vsel %vm4240, %v7101, 0.0
  %v7180 = vadd.f32 %v7178, %v7179
  %v7181 = vsel %vm4240, %v7107, 0.0
  %v7182 = vadd.f32 %v7180, %v7181
  %v7183 = vsel %vm4240, %v7113, 0.0
  %v7184 = vadd.f32 %v7182, %v7183
  %v7185 = vsel %vm4240, %v7119, 0.0
  %v7186 = vadd.f32 %v7184, %v7185
  %v7187 = vsel %vm4240, %v7125, 0.0
  %v7188 = vadd.f32 %v7186, %v7187
  %v7189 = vsel %vm4240, %v7131, 0.0
  %v7190 = vadd.f32 %v7188, %v7189
  %v7191 = vsel %vm4240, %v7137, 0.0
  %v7192 = vadd.f32 %v7190, %v7191
  %v7193 = vsel %vm4240, %v7143, 0.0
  %v7194 = vadd.f32 %v7192, %v7193
  %v7195 = vsel %vm4240, %v7149, 0.0
  %v7196 = vadd.f32 %v7194, %v7195
  %v7197 = vsel %vm4240, %v7155, 0.0
  %v7198 = vadd.f32 %v7196, %v7197
  %v7199 = vsel %vm4240, %v7161, 0.0
  %v7200 = vadd.f32 %v7198, %v7199
  %v7201 = vsel %vm4240, %v7167, 0.0
  %v7202 = vadd.f32 %v7200, %v7201
  %v7203 = vrot.slane %v7202, 4
  %v7204 = vadd.f32 %v7202, %v7203
  %v7205 = vrot.slane %v7204, 2
  %v7206 = vadd.f32 %v7204, %v7205
  %v7207 = vrot.slane %v7206, 1
  %v7208 = vadd.f32 %v7206, %v7207
  %v7209 = vrcp.pop 128.0
  %v7210 = vmul.f32 %v7208, %v7209
  %7212 = vrot.lane.b32.xlu0 %v7210, 127
  %v7213 = vpop.permute.xlu0 %7212
  %v7215 = vadd.f32 %v7210, %v7213
  %7216 = vrot.lane.b32.xlu0 %v7210, 126
  %v7217 = vpop.permute.xlu0 %7216
  %v7219 = vadd.f32 %v7215, %v7217
  %7220 = vrot.lane.b32.xlu0 %v7210, 125
  %v7221 = vpop.permute.xlu0 %7220
  %v7223 = vadd.f32 %v7219, %v7221
  %v7224 = vmul.f32 %v7223, 0.25
  %7226 = vrot.lane.b32.xlu0 %v7224, 1
  %v7227 = vpop.permute.xlu0 %7226
  %7229 = vrot.lane.b32.xlu0 %v7224, 2
  %v7230 = vpop.permute.xlu0 %7229
  %7232 = vrot.lane.b32.xlu0 %v7224, 3
  %v7233 = vpop.permute.xlu0 %7232
  %vm7235 = vcmask 7168
  %v7236 = vsel %vm7235, %v7224, %v7227
  %vm7237 = vcmask 15360
  %v7238 = vsel %vm7237, %v7236, %v7230
  %vm7239 = vcmask 23552
  %v7240 = vsel %vm7239, %v7238, %v7233
  %v7241 = vlaneseq
  %v7242 = vshrl.u32 %v7241, 7
  %v7243 = vsub.s32 0, %v7242
  %v7244 = vrot.slane %v7240, %v7243
  %v7245 = vsub.f32 %v7077, %v7244
  %v7246 = vsub.f32 %v7083, %v7244
  %v7247 = vsub.f32 %v7089, %v7244
  %v7248 = vsub.f32 %v7095, %v7244
  %v7249 = vsub.f32 %v7101, %v7244
  %v7250 = vsub.f32 %v7107, %v7244
  %v7251 = vsub.f32 %v7113, %v7244
  %v7252 = vsub.f32 %v7119, %v7244
  %v7253 = vsub.f32 %v7125, %v7244
  %v7254 = vsub.f32 %v7131, %v7244
  %v7255 = vsub.f32 %v7137, %v7244
  %v7256 = vsub.f32 %v7143, %v7244
  %v7257 = vsub.f32 %v7149, %v7244
  %v7258 = vsub.f32 %v7155, %v7244
  %v7259 = vsub.f32 %v7161, %v7244
  %v7260 = vsub.f32 %v7167, %v7244
  %v7261 = vmul.f32 %v7245, %v7245
  %v7262 = vmul.f32 %v7246, %v7246
  %v7263 = vmul.f32 %v7247, %v7247
  %v7264 = vmul.f32 %v7248, %v7248
  %v7265 = vmul.f32 %v7249, %v7249
  %v7266 = vmul.f32 %v7250, %v7250
  %v7267 = vmul.f32 %v7251, %v7251
  %v7268 = vmul.f32 %v7252, %v7252
  %v7269 = vmul.f32 %v7253, %v7253
  %v7270 = vmul.f32 %v7254, %v7254
  %v7271 = vmul.f32 %v7255, %v7255
  %v7272 = vmul.f32 %v7256, %v7256
  %v7273 = vmul.f32 %v7257, %v7257
  %v7274 = vmul.f32 %v7258, %v7258
  %v7275 = vmul.f32 %v7259, %v7259
  %v7276 = vmul.f32 %v7260, %v7260
  %v7277 = vsel %vm4240, %v7261, 0.0
  %v7278 = vsel %vm4240, %v7262, 0.0
  %v7279 = vadd.f32 %v7277, %v7278
  %v7280 = vsel %vm4240, %v7263, 0.0
  %v7281 = vadd.f32 %v7279, %v7280
  %v7282 = vsel %vm4240, %v7264, 0.0
  %v7283 = vadd.f32 %v7281, %v7282
  %v7284 = vsel %vm4240, %v7265, 0.0
  %v7285 = vadd.f32 %v7283, %v7284
  %v7286 = vsel %vm4240, %v7266, 0.0
  %v7287 = vadd.f32 %v7285, %v7286
  %v7288 = vsel %vm4240, %v7267, 0.0
  %v7289 = vadd.f32 %v7287, %v7288
  %v7290 = vsel %vm4240, %v7268, 0.0
  %v7291 = vadd.f32 %v7289, %v7290
  %v7292 = vsel %vm4240, %v7269, 0.0
  %v7293 = vadd.f32 %v7291, %v7292
  %v7294 = vsel %vm4240, %v7270, 0.0
  %v7295 = vadd.f32 %v7293, %v7294
  %v7296 = vsel %vm4240, %v7271, 0.0
  %v7297 = vadd.f32 %v7295, %v7296
  %v7298 = vsel %vm4240, %v7272, 0.0
  %v7299 = vadd.f32 %v7297, %v7298
  %v7300 = vsel %vm4240, %v7273, 0.0
  %v7301 = vadd.f32 %v7299, %v7300
  %v7302 = vsel %vm4240, %v7274, 0.0
  %v7303 = vadd.f32 %v7301, %v7302
  %v7304 = vsel %vm4240, %v7275, 0.0
  %v7305 = vadd.f32 %v7303, %v7304
  %v7306 = vsel %vm4240, %v7276, 0.0
  %v7307 = vadd.f32 %v7305, %v7306
  %v7308 = vrot.slane %v7307, 4
  %v7309 = vadd.f32 %v7307, %v7308
  %v7310 = vrot.slane %v7309, 2
  %v7311 = vadd.f32 %v7309, %v7310
  %v7312 = vrot.slane %v7311, 1
  %v7313 = vadd.f32 %v7311, %v7312
  %v7314 = vmul.f32 %v7313, %v7209
  %7316 = vrot.lane.b32.xlu0 %v7314, 127
  %v7317 = vpop.permute.xlu0 %7316
  %v7319 = vadd.f32 %v7314, %v7317
  %7320 = vrot.lane.b32.xlu0 %v7314, 126
  %v7321 = vpop.permute.xlu0 %7320
  %v7323 = vadd.f32 %v7319, %v7321
  %7324 = vrot.lane.b32.xlu0 %v7314, 125
  %v7325 = vpop.permute.xlu0 %7324
  %v7327 = vadd.f32 %v7323, %v7325
  %v7328 = vmul.f32 %v7327, 0.25
  %v7329 = vadd.f32 %v7328, 1e-05
  %v7330 = vrsqrt.pop %v7329
  %v7331 = vmul.f32 %v7170, %v7330
  %v7333 = vlaneseq
  %v7334 = vshrl.u32 %v7333, 7
  %v7335 = vsub.s32 0, %v7334
  %v7336 = vrot.slane %v7331, %v7335
  %7337 = vrot.lane.b32.xlu0 %v7336, 1
  %v7338 = vpop.permute.xlu0 %7337
  %7340 = vrot.lane.b32.xlu0 %v7336, 2
  %v7341 = vpop.permute.xlu0 %7340
  %7343 = vrot.lane.b32.xlu0 %v7336, 3
  %v7344 = vpop.permute.xlu0 %7343
  %v7346 = vsel %vm7235, %v7331, %v7338
  %v7347 = vsel %vm7237, %v7346, %v7341
  %v7348 = vsel %vm7239, %v7347, %v7344
  %v7349 = vlaneseq
  %v7350 = vshrl.u32 %v7349, 7
  %v7351 = vsub.s32 0, %v7350
  %v7352 = vrot.slane %v7348, %v7351
  %v7353 = vmul.f32 %v7245, %v7352
  %v7354 = vmul.f32 %v7246, %v7352
  %v7355 = vmul.f32 %v7247, %v7352
  %v7356 = vmul.f32 %v7248, %v7352
  %v7357 = vmul.f32 %v7249, %v7352
  %v7358 = vmul.f32 %v7250, %v7352
  %v7359 = vmul.f32 %v7251, %v7352
  %v7360 = vmul.f32 %v7252, %v7352
  %v7361 = vmul.f32 %v7253, %v7352
  %v7362 = vmul.f32 %v7254, %v7352
  %v7363 = vmul.f32 %v7255, %v7352
  %v7364 = vmul.f32 %v7256, %v7352
  %v7365 = vmul.f32 %v7257, %v7352
  %v7366 = vmul.f32 %v7258, %v7352
  %v7367 = vmul.f32 %v7259, %v7352
  %v7368 = vmul.f32 %v7260, %v7352
  %v7370 = vlaneseq
  %v7371 = vshrl.u32 %v7370, 7
  %v7372 = vsub.s32 0, %v7371
  %v7373 = vrot.slane %v7171, %v7372
  %7374 = vrot.lane.b32.xlu0 %v7373, 1
  %v7375 = vpop.permute.xlu0 %7374
  %7377 = vrot.lane.b32.xlu0 %v7373, 2
  %v7378 = vpop.permute.xlu0 %7377
  %7380 = vrot.lane.b32.xlu0 %v7373, 3
  %v7381 = vpop.permute.xlu0 %7380
  %v7383 = vsel %vm7235, %v7171, %v7375
  %v7384 = vsel %vm7237, %v7383, %v7378
  %v7385 = vsel %vm7239, %v7384, %v7381
  %v7386 = vlaneseq
  %v7387 = vshrl.u32 %v7386, 7
  %v7388 = vsub.s32 0, %v7387
  %v7389 = vrot.slane %v7385, %v7388
  %v7390 = vadd.f32 %v7353, %v7389
  %v7391 = vadd.f32 %v7354, %v7389
  %v7392 = vadd.f32 %v7355, %v7389
  %v7393 = vadd.f32 %v7356, %v7389
  %v7394 = vadd.f32 %v7357, %v7389
  %v7395 = vadd.f32 %v7358, %v7389
  %v7396 = vadd.f32 %v7359, %v7389
  %v7397 = vadd.f32 %v7360, %v7389
  %v7398 = vadd.f32 %v7361, %v7389
  %v7399 = vadd.f32 %v7362, %v7389
  %v7400 = vadd.f32 %v7363, %v7389
  %v7401 = vadd.f32 %v7364, %v7389
  %v7402 = vadd.f32 %v7365, %v7389
  %v7403 = vadd.f32 %v7366, %v7389
  %v7404 = vadd.f32 %v7367, %v7389
  %v7405 = vadd.f32 %v7368, %v7389
  %v7406 = vxor.u32 %v7390, 2147483648
  %v7407 = vxor.u32 %v7391, 2147483648
  %v7408 = vxor.u32 %v7392, 2147483648
  %v7409 = vxor.u32 %v7393, 2147483648
  %v7410 = vxor.u32 %v7394, 2147483648
  %v7411 = vxor.u32 %v7395, 2147483648
  %v7412 = vxor.u32 %v7396, 2147483648
  %v7413 = vxor.u32 %v7397, 2147483648
  %v7414 = vxor.u32 %v7398, 2147483648
  %v7415 = vxor.u32 %v7399, 2147483648
  %v7416 = vxor.u32 %v7400, 2147483648
  %v7417 = vxor.u32 %v7401, 2147483648
  %v7418 = vxor.u32 %v7402, 2147483648
  %v7419 = vxor.u32 %v7403, 2147483648
  %v7420 = vxor.u32 %v7404, 2147483648
  %v7421 = vxor.u32 %v7405, 2147483648
  %v7422 = vmul.f32 %v7406, 1.442695
  %v7423 = vpow.pop %v7422
  %v7424 = vmul.f32 %v7407, 1.442695
  %v7425 = vpow.pop %v7424
  %v7426 = vmul.f32 %v7408, 1.442695
  %v7427 = vpow.pop %v7426
  %v7428 = vmul.f32 %v7409, 1.442695
  %v7429 = vpow.pop %v7428
  %v7430 = vmul.f32 %v7410, 1.442695
  %v7431 = vpow.pop %v7430
  %v7432 = vmul.f32 %v7411, 1.442695
  %v7433 = vpow.pop %v7432
  %v7434 = vmul.f32 %v7412, 1.442695
  %v7435 = vpow.pop %v7434
  %v7436 = vmul.f32 %v7413, 1.442695
  %v7437 = vpow.pop %v7436
  %v7438 = vmul.f32 %v7414, 1.442695
  %v7439 = vpow.pop %v7438
  %v7440 = vmul.f32 %v7415, 1.442695
  %v7441 = vpow.pop %v7440
  %v7442 = vmul.f32 %v7416, 1.442695
  %v7443 = vpow.pop %v7442
  %v7444 = vmul.f32 %v7417, 1.442695
  %v7445 = vpow.pop %v7444
  %v7446 = vmul.f32 %v7418, 1.442695
  %v7447 = vpow.pop %v7446
  %v7448 = vmul.f32 %v7419, 1.442695
  %v7449 = vpow.pop %v7448
  %v7450 = vmul.f32 %v7420, 1.442695
  %v7451 = vpow.pop %v7450
  %v7452 = vmul.f32 %v7421, 1.442695
  %v7453 = vpow.pop %v7452
  %v7454 = vadd.f32 %v7423, 1.0
  %v7455 = vadd.f32 %v7425, 1.0
  %v7456 = vadd.f32 %v7427, 1.0
  %v7457 = vadd.f32 %v7429, 1.0
  %v7458 = vadd.f32 %v7431, 1.0
  %v7459 = vadd.f32 %v7433, 1.0
  %v7460 = vadd.f32 %v7435, 1.0
  %v7461 = vadd.f32 %v7437, 1.0
  %v7462 = vadd.f32 %v7439, 1.0
  %v7463 = vadd.f32 %v7441, 1.0
  %v7464 = vadd.f32 %v7443, 1.0
  %v7465 = vadd.f32 %v7445, 1.0
  %v7466 = vadd.f32 %v7447, 1.0
  %v7467 = vadd.f32 %v7449, 1.0
  %v7468 = vadd.f32 %v7451, 1.0
  %v7469 = vadd.f32 %v7453, 1.0
  %v7470 = vrcp.pop %v7454
  %v7471 = vmul.f32 1.0, %v7470
  %v7472 = vrcp.pop %v7455
  %v7473 = vmul.f32 1.0, %v7472
  %v7474 = vrcp.pop %v7456
  %v7475 = vmul.f32 1.0, %v7474
  %v7476 = vrcp.pop %v7457
  %v7477 = vmul.f32 1.0, %v7476
  %v7478 = vrcp.pop %v7458
  %v7479 = vmul.f32 1.0, %v7478
  %v7480 = vrcp.pop %v7459
  %v7481 = vmul.f32 1.0, %v7480
  %v7482 = vrcp.pop %v7460
  %v7483 = vmul.f32 1.0, %v7482
  %v7484 = vrcp.pop %v7461
  %v7485 = vmul.f32 1.0, %v7484
  %v7486 = vrcp.pop %v7462
  %v7487 = vmul.f32 1.0, %v7486
  %v7488 = vrcp.pop %v7463
  %v7489 = vmul.f32 1.0, %v7488
  %v7490 = vrcp.pop %v7464
  %v7491 = vmul.f32 1.0, %v7490
  %v7492 = vrcp.pop %v7465
  %v7493 = vmul.f32 1.0, %v7492
  %v7494 = vrcp.pop %v7466
  %v7495 = vmul.f32 1.0, %v7494
  %v7496 = vrcp.pop %v7467
  %v7497 = vmul.f32 1.0, %v7496
  %v7498 = vrcp.pop %v7468
  %v7499 = vmul.f32 1.0, %v7498
  %v7500 = vrcp.pop %v7469
  %v7501 = vmul.f32 1.0, %v7500
  %7502 = vxpose.xlu0.b32.start [1/16] %v7471, 128
  %7503 = vxpose.xlu0.b32.cont [2/16] %v7473, 128
  %7504 = vxpose.xlu0.b32.cont [3/16] %v7475, 128
  %7505 = vxpose.xlu0.b32.cont [4/16] %v7477, 128
  %7506 = vxpose.xlu0.b32.cont [5/16] %v7479, 128
  %7507 = vxpose.xlu0.b32.cont [6/16] %v7481, 128
  %7508 = vxpose.xlu0.b32.cont [7/16] %v7483, 128
  %7509 = vxpose.xlu0.b32.cont [8/16] %v7485, 128
  %7510 = vxpose.xlu0.b32.cont [9/16] %v7487, 128
  %7511 = vxpose.xlu0.b32.cont [10/16] %v7489, 128
  %7512 = vxpose.xlu0.b32.cont [11/16] %v7491, 128
  %7513 = vxpose.xlu0.b32.cont [12/16] %v7493, 128
  %7514 = vxpose.xlu0.b32.cont [13/16] %v7495, 128
  %7515 = vxpose.xlu0.b32.cont [14/16] %v7497, 128
  %7516 = vxpose.xlu0.b32.cont [15/16] %v7499, 128
  %7517 = vxpose.xlu0.b32.end [16/16] %v7501, 128
  %v7518 = vpop.trf.xlu0
  %v7519 = vpop.trf.xlu0
  %v7520 = vpop.trf.xlu0
  %v7521 = vpop.trf.xlu0
  %v7522 = vpop.trf.xlu0
  %v7523 = vpop.trf.xlu0
  %v7524 = vpop.trf.xlu0
  %v7525 = vpop.trf.xlu0
  %v7526 = vpop.trf.xlu0
  %v7527 = vpop.trf.xlu0
  %v7528 = vpop.trf.xlu0
  %v7529 = vpop.trf.xlu0
  %v7530 = vpop.trf.xlu0
  %v7531 = vpop.trf.xlu0
  %v7532 = vpop.trf.xlu0
  %v7533 = vpop.trf.xlu0
  %7534 = vst [vmem:[%s15] sm:$0xf] %v7518
  // Predicated region
  $region62: #{decoder_cnn_forward.1} parent=0 // pred_check
    _
  $region63: #{decoder_cnn_forward.1} parent=0 // pred_check_branch
    %7536 = sbr.rel (0) target = $region65
  $region64: #{decoder_cnn_forward.1} parent=0 // pred_region
    _
  $region65: #{decoder_cnn_forward.1} parent=0 // pred_fallthru
    _
  // Predicated region
  $region66: #{decoder_cnn_forward.1} parent=0 // pred_check
    _
  $region67: #{decoder_cnn_forward.1} parent=0 // pred_check_branch
    %7538 = sbr.rel (0) target = $region69
  $region68: #{decoder_cnn_forward.1} parent=0 // pred_region
    _
  $region69: #{decoder_cnn_forward.1} parent=0 // pred_fallthru
    _

</llo_original>
